<compile_context>
chip_gen: v6e
topology: v6e:2x2x1
jax: 0.10.0
libtpu: 0.0.40
codegen_flags: <defaults>
</compile_context>

<pallas_src>
import functools

import numpy as np

import jax
import jax.numpy as jnp
from jax.experimental import pallas as pl
from jax.experimental.pallas import tpu as pltpu

LANE = 128  # all channel dims live in the 128-lane axis (lane-dense stores)


def _ceil8(n):
    return -(-n // 8) * 8


# -----------------------------------------------------------------------------
# Static layer table.
#   (name, transposed, k, stride, pad, cin, cout, in_lane_off, out_lane_off)
# Lane offsets are chosen so that every torch.cat([...], dim=1) maps to a pair
# of lane-disjoint tensors (lane == concatenated-channel index).
# -----------------------------------------------------------------------------
_LAYER_DEFS = [
    ("conv1",   False, 3, 2, 1,  2,  8,  0,  8),
    ("conv2",   False, 3, 2, 1,  8, 16,  8, 16),
    ("conv3",   False, 3, 2, 1, 16, 32, 16, 32),
    ("conv4",   False, 3, 2, 1, 32, 32, 32,  0),
    ("deconv3", True,  3, 2, 1, 32, 32,  0,  0),
    ("deconv2", True,  4, 2, 1, 64, 16,  0,  0),
    ("deconv1", True,  4, 2, 1, 32,  8,  0,  0),
    ("deconv0", True,  4, 2, 1, 16,  1,  0,  0),
]


def _layer_geometry(H, W):
    """Per-layer ((Hi, Wi), (Ho, Wo)) following the PyTorch forward chain."""
    def conv_out(h, k, s, p):
        return (h + 2 * p - k) // s + 1

    def tconv_out(h, k, s, p):
        return (h - 1) * s - 2 * p + k

    geo, h, w = [], H, W
    for _, transposed, k, s, p, *_ in _LAYER_DEFS:
        if transposed:
            ho, wo = tconv_out(h, k, s, p), tconv_out(w, k, s, p)
        else:
            ho, wo = conv_out(h, k, s, p), conv_out(w, k, s, p)
        geo.append(((h, w), (ho, wo)))
        h, w = ho, wo
    # Same skip-connection size constraints as the PyTorch model.
    assert geo[4][1] == geo[2][1], "deconv3 output must match conv3 output"
    assert geo[5][1] == geo[1][1], "deconv2 output must match conv2 output"
    assert geo[6][1] == geo[0][1], "deconv1 output must match conv1 output"
    assert geo[7][1] == (H, W), "deconv0 output must match the input size"
    return geo


def _make_gather(hi, wi, ho, wo, k, stride, pad, dil, m_in_pad, m_out_pad):
    """0/1 matrices G[t, out_pos, in_pos] implementing padded (dilated) conv
    patch extraction for tap t = dy*k + dx.  Rows/cols beyond the real spatial
    extents stay zero, so padded scratch rows never propagate."""
    g = np.zeros((k * k, m_out_pad, m_in_pad), np.float32)
    hd = (hi - 1) * dil + 1
    wd = (wi - 1) * dil + 1
    for dy in range(k):
        for dx in range(k):
            t = dy * k + dx
            for oi in range(ho):
                for oj in range(wo):
                    y = stride * oi + dy - pad
                    x = stride * oj + dx - pad
                    if (0 <= y < hd and 0 <= x < wd
                            and y % dil == 0 and x % dil == 0):
                        g[t, oi * wo + oj, (y // dil) * wi + (x // dil)] = 1.0
    return g


def _init_raw_layer(key, transposed, k, cin, cout):
    """Deterministic synthetic Conv/ConvTranspose + BatchNorm parameters."""
    kw_, kb, kg, kbt, km, kv = jax.random.split(key, 6)
    std = 1.0 / float(np.sqrt(cin * k * k))
    if transposed:  # PyTorch ConvTranspose2d weight: (Cin, Cout, KH, KW)
        w = std * jax.random.normal(kw_, (cin, cout, k, k), jnp.float32)
    else:           # PyTorch Conv2d weight: (Cout, Cin, KH, KW)
        w = std * jax.random.normal(kw_, (cout, cin, k, k), jnp.float32)
    return dict(
        w=w,
        conv_bias=0.05 * jax.random.normal(kb, (cout,), jnp.float32),
        gamma=1.0 + 0.1 * jax.random.normal(kg, (cout,), jnp.float32),
        beta=0.1 * jax.random.normal(kbt, (cout,), jnp.float32),
        mean=0.1 * jax.random.normal(km, (cout,), jnp.float32),
        var=1.0 + 0.1 * jnp.abs(jax.random.normal(kv, (cout,), jnp.float32)),
        transposed=transposed, k=k)


def build_unet(key, H, W):
    """Builds gather matrices, BN-folded per-tap weight slabs and biases."""
    geo = _layer_geometry(H, W)
    keys = jax.random.split(key, len(_LAYER_DEFS))
    layers, raw_layers = [], []
    for idx, (name, transposed, k, stride, pad, cin, cout,
              in_off, out_off) in enumerate(_LAYER_DEFS):
        (hi, wi), (ho, wo) = geo[idx]
        raw = _init_raw_layer(keys[idx], transposed, k, cin, cout)
        raw.update(name=name, stride=stride, pad=pad)
        raw_layers.append(raw)

        m_in_pad = _ceil8(hi * wi)
        m_out_pad = _ceil8(ho * wo)

        w_np = np.asarray(raw["w"])
        if transposed:
            # Equivalent forward conv on the stride-dilated input, with the
            # kernel spatially flipped and channel axes swapped.
            g = _make_gather(hi, wi, ho, wo, k, 1, k - 1 - pad, stride,
                             m_in_pad, m_out_pad)
            w_eq = w_np[:, :, ::-1, ::-1].transpose(2, 3, 0, 1)  # (KH,KW,Ci,Co)
        else:
            g = _make_gather(hi, wi, ho, wo, k, stride, pad, 1,
                             m_in_pad, m_out_pad)
            w_eq = w_np.transpose(2, 3, 1, 0)                    # (KH,KW,Ci,Co)

        scale = np.asarray(raw["gamma"]) / np.sqrt(np.asarray(raw["var"]) + 1e-5)
        bias = (np.asarray(raw["beta"])
                + scale * (np.asarray(raw["conv_bias"]) - np.asarray(raw["mean"])))

        # BN-folded per-tap weight slabs, placed at the layer's lane ranges.
        slab = np.zeros((k * k, LANE, LANE), np.float32)
        for dy in range(k):
            for dx in range(k):
                slab[dy * k + dx, in_off:in_off + cin,
                     out_off:out_off + cout] = w_eq[dy, dx] * scale[None, :]
        b_pad = np.zeros((1, LANE), np.float32)
        b_pad[0, out_off:out_off + cout] = bias

        layers.append(dict(
            name=name, taps=k * k, m_in=m_in_pad, m_out=m_out_pad,
            act="sigmoid" if name == "deconv0" else "relu",
            g=jnp.asarray(g, jnp.bfloat16),
            w=jnp.asarray(slab, jnp.bfloat16),
            b=jnp.asarray(b_pad, jnp.float32)))

    # Consistency: each layer consumes exactly the producer's padded row count.
    for i in range(1, 4):
        assert layers[i]["m_in"] == layers[i - 1]["m_out"]
    assert layers[4]["m_in"] == layers[3]["m_out"]
    assert layers[5]["m_in"] == layers[4]["m_out"] == layers[2]["m_out"]
    assert layers[6]["m_in"] == layers[5]["m_out"] == layers[1]["m_out"]
    assert layers[7]["m_in"] == layers[6]["m_out"] == layers[0]["m_out"]
    return dict(H=H, W=W, layers=layers, raw=raw_layers)


# -----------------------------------------------------------------------------
# The fused Pallas kernel: whole UNet for one image per grid step.
# -----------------------------------------------------------------------------
def _unet_kernel(x_ref, *refs, plan):
    n_layers = len(plan)
    params = refs[:3 * n_layers]                  # (g, w, b) per layer
    out_ref = refs[3 * n_layers]
    c1, c2, c3, c4, d3, d2, d1, acc = refs[3 * n_layers + 1:]

    def layer(i, a_in):
        """a_in: bf16 (m_in, 128) value.  Returns activated f32 (m_out, 128)."""
        g_ref, w_ref, b_ref = params[3 * i], params[3 * i + 1], params[3 * i + 2]
        taps = plan[i]["taps"]
        m_out = plan[i]["m_out"]

        acc[0:m_out, :] = jnp.zeros((m_out, LANE), jnp.float32)

        def tap(t, carry):
            # Gather the tap's input rows (exact bf16 row selection), then one
            # MXU matmul against the BN-folded per-tap weight slab.
            patch = jnp.dot(g_ref[t], a_in,
                            preferred_element_type=jnp.float32)
            patch = patch.astype(jnp.bfloat16)
            acc[0:m_out, :] = acc[0:m_out, :] + jnp.dot(
                patch, w_ref[t], preferred_element_type=jnp.float32)
            return carry

        jax.lax.fori_loop(0, taps, tap, 0)

        y = acc[0:m_out, :] + b_ref[...]
        if plan[i]["act"] == "relu":
            return jnp.maximum(y, 0.0)
        return jax.nn.sigmoid(y)

    x = x_ref[0]                                          # (m0, 128) bf16
    c1[...] = layer(0, x).astype(jnp.bfloat16)            # lanes  8..15
    c2[...] = layer(1, c1[...]).astype(jnp.bfloat16)      # lanes 16..31
    c3[...] = layer(2, c2[...]).astype(jnp.bfloat16)      # lanes 32..63
    c4[...] = layer(3, c3[...]).astype(jnp.bfloat16)      # lanes  0..31
    d3[...] = layer(4, c4[...]).astype(jnp.bfloat16)      # lanes  0..31
    # torch.cat([dX, cX], dim=1) == lane-disjoint elementwise add.
    d2[...] = layer(5, d3[...] + c3[...]).astype(jnp.bfloat16)   # lanes 0..15
    d1[...] = layer(6, d2[...] + c2[...]).astype(jnp.bfloat16)   # lanes 0..7
    out_ref[0] = layer(7, d1[...] + c1[...])              # f32, channel at lane 0


def make_unet_forward(net):
    layers = net["layers"]
    H, W = net["H"], net["W"]
    plan = [dict(taps=l["taps"], m_out=l["m_out"], act=l["act"]) for l in layers]
    m0 = layers[0]["m_in"]
    m_last = layers[-1]["m_out"]
    kernel = functools.partial(_unet_kernel, plan=plan)

    def pallas_unet(x_flat):
        B = x_flat.shape[0]
        in_specs = [pl.BlockSpec((1, m0, LANE), lambda i: (i, 0, 0))]
        args = [x_flat]
        for l in layers:
            in_specs.append(pl.BlockSpec(l["g"].shape, lambda i: (0, 0, 0)))
            in_specs.append(pl.BlockSpec(l["w"].shape, lambda i: (0, 0, 0)))
            in_specs.append(pl.BlockSpec(l["b"].shape, lambda i: (0, 0)))
            args += [l["g"], l["w"], l["b"]]
        scratch = [pltpu.VMEM((layers[j]["m_out"], LANE), jnp.bfloat16)
                   for j in range(7)]                       # c1..c4, d3, d2, d1
        scratch.append(pltpu.VMEM((max(p["m_out"] for p in plan), LANE),
                                  jnp.float32))             # shared f32 acc
        return pl.pallas_call(
            kernel,
            out_shape=jax.ShapeDtypeStruct((B, m_last, LANE), jnp.float32),
            grid=(B,),
            in_specs=in_specs,
            out_specs=pl.BlockSpec((1, m_last, LANE), lambda i: (i, 0, 0)),
            scratch_shapes=scratch,
            compiler_params=pltpu.CompilerParams(
                dimension_semantics=("parallel",),
                vmem_limit_bytes=48 * 1024 * 1024),
        )(*args)

    def forward(q, s_list):
        # q: (N, 1, H, W); s_list: list of (N, 1, H, W)  (NCHW like PyTorch).
        N = q.shape[0]
        xs = [jnp.concatenate([q, si], axis=1) for si in s_list]   # (N, 2, H, W)
        x = jnp.concatenate(xs, axis=0)                            # (B, 2, H, W)
        B = x.shape[0]
        x = jnp.transpose(x, (0, 2, 3, 1)).reshape(B, H * W, 2)
        x = jnp.pad(x, ((0, 0), (0, m0 - H * W), (0, LANE - 2)))
        y = pallas_unet(x.astype(jnp.bfloat16))                    # (B, m_last, 128)
        out = y[:, :H * W, 0].reshape(B, 1, H, W)
        return [out[i * N:(i + 1) * N] for i in range(len(s_list))]

    return forward


# -----------------------------------------------------------------------------
# Pure-JAX reference (f32, lax convolutions + explicit BatchNorm) for checking.
# -----------------------------------------------------------------------------
def reference_forward(net, q, s_list):
    raws = net["raw"]

    def layer(x, raw, act):
        if raw["transposed"]:
            w = jnp.flip(raw["w"], (2, 3)).transpose(1, 0, 2, 3)  # (Co, Ci, k, k)
            y = jax.lax.conv_general_dilated(
                x, w, window_strides=(1, 1),
                padding=[(raw["k"] - 1 - raw["pad"],) * 2] * 2,
                lhs_dilation=(raw["stride"],) * 2,
                dimension_numbers=("NCHW", "OIHW", "NCHW"))
        else:
            y = jax.lax.conv_general_dilated(
                x, raw["w"], window_strides=(raw["stride"],) * 2,
                padding=[(raw["pad"],) * 2] * 2,
                dimension_numbers=("NCHW", "OIHW", "NCHW"))
        y = y + raw["conv_bias"][None, :, None, None]
        scale = raw["gamma"] / jnp.sqrt(raw["var"] + 1e-5)
        y = ((y - raw["mean"][None, :, None, None])
             * scale[None, :, None, None] + raw["beta"][None, :, None, None])
        return jnp.maximum(y, 0.0) if act == "relu" else jax.nn.sigmoid(y)

    outs = []
    for si in s_list:
        x = jnp.concatenate([q, si], axis=1)
        c1 = layer(x, raws[0], "relu")
        c2 = layer(c1, raws[1], "relu")
        c3 = layer(c2, raws[2], "relu")
        c4 = layer(c3, raws[3], "relu")
        d3 = layer(c4, raws[4], "relu")
        d2 = layer(jnp.concatenate([d3, c3], 1), raws[5], "relu")
        d1 = layer(jnp.concatenate([d2, c2], 1), raws[6], "relu")
        outs.append(layer(jnp.concatenate([d1, c1], 1), raws[7], "sigmoid"))
    return outs


if __name__ == "__main__":
    key = jax.random.PRNGKey(0)
    kp, kq, ks1, ks2 = jax.random.split(key, 4)

    # H=W=16 breaks the original PyTorch model's skip-connection sizes too;
    # 24 works: 24 -> 12 -> 6 -> 3 -> 2 -> 3 -> 6 -> 12 -> 24.
    N, H, W = 2, 24, 24
    net = build_unet(kp, H, W)

    q = jax.random.normal(kq, (N, 1, H, W), jnp.float32)
    s = [jax.random.normal(ks1, (N, 1, H, W), jnp.float32),
         jax.random.normal(ks2, (N, 1, H, W), jnp.float32)]

    fwd = jax.jit(make_unet_forward(net))
    outs = fwd(q, s)
    outs = [jax.block_until_ready(o) for o in outs]

    assert len(outs) == len(s)
    assert all(o.shape == (N, 1, H, W) for o in outs)
    assert all(bool(jnp.all((o >= 0.0) & (o <= 1.0))) for o in outs)

    # Correctness vs a pure-JAX f32 reference (bf16 weights/activations in the
    # kernel -> loose tolerance; real bugs would show up as O(0.3+) errors).
    refs = reference_forward(net, q, s)
    max_err = max(float(jnp.max(jnp.abs(o - r))) for o, r in zip(outs, refs))
    assert max_err < 0.1, f"max |pallas - reference| = {max_err}"

    print("KERNEL_OK")
</pallas_src>

<mosaic_0001>
module attributes {stable_mosaic.version = 11 : i64} {
  func.func @_unet_kernel(%arg0: i32, %arg1: memref<1x576x128xbf16, #tpu.memory_space<vmem>>, %arg2: memref<9x144x576xbf16, #tpu.memory_space<vmem>>, %arg3: memref<9x128x128xbf16, #tpu.memory_space<vmem>>, %arg4: memref<1x128xf32, #tpu.memory_space<vmem>>, %arg5: memref<9x40x144xbf16, #tpu.memory_space<vmem>>, %arg6: memref<9x128x128xbf16, #tpu.memory_space<vmem>>, %arg7: memref<1x128xf32, #tpu.memory_space<vmem>>, %arg8: memref<9x16x40xbf16, #tpu.memory_space<vmem>>, %arg9: memref<9x128x128xbf16, #tpu.memory_space<vmem>>, %arg10: memref<1x128xf32, #tpu.memory_space<vmem>>, %arg11: memref<9x8x16xbf16, #tpu.memory_space<vmem>>, %arg12: memref<9x128x128xbf16, #tpu.memory_space<vmem>>, %arg13: memref<1x128xf32, #tpu.memory_space<vmem>>, %arg14: memref<9x16x8xbf16, #tpu.memory_space<vmem>>, %arg15: memref<9x128x128xbf16, #tpu.memory_space<vmem>>, %arg16: memref<1x128xf32, #tpu.memory_space<vmem>>, %arg17: memref<16x40x16xbf16, #tpu.memory_space<vmem>>, %arg18: memref<16x128x128xbf16, #tpu.memory_space<vmem>>, %arg19: memref<1x128xf32, #tpu.memory_space<vmem>>, %arg20: memref<16x144x40xbf16, #tpu.memory_space<vmem>>, %arg21: memref<16x128x128xbf16, #tpu.memory_space<vmem>>, %arg22: memref<1x128xf32, #tpu.memory_space<vmem>>, %arg23: memref<16x576x144xbf16, #tpu.memory_space<vmem>>, %arg24: memref<16x128x128xbf16, #tpu.memory_space<vmem>>, %arg25: memref<1x128xf32, #tpu.memory_space<vmem>>, %arg26: memref<1x576x128xf32, #tpu.memory_space<vmem>>, %arg27: memref<144x128xbf16, #tpu.memory_space<vmem>>, %arg28: memref<40x128xbf16, #tpu.memory_space<vmem>>, %arg29: memref<16x128xbf16, #tpu.memory_space<vmem>>, %arg30: memref<8x128xbf16, #tpu.memory_space<vmem>>, %arg31: memref<16x128xbf16, #tpu.memory_space<vmem>>, %arg32: memref<40x128xbf16, #tpu.memory_space<vmem>>, %arg33: memref<144x128xbf16, #tpu.memory_space<vmem>>, %arg34: memref<576x128xf32, #tpu.memory_space<vmem>>) attributes {dimension_semantics = [#tpu.dimension_semantics<parallel>], iteration_bounds = array<i64: 4>, scalar_prefetch = 0 : i64, scratch_operands = 8 : i64, tpu.core_type = #tpu.core_type<tc>, window_params = [{transform_indices = @transform_0, window_bounds = array<i64: 1, 576, 128>}, {pipeline_mode = #tpu.pipeline_mode<synchronous>, transform_indices = @transform_1, window_bounds = array<i64: 9, 144, 576>}, {pipeline_mode = #tpu.pipeline_mode<synchronous>, transform_indices = @transform_2, window_bounds = array<i64: 9, 128, 128>}, {pipeline_mode = #tpu.pipeline_mode<synchronous>, transform_indices = @transform_3, window_bounds = array<i64: 1, 128>}, {pipeline_mode = #tpu.pipeline_mode<synchronous>, transform_indices = @transform_4, window_bounds = array<i64: 9, 40, 144>}, {pipeline_mode = #tpu.pipeline_mode<synchronous>, transform_indices = @transform_5, window_bounds = array<i64: 9, 128, 128>}, {pipeline_mode = #tpu.pipeline_mode<synchronous>, transform_indices = @transform_6, window_bounds = array<i64: 1, 128>}, {pipeline_mode = #tpu.pipeline_mode<synchronous>, transform_indices = @transform_7, window_bounds = array<i64: 9, 16, 40>}, {pipeline_mode = #tpu.pipeline_mode<synchronous>, transform_indices = @transform_8, window_bounds = array<i64: 9, 128, 128>}, {pipeline_mode = #tpu.pipeline_mode<synchronous>, transform_indices = @transform_9, window_bounds = array<i64: 1, 128>}, {pipeline_mode = #tpu.pipeline_mode<synchronous>, transform_indices = @transform_10, window_bounds = array<i64: 9, 8, 16>}, {pipeline_mode = #tpu.pipeline_mode<synchronous>, transform_indices = @transform_11, window_bounds = array<i64: 9, 128, 128>}, {pipeline_mode = #tpu.pipeline_mode<synchronous>, transform_indices = @transform_12, window_bounds = array<i64: 1, 128>}, {pipeline_mode = #tpu.pipeline_mode<synchronous>, transform_indices = @transform_13, window_bounds = array<i64: 9, 16, 8>}, {pipeline_mode = #tpu.pipeline_mode<synchronous>, transform_indices = @transform_14, window_bounds = array<i64: 9, 128, 128>}, {pipeline_mode = #tpu.pipeline_mode<synchronous>, transform_indices = @transform_15, window_bounds = array<i64: 1, 128>}, {pipeline_mode = #tpu.pipeline_mode<synchronous>, transform_indices = @transform_16, window_bounds = array<i64: 16, 40, 16>}, {pipeline_mode = #tpu.pipeline_mode<synchronous>, transform_indices = @transform_17, window_bounds = array<i64: 16, 128, 128>}, {pipeline_mode = #tpu.pipeline_mode<synchronous>, transform_indices = @transform_18, window_bounds = array<i64: 1, 128>}, {pipeline_mode = #tpu.pipeline_mode<synchronous>, transform_indices = @transform_19, window_bounds = array<i64: 16, 144, 40>}, {pipeline_mode = #tpu.pipeline_mode<synchronous>, transform_indices = @transform_20, window_bounds = array<i64: 16, 128, 128>}, {pipeline_mode = #tpu.pipeline_mode<synchronous>, transform_indices = @transform_21, window_bounds = array<i64: 1, 128>}, {pipeline_mode = #tpu.pipeline_mode<synchronous>, transform_indices = @transform_22, window_bounds = array<i64: 16, 576, 144>}, {pipeline_mode = #tpu.pipeline_mode<synchronous>, transform_indices = @transform_23, window_bounds = array<i64: 16, 128, 128>}, {pipeline_mode = #tpu.pipeline_mode<synchronous>, transform_indices = @transform_24, window_bounds = array<i64: 1, 128>}, {transform_indices = @transform_25, window_bounds = array<i64: 1, 576, 128>}]} {
    %c0 = arith.constant 0 : index
    %c0_0 = arith.constant 0 : index
    %c0_1 = arith.constant 0 : index
    %0 = vector.load %arg1[%c0, %c0_0, %c0_1] : memref<1x576x128xbf16, #tpu.memory_space<vmem>>, vector<1x576x128xbf16>
    %1 = vector.shape_cast %0 : vector<1x576x128xbf16> to vector<576x128xbf16>
    %cst = arith.constant 0.000000e+00 : f32
    %2 = vector.broadcast %cst : f32 to vector<144x128xf32>
    %c0_2 = arith.constant 0 : index
    %c0_3 = arith.constant 0 : index
    %3 = vector.load %arg34[%c0_2, %c0_3] : memref<576x128xf32, #tpu.memory_space<vmem>>, vector<144x128xf32>
    tpu.vector_store %arg34[%c0_2, %c0_3], %2 {strides = array<i32>} : memref<576x128xf32, #tpu.memory_space<vmem>>, vector<144x128xf32>,
    %c0_i32 = arith.constant 0 : i32
    %c9_i32 = arith.constant 9 : i32
    %4 = arith.addi %c0_i32, %c9_i32 : i32
    %c1_i32 = arith.constant 1 : i32
    scf.for %arg35 = %c0_i32 to %4 step %c1_i32  : i32 {
      %107 = arith.index_cast %arg35 : i32 to index
      %c0_130 = arith.constant 0 : index
      %c0_131 = arith.constant 0 : index
      %108 = vector.load %arg2[%107, %c0_130, %c0_131] : memref<9x144x576xbf16, #tpu.memory_space<vmem>>, vector<1x144x576xbf16>
      %109 = vector.shape_cast %108 : vector<1x144x576xbf16> to vector<144x576xbf16>
      %cst_132 = arith.constant dense<0.000000e+00> : vector<144x128xf32>
      %110 = tpu.matmul %109, %1, %cst_132 {dimension_numbers = #tpu.dot_dimension_numbers<[1], [0], [0], [1], [0, 0, 1, 1], [], []>} : vector<144x576xbf16>, vector<576x128xbf16>, vector<144x128xf32> -> vector<144x128xf32>
      %111 = arith.truncf %110 : vector<144x128xf32> to vector<144x128xbf16>
      %c0_133 = arith.constant 0 : index
      %c0_134 = arith.constant 0 : index
      %112 = vector.load %arg34[%c0_133, %c0_134] : memref<576x128xf32, #tpu.memory_space<vmem>>, vector<144x128xf32>
      %113 = arith.index_cast %arg35 : i32 to index
      %c0_135 = arith.constant 0 : index
      %c0_136 = arith.constant 0 : index
      %114 = vector.load %arg3[%113, %c0_135, %c0_136] : memref<9x128x128xbf16, #tpu.memory_space<vmem>>, vector<1x128x128xbf16>
      %115 = vector.shape_cast %114 : vector<1x128x128xbf16> to vector<128x128xbf16>
      %cst_137 = arith.constant dense<0.000000e+00> : vector<144x128xf32>
      %116 = tpu.matmul %111, %115, %cst_137 {dimension_numbers = #tpu.dot_dimension_numbers<[1], [0], [0], [1], [0, 0, 1, 1], [], []>} : vector<144x128xbf16>, vector<128x128xbf16>, vector<144x128xf32> -> vector<144x128xf32>
      %117 = arith.addf %112, %116 : vector<144x128xf32>
      %c0_138 = arith.constant 0 : index
      %c0_139 = arith.constant 0 : index
      %118 = vector.load %arg34[%c0_138, %c0_139] : memref<576x128xf32, #tpu.memory_space<vmem>>, vector<144x128xf32>
      tpu.vector_store %arg34[%c0_138, %c0_139], %117 {strides = array<i32>} : memref<576x128xf32, #tpu.memory_space<vmem>>, vector<144x128xf32>,
    }
    %c9_i32_4 = arith.constant 9 : i32
    %c0_5 = arith.constant 0 : index
    %c0_6 = arith.constant 0 : index
    %5 = vector.load %arg34[%c0_5, %c0_6] : memref<576x128xf32, #tpu.memory_space<vmem>>, vector<144x128xf32>
    %c0_7 = arith.constant 0 : index
    %c0_8 = arith.constant 0 : index
    %6 = vector.load %arg4[%c0_7, %c0_8] : memref<1x128xf32, #tpu.memory_space<vmem>>, vector<1x128xf32>
    %7 = vector.broadcast %6 : vector<1x128xf32> to vector<144x128xf32>
    %8 = arith.addf %5, %7 : vector<144x128xf32>
    %cst_9 = arith.constant 0.000000e+00 : f32
    %9 = vector.broadcast %cst_9 : f32 to vector<144x128xf32>
    %10 = arith.maximumf %8, %9 : vector<144x128xf32>
    %11 = arith.truncf %10 : vector<144x128xf32> to vector<144x128xbf16>
    %c0_10 = arith.constant 0 : index
    %c0_11 = arith.constant 0 : index
    %12 = vector.load %arg27[%c0_10, %c0_11] : memref<144x128xbf16, #tpu.memory_space<vmem>>, vector<144x128xbf16>
    tpu.vector_store %arg27[%c0_10, %c0_11], %11 {strides = array<i32>} : memref<144x128xbf16, #tpu.memory_space<vmem>>, vector<144x128xbf16>,
    %c0_12 = arith.constant 0 : index
    %c0_13 = arith.constant 0 : index
    %13 = vector.load %arg27[%c0_12, %c0_13] : memref<144x128xbf16, #tpu.memory_space<vmem>>, vector<144x128xbf16>
    %cst_14 = arith.constant 0.000000e+00 : f32
    %14 = vector.broadcast %cst_14 : f32 to vector<40x128xf32>
    %c0_15 = arith.constant 0 : index
    %c0_16 = arith.constant 0 : index
    %15 = vector.load %arg34[%c0_15, %c0_16] : memref<576x128xf32, #tpu.memory_space<vmem>>, vector<40x128xf32>
    tpu.vector_store %arg34[%c0_15, %c0_16], %14 {strides = array<i32>} : memref<576x128xf32, #tpu.memory_space<vmem>>, vector<40x128xf32>,
    %c0_i32_17 = arith.constant 0 : i32
    %c9_i32_18 = arith.constant 9 : i32
    %16 = arith.addi %c0_i32_17, %c9_i32_18 : i32
    %c1_i32_19 = arith.constant 1 : i32
    scf.for %arg35 = %c0_i32_17 to %16 step %c1_i32_19  : i32 {
      %107 = arith.index_cast %arg35 : i32 to index
      %c0_130 = arith.constant 0 : index
      %c0_131 = arith.constant 0 : index
      %108 = vector.load %arg5[%107, %c0_130, %c0_131] : memref<9x40x144xbf16, #tpu.memory_space<vmem>>, vector<1x40x144xbf16>
      %109 = vector.shape_cast %108 : vector<1x40x144xbf16> to vector<40x144xbf16>
      %cst_132 = arith.constant dense<0.000000e+00> : vector<40x128xf32>
      %110 = tpu.matmul %109, %13, %cst_132 {dimension_numbers = #tpu.dot_dimension_numbers<[1], [0], [0], [1], [0, 0, 1, 1], [], []>} : vector<40x144xbf16>, vector<144x128xbf16>, vector<40x128xf32> -> vector<40x128xf32>
      %111 = arith.truncf %110 : vector<40x128xf32> to vector<40x128xbf16>
      %c0_133 = arith.constant 0 : index
      %c0_134 = arith.constant 0 : index
      %112 = vector.load %arg34[%c0_133, %c0_134] : memref<576x128xf32, #tpu.memory_space<vmem>>, vector<40x128xf32>
      %113 = arith.index_cast %arg35 : i32 to index
      %c0_135 = arith.constant 0 : index
      %c0_136 = arith.constant 0 : index
      %114 = vector.load %arg6[%113, %c0_135, %c0_136] : memref<9x128x128xbf16, #tpu.memory_space<vmem>>, vector<1x128x128xbf16>
      %115 = vector.shape_cast %114 : vector<1x128x128xbf16> to vector<128x128xbf16>
      %cst_137 = arith.constant dense<0.000000e+00> : vector<40x128xf32>
      %116 = tpu.matmul %111, %115, %cst_137 {dimension_numbers = #tpu.dot_dimension_numbers<[1], [0], [0], [1], [0, 0, 1, 1], [], []>} : vector<40x128xbf16>, vector<128x128xbf16>, vector<40x128xf32> -> vector<40x128xf32>
      %117 = arith.addf %112, %116 : vector<40x128xf32>
      %c0_138 = arith.constant 0 : index
      %c0_139 = arith.constant 0 : index
      %118 = vector.load %arg34[%c0_138, %c0_139] : memref<576x128xf32, #tpu.memory_space<vmem>>, vector<40x128xf32>
      tpu.vector_store %arg34[%c0_138, %c0_139], %117 {strides = array<i32>} : memref<576x128xf32, #tpu.memory_space<vmem>>, vector<40x128xf32>,
    }
    %c9_i32_20 = arith.constant 9 : i32
    %c0_21 = arith.constant 0 : index
    %c0_22 = arith.constant 0 : index
    %17 = vector.load %arg34[%c0_21, %c0_22] : memref<576x128xf32, #tpu.memory_space<vmem>>, vector<40x128xf32>
    %c0_23 = arith.constant 0 : index
    %c0_24 = arith.constant 0 : index
    %18 = vector.load %arg7[%c0_23, %c0_24] : memref<1x128xf32, #tpu.memory_space<vmem>>, vector<1x128xf32>
    %19 = vector.broadcast %18 : vector<1x128xf32> to vector<40x128xf32>
    %20 = arith.addf %17, %19 : vector<40x128xf32>
    %cst_25 = arith.constant 0.000000e+00 : f32
    %21 = vector.broadcast %cst_25 : f32 to vector<40x128xf32>
    %22 = arith.maximumf %20, %21 : vector<40x128xf32>
    %23 = arith.truncf %22 : vector<40x128xf32> to vector<40x128xbf16>
    %c0_26 = arith.constant 0 : index
    %c0_27 = arith.constant 0 : index
    %24 = vector.load %arg28[%c0_26, %c0_27] : memref<40x128xbf16, #tpu.memory_space<vmem>>, vector<40x128xbf16>
    tpu.vector_store %arg28[%c0_26, %c0_27], %23 {strides = array<i32>} : memref<40x128xbf16, #tpu.memory_space<vmem>>, vector<40x128xbf16>,
    %c0_28 = arith.constant 0 : index
    %c0_29 = arith.constant 0 : index
    %25 = vector.load %arg28[%c0_28, %c0_29] : memref<40x128xbf16, #tpu.memory_space<vmem>>, vector<40x128xbf16>
    %cst_30 = arith.constant 0.000000e+00 : f32
    %26 = vector.broadcast %cst_30 : f32 to vector<16x128xf32>
    %c0_31 = arith.constant 0 : index
    %c0_32 = arith.constant 0 : index
    %27 = vector.load %arg34[%c0_31, %c0_32] : memref<576x128xf32, #tpu.memory_space<vmem>>, vector<16x128xf32>
    tpu.vector_store %arg34[%c0_31, %c0_32], %26 {strides = array<i32>} : memref<576x128xf32, #tpu.memory_space<vmem>>, vector<16x128xf32>,
    %c0_i32_33 = arith.constant 0 : i32
    %c9_i32_34 = arith.constant 9 : i32
    %28 = arith.addi %c0_i32_33, %c9_i32_34 : i32
    %c1_i32_35 = arith.constant 1 : i32
    scf.for %arg35 = %c0_i32_33 to %28 step %c1_i32_35  : i32 {
      %107 = arith.index_cast %arg35 : i32 to index
      %c0_130 = arith.constant 0 : index
      %c0_131 = arith.constant 0 : index
      %108 = vector.load %arg8[%107, %c0_130, %c0_131] : memref<9x16x40xbf16, #tpu.memory_space<vmem>>, vector<1x16x40xbf16>
      %109 = vector.shape_cast %108 : vector<1x16x40xbf16> to vector<16x40xbf16>
      %cst_132 = arith.constant dense<0.000000e+00> : vector<16x128xf32>
      %110 = tpu.matmul %109, %25, %cst_132 {dimension_numbers = #tpu.dot_dimension_numbers<[1], [0], [0], [1], [0, 0, 1, 1], [], []>} : vector<16x40xbf16>, vector<40x128xbf16>, vector<16x128xf32> -> vector<16x128xf32>
      %111 = arith.truncf %110 : vector<16x128xf32> to vector<16x128xbf16>
      %c0_133 = arith.constant 0 : index
      %c0_134 = arith.constant 0 : index
      %112 = vector.load %arg34[%c0_133, %c0_134] : memref<576x128xf32, #tpu.memory_space<vmem>>, vector<16x128xf32>
      %113 = arith.index_cast %arg35 : i32 to index
      %c0_135 = arith.constant 0 : index
      %c0_136 = arith.constant 0 : index
      %114 = vector.load %arg9[%113, %c0_135, %c0_136] : memref<9x128x128xbf16, #tpu.memory_space<vmem>>, vector<1x128x128xbf16>
      %115 = vector.shape_cast %114 : vector<1x128x128xbf16> to vector<128x128xbf16>
      %cst_137 = arith.constant dense<0.000000e+00> : vector<16x128xf32>
      %116 = tpu.matmul %111, %115, %cst_137 {dimension_numbers = #tpu.dot_dimension_numbers<[1], [0], [0], [1], [0, 0, 1, 1], [], []>} : vector<16x128xbf16>, vector<128x128xbf16>, vector<16x128xf32> -> vector<16x128xf32>
      %117 = arith.addf %112, %116 : vector<16x128xf32>
      %c0_138 = arith.constant 0 : index
      %c0_139 = arith.constant 0 : index
      %118 = vector.load %arg34[%c0_138, %c0_139] : memref<576x128xf32, #tpu.memory_space<vmem>>, vector<16x128xf32>
      tpu.vector_store %arg34[%c0_138, %c0_139], %117 {strides = array<i32>} : memref<576x128xf32, #tpu.memory_space<vmem>>, vector<16x128xf32>,
    }
    %c9_i32_36 = arith.constant 9 : i32
    %c0_37 = arith.constant 0 : index
    %c0_38 = arith.constant 0 : index
    %29 = vector.load %arg34[%c0_37, %c0_38] : memref<576x128xf32, #tpu.memory_space<vmem>>, vector<16x128xf32>
    %c0_39 = arith.constant 0 : index
    %c0_40 = arith.constant 0 : index
    %30 = vector.load %arg10[%c0_39, %c0_40] : memref<1x128xf32, #tpu.memory_space<vmem>>, vector<1x128xf32>
    %31 = vector.broadcast %30 : vector<1x128xf32> to vector<16x128xf32>
    %32 = arith.addf %29, %31 : vector<16x128xf32>
    %cst_41 = arith.constant 0.000000e+00 : f32
    %33 = vector.broadcast %cst_41 : f32 to vector<16x128xf32>
    %34 = arith.maximumf %32, %33 : vector<16x128xf32>
    %35 = arith.truncf %34 : vector<16x128xf32> to vector<16x128xbf16>
    %c0_42 = arith.constant 0 : index
    %c0_43 = arith.constant 0 : index
    %36 = vector.load %arg29[%c0_42, %c0_43] : memref<16x128xbf16, #tpu.memory_space<vmem>>, vector<16x128xbf16>
    tpu.vector_store %arg29[%c0_42, %c0_43], %35 {strides = array<i32>} : memref<16x128xbf16, #tpu.memory_space<vmem>>, vector<16x128xbf16>,
    %c0_44 = arith.constant 0 : index
    %c0_45 = arith.constant 0 : index
    %37 = vector.load %arg29[%c0_44, %c0_45] : memref<16x128xbf16, #tpu.memory_space<vmem>>, vector<16x128xbf16>
    %cst_46 = arith.constant 0.000000e+00 : f32
    %38 = vector.broadcast %cst_46 : f32 to vector<8x128xf32>
    %c0_47 = arith.constant 0 : index
    %c0_48 = arith.constant 0 : index
    %39 = vector.load %arg34[%c0_47, %c0_48] : memref<576x128xf32, #tpu.memory_space<vmem>>, vector<8x128xf32>
    tpu.vector_store %arg34[%c0_47, %c0_48], %38 {strides = array<i32>} : memref<576x128xf32, #tpu.memory_space<vmem>>, vector<8x128xf32>,
    %c0_i32_49 = arith.constant 0 : i32
    %c9_i32_50 = arith.constant 9 : i32
    %40 = arith.addi %c0_i32_49, %c9_i32_50 : i32
    %c1_i32_51 = arith.constant 1 : i32
    scf.for %arg35 = %c0_i32_49 to %40 step %c1_i32_51  : i32 {
      %107 = arith.index_cast %arg35 : i32 to index
      %c0_130 = arith.constant 0 : index
      %c0_131 = arith.constant 0 : index
      %108 = vector.load %arg11[%107, %c0_130, %c0_131] : memref<9x8x16xbf16, #tpu.memory_space<vmem>>, vector<1x8x16xbf16>
      %109 = vector.shape_cast %108 : vector<1x8x16xbf16> to vector<8x16xbf16>
      %cst_132 = arith.constant dense<0.000000e+00> : vector<8x128xf32>
      %110 = tpu.matmul %109, %37, %cst_132 {dimension_numbers = #tpu.dot_dimension_numbers<[1], [0], [0], [1], [0, 0, 1, 1], [], []>} : vector<8x16xbf16>, vector<16x128xbf16>, vector<8x128xf32> -> vector<8x128xf32>
      %111 = arith.truncf %110 : vector<8x128xf32> to vector<8x128xbf16>
      %c0_133 = arith.constant 0 : index
      %c0_134 = arith.constant 0 : index
      %112 = vector.load %arg34[%c0_133, %c0_134] : memref<576x128xf32, #tpu.memory_space<vmem>>, vector<8x128xf32>
      %113 = arith.index_cast %arg35 : i32 to index
      %c0_135 = arith.constant 0 : index
      %c0_136 = arith.constant 0 : index
      %114 = vector.load %arg12[%113, %c0_135, %c0_136] : memref<9x128x128xbf16, #tpu.memory_space<vmem>>, vector<1x128x128xbf16>
      %115 = vector.shape_cast %114 : vector<1x128x128xbf16> to vector<128x128xbf16>
      %cst_137 = arith.constant dense<0.000000e+00> : vector<8x128xf32>
      %116 = tpu.matmul %111, %115, %cst_137 {dimension_numbers = #tpu.dot_dimension_numbers<[1], [0], [0], [1], [0, 0, 1, 1], [], []>} : vector<8x128xbf16>, vector<128x128xbf16>, vector<8x128xf32> -> vector<8x128xf32>
      %117 = arith.addf %112, %116 : vector<8x128xf32>
      %c0_138 = arith.constant 0 : index
      %c0_139 = arith.constant 0 : index
      %118 = vector.load %arg34[%c0_138, %c0_139] : memref<576x128xf32, #tpu.memory_space<vmem>>, vector<8x128xf32>
      tpu.vector_store %arg34[%c0_138, %c0_139], %117 {strides = array<i32>} : memref<576x128xf32, #tpu.memory_space<vmem>>, vector<8x128xf32>,
    }
    %c9_i32_52 = arith.constant 9 : i32
    %c0_53 = arith.constant 0 : index
    %c0_54 = arith.constant 0 : index
    %41 = vector.load %arg34[%c0_53, %c0_54] : memref<576x128xf32, #tpu.memory_space<vmem>>, vector<8x128xf32>
    %c0_55 = arith.constant 0 : index
    %c0_56 = arith.constant 0 : index
    %42 = vector.load %arg13[%c0_55, %c0_56] : memref<1x128xf32, #tpu.memory_space<vmem>>, vector<1x128xf32>
    %43 = vector.broadcast %42 : vector<1x128xf32> to vector<8x128xf32>
    %44 = arith.addf %41, %43 : vector<8x128xf32>
    %cst_57 = arith.constant 0.000000e+00 : f32
    %45 = vector.broadcast %cst_57 : f32 to vector<8x128xf32>
    %46 = arith.maximumf %44, %45 : vector<8x128xf32>
    %47 = arith.truncf %46 : vector<8x128xf32> to vector<8x128xbf16>
    %c0_58 = arith.constant 0 : index
    %c0_59 = arith.constant 0 : index
    %48 = vector.load %arg30[%c0_58, %c0_59] : memref<8x128xbf16, #tpu.memory_space<vmem>>, vector<8x128xbf16>
    tpu.vector_store %arg30[%c0_58, %c0_59], %47 {strides = array<i32>} : memref<8x128xbf16, #tpu.memory_space<vmem>>, vector<8x128xbf16>,
    %c0_60 = arith.constant 0 : index
    %c0_61 = arith.constant 0 : index
    %49 = vector.load %arg30[%c0_60, %c0_61] : memref<8x128xbf16, #tpu.memory_space<vmem>>, vector<8x128xbf16>
    %cst_62 = arith.constant 0.000000e+00 : f32
    %50 = vector.broadcast %cst_62 : f32 to vector<16x128xf32>
    %c0_63 = arith.constant 0 : index
    %c0_64 = arith.constant 0 : index
    %51 = vector.load %arg34[%c0_63, %c0_64] : memref<576x128xf32, #tpu.memory_space<vmem>>, vector<16x128xf32>
    tpu.vector_store %arg34[%c0_63, %c0_64], %50 {strides = array<i32>} : memref<576x128xf32, #tpu.memory_space<vmem>>, vector<16x128xf32>,
    %c0_i32_65 = arith.constant 0 : i32
    %c9_i32_66 = arith.constant 9 : i32
    %52 = arith.addi %c0_i32_65, %c9_i32_66 : i32
    %c1_i32_67 = arith.constant 1 : i32
    scf.for %arg35 = %c0_i32_65 to %52 step %c1_i32_67  : i32 {
      %107 = arith.index_cast %arg35 : i32 to index
      %c0_130 = arith.constant 0 : index
      %c0_131 = arith.constant 0 : index
      %108 = vector.load %arg14[%107, %c0_130, %c0_131] : memref<9x16x8xbf16, #tpu.memory_space<vmem>>, vector<1x16x8xbf16>
      %109 = vector.shape_cast %108 : vector<1x16x8xbf16> to vector<16x8xbf16>
      %cst_132 = arith.constant dense<0.000000e+00> : vector<16x128xf32>
      %110 = tpu.matmul %109, %49, %cst_132 {dimension_numbers = #tpu.dot_dimension_numbers<[1], [0], [0], [1], [0, 0, 1, 1], [], []>} : vector<16x8xbf16>, vector<8x128xbf16>, vector<16x128xf32> -> vector<16x128xf32>
      %111 = arith.truncf %110 : vector<16x128xf32> to vector<16x128xbf16>
      %c0_133 = arith.constant 0 : index
      %c0_134 = arith.constant 0 : index
      %112 = vector.load %arg34[%c0_133, %c0_134] : memref<576x128xf32, #tpu.memory_space<vmem>>, vector<16x128xf32>
      %113 = arith.index_cast %arg35 : i32 to index
      %c0_135 = arith.constant 0 : index
      %c0_136 = arith.constant 0 : index
      %114 = vector.load %arg15[%113, %c0_135, %c0_136] : memref<9x128x128xbf16, #tpu.memory_space<vmem>>, vector<1x128x128xbf16>
      %115 = vector.shape_cast %114 : vector<1x128x128xbf16> to vector<128x128xbf16>
      %cst_137 = arith.constant dense<0.000000e+00> : vector<16x128xf32>
      %116 = tpu.matmul %111, %115, %cst_137 {dimension_numbers = #tpu.dot_dimension_numbers<[1], [0], [0], [1], [0, 0, 1, 1], [], []>} : vector<16x128xbf16>, vector<128x128xbf16>, vector<16x128xf32> -> vector<16x128xf32>
      %117 = arith.addf %112, %116 : vector<16x128xf32>
      %c0_138 = arith.constant 0 : index
      %c0_139 = arith.constant 0 : index
      %118 = vector.load %arg34[%c0_138, %c0_139] : memref<576x128xf32, #tpu.memory_space<vmem>>, vector<16x128xf32>
      tpu.vector_store %arg34[%c0_138, %c0_139], %117 {strides = array<i32>} : memref<576x128xf32, #tpu.memory_space<vmem>>, vector<16x128xf32>,
    }
    %c9_i32_68 = arith.constant 9 : i32
    %c0_69 = arith.constant 0 : index
    %c0_70 = arith.constant 0 : index
    %53 = vector.load %arg34[%c0_69, %c0_70] : memref<576x128xf32, #tpu.memory_space<vmem>>, vector<16x128xf32>
    %c0_71 = arith.constant 0 : index
    %c0_72 = arith.constant 0 : index
    %54 = vector.load %arg16[%c0_71, %c0_72] : memref<1x128xf32, #tpu.memory_space<vmem>>, vector<1x128xf32>
    %55 = vector.broadcast %54 : vector<1x128xf32> to vector<16x128xf32>
    %56 = arith.addf %53, %55 : vector<16x128xf32>
    %cst_73 = arith.constant 0.000000e+00 : f32
    %57 = vector.broadcast %cst_73 : f32 to vector<16x128xf32>
    %58 = arith.maximumf %56, %57 : vector<16x128xf32>
    %59 = arith.truncf %58 : vector<16x128xf32> to vector<16x128xbf16>
    %c0_74 = arith.constant 0 : index
    %c0_75 = arith.constant 0 : index
    %60 = vector.load %arg31[%c0_74, %c0_75] : memref<16x128xbf16, #tpu.memory_space<vmem>>, vector<16x128xbf16>
    tpu.vector_store %arg31[%c0_74, %c0_75], %59 {strides = array<i32>} : memref<16x128xbf16, #tpu.memory_space<vmem>>, vector<16x128xbf16>,
    %c0_76 = arith.constant 0 : index
    %c0_77 = arith.constant 0 : index
    %61 = vector.load %arg31[%c0_76, %c0_77] : memref<16x128xbf16, #tpu.memory_space<vmem>>, vector<16x128xbf16>
    %c0_78 = arith.constant 0 : index
    %c0_79 = arith.constant 0 : index
    %62 = vector.load %arg29[%c0_78, %c0_79] : memref<16x128xbf16, #tpu.memory_space<vmem>>, vector<16x128xbf16>
    %63 = arith.addf %61, %62 : vector<16x128xbf16>
    %cst_80 = arith.constant 0.000000e+00 : f32
    %64 = vector.broadcast %cst_80 : f32 to vector<40x128xf32>
    %c0_81 = arith.constant 0 : index
    %c0_82 = arith.constant 0 : index
    %65 = vector.load %arg34[%c0_81, %c0_82] : memref<576x128xf32, #tpu.memory_space<vmem>>, vector<40x128xf32>
    tpu.vector_store %arg34[%c0_81, %c0_82], %64 {strides = array<i32>} : memref<576x128xf32, #tpu.memory_space<vmem>>, vector<40x128xf32>,
    %c0_i32_83 = arith.constant 0 : i32
    %c16_i32 = arith.constant 16 : i32
    %66 = arith.addi %c0_i32_83, %c16_i32 : i32
    %c1_i32_84 = arith.constant 1 : i32
    scf.for %arg35 = %c0_i32_83 to %66 step %c1_i32_84  : i32 {
      %107 = arith.index_cast %arg35 : i32 to index
      %c0_130 = arith.constant 0 : index
      %c0_131 = arith.constant 0 : index
      %108 = vector.load %arg17[%107, %c0_130, %c0_131] : memref<16x40x16xbf16, #tpu.memory_space<vmem>>, vector<1x40x16xbf16>
      %109 = vector.shape_cast %108 : vector<1x40x16xbf16> to vector<40x16xbf16>
      %cst_132 = arith.constant dense<0.000000e+00> : vector<40x128xf32>
      %110 = tpu.matmul %109, %63, %cst_132 {dimension_numbers = #tpu.dot_dimension_numbers<[1], [0], [0], [1], [0, 0, 1, 1], [], []>} : vector<40x16xbf16>, vector<16x128xbf16>, vector<40x128xf32> -> vector<40x128xf32>
      %111 = arith.truncf %110 : vector<40x128xf32> to vector<40x128xbf16>
      %c0_133 = arith.constant 0 : index
      %c0_134 = arith.constant 0 : index
      %112 = vector.load %arg34[%c0_133, %c0_134] : memref<576x128xf32, #tpu.memory_space<vmem>>, vector<40x128xf32>
      %113 = arith.index_cast %arg35 : i32 to index
      %c0_135 = arith.constant 0 : index
      %c0_136 = arith.constant 0 : index
      %114 = vector.load %arg18[%113, %c0_135, %c0_136] : memref<16x128x128xbf16, #tpu.memory_space<vmem>>, vector<1x128x128xbf16>
      %115 = vector.shape_cast %114 : vector<1x128x128xbf16> to vector<128x128xbf16>
      %cst_137 = arith.constant dense<0.000000e+00> : vector<40x128xf32>
      %116 = tpu.matmul %111, %115, %cst_137 {dimension_numbers = #tpu.dot_dimension_numbers<[1], [0], [0], [1], [0, 0, 1, 1], [], []>} : vector<40x128xbf16>, vector<128x128xbf16>, vector<40x128xf32> -> vector<40x128xf32>
      %117 = arith.addf %112, %116 : vector<40x128xf32>
      %c0_138 = arith.constant 0 : index
      %c0_139 = arith.constant 0 : index
      %118 = vector.load %arg34[%c0_138, %c0_139] : memref<576x128xf32, #tpu.memory_space<vmem>>, vector<40x128xf32>
      tpu.vector_store %arg34[%c0_138, %c0_139], %117 {strides = array<i32>} : memref<576x128xf32, #tpu.memory_space<vmem>>, vector<40x128xf32>,
    }
    %c16_i32_85 = arith.constant 16 : i32
    %c0_86 = arith.constant 0 : index
    %c0_87 = arith.constant 0 : index
    %67 = vector.load %arg34[%c0_86, %c0_87] : memref<576x128xf32, #tpu.memory_space<vmem>>, vector<40x128xf32>
    %c0_88 = arith.constant 0 : index
    %c0_89 = arith.constant 0 : index
    %68 = vector.load %arg19[%c0_88, %c0_89] : memref<1x128xf32, #tpu.memory_space<vmem>>, vector<1x128xf32>
    %69 = vector.broadcast %68 : vector<1x128xf32> to vector<40x128xf32>
    %70 = arith.addf %67, %69 : vector<40x128xf32>
    %cst_90 = arith.constant 0.000000e+00 : f32
    %71 = vector.broadcast %cst_90 : f32 to vector<40x128xf32>
    %72 = arith.maximumf %70, %71 : vector<40x128xf32>
    %73 = arith.truncf %72 : vector<40x128xf32> to vector<40x128xbf16>
    %c0_91 = arith.constant 0 : index
    %c0_92 = arith.constant 0 : index
    %74 = vector.load %arg32[%c0_91, %c0_92] : memref<40x128xbf16, #tpu.memory_space<vmem>>, vector<40x128xbf16>
    tpu.vector_store %arg32[%c0_91, %c0_92], %73 {strides = array<i32>} : memref<40x128xbf16, #tpu.memory_space<vmem>>, vector<40x128xbf16>,
    %c0_93 = arith.constant 0 : index
    %c0_94 = arith.constant 0 : index
    %75 = vector.load %arg32[%c0_93, %c0_94] : memref<40x128xbf16, #tpu.memory_space<vmem>>, vector<40x128xbf16>
    %c0_95 = arith.constant 0 : index
    %c0_96 = arith.constant 0 : index
    %76 = vector.load %arg28[%c0_95, %c0_96] : memref<40x128xbf16, #tpu.memory_space<vmem>>, vector<40x128xbf16>
    %77 = arith.addf %75, %76 : vector<40x128xbf16>
    %cst_97 = arith.constant 0.000000e+00 : f32
    %78 = vector.broadcast %cst_97 : f32 to vector<144x128xf32>
    %c0_98 = arith.constant 0 : index
    %c0_99 = arith.constant 0 : index
    %79 = vector.load %arg34[%c0_98, %c0_99] : memref<576x128xf32, #tpu.memory_space<vmem>>, vector<144x128xf32>
    tpu.vector_store %arg34[%c0_98, %c0_99], %78 {strides = array<i32>} : memref<576x128xf32, #tpu.memory_space<vmem>>, vector<144x128xf32>,
    %c0_i32_100 = arith.constant 0 : i32
    %c16_i32_101 = arith.constant 16 : i32
    %80 = arith.addi %c0_i32_100, %c16_i32_101 : i32
    %c1_i32_102 = arith.constant 1 : i32
    scf.for %arg35 = %c0_i32_100 to %80 step %c1_i32_102  : i32 {
      %107 = arith.index_cast %arg35 : i32 to index
      %c0_130 = arith.constant 0 : index
      %c0_131 = arith.constant 0 : index
      %108 = vector.load %arg20[%107, %c0_130, %c0_131] : memref<16x144x40xbf16, #tpu.memory_space<vmem>>, vector<1x144x40xbf16>
      %109 = vector.shape_cast %108 : vector<1x144x40xbf16> to vector<144x40xbf16>
      %cst_132 = arith.constant dense<0.000000e+00> : vector<144x128xf32>
      %110 = tpu.matmul %109, %77, %cst_132 {dimension_numbers = #tpu.dot_dimension_numbers<[1], [0], [0], [1], [0, 0, 1, 1], [], []>} : vector<144x40xbf16>, vector<40x128xbf16>, vector<144x128xf32> -> vector<144x128xf32>
      %111 = arith.truncf %110 : vector<144x128xf32> to vector<144x128xbf16>
      %c0_133 = arith.constant 0 : index
      %c0_134 = arith.constant 0 : index
      %112 = vector.load %arg34[%c0_133, %c0_134] : memref<576x128xf32, #tpu.memory_space<vmem>>, vector<144x128xf32>
      %113 = arith.index_cast %arg35 : i32 to index
      %c0_135 = arith.constant 0 : index
      %c0_136 = arith.constant 0 : index
      %114 = vector.load %arg21[%113, %c0_135, %c0_136] : memref<16x128x128xbf16, #tpu.memory_space<vmem>>, vector<1x128x128xbf16>
      %115 = vector.shape_cast %114 : vector<1x128x128xbf16> to vector<128x128xbf16>
      %cst_137 = arith.constant dense<0.000000e+00> : vector<144x128xf32>
      %116 = tpu.matmul %111, %115, %cst_137 {dimension_numbers = #tpu.dot_dimension_numbers<[1], [0], [0], [1], [0, 0, 1, 1], [], []>} : vector<144x128xbf16>, vector<128x128xbf16>, vector<144x128xf32> -> vector<144x128xf32>
      %117 = arith.addf %112, %116 : vector<144x128xf32>
      %c0_138 = arith.constant 0 : index
      %c0_139 = arith.constant 0 : index
      %118 = vector.load %arg34[%c0_138, %c0_139] : memref<576x128xf32, #tpu.memory_space<vmem>>, vector<144x128xf32>
      tpu.vector_store %arg34[%c0_138, %c0_139], %117 {strides = array<i32>} : memref<576x128xf32, #tpu.memory_space<vmem>>, vector<144x128xf32>,
    }
    %c16_i32_103 = arith.constant 16 : i32
    %c0_104 = arith.constant 0 : index
    %c0_105 = arith.constant 0 : index
    %81 = vector.load %arg34[%c0_104, %c0_105] : memref<576x128xf32, #tpu.memory_space<vmem>>, vector<144x128xf32>
    %c0_106 = arith.constant 0 : index
    %c0_107 = arith.constant 0 : index
    %82 = vector.load %arg22[%c0_106, %c0_107] : memref<1x128xf32, #tpu.memory_space<vmem>>, vector<1x128xf32>
    %83 = vector.broadcast %82 : vector<1x128xf32> to vector<144x128xf32>
    %84 = arith.addf %81, %83 : vector<144x128xf32>
    %cst_108 = arith.constant 0.000000e+00 : f32
    %85 = vector.broadcast %cst_108 : f32 to vector<144x128xf32>
    %86 = arith.maximumf %84, %85 : vector<144x128xf32>
    %87 = arith.truncf %86 : vector<144x128xf32> to vector<144x128xbf16>
    %c0_109 = arith.constant 0 : index
    %c0_110 = arith.constant 0 : index
    %88 = vector.load %arg33[%c0_109, %c0_110] : memref<144x128xbf16, #tpu.memory_space<vmem>>, vector<144x128xbf16>
    tpu.vector_store %arg33[%c0_109, %c0_110], %87 {strides = array<i32>} : memref<144x128xbf16, #tpu.memory_space<vmem>>, vector<144x128xbf16>,
    %c0_111 = arith.constant 0 : index
    %c0_112 = arith.constant 0 : index
    %89 = vector.load %arg33[%c0_111, %c0_112] : memref<144x128xbf16, #tpu.memory_space<vmem>>, vector<144x128xbf16>
    %c0_113 = arith.constant 0 : index
    %c0_114 = arith.constant 0 : index
    %90 = vector.load %arg27[%c0_113, %c0_114] : memref<144x128xbf16, #tpu.memory_space<vmem>>, vector<144x128xbf16>
    %91 = arith.addf %89, %90 : vector<144x128xbf16>
    %cst_115 = arith.constant 0.000000e+00 : f32
    %92 = vector.broadcast %cst_115 : f32 to vector<576x128xf32>
    %c0_116 = arith.constant 0 : index
    %c0_117 = arith.constant 0 : index
    %93 = vector.load %arg34[%c0_116, %c0_117] : memref<576x128xf32, #tpu.memory_space<vmem>>, vector<576x128xf32>
    tpu.vector_store %arg34[%c0_116, %c0_117], %92 {strides = array<i32>} : memref<576x128xf32, #tpu.memory_space<vmem>>, vector<576x128xf32>,
    %c0_i32_118 = arith.constant 0 : i32
    %c16_i32_119 = arith.constant 16 : i32
    %94 = arith.addi %c0_i32_118, %c16_i32_119 : i32
    %c1_i32_120 = arith.constant 1 : i32
    scf.for %arg35 = %c0_i32_118 to %94 step %c1_i32_120  : i32 {
      %107 = arith.index_cast %arg35 : i32 to index
      %c0_130 = arith.constant 0 : index
      %c0_131 = arith.constant 0 : index
      %108 = vector.load %arg23[%107, %c0_130, %c0_131] : memref<16x576x144xbf16, #tpu.memory_space<vmem>>, vector<1x576x144xbf16>
      %109 = vector.shape_cast %108 : vector<1x576x144xbf16> to vector<576x144xbf16>
      %cst_132 = arith.constant dense<0.000000e+00> : vector<576x128xf32>
      %110 = tpu.matmul %109, %91, %cst_132 {dimension_numbers = #tpu.dot_dimension_numbers<[1], [0], [0], [1], [0, 0, 1, 1], [], []>} : vector<576x144xbf16>, vector<144x128xbf16>, vector<576x128xf32> -> vector<576x128xf32>
      %111 = arith.truncf %110 : vector<576x128xf32> to vector<576x128xbf16>
      %c0_133 = arith.constant 0 : index
      %c0_134 = arith.constant 0 : index
      %112 = vector.load %arg34[%c0_133, %c0_134] : memref<576x128xf32, #tpu.memory_space<vmem>>, vector<576x128xf32>
      %113 = arith.index_cast %arg35 : i32 to index
      %c0_135 = arith.constant 0 : index
      %c0_136 = arith.constant 0 : index
      %114 = vector.load %arg24[%113, %c0_135, %c0_136] : memref<16x128x128xbf16, #tpu.memory_space<vmem>>, vector<1x128x128xbf16>
      %115 = vector.shape_cast %114 : vector<1x128x128xbf16> to vector<128x128xbf16>
      %cst_137 = arith.constant dense<0.000000e+00> : vector<576x128xf32>
      %116 = tpu.matmul %111, %115, %cst_137 {dimension_numbers = #tpu.dot_dimension_numbers<[1], [0], [0], [1], [0, 0, 1, 1], [], []>} : vector<576x128xbf16>, vector<128x128xbf16>, vector<576x128xf32> -> vector<576x128xf32>
      %117 = arith.addf %112, %116 : vector<576x128xf32>
      %c0_138 = arith.constant 0 : index
      %c0_139 = arith.constant 0 : index
      %118 = vector.load %arg34[%c0_138, %c0_139] : memref<576x128xf32, #tpu.memory_space<vmem>>, vector<576x128xf32>
      tpu.vector_store %arg34[%c0_138, %c0_139], %117 {strides = array<i32>} : memref<576x128xf32, #tpu.memory_space<vmem>>, vector<576x128xf32>,
    }
    %c16_i32_121 = arith.constant 16 : i32
    %c0_122 = arith.constant 0 : index
    %c0_123 = arith.constant 0 : index
    %95 = vector.load %arg34[%c0_122, %c0_123] : memref<576x128xf32, #tpu.memory_space<vmem>>, vector<576x128xf32>
    %c0_124 = arith.constant 0 : index
    %c0_125 = arith.constant 0 : index
    %96 = vector.load %arg25[%c0_124, %c0_125] : memref<1x128xf32, #tpu.memory_space<vmem>>, vector<1x128xf32>
    %97 = vector.broadcast %96 : vector<1x128xf32> to vector<576x128xf32>
    %98 = arith.addf %95, %97 : vector<576x128xf32>
    %99 = arith.negf %98 : vector<576x128xf32>
    %100 = math.exp %99 : vector<576x128xf32>
    %cst_126 = arith.constant 1.000000e+00 : f32
    %101 = vector.broadcast %cst_126 : f32 to vector<576x128xf32>
    %102 = arith.addf %101, %100 : vector<576x128xf32>
    %103 = arith.divf %101, %102 : vector<576x128xf32>
    %c0_127 = arith.constant 0 : index
    %c0_128 = arith.constant 0 : index
    %c0_129 = arith.constant 0 : index
    %104 = vector.load %arg26[%c0_127, %c0_128, %c0_129] : memref<1x576x128xf32, #tpu.memory_space<vmem>>, vector<1x576x128xf32>
    %105 = vector.shape_cast %104 : vector<1x576x128xf32> to vector<576x128xf32>
    %106 = vector.shape_cast %103 : vector<576x128xf32> to vector<1x576x128xf32>
    tpu.vector_store %arg26[%c0_127, %c0_128, %c0_129], %106 {strides = array<i32>} : memref<1x576x128xf32, #tpu.memory_space<vmem>>, vector<1x576x128xf32>,
    return
  }
  func.func @transform_0(%arg0: i32) -> (i32, i32, i32) {
    %c0_i32 = arith.constant 0 : i32
    %c0_i32_0 = arith.constant 0 : i32
    %c0_i32_1 = arith.constant 0 : i32
    return %arg0, %c0_i32, %c0_i32_0 : i32, i32, i32
  }
  func.func @transform_1(%arg0: i32) -> (i32, i32, i32) {
    %c0_i32 = arith.constant 0 : i32
    %c0_i32_0 = arith.constant 0 : i32
    %c0_i32_1 = arith.constant 0 : i32
    %c0_i32_2 = arith.constant 0 : i32
    return %c0_i32, %c0_i32_0, %c0_i32_1 : i32, i32, i32
  }
  func.func @transform_2(%arg0: i32) -> (i32, i32, i32) {
    %c0_i32 = arith.constant 0 : i32
    %c0_i32_0 = arith.constant 0 : i32
    %c0_i32_1 = arith.constant 0 : i32
    %c0_i32_2 = arith.constant 0 : i32
    return %c0_i32, %c0_i32_0, %c0_i32_1 : i32, i32, i32
  }
  func.func @transform_3(%arg0: i32) -> (i32, i32) {
    %c0_i32 = arith.constant 0 : i32
    %c0_i32_0 = arith.constant 0 : i32
    %c0_i32_1 = arith.constant 0 : i32
    return %c0_i32, %c0_i32_0 : i32, i32
  }
  func.func @transform_4(%arg0: i32) -> (i32, i32, i32) {
    %c0_i32 = arith.constant 0 : i32
    %c0_i32_0 = arith.constant 0 : i32
    %c0_i32_1 = arith.constant 0 : i32
    %c0_i32_2 = arith.constant 0 : i32
    return %c0_i32, %c0_i32_0, %c0_i32_1 : i32, i32, i32
  }
  func.func @transform_5(%arg0: i32) -> (i32, i32, i32) {
    %c0_i32 = arith.constant 0 : i32
    %c0_i32_0 = arith.constant 0 : i32
    %c0_i32_1 = arith.constant 0 : i32
    %c0_i32_2 = arith.constant 0 : i32
    return %c0_i32, %c0_i32_0, %c0_i32_1 : i32, i32, i32
  }
  func.func @transform_6(%arg0: i32) -> (i32, i32) {
    %c0_i32 = arith.constant 0 : i32
    %c0_i32_0 = arith.constant 0 : i32
    %c0_i32_1 = arith.constant 0 : i32
    return %c0_i32, %c0_i32_0 : i32, i32
  }
  func.func @transform_7(%arg0: i32) -> (i32, i32, i32) {
    %c0_i32 = arith.constant 0 : i32
    %c0_i32_0 = arith.constant 0 : i32
    %c0_i32_1 = arith.constant 0 : i32
    %c0_i32_2 = arith.constant 0 : i32
    return %c0_i32, %c0_i32_0, %c0_i32_1 : i32, i32, i32
  }
  func.func @transform_8(%arg0: i32) -> (i32, i32, i32) {
    %c0_i32 = arith.constant 0 : i32
    %c0_i32_0 = arith.constant 0 : i32
    %c0_i32_1 = arith.constant 0 : i32
    %c0_i32_2 = arith.constant 0 : i32
    return %c0_i32, %c0_i32_0, %c0_i32_1 : i32, i32, i32
  }
  func.func @transform_9(%arg0: i32) -> (i32, i32) {
    %c0_i32 = arith.constant 0 : i32
    %c0_i32_0 = arith.constant 0 : i32
    %c0_i32_1 = arith.constant 0 : i32
    return %c0_i32, %c0_i32_0 : i32, i32
  }
  func.func @transform_10(%arg0: i32) -> (i32, i32, i32) {
    %c0_i32 = arith.constant 0 : i32
    %c0_i32_0 = arith.constant 0 : i32
    %c0_i32_1 = arith.constant 0 : i32
    %c0_i32_2 = arith.constant 0 : i32
    return %c0_i32, %c0_i32_0, %c0_i32_1 : i32, i32, i32
  }
  func.func @transform_11(%arg0: i32) -> (i32, i32, i32) {
    %c0_i32 = arith.constant 0 : i32
    %c0_i32_0 = arith.constant 0 : i32
    %c0_i32_1 = arith.constant 0 : i32
    %c0_i32_2 = arith.constant 0 : i32
    return %c0_i32, %c0_i32_0, %c0_i32_1 : i32, i32, i32
  }
  func.func @transform_12(%arg0: i32) -> (i32, i32) {
    %c0_i32 = arith.constant 0 : i32
    %c0_i32_0 = arith.constant 0 : i32
    %c0_i32_1 = arith.constant 0 : i32
    return %c0_i32, %c0_i32_0 : i32, i32
  }
  func.func @transform_13(%arg0: i32) -> (i32, i32, i32) {
    %c0_i32 = arith.constant 0 : i32
    %c0_i32_0 = arith.constant 0 : i32
    %c0_i32_1 = arith.constant 0 : i32
    %c0_i32_2 = arith.constant 0 : i32
    return %c0_i32, %c0_i32_0, %c0_i32_1 : i32, i32, i32
  }
  func.func @transform_14(%arg0: i32) -> (i32, i32, i32) {
    %c0_i32 = arith.constant 0 : i32
    %c0_i32_0 = arith.constant 0 : i32
    %c0_i32_1 = arith.constant 0 : i32
    %c0_i32_2 = arith.constant 0 : i32
    return %c0_i32, %c0_i32_0, %c0_i32_1 : i32, i32, i32
  }
  func.func @transform_15(%arg0: i32) -> (i32, i32) {
    %c0_i32 = arith.constant 0 : i32
    %c0_i32_0 = arith.constant 0 : i32
    %c0_i32_1 = arith.constant 0 : i32
    return %c0_i32, %c0_i32_0 : i32, i32
  }
  func.func @transform_16(%arg0: i32) -> (i32, i32, i32) {
    %c0_i32 = arith.constant 0 : i32
    %c0_i32_0 = arith.constant 0 : i32
    %c0_i32_1 = arith.constant 0 : i32
    %c0_i32_2 = arith.constant 0 : i32
    return %c0_i32, %c0_i32_0, %c0_i32_1 : i32, i32, i32
  }
  func.func @transform_17(%arg0: i32) -> (i32, i32, i32) {
    %c0_i32 = arith.constant 0 : i32
    %c0_i32_0 = arith.constant 0 : i32
    %c0_i32_1 = arith.constant 0 : i32
    %c0_i32_2 = arith.constant 0 : i32
    return %c0_i32, %c0_i32_0, %c0_i32_1 : i32, i32, i32
  }
  func.func @transform_18(%arg0: i32) -> (i32, i32) {
    %c0_i32 = arith.constant 0 : i32
    %c0_i32_0 = arith.constant 0 : i32
    %c0_i32_1 = arith.constant 0 : i32
    return %c0_i32, %c0_i32_0 : i32, i32
  }
  func.func @transform_19(%arg0: i32) -> (i32, i32, i32) {
    %c0_i32 = arith.constant 0 : i32
    %c0_i32_0 = arith.constant 0 : i32
    %c0_i32_1 = arith.constant 0 : i32
    %c0_i32_2 = arith.constant 0 : i32
    return %c0_i32, %c0_i32_0, %c0_i32_1 : i32, i32, i32
  }
  func.func @transform_20(%arg0: i32) -> (i32, i32, i32) {
    %c0_i32 = arith.constant 0 : i32
    %c0_i32_0 = arith.constant 0 : i32
    %c0_i32_1 = arith.constant 0 : i32
    %c0_i32_2 = arith.constant 0 : i32
    return %c0_i32, %c0_i32_0, %c0_i32_1 : i32, i32, i32
  }
  func.func @transform_21(%arg0: i32) -> (i32, i32) {
    %c0_i32 = arith.constant 0 : i32
    %c0_i32_0 = arith.constant 0 : i32
    %c0_i32_1 = arith.constant 0 : i32
    return %c0_i32, %c0_i32_0 : i32, i32
  }
  func.func @transform_22(%arg0: i32) -> (i32, i32, i32) {
    %c0_i32 = arith.constant 0 : i32
    %c0_i32_0 = arith.constant 0 : i32
    %c0_i32_1 = arith.constant 0 : i32
    %c0_i32_2 = arith.constant 0 : i32
    return %c0_i32, %c0_i32_0, %c0_i32_1 : i32, i32, i32
  }
  func.func @transform_23(%arg0: i32) -> (i32, i32, i32) {
    %c0_i32 = arith.constant 0 : i32
    %c0_i32_0 = arith.constant 0 : i32
    %c0_i32_1 = arith.constant 0 : i32
    %c0_i32_2 = arith.constant 0 : i32
    return %c0_i32, %c0_i32_0, %c0_i32_1 : i32, i32, i32
  }
  func.func @transform_24(%arg0: i32) -> (i32, i32) {
    %c0_i32 = arith.constant 0 : i32
    %c0_i32_0 = arith.constant 0 : i32
    %c0_i32_1 = arith.constant 0 : i32
    return %c0_i32, %c0_i32_0 : i32, i32
  }
  func.func @transform_25(%arg0: i32) -> (i32, i32, i32) {
    %c0_i32 = arith.constant 0 : i32
    %c0_i32_0 = arith.constant 0 : i32
    %c0_i32_1 = arith.constant 0 : i32
    return %arg0, %c0_i32, %c0_i32_0 : i32, i32, i32
  }
}

</mosaic_0001>

<llo_original>
// kernel: squeeze.1
$region0: #{squeeze.1}
  %s0 = inlined_call_operand.vmem [shape: f32[4,576], index: 0, kind: input, shape index: {}]
  %s1 = inlined_call_operand.vmem [shape: f32[4,1,24,24], index: 1, kind: output, shape index: {}]
  $region1: #{squeeze.1} parent=0
    #allocation0 [shape = 'u8[20480]{0}', space=vmem, size = 0x5000, scoped, tag = 'scoped mem for input reshape']
    %s3 = sshll.u32 1, 4
    %s4 = ssub.s32 %s3, 1
    %s5 = smul.addr 4, 4
    %s6 = scalar_lea.vmem %s0, %s5
    %v7 = vld [vmem:[%s6] sm:%s4]
    %s8 = scalar_lea.vmem [#allocation0], 32
    %9 = vst [vmem:[%s8] sm:%s4] %v7
    %s10 = smul.addr 4, 3
    %s11 = scalar_lea.vmem %s0, %s10
    %v12 = vld [vmem:[%s11] sm:%s4]
    %s13 = scalar_lea.vmem [#allocation0], 24
    %14 = vst [vmem:[%s13] sm:%s4] %v12
    %s15 = smul.addr 4, 2
    %s16 = scalar_lea.vmem %s0, %s15
    %v17 = vld [vmem:[%s16] sm:%s4]
    %s18 = scalar_lea.vmem [#allocation0], 16
    %19 = vst [vmem:[%s18] sm:%s4] %v17
    %s20 = scalar_lea.vmem %s0, 4
    %v21 = vld [vmem:[%s20] sm:%s4]
    %s22 = scalar_lea.vmem [#allocation0], 8
    %23 = vst [vmem:[%s22] sm:%s4] %v21
    %v24 = vld [vmem:[%s0] sm:%s4]
    %25 = vst [vmem:[#allocation0] sm:%s4] %v24
    %v26 = vld [vmem:[#allocation0] sm:$0xf]
    %vm27 = vcmask 195584
    %28 = vst.msk [vmem:[%s1] ss:$24 sm:$0xf] %vm27, %v26
    %s29 = scalar_lea.vmem [#allocation0], 24
    %v30 = vld [vmem:[%s29] sm:$0xf]
    %vm31 = vcmask 195584
    %s32 = scalar_lea.vmem %s1, 16
    %33 = vst.msk [vmem:[%s32] ss:$24 sm:$0xf] %vm31, %v30
    %s34 = scalar_lea.vmem [#allocation0], 16
    %v35 = vld.sshfl [vmem:[%s34] sm:$0xff pattern:$0x22222301]
    %36 = vrot.lane.b32.xlu0 %v35, 120
    %v37 = vpop.permute.xlu0 %36
    %vm38 = vcmask 195584
    %s39 = scalar_lea.vmem %s1, 35
    %40 = vst.msk [vmem:[%s39] ss:$-24 sm:$0x3] %vm38, %v37
    %s41 = scalar_lea.vmem %s1, 131
    %42 = vst.msk [vmem:[%s41] ss:$-24 sm:$0xc] %vm38, %v37
    %s43 = scalar_lea.vmem [#allocation0], 8
    %v44 = vld.sshfl [vmem:[%s43] sm:$0xff pattern:$0x11111230]
    %s45 = scalar_lea.vmem [#allocation0], 32
    %v46 = vld.sshfl [vmem:[%s45] sm:$0xff pattern:$0x30122222]
    %vm47 = vcmask 1047556
    %v48 = vsel %vm47, %v46, %v44
    %49 = vrot.lane.b32.xlu0 %v48, 112
    %v50 = vpop.permute.xlu0 %49
    %vm51 = vcmask 195584
    %s52 = scalar_lea.vmem %s1, 6
    %53 = vst.msk [vmem:[%s52] ss:$72 sm:$0x3] %vm51, %v50
    %s54 = scalar_lea.vmem %s1, 102
    %55 = vst.msk [vmem:[%s54] ss:$-24 sm:$0xc] %vm51, %v50
    %s56 = scalar_lea.vmem %s1, 166
    %57 = vst.msk [vmem:[%s56] ss:$-24 sm:$0x70] %vm51, %v50
    %s58 = scalar_lea.vmem %s1, 87
    %59 = vst.msk [vmem:[%s58] sm:$0x80] %vm51, %v50
    %v60 = vld.sshfl [vmem:[#allocation0] sm:$0xff pattern:$0x11111230]
    %s61 = scalar_lea.vmem [#allocation0], 24
    %v62 = vld.sshfl [vmem:[%s61] sm:$0xff pattern:$0x30122222]
    %vm63 = vcmask 1047556
    %v64 = vsel %vm63, %v62, %v60
    %65 = vrot.lane.b32.xlu0 %v64, 104
    %v66 = vpop.permute.xlu0 %65
    %vm67 = vcmask 195584
    %s68 = scalar_lea.vmem %s1, 1
    %69 = vst.msk [vmem:[%s68] ss:$72 sm:$0x3] %vm67, %v66
    %s70 = scalar_lea.vmem %s1, 97
    %71 = vst.msk [vmem:[%s70] ss:$-24 sm:$0xc] %vm67, %v66
    %s72 = scalar_lea.vmem %s1, 161
    %73 = vst.msk [vmem:[%s72] ss:$-24 sm:$0x70] %vm67, %v66
    %s74 = scalar_lea.vmem %s1, 82
    %75 = vst.msk [vmem:[%s74] sm:$0x80] %vm67, %v66
    %s76 = scalar_lea.vmem [#allocation0], 16
    %v77 = vld.sshfl [vmem:[%s76] sm:$0xff pattern:$0x22222301]
    %78 = vrot.lane.b32.xlu0 %v77, 96
    %v79 = vpop.permute.xlu0 %78
    %vm80 = vcmask 195584
    %s81 = scalar_lea.vmem %s1, 36
    %82 = vst.msk [vmem:[%s81] ss:$-24 sm:$0x3] %vm80, %v79
    %s83 = scalar_lea.vmem %s1, 132
    %84 = vst.msk [vmem:[%s83] ss:$-24 sm:$0xc] %vm80, %v79
    %s85 = scalar_lea.vmem [#allocation0], 8
    %v86 = vld.sshfl [vmem:[%s85] sm:$0xff pattern:$0x11111230]
    %s87 = scalar_lea.vmem [#allocation0], 32
    %v88 = vld.sshfl [vmem:[%s87] sm:$0xff pattern:$0x30122222]
    %vm89 = vcmask 1047556
    %v90 = vsel %vm89, %v88, %v86
    %91 = vrot.lane.b32.xlu0 %v90, 88
    %v92 = vpop.permute.xlu0 %91
    %vm93 = vcmask 195584
    %s94 = scalar_lea.vmem %s1, 7
    %95 = vst.msk [vmem:[%s94] ss:$72 sm:$0x3] %vm93, %v92
    %s96 = scalar_lea.vmem %s1, 103
    %97 = vst.msk [vmem:[%s96] ss:$-24 sm:$0xc] %vm93, %v92
    %s98 = scalar_lea.vmem %s1, 167
    %99 = vst.msk [vmem:[%s98] ss:$-24 sm:$0x70] %vm93, %v92
    %s100 = scalar_lea.vmem %s1, 88
    %101 = vst.msk [vmem:[%s100] sm:$0x80] %vm93, %v92
    %v102 = vld.sshfl [vmem:[#allocation0] sm:$0xff pattern:$0x11111230]
    %s103 = scalar_lea.vmem [#allocation0], 24
    %v104 = vld.sshfl [vmem:[%s103] sm:$0xff pattern:$0x30122222]
    %vm105 = vcmask 1047556
    %v106 = vsel %vm105, %v104, %v102
    %107 = vrot.lane.b32.xlu0 %v106, 80
    %v108 = vpop.permute.xlu0 %107
    %vm109 = vcmask 195584
    %s110 = scalar_lea.vmem %s1, 2
    %111 = vst.msk [vmem:[%s110] ss:$72 sm:$0x3] %vm109, %v108
    %s112 = scalar_lea.vmem %s1, 98
    %113 = vst.msk [vmem:[%s112] ss:$-24 sm:$0xc] %vm109, %v108
    %s114 = scalar_lea.vmem %s1, 162
    %115 = vst.msk [vmem:[%s114] ss:$-24 sm:$0x70] %vm109, %v108
    %s116 = scalar_lea.vmem %s1, 83
    %117 = vst.msk [vmem:[%s116] sm:$0x80] %vm109, %v108
    %s118 = scalar_lea.vmem [#allocation0], 16
    %v119 = vld.sshfl [vmem:[%s118] sm:$0xff pattern:$0x22222301]
    %120 = vrot.lane.b32.xlu0 %v119, 72
    %v121 = vpop.permute.xlu0 %120
    %vm122 = vcmask 195584
    %s123 = scalar_lea.vmem %s1, 37
    %124 = vst.msk [vmem:[%s123] ss:$-24 sm:$0x3] %vm122, %v121
    %s125 = scalar_lea.vmem %s1, 133
    %126 = vst.msk [vmem:[%s125] ss:$-24 sm:$0xc] %vm122, %v121
    %s127 = scalar_lea.vmem [#allocation0], 8
    %v128 = vld.sshfl [vmem:[%s127] sm:$0xff pattern:$0x22222301]
    %129 = vrot.lane.b32.xlu0 %v128, 64
    %v130 = vpop.permute.xlu0 %129
    %vm131 = vcmask 195584
    %s132 = scalar_lea.vmem %s1, 32
    %133 = vst.msk [vmem:[%s132] ss:$-24 sm:$0x3] %vm131, %v130
    %s134 = scalar_lea.vmem %s1, 128
    %135 = vst.msk [vmem:[%s134] ss:$-24 sm:$0xc] %vm131, %v130
    %v136 = vld.sshfl [vmem:[#allocation0] sm:$0xff pattern:$0x11111230]
    %s137 = scalar_lea.vmem [#allocation0], 24
    %v138 = vld.sshfl [vmem:[%s137] sm:$0xff pattern:$0x30122222]
    %vm139 = vcmask 1047556
    %v140 = vsel %vm139, %v138, %v136
    %141 = vrot.lane.b32.xlu0 %v140, 56
    %v142 = vpop.permute.xlu0 %141
    %vm143 = vcmask 195584
    %s144 = scalar_lea.vmem %s1, 3
    %145 = vst.msk [vmem:[%s144] ss:$72 sm:$0x3] %vm143, %v142
    %s146 = scalar_lea.vmem %s1, 99
    %147 = vst.msk [vmem:[%s146] ss:$-24 sm:$0xc] %vm143, %v142
    %s148 = scalar_lea.vmem %s1, 163
    %149 = vst.msk [vmem:[%s148] ss:$-24 sm:$0x70] %vm143, %v142
    %s150 = scalar_lea.vmem %s1, 84
    %151 = vst.msk [vmem:[%s150] sm:$0x80] %vm143, %v142
    %s152 = scalar_lea.vmem [#allocation0], 16
    %v153 = vld.sshfl [vmem:[%s152] sm:$0xff pattern:$0x22222301]
    %154 = vrot.lane.b32.xlu0 %v153, 48
    %v155 = vpop.permute.xlu0 %154
    %vm156 = vcmask 195584
    %s157 = scalar_lea.vmem %s1, 38
    %158 = vst.msk [vmem:[%s157] ss:$-24 sm:$0x3] %vm156, %v155
    %s159 = scalar_lea.vmem %s1, 134
    %160 = vst.msk [vmem:[%s159] ss:$-24 sm:$0xc] %vm156, %v155
    %s161 = scalar_lea.vmem [#allocation0], 8
    %v162 = vld.sshfl [vmem:[%s161] sm:$0xff pattern:$0x22222301]
    %163 = vrot.lane.b32.xlu0 %v162, 40
    %v164 = vpop.permute.xlu0 %163
    %vm165 = vcmask 195584
    %s166 = scalar_lea.vmem %s1, 33
    %167 = vst.msk [vmem:[%s166] ss:$-24 sm:$0x3] %vm165, %v164
    %s168 = scalar_lea.vmem %s1, 129
    %169 = vst.msk [vmem:[%s168] ss:$-24 sm:$0xc] %vm165, %v164
    %v170 = vld.sshfl [vmem:[#allocation0] sm:$0xff pattern:$0x11111230]
    %s171 = scalar_lea.vmem [#allocation0], 24
    %v172 = vld.sshfl [vmem:[%s171] sm:$0xff pattern:$0x30122222]
    %vm173 = vcmask 1047556
    %v174 = vsel %vm173, %v172, %v170
    %175 = vrot.lane.b32.xlu0 %v174, 32
    %v176 = vpop.permute.xlu0 %175
    %vm177 = vcmask 195584
    %s178 = scalar_lea.vmem %s1, 4
    %179 = vst.msk [vmem:[%s178] ss:$72 sm:$0x3] %vm177, %v176
    %s180 = scalar_lea.vmem %s1, 100
    %181 = vst.msk [vmem:[%s180] ss:$-24 sm:$0xc] %vm177, %v176
    %s182 = scalar_lea.vmem %s1, 164
    %183 = vst.msk [vmem:[%s182] ss:$-24 sm:$0x70] %vm177, %v176
    %s184 = scalar_lea.vmem %s1, 85
    %185 = vst.msk [vmem:[%s184] sm:$0x80] %vm177, %v176
    %s186 = scalar_lea.vmem [#allocation0], 16
    %v187 = vld.sshfl [vmem:[%s186] sm:$0xff pattern:$0x22222301]
    %188 = vrot.lane.b32.xlu0 %v187, 24
    %v189 = vpop.permute.xlu0 %188
    %vm190 = vcmask 195584
    %s191 = scalar_lea.vmem %s1, 39
    %192 = vst.msk [vmem:[%s191] ss:$-24 sm:$0x3] %vm190, %v189
    %s193 = scalar_lea.vmem %s1, 135
    %194 = vst.msk [vmem:[%s193] ss:$-24 sm:$0xc] %vm190, %v189
    %s195 = scalar_lea.vmem [#allocation0], 8
    %v196 = vld.sshfl [vmem:[%s195] sm:$0xff pattern:$0x22222301]
    %s197 = scalar_lea.vmem [#allocation0], 16
    %v198 = vld.sshfl [vmem:[%s197] sm:$0xff pattern:$0x22222301]
    %vm199 = vcmask 916480
    %v200 = vsel %vm199, %v198, %v196
    %201 = vrot.lane.b32.xlu0 %v200, 16
    %v202 = vpop.permute.xlu0 %201
    %vm203 = vcmask 130048
    %s204 = scalar_lea.vmem %s1, 34
    %205 = vst.msk [vmem:[%s204] ss:$-24 sm:$0x3] %vm203, %v202
    %s206 = scalar_lea.vmem %s1, 130
    %207 = vst.msk [vmem:[%s206] ss:$-24 sm:$0xc] %vm203, %v202
    %vm208 = vcmask 195712
    %s209 = scalar_lea.vmem %s1, 34
    %210 = vst.msk [vmem:[%s209] ss:$-24 sm:$0x3] %vm208, %v202
    %s211 = scalar_lea.vmem %s1, 130
    %212 = vst.msk [vmem:[%s211] ss:$-24 sm:$0xc] %vm208, %v202
    %v213 = vld.sshfl [vmem:[#allocation0] sm:$0xff pattern:$0x11111230]
    %s214 = scalar_lea.vmem [#allocation0], 24
    %v215 = vld.sshfl [vmem:[%s214] sm:$0xff pattern:$0x30122222]
    %vm216 = vcmask 1047556
    %v217 = vsel %vm216, %v215, %v213
    %s218 = scalar_lea.vmem [#allocation0], 8
    %v219 = vld.sshfl [vmem:[%s218] sm:$0xff pattern:$0x11111230]
    %s220 = scalar_lea.vmem [#allocation0], 32
    %v221 = vld.sshfl [vmem:[%s220] sm:$0xff pattern:$0x30122222]
    %vm222 = vcmask 1047556
    %v223 = vsel %vm222, %v221, %v219
    %vm224 = vcmask 982016
    %v225 = vsel %vm224, %v223, %v217
    %226 = vrot.lane.b32.xlu0 %v225, 8
    %v227 = vpop.permute.xlu0 %226
    %vm228 = vcmask 64512
    %s229 = scalar_lea.vmem %s1, 5
    %230 = vst.msk [vmem:[%s229] ss:$72 sm:$0x3] %vm228, %v227
    %s231 = scalar_lea.vmem %s1, 101
    %232 = vst.msk [vmem:[%s231] ss:$-24 sm:$0xc] %vm228, %v227
    %s233 = scalar_lea.vmem %s1, 165
    %234 = vst.msk [vmem:[%s233] ss:$-24 sm:$0x70] %vm228, %v227
    %s235 = scalar_lea.vmem %s1, 86
    %236 = vst.msk [vmem:[%s235] sm:$0x80] %vm228, %v227
    %vm237 = vcmask 195648
    %s238 = scalar_lea.vmem %s1, 5
    %239 = vst.msk [vmem:[%s238] ss:$72 sm:$0x3] %vm237, %v227
    %s240 = scalar_lea.vmem %s1, 101
    %241 = vst.msk [vmem:[%s240] ss:$-24 sm:$0xc] %vm237, %v227
    %s242 = scalar_lea.vmem %s1, 165
    %243 = vst.msk [vmem:[%s242] ss:$-24 sm:$0x70] %vm237, %v227
    %s244 = scalar_lea.vmem %s1, 86
    %245 = vst.msk [vmem:[%s244] sm:$0x80] %vm237, %v227

// kernel: forward.1
$region0: #{forward.1}
  #allocation0 [shape = 'u32[]', space=smem, size = 0x4, offset = 0x4, fixed_abs, tag = 'smem constant byte address 0x4 - core index']
  #allocation1 [shape = 'u32[144,128]{1,0:T(1,128)}', space=vmem, size = 0x12000, scoped, tag = 'internal scratch']
  #allocation2 [shape = 'bf16[144,128]{1,0:T(8,128)(2,1)}', space=vmem, size = 0x9000, scoped, tag = 'scratch operand']
  #allocation3 [shape = 'bf16[40,128]{1,0:T(8,128)(2,1)}', space=vmem, size = 0x2800, scoped, tag = 'scratch operand']
  #allocation4 [shape = 'bf16[16,128]{1,0:T(8,128)(2,1)}', space=vmem, size = 0x1000, scoped, tag = 'scratch operand']
  #allocation5 [shape = 'bf16[8,128]{1,0:T(8,128)(2,1)}', space=vmem, size = 0x800, scoped, tag = 'scratch operand']
  #allocation6 [shape = 'bf16[16,128]{1,0:T(8,128)(2,1)}', space=vmem, size = 0x1000, scoped, tag = 'scratch operand']
  #allocation7 [shape = 'bf16[40,128]{1,0:T(8,128)(2,1)}', space=vmem, size = 0x2800, scoped, tag = 'scratch operand']
  #allocation8 [shape = 'bf16[144,128]{1,0:T(8,128)(2,1)}', space=vmem, size = 0x9000, scoped, tag = 'scratch operand']
  #allocation9 [shape = 'f32[576,128]{1,0:T(8,128)}', space=vmem, size = 0x48000, scoped, tag = 'scratch operand']
  %s0 = inlined_call_operand.vmem [shape: bf16[4,576,128], index: 0, kind: input, shape index: {}]
  %s1 = inlined_call_operand.vmem [shape: bf16[9,144,576], index: 1, kind: input, shape index: {}]
  %s2 = inlined_call_operand.hbm [shape: bf16[9,128,128], index: 2, kind: input, shape index: {}]
  %s3 = inlined_call_operand.vmem [shape: f32[1,128], index: 3, kind: input, shape index: {}]
  %s4 = inlined_call_operand.hbm [shape: bf16[9,40,144], index: 4, kind: input, shape index: {}]
  %s5 = inlined_call_operand.hbm [shape: bf16[9,128,128], index: 5, kind: input, shape index: {}]
  %s6 = inlined_call_operand.vmem [shape: f32[1,128], index: 6, kind: input, shape index: {}]
  %s7 = inlined_call_operand.vmem [shape: bf16[9,16,40], index: 7, kind: input, shape index: {}]
  %s8 = inlined_call_operand.hbm [shape: bf16[9,128,128], index: 8, kind: input, shape index: {}]
  %s9 = inlined_call_operand.vmem [shape: f32[1,128], index: 9, kind: input, shape index: {}]
  %s10 = inlined_call_operand.hbm [shape: bf16[9,8,16], index: 10, kind: input, shape index: {}]
  %s11 = inlined_call_operand.hbm [shape: bf16[9,128,128], index: 11, kind: input, shape index: {}]
  %s12 = inlined_call_operand.vmem [shape: f32[1,128], index: 12, kind: input, shape index: {}]
  %s13 = inlined_call_operand.vmem [shape: bf16[9,16,8], index: 13, kind: input, shape index: {}]
  %s14 = inlined_call_operand.vmem [shape: bf16[9,128,128], index: 14, kind: input, shape index: {}]
  %s15 = inlined_call_operand.vmem [shape: f32[1,128], index: 15, kind: input, shape index: {}]
  %s16 = inlined_call_operand.hbm [shape: bf16[16,40,16], index: 16, kind: input, shape index: {}]
  %s17 = inlined_call_operand.hbm [shape: bf16[16,128,128], index: 17, kind: input, shape index: {}]
  %s18 = inlined_call_operand.vmem [shape: f32[1,128], index: 18, kind: input, shape index: {}]
  %s19 = inlined_call_operand.hbm [shape: bf16[16,144,40], index: 19, kind: input, shape index: {}]
  %s20 = inlined_call_operand.hbm [shape: bf16[16,128,128], index: 20, kind: input, shape index: {}]
  %s21 = inlined_call_operand.vmem [shape: f32[1,128], index: 21, kind: input, shape index: {}]
  %s22 = inlined_call_operand.hbm [shape: bf16[16,576,144], index: 22, kind: input, shape index: {}]
  %s23 = inlined_call_operand.hbm [shape: bf16[16,128,128], index: 23, kind: input, shape index: {}]
  %s24 = inlined_call_operand.vmem [shape: f32[1,128], index: 24, kind: input, shape index: {}]
  %s25 = inlined_call_operand.vmem [shape: f32[4,576,128], index: 25, kind: output, shape index: {}]
  %s26 = sld [smem:[#allocation0]]
  $region237: #{forward.1} parent=0
    _
  %s28 = ssub.s32 1, %s26
  %s29 = scalar_select 0, %s28, %s26
  $region1: #{forward.1} parent=0
    #allocation10 [shape = 'u8[294912]{0}', space=vmem, size = 0x48000, scoped, tag = 'input window, operand 2, single buffered']
    #allocation11 [shape = 's32[2]{0}', space=sflag, size = 0x8, scoped, tag = 'scoped memory for forward.1']
    #allocation12 [shape = 'u8[184320]{0}', space=vmem, size = 0x2d000, scoped, tag = 'input window, operand 4, single buffered']
    #allocation13 [shape = 's32[1]{0}', space=sflag, size = 0x4, scoped, tag = 'scoped memory for forward.1']
    #allocation14 [shape = 'u8[294912]{0}', space=vmem, size = 0x48000, scoped, tag = 'input window, operand 5, single buffered']
    #allocation15 [shape = 'u8[294912]{0}', space=vmem, size = 0x48000, scoped, tag = 'input window, operand 8, single buffered']
    #allocation16 [shape = 's32[1]{0}', space=sflag, size = 0x4, scoped, tag = 'scoped memory for forward.1']
    #allocation17 [shape = 'u8[18432]{0}', space=vmem, size = 0x4800, scoped, tag = 'input window, operand 10, single buffered']
    #allocation18 [shape = 'u8[294912]{0}', space=vmem, size = 0x48000, scoped, tag = 'input window, operand 11, single buffered']
    #allocation19 [shape = 's32[1]{0}', space=sflag, size = 0x4, scoped, tag = 'scoped memory for forward.1']
    #allocation20 [shape = 'u8[163840]{0}', space=vmem, size = 0x28000, scoped, tag = 'input window, operand 16, single buffered']
    #allocation21 [shape = 'u8[524288]{0}', space=vmem, size = 0x80000, scoped, tag = 'input window, operand 17, single buffered']
    #allocation22 [shape = 's32[1]{0}', space=sflag, size = 0x4, scoped, tag = 'scoped memory for forward.1']
    #allocation23 [shape = 'u8[589824]{0}', space=vmem, size = 0x90000, scoped, tag = 'input window, operand 19, single buffered']
    #allocation24 [shape = 'u8[524288]{0}', space=vmem, size = 0x80000, scoped, tag = 'input window, operand 20, single buffered']
    #allocation25 [shape = 's32[1]{0}', space=sflag, size = 0x4, scoped, tag = 'scoped memory for forward.1']
    #allocation26 [shape = 'u8[4718592]{0}', space=vmem, size = 0x480000, scoped, tag = 'input window, operand 22, single buffered']
    #allocation27 [shape = 'u8[524288]{0}', space=vmem, size = 0x80000, scoped, tag = 'input window, operand 23, single buffered']
    #allocation28 [shape = 's32[1]{0}', space=sflag, size = 0x4, scoped, tag = 'scoped memory for forward.1']
    %30 = vsyncpa [#allocation11], 0
    %31 = vsyncpa [#allocation13], 0
    %32 = vsyncpa [#allocation16], 0
    %33 = vsyncpa [#allocation19], 0
    %34 = vsyncpa [#allocation22], 0
    %35 = vsyncpa [#allocation25], 0
    %36 = vsyncpa [#allocation28], 0
    loop: start=0, step=1, limit=6
    $region2: #{forward.1} parent=1 // loop_pre_header
      _
    $region3: #{forward.1} parent=1 // loop_header
      %s38 = sphi 0, %s42
      %p39 = scmp.ge.s32.totalorder %s38, 6
      %s48 = sphi 0, %s50
      %s51 = sphi 0, %s48
      %s52 = sphi 0, %s51
      %s68 = sphi 0, %s52
      %s72 = sphi 0, %s72
      %s74 = sphi 0, %s72
      %s75 = sphi 0, %s74
      %s89 = sphi 0, %s75
      %s93 = sphi 0, %s93
      %s95 = sphi 0, %s93
      %s96 = sphi 0, %s95
      %s110 = sphi 0, %s96
      %s114 = sphi 0, %s114
      %s116 = sphi 0, %s114
      %s117 = sphi 0, %s116
      %s131 = sphi 0, %s117
      %s135 = sphi 0, %s135
      %s137 = sphi 0, %s135
      %s138 = sphi 0, %s137
      %s152 = sphi 0, %s138
      %s156 = sphi 0, %s156
      %s158 = sphi 0, %s156
      %s159 = sphi 0, %s158
      %s173 = sphi 0, %s159
      %s177 = sphi 0, %s177
      %s179 = sphi 0, %s177
      %s180 = sphi 0, %s179
      %s194 = sphi 0, %s180
      %s198 = sphi 0, %s198
      %s200 = sphi 0, %s198
      %s201 = sphi 0, %s200
      %s215 = sphi 0, %s201
      %s219 = sphi 0, %s219
      %s221 = sphi 0, %s219
      %s222 = sphi 0, %s221
      %s236 = sphi 0, %s222
      %s240 = sphi 0, %s240
      %s242 = sphi 0, %s240
      %s243 = sphi 0, %s242
      %s257 = sphi 0, %s243
      %s261 = sphi 0, %s261
      %s263 = sphi 0, %s261
      %s264 = sphi 0, %s263
      %s278 = sphi 0, %s264
      %s282 = sphi 0, %s282
      %s284 = sphi 0, %s282
      %s285 = sphi 0, %s284
      %s299 = sphi 0, %s285
      %s303 = sphi 0, %s303
      %s305 = sphi 0, %s303
      %s306 = sphi 0, %s305
      %s320 = sphi 0, %s306
      %s324 = sphi 0, %s324
      %s326 = sphi 0, %s324
      %s327 = sphi 0, %s326
      %s341 = sphi 0, %s327
      %s345 = sphi 0, %s345
      %s347 = sphi 0, %s345
      %s348 = sphi 0, %s347
      %s362 = sphi 0, %s348
      %s366 = sphi 0, %s366
      %s368 = sphi 0, %s366
      %s369 = sphi 0, %s368
      %s383 = sphi 0, %s369
      %s387 = sphi 0, %s387
      %s389 = sphi 0, %s387
      %s390 = sphi 0, %s389
      %s404 = sphi 0, %s390
      %s408 = sphi 0, %s408
      %s410 = sphi 0, %s408
      %s411 = sphi 0, %s410
      %s425 = sphi 0, %s411
      %s429 = sphi 0, %s429
      %s431 = sphi 0, %s429
      %s432 = sphi 0, %s431
      %s446 = sphi 0, %s432
      %s450 = sphi 0, %s450
      %s452 = sphi 0, %s450
      %s453 = sphi 0, %s452
      %s467 = sphi 0, %s453
      %s471 = sphi 0, %s471
      %s473 = sphi 0, %s471
      %s474 = sphi 0, %s473
      %s488 = sphi 0, %s474
      %s492 = sphi 0, %s492
      %s494 = sphi 0, %s492
      %s495 = sphi 0, %s494
      %s509 = sphi 0, %s495
      %s513 = sphi 0, %s513
      %s515 = sphi 0, %s513
      %s516 = sphi 0, %s515
      %s530 = sphi 0, %s516
      %s534 = sphi 0, %s534
      %s536 = sphi 0, %s534
      %s537 = sphi 0, %s536
      %s551 = sphi 0, %s537
      %s555 = sphi 0, %s555
      %s557 = sphi 0, %s555
      %s558 = sphi 0, %s557
      %s572 = sphi 0, %s558
      %s578 = sphi 0, %s580
      %s581 = sphi 0, %s578
      %s582 = sphi 0, %s581
      %s598 = sphi 0, %s582
    $region4: #{forward.1} parent=1 // loop_header_branch
      %41 = sbr.rel (%p39) target = $region8
    $region5: #{forward.1} parent=1 // loop_body
      %s43 = ssub.s32 %s38, 1
      %s44 = ssub.s32 %s38, 2
      %s45 = sadd.s32 %s38, 1
      %s46 = ssub.s32 %s38, %s45
      %p47 = scmp.eq.s32.totalorder %s46, 0
      %s49 = sadd.s32 %s48, 1
      %s50 = scalar_select %p47, %s48, %s49
      %p53 = pneg %p47
      %p54 = scmp.eq.s32.totalorder %s38, 3
      %p55 = por %p53, %p54
      %p56 = scmp.ne.s32.totalorder %s48, %s51
      %p57 = scmp.eq.s32.totalorder %s38, 0
      %p58 = por %p56, %p57
      %p59 = scmp.ne.s32.totalorder %s48, %s51
      %p60 = scmp.eq.s32.totalorder %s43, 3
      %p61 = por %p59, %p60
      %p62 = scmp.ne.s32.totalorder %s51, %s52
      %p63 = scmp.eq.s32.totalorder %s43, 0
      %p64 = por %p62, %p63
      %p65 = scmp.ne.s32.totalorder %s51, %s52
      %p66 = scmp.eq.s32.totalorder %s44, 3
      %p67 = por %p65, %p66
      %p69 = scmp.ne.s32.totalorder %s52, %s68
      %p70 = scmp.eq.s32.totalorder %s44, 0
      %p71 = por %p69, %p70
      %s73 = sadd.s32 %s72, 1
      %p76 = scmp.eq.s32.totalorder %s38, 3
      %p77 = scmp.ne.s32.totalorder %s72, %s74
      %p78 = scmp.eq.s32.totalorder %s38, 0
      %p79 = por %p77, %p78
      %p80 = scmp.ne.s32.totalorder %s72, %s74
      %p81 = scmp.eq.s32.totalorder %s43, 3
      %p82 = por %p80, %p81
      %p83 = scmp.ne.s32.totalorder %s74, %s75
      %p84 = scmp.eq.s32.totalorder %s43, 0
      %p85 = por %p83, %p84
      %p86 = scmp.ne.s32.totalorder %s74, %s75
      %p87 = scmp.eq.s32.totalorder %s44, 3
      %p88 = por %p86, %p87
      %p90 = scmp.ne.s32.totalorder %s75, %s89
      %p91 = scmp.eq.s32.totalorder %s44, 0
      %p92 = por %p90, %p91
      %s94 = sadd.s32 %s93, 1
      %p97 = scmp.eq.s32.totalorder %s38, 3
      %p98 = scmp.ne.s32.totalorder %s93, %s95
      %p99 = scmp.eq.s32.totalorder %s38, 0
      %p100 = por %p98, %p99
      %p101 = scmp.ne.s32.totalorder %s93, %s95
      %p102 = scmp.eq.s32.totalorder %s43, 3
      %p103 = por %p101, %p102
      %p104 = scmp.ne.s32.totalorder %s95, %s96
      %p105 = scmp.eq.s32.totalorder %s43, 0
      %p106 = por %p104, %p105
      %p107 = scmp.ne.s32.totalorder %s95, %s96
      %p108 = scmp.eq.s32.totalorder %s44, 3
      %p109 = por %p107, %p108
      %p111 = scmp.ne.s32.totalorder %s96, %s110
      %p112 = scmp.eq.s32.totalorder %s44, 0
      %p113 = por %p111, %p112
      %s115 = sadd.s32 %s114, 1
      %p118 = scmp.eq.s32.totalorder %s38, 3
      %p119 = scmp.ne.s32.totalorder %s114, %s116
      %p120 = scmp.eq.s32.totalorder %s38, 0
      %p121 = por %p119, %p120
      %p122 = scmp.ne.s32.totalorder %s114, %s116
      %p123 = scmp.eq.s32.totalorder %s43, 3
      %p124 = por %p122, %p123
      %p125 = scmp.ne.s32.totalorder %s116, %s117
      %p126 = scmp.eq.s32.totalorder %s43, 0
      %p127 = por %p125, %p126
      %p128 = scmp.ne.s32.totalorder %s116, %s117
      %p129 = scmp.eq.s32.totalorder %s44, 3
      %p130 = por %p128, %p129
      %p132 = scmp.ne.s32.totalorder %s117, %s131
      %p133 = scmp.eq.s32.totalorder %s44, 0
      %p134 = por %p132, %p133
      %s136 = sadd.s32 %s135, 1
      %p139 = scmp.eq.s32.totalorder %s38, 3
      %p140 = scmp.ne.s32.totalorder %s135, %s137
      %p141 = scmp.eq.s32.totalorder %s38, 0
      %p142 = por %p140, %p141
      %p143 = scmp.ne.s32.totalorder %s135, %s137
      %p144 = scmp.eq.s32.totalorder %s43, 3
      %p145 = por %p143, %p144
      %p146 = scmp.ne.s32.totalorder %s137, %s138
      %p147 = scmp.eq.s32.totalorder %s43, 0
      %p148 = por %p146, %p147
      %p149 = scmp.ne.s32.totalorder %s137, %s138
      %p150 = scmp.eq.s32.totalorder %s44, 3
      %p151 = por %p149, %p150
      %p153 = scmp.ne.s32.totalorder %s138, %s152
      %p154 = scmp.eq.s32.totalorder %s44, 0
      %p155 = por %p153, %p154
      %s157 = sadd.s32 %s156, 1
      %p160 = scmp.eq.s32.totalorder %s38, 3
      %p161 = scmp.ne.s32.totalorder %s156, %s158
      %p162 = scmp.eq.s32.totalorder %s38, 0
      %p163 = por %p161, %p162
      %p164 = scmp.ne.s32.totalorder %s156, %s158
      %p165 = scmp.eq.s32.totalorder %s43, 3
      %p166 = por %p164, %p165
      %p167 = scmp.ne.s32.totalorder %s158, %s159
      %p168 = scmp.eq.s32.totalorder %s43, 0
      %p169 = por %p167, %p168
      %p170 = scmp.ne.s32.totalorder %s158, %s159
      %p171 = scmp.eq.s32.totalorder %s44, 3
      %p172 = por %p170, %p171
      %p174 = scmp.ne.s32.totalorder %s159, %s173
      %p175 = scmp.eq.s32.totalorder %s44, 0
      %p176 = por %p174, %p175
      %s178 = sadd.s32 %s177, 1
      %p181 = scmp.eq.s32.totalorder %s38, 3
      %p182 = scmp.ne.s32.totalorder %s177, %s179
      %p183 = scmp.eq.s32.totalorder %s38, 0
      %p184 = por %p182, %p183
      %p185 = scmp.ne.s32.totalorder %s177, %s179
      %p186 = scmp.eq.s32.totalorder %s43, 3
      %p187 = por %p185, %p186
      %p188 = scmp.ne.s32.totalorder %s179, %s180
      %p189 = scmp.eq.s32.totalorder %s43, 0
      %p190 = por %p188, %p189
      %p191 = scmp.ne.s32.totalorder %s179, %s180
      %p192 = scmp.eq.s32.totalorder %s44, 3
      %p193 = por %p191, %p192
      %p195 = scmp.ne.s32.totalorder %s180, %s194
      %p196 = scmp.eq.s32.totalorder %s44, 0
      %p197 = por %p195, %p196
      %s199 = sadd.s32 %s198, 1
      %p202 = scmp.eq.s32.totalorder %s38, 3
      %p203 = scmp.ne.s32.totalorder %s198, %s200
      %p204 = scmp.eq.s32.totalorder %s38, 0
      %p205 = por %p203, %p204
      %p206 = scmp.ne.s32.totalorder %s198, %s200
      %p207 = scmp.eq.s32.totalorder %s43, 3
      %p208 = por %p206, %p207
      %p209 = scmp.ne.s32.totalorder %s200, %s201
      %p210 = scmp.eq.s32.totalorder %s43, 0
      %p211 = por %p209, %p210
      %p212 = scmp.ne.s32.totalorder %s200, %s201
      %p213 = scmp.eq.s32.totalorder %s44, 3
      %p214 = por %p212, %p213
      %p216 = scmp.ne.s32.totalorder %s201, %s215
      %p217 = scmp.eq.s32.totalorder %s44, 0
      %p218 = por %p216, %p217
      %s220 = sadd.s32 %s219, 1
      %p223 = scmp.eq.s32.totalorder %s38, 3
      %p224 = scmp.ne.s32.totalorder %s219, %s221
      %p225 = scmp.eq.s32.totalorder %s38, 0
      %p226 = por %p224, %p225
      %p227 = scmp.ne.s32.totalorder %s219, %s221
      %p228 = scmp.eq.s32.totalorder %s43, 3
      %p229 = por %p227, %p228
      %p230 = scmp.ne.s32.totalorder %s221, %s222
      %p231 = scmp.eq.s32.totalorder %s43, 0
      %p232 = por %p230, %p231
      %p233 = scmp.ne.s32.totalorder %s221, %s222
      %p234 = scmp.eq.s32.totalorder %s44, 3
      %p235 = por %p233, %p234
      %p237 = scmp.ne.s32.totalorder %s222, %s236
      %p238 = scmp.eq.s32.totalorder %s44, 0
      %p239 = por %p237, %p238
      %s241 = sadd.s32 %s240, 1
      %p244 = scmp.eq.s32.totalorder %s38, 3
      %p245 = scmp.ne.s32.totalorder %s240, %s242
      %p246 = scmp.eq.s32.totalorder %s38, 0
      %p247 = por %p245, %p246
      %p248 = scmp.ne.s32.totalorder %s240, %s242
      %p249 = scmp.eq.s32.totalorder %s43, 3
      %p250 = por %p248, %p249
      %p251 = scmp.ne.s32.totalorder %s242, %s243
      %p252 = scmp.eq.s32.totalorder %s43, 0
      %p253 = por %p251, %p252
      %p254 = scmp.ne.s32.totalorder %s242, %s243
      %p255 = scmp.eq.s32.totalorder %s44, 3
      %p256 = por %p254, %p255
      %p258 = scmp.ne.s32.totalorder %s243, %s257
      %p259 = scmp.eq.s32.totalorder %s44, 0
      %p260 = por %p258, %p259
      %s262 = sadd.s32 %s261, 1
      %p265 = scmp.eq.s32.totalorder %s38, 3
      %p266 = scmp.ne.s32.totalorder %s261, %s263
      %p267 = scmp.eq.s32.totalorder %s38, 0
      %p268 = por %p266, %p267
      %p269 = scmp.ne.s32.totalorder %s261, %s263
      %p270 = scmp.eq.s32.totalorder %s43, 3
      %p271 = por %p269, %p270
      %p272 = scmp.ne.s32.totalorder %s263, %s264
      %p273 = scmp.eq.s32.totalorder %s43, 0
      %p274 = por %p272, %p273
      %p275 = scmp.ne.s32.totalorder %s263, %s264
      %p276 = scmp.eq.s32.totalorder %s44, 3
      %p277 = por %p275, %p276
      %p279 = scmp.ne.s32.totalorder %s264, %s278
      %p280 = scmp.eq.s32.totalorder %s44, 0
      %p281 = por %p279, %p280
      %s283 = sadd.s32 %s282, 1
      %p286 = scmp.eq.s32.totalorder %s38, 3
      %p287 = scmp.ne.s32.totalorder %s282, %s284
      %p288 = scmp.eq.s32.totalorder %s38, 0
      %p289 = por %p287, %p288
      %p290 = scmp.ne.s32.totalorder %s282, %s284
      %p291 = scmp.eq.s32.totalorder %s43, 3
      %p292 = por %p290, %p291
      %p293 = scmp.ne.s32.totalorder %s284, %s285
      %p294 = scmp.eq.s32.totalorder %s43, 0
      %p295 = por %p293, %p294
      %p296 = scmp.ne.s32.totalorder %s284, %s285
      %p297 = scmp.eq.s32.totalorder %s44, 3
      %p298 = por %p296, %p297
      %p300 = scmp.ne.s32.totalorder %s285, %s299
      %p301 = scmp.eq.s32.totalorder %s44, 0
      %p302 = por %p300, %p301
      %s304 = sadd.s32 %s303, 1
      %p307 = scmp.eq.s32.totalorder %s38, 3
      %p308 = scmp.ne.s32.totalorder %s303, %s305
      %p309 = scmp.eq.s32.totalorder %s38, 0
      %p310 = por %p308, %p309
      %p311 = scmp.ne.s32.totalorder %s303, %s305
      %p312 = scmp.eq.s32.totalorder %s43, 3
      %p313 = por %p311, %p312
      %p314 = scmp.ne.s32.totalorder %s305, %s306
      %p315 = scmp.eq.s32.totalorder %s43, 0
      %p316 = por %p314, %p315
      %p317 = scmp.ne.s32.totalorder %s305, %s306
      %p318 = scmp.eq.s32.totalorder %s44, 3
      %p319 = por %p317, %p318
      %p321 = scmp.ne.s32.totalorder %s306, %s320
      %p322 = scmp.eq.s32.totalorder %s44, 0
      %p323 = por %p321, %p322
      %s325 = sadd.s32 %s324, 1
      %p328 = scmp.eq.s32.totalorder %s38, 3
      %p329 = scmp.ne.s32.totalorder %s324, %s326
      %p330 = scmp.eq.s32.totalorder %s38, 0
      %p331 = por %p329, %p330
      %p332 = scmp.ne.s32.totalorder %s324, %s326
      %p333 = scmp.eq.s32.totalorder %s43, 3
      %p334 = por %p332, %p333
      %p335 = scmp.ne.s32.totalorder %s326, %s327
      %p336 = scmp.eq.s32.totalorder %s43, 0
      %p337 = por %p335, %p336
      %p338 = scmp.ne.s32.totalorder %s326, %s327
      %p339 = scmp.eq.s32.totalorder %s44, 3
      %p340 = por %p338, %p339
      %p342 = scmp.ne.s32.totalorder %s327, %s341
      %p343 = scmp.eq.s32.totalorder %s44, 0
      %p344 = por %p342, %p343
      %s346 = sadd.s32 %s345, 1
      %p349 = scmp.eq.s32.totalorder %s38, 3
      %p350 = scmp.ne.s32.totalorder %s345, %s347
      %p351 = scmp.eq.s32.totalorder %s38, 0
      %p352 = por %p350, %p351
      %p353 = scmp.ne.s32.totalorder %s345, %s347
      %p354 = scmp.eq.s32.totalorder %s43, 3
      %p355 = por %p353, %p354
      %p356 = scmp.ne.s32.totalorder %s347, %s348
      %p357 = scmp.eq.s32.totalorder %s43, 0
      %p358 = por %p356, %p357
      %p359 = scmp.ne.s32.totalorder %s347, %s348
      %p360 = scmp.eq.s32.totalorder %s44, 3
      %p361 = por %p359, %p360
      %p363 = scmp.ne.s32.totalorder %s348, %s362
      %p364 = scmp.eq.s32.totalorder %s44, 0
      %p365 = por %p363, %p364
      %s367 = sadd.s32 %s366, 1
      %p370 = scmp.eq.s32.totalorder %s38, 3
      %p371 = scmp.ne.s32.totalorder %s366, %s368
      %p372 = scmp.eq.s32.totalorder %s38, 0
      %p373 = por %p371, %p372
      %p374 = scmp.ne.s32.totalorder %s366, %s368
      %p375 = scmp.eq.s32.totalorder %s43, 3
      %p376 = por %p374, %p375
      %p377 = scmp.ne.s32.totalorder %s368, %s369
      %p378 = scmp.eq.s32.totalorder %s43, 0
      %p379 = por %p377, %p378
      %p380 = scmp.ne.s32.totalorder %s368, %s369
      %p381 = scmp.eq.s32.totalorder %s44, 3
      %p382 = por %p380, %p381
      %p384 = scmp.ne.s32.totalorder %s369, %s383
      %p385 = scmp.eq.s32.totalorder %s44, 0
      %p386 = por %p384, %p385
      %s388 = sadd.s32 %s387, 1
      %p391 = scmp.eq.s32.totalorder %s38, 3
      %p392 = scmp.ne.s32.totalorder %s387, %s389
      %p393 = scmp.eq.s32.totalorder %s38, 0
      %p394 = por %p392, %p393
      %p395 = scmp.ne.s32.totalorder %s387, %s389
      %p396 = scmp.eq.s32.totalorder %s43, 3
      %p397 = por %p395, %p396
      %p398 = scmp.ne.s32.totalorder %s389, %s390
      %p399 = scmp.eq.s32.totalorder %s43, 0
      %p400 = por %p398, %p399
      %p401 = scmp.ne.s32.totalorder %s389, %s390
      %p402 = scmp.eq.s32.totalorder %s44, 3
      %p403 = por %p401, %p402
      %p405 = scmp.ne.s32.totalorder %s390, %s404
      %p406 = scmp.eq.s32.totalorder %s44, 0
      %p407 = por %p405, %p406
      %s409 = sadd.s32 %s408, 1
      %p412 = scmp.eq.s32.totalorder %s38, 3
      %p413 = scmp.ne.s32.totalorder %s408, %s410
      %p414 = scmp.eq.s32.totalorder %s38, 0
      %p415 = por %p413, %p414
      %p416 = scmp.ne.s32.totalorder %s408, %s410
      %p417 = scmp.eq.s32.totalorder %s43, 3
      %p418 = por %p416, %p417
      %p419 = scmp.ne.s32.totalorder %s410, %s411
      %p420 = scmp.eq.s32.totalorder %s43, 0
      %p421 = por %p419, %p420
      %p422 = scmp.ne.s32.totalorder %s410, %s411
      %p423 = scmp.eq.s32.totalorder %s44, 3
      %p424 = por %p422, %p423
      %p426 = scmp.ne.s32.totalorder %s411, %s425
      %p427 = scmp.eq.s32.totalorder %s44, 0
      %p428 = por %p426, %p427
      %s430 = sadd.s32 %s429, 1
      %p433 = scmp.eq.s32.totalorder %s38, 3
      %p434 = scmp.ne.s32.totalorder %s429, %s431
      %p435 = scmp.eq.s32.totalorder %s38, 0
      %p436 = por %p434, %p435
      %p437 = scmp.ne.s32.totalorder %s429, %s431
      %p438 = scmp.eq.s32.totalorder %s43, 3
      %p439 = por %p437, %p438
      %p440 = scmp.ne.s32.totalorder %s431, %s432
      %p441 = scmp.eq.s32.totalorder %s43, 0
      %p442 = por %p440, %p441
      %p443 = scmp.ne.s32.totalorder %s431, %s432
      %p444 = scmp.eq.s32.totalorder %s44, 3
      %p445 = por %p443, %p444
      %p447 = scmp.ne.s32.totalorder %s432, %s446
      %p448 = scmp.eq.s32.totalorder %s44, 0
      %p449 = por %p447, %p448
      %s451 = sadd.s32 %s450, 1
      %p454 = scmp.eq.s32.totalorder %s38, 3
      %p455 = scmp.ne.s32.totalorder %s450, %s452
      %p456 = scmp.eq.s32.totalorder %s38, 0
      %p457 = por %p455, %p456
      %p458 = scmp.ne.s32.totalorder %s450, %s452
      %p459 = scmp.eq.s32.totalorder %s43, 3
      %p460 = por %p458, %p459
      %p461 = scmp.ne.s32.totalorder %s452, %s453
      %p462 = scmp.eq.s32.totalorder %s43, 0
      %p463 = por %p461, %p462
      %p464 = scmp.ne.s32.totalorder %s452, %s453
      %p465 = scmp.eq.s32.totalorder %s44, 3
      %p466 = por %p464, %p465
      %p468 = scmp.ne.s32.totalorder %s453, %s467
      %p469 = scmp.eq.s32.totalorder %s44, 0
      %p470 = por %p468, %p469
      %s472 = sadd.s32 %s471, 1
      %p475 = scmp.eq.s32.totalorder %s38, 3
      %p476 = scmp.ne.s32.totalorder %s471, %s473
      %p477 = scmp.eq.s32.totalorder %s38, 0
      %p478 = por %p476, %p477
      %p479 = scmp.ne.s32.totalorder %s471, %s473
      %p480 = scmp.eq.s32.totalorder %s43, 3
      %p481 = por %p479, %p480
      %p482 = scmp.ne.s32.totalorder %s473, %s474
      %p483 = scmp.eq.s32.totalorder %s43, 0
      %p484 = por %p482, %p483
      %p485 = scmp.ne.s32.totalorder %s473, %s474
      %p486 = scmp.eq.s32.totalorder %s44, 3
      %p487 = por %p485, %p486
      %p489 = scmp.ne.s32.totalorder %s474, %s488
      %p490 = scmp.eq.s32.totalorder %s44, 0
      %p491 = por %p489, %p490
      %s493 = sadd.s32 %s492, 1
      %p496 = scmp.eq.s32.totalorder %s38, 3
      %p497 = scmp.ne.s32.totalorder %s492, %s494
      %p498 = scmp.eq.s32.totalorder %s38, 0
      %p499 = por %p497, %p498
      %p500 = scmp.ne.s32.totalorder %s492, %s494
      %p501 = scmp.eq.s32.totalorder %s43, 3
      %p502 = por %p500, %p501
      %p503 = scmp.ne.s32.totalorder %s494, %s495
      %p504 = scmp.eq.s32.totalorder %s43, 0
      %p505 = por %p503, %p504
      %p506 = scmp.ne.s32.totalorder %s494, %s495
      %p507 = scmp.eq.s32.totalorder %s44, 3
      %p508 = por %p506, %p507
      %p510 = scmp.ne.s32.totalorder %s495, %s509
      %p511 = scmp.eq.s32.totalorder %s44, 0
      %p512 = por %p510, %p511
      %s514 = sadd.s32 %s513, 1
      %p517 = scmp.eq.s32.totalorder %s38, 3
      %p518 = scmp.ne.s32.totalorder %s513, %s515
      %p519 = scmp.eq.s32.totalorder %s38, 0
      %p520 = por %p518, %p519
      %p521 = scmp.ne.s32.totalorder %s513, %s515
      %p522 = scmp.eq.s32.totalorder %s43, 3
      %p523 = por %p521, %p522
      %p524 = scmp.ne.s32.totalorder %s515, %s516
      %p525 = scmp.eq.s32.totalorder %s43, 0
      %p526 = por %p524, %p525
      %p527 = scmp.ne.s32.totalorder %s515, %s516
      %p528 = scmp.eq.s32.totalorder %s44, 3
      %p529 = por %p527, %p528
      %p531 = scmp.ne.s32.totalorder %s516, %s530
      %p532 = scmp.eq.s32.totalorder %s44, 0
      %p533 = por %p531, %p532
      %s535 = sadd.s32 %s534, 1
      %p538 = scmp.eq.s32.totalorder %s38, 3
      %p539 = scmp.ne.s32.totalorder %s534, %s536
      %p540 = scmp.eq.s32.totalorder %s38, 0
      %p541 = por %p539, %p540
      %p542 = scmp.ne.s32.totalorder %s534, %s536
      %p543 = scmp.eq.s32.totalorder %s43, 3
      %p544 = por %p542, %p543
      %p545 = scmp.ne.s32.totalorder %s536, %s537
      %p546 = scmp.eq.s32.totalorder %s43, 0
      %p547 = por %p545, %p546
      %p548 = scmp.ne.s32.totalorder %s536, %s537
      %p549 = scmp.eq.s32.totalorder %s44, 3
      %p550 = por %p548, %p549
      %p552 = scmp.ne.s32.totalorder %s537, %s551
      %p553 = scmp.eq.s32.totalorder %s44, 0
      %p554 = por %p552, %p553
      %s556 = sadd.s32 %s555, 1
      %p559 = scmp.eq.s32.totalorder %s38, 3
      %p560 = scmp.ne.s32.totalorder %s555, %s557
      %p561 = scmp.eq.s32.totalorder %s38, 0
      %p562 = por %p560, %p561
      %p563 = scmp.ne.s32.totalorder %s555, %s557
      %p564 = scmp.eq.s32.totalorder %s43, 3
      %p565 = por %p563, %p564
      %p566 = scmp.ne.s32.totalorder %s557, %s558
      %p567 = scmp.eq.s32.totalorder %s43, 0
      %p568 = por %p566, %p567
      %p569 = scmp.ne.s32.totalorder %s557, %s558
      %p570 = scmp.eq.s32.totalorder %s44, 3
      %p571 = por %p569, %p570
      %p573 = scmp.ne.s32.totalorder %s558, %s572
      %p574 = scmp.eq.s32.totalorder %s44, 0
      %p575 = por %p573, %p574
      %s576 = ssub.s32 %s38, %s45
      %p577 = scmp.eq.s32.totalorder %s576, 0
      %s579 = sadd.s32 %s578, 1
      %s580 = scalar_select %p577, %s578, %s579
      %p583 = pneg %p577
      %p584 = scmp.eq.s32.totalorder %s38, 3
      %p585 = por %p583, %p584
      %p586 = scmp.ne.s32.totalorder %s578, %s581
      %p587 = scmp.eq.s32.totalorder %s38, 0
      %p588 = por %p586, %p587
      %p589 = scmp.ne.s32.totalorder %s578, %s581
      %p590 = scmp.eq.s32.totalorder %s43, 3
      %p591 = por %p589, %p590
      %p592 = scmp.ne.s32.totalorder %s581, %s582
      %p593 = scmp.eq.s32.totalorder %s43, 0
      %p594 = por %p592, %p593
      %p595 = scmp.ne.s32.totalorder %s581, %s582
      %p596 = scmp.eq.s32.totalorder %s44, 3
      %p597 = por %p595, %p596
      %p599 = scmp.ne.s32.totalorder %s582, %s598
      %p600 = scmp.eq.s32.totalorder %s44, 0
      %p601 = por %p599, %p600
      %p602 = scmp.le.s32.totalorder 1, %s38
      %p603 = scmp.lt.s32.totalorder %s38, 5
      %p604 = pnand %p602, %p603
      %p605 = pneg %p604
      // Predicated region
      $region9: #{forward.1} parent=5 // pred_check
        _
      $region10: #{forward.1} parent=5 // pred_check_branch
        %607 = sbr.rel (%p604) target = $region12
      $region11: #{forward.1} parent=5 // pred_region
        %s608 = ssub.s32 %s38, 1
        // Predicated region
        $region13: #{forward.1} parent=11 // pred_check
          %p609 = pneg %p85
        $region14: #{forward.1} parent=11 // pred_check_branch
          %611 = sbr.rel (%p609) target = $region16
        $region15: #{forward.1} parent=11 // pred_region
          _
        $region16: #{forward.1} parent=11 // pred_fallthru
          _
        // Predicated region
        $region17: #{forward.1} parent=11 // pred_check
          %p612 = pneg %p106
        $region18: #{forward.1} parent=11 // pred_check_branch
          %614 = sbr.rel (%p612) target = $region20
        $region19: #{forward.1} parent=11 // pred_region
          %s616 = ssub.s32 9216, 9216
          %617 = vsyncadd [#allocation11], %s616
          %s618 = sshll.u32 [#allocation10], 4
          %s619 = int_to_ptr.vmem [resolvable:$true] %s618
          %624 = dma.hbm_to_vmem [thread:$0]  %s2, 9216, %s619, [#allocation11], 64, 64, 4
        $region20: #{forward.1} parent=11 // pred_fallthru
          _
        // Predicated region
        $region21: #{forward.1} parent=11 // pred_check
          %p625 = pneg %p127
        $region22: #{forward.1} parent=11 // pred_check_branch
          %627 = sbr.rel (%p625) target = $region24
        $region23: #{forward.1} parent=11 // pred_region
          _
        $region24: #{forward.1} parent=11 // pred_fallthru
          _
        // Predicated region
        $region25: #{forward.1} parent=11 // pred_check
          %p628 = pneg %p148
        $region26: #{forward.1} parent=11 // pred_check_branch
          %630 = sbr.rel (%p628) target = $region28
        $region27: #{forward.1} parent=11 // pred_region
          %s632 = ssub.s32 5760, 5760
          %633 = vsyncadd [#allocation13], %s632
          %s634 = sshll.u32 [#allocation12], 4
          %s635 = int_to_ptr.vmem [resolvable:$true] %s634
          %640 = dma.hbm_to_vmem [thread:$0]  %s4, 5760, %s635, [#allocation13], 128, 128, 8
        $region28: #{forward.1} parent=11 // pred_fallthru
          _
        // Predicated region
        $region29: #{forward.1} parent=11 // pred_check
          %p641 = pneg %p169
        $region30: #{forward.1} parent=11 // pred_check_branch
          %643 = sbr.rel (%p641) target = $region32
        $region31: #{forward.1} parent=11 // pred_region
          %s645 = ssub.s32 9216, 9216
          %646 = vsyncadd [#allocation13], %s645
          %s647 = sshll.u32 [#allocation14], 4
          %s648 = int_to_ptr.vmem [resolvable:$true] %s647
          %653 = dma.hbm_to_vmem [thread:$0]  %s5, 9216, %s648, [#allocation13], 64, 64, 4
        $region32: #{forward.1} parent=11 // pred_fallthru
          _
        // Predicated region
        $region33: #{forward.1} parent=11 // pred_check
          %p654 = pneg %p190
        $region34: #{forward.1} parent=11 // pred_check_branch
          %656 = sbr.rel (%p654) target = $region36
        $region35: #{forward.1} parent=11 // pred_region
          _
        $region36: #{forward.1} parent=11 // pred_fallthru
          _
        // Predicated region
        $region37: #{forward.1} parent=11 // pred_check
          %p657 = pneg %p211
        $region38: #{forward.1} parent=11 // pred_check_branch
          %659 = sbr.rel (%p657) target = $region40
        $region39: #{forward.1} parent=11 // pred_region
          _
        $region40: #{forward.1} parent=11 // pred_fallthru
          _
        // Predicated region
        $region41: #{forward.1} parent=11 // pred_check
          %p660 = pneg %p232
        $region42: #{forward.1} parent=11 // pred_check_branch
          %662 = sbr.rel (%p660) target = $region44
        $region43: #{forward.1} parent=11 // pred_region
          %s664 = ssub.s32 9216, 9216
          %665 = vsyncadd [#allocation16], %s664
          %s666 = sshll.u32 [#allocation15], 4
          %s667 = int_to_ptr.vmem [resolvable:$true] %s666
          %672 = dma.hbm_to_vmem [thread:$0]  %s8, 9216, %s667, [#allocation16], 64, 64, 4
        $region44: #{forward.1} parent=11 // pred_fallthru
          _
        // Predicated region
        $region45: #{forward.1} parent=11 // pred_check
          %p673 = pneg %p253
        $region46: #{forward.1} parent=11 // pred_check_branch
          %675 = sbr.rel (%p673) target = $region48
        $region47: #{forward.1} parent=11 // pred_region
          _
        $region48: #{forward.1} parent=11 // pred_fallthru
          _
        // Predicated region
        $region49: #{forward.1} parent=11 // pred_check
          %p676 = pneg %p274
        $region50: #{forward.1} parent=11 // pred_check_branch
          %678 = sbr.rel (%p676) target = $region52
        $region51: #{forward.1} parent=11 // pred_region
          %s680 = ssub.s32 576, 576
          %681 = vsyncadd [#allocation16], %s680
          %s682 = sshll.u32 [#allocation17], 4
          %s683 = int_to_ptr.vmem [resolvable:$true] %s682
          %688 = dma.hbm_to_vmem [thread:$0]  %s10, 576, %s683, [#allocation16], 64, 64, 4
        $region52: #{forward.1} parent=11 // pred_fallthru
          _
        // Predicated region
        $region53: #{forward.1} parent=11 // pred_check
          %p689 = pneg %p295
        $region54: #{forward.1} parent=11 // pred_check_branch
          %691 = sbr.rel (%p689) target = $region56
        $region55: #{forward.1} parent=11 // pred_region
          %s693 = ssub.s32 9216, 9216
          %694 = vsyncadd [#allocation19], %s693
          %s695 = sshll.u32 [#allocation18], 4
          %s696 = int_to_ptr.vmem [resolvable:$true] %s695
          %701 = dma.hbm_to_vmem [thread:$0]  %s11, 9216, %s696, [#allocation19], 64, 64, 4
        $region56: #{forward.1} parent=11 // pred_fallthru
          _
        // Predicated region
        $region57: #{forward.1} parent=11 // pred_check
          %p702 = pneg %p316
        $region58: #{forward.1} parent=11 // pred_check_branch
          %704 = sbr.rel (%p702) target = $region60
        $region59: #{forward.1} parent=11 // pred_region
          _
        $region60: #{forward.1} parent=11 // pred_fallthru
          _
        // Predicated region
        $region61: #{forward.1} parent=11 // pred_check
          %p705 = pneg %p337
        $region62: #{forward.1} parent=11 // pred_check_branch
          %707 = sbr.rel (%p705) target = $region64
        $region63: #{forward.1} parent=11 // pred_region
          _
        $region64: #{forward.1} parent=11 // pred_fallthru
          _
        // Predicated region
        $region65: #{forward.1} parent=11 // pred_check
          %p708 = pneg %p358
        $region66: #{forward.1} parent=11 // pred_check_branch
          %710 = sbr.rel (%p708) target = $region68
        $region67: #{forward.1} parent=11 // pred_region
          _
        $region68: #{forward.1} parent=11 // pred_fallthru
          _
        // Predicated region
        $region69: #{forward.1} parent=11 // pred_check
          %p711 = pneg %p379
        $region70: #{forward.1} parent=11 // pred_check_branch
          %713 = sbr.rel (%p711) target = $region72
        $region71: #{forward.1} parent=11 // pred_region
          _
        $region72: #{forward.1} parent=11 // pred_fallthru
          _
        // Predicated region
        $region73: #{forward.1} parent=11 // pred_check
          %p714 = pneg %p400
        $region74: #{forward.1} parent=11 // pred_check_branch
          %716 = sbr.rel (%p714) target = $region76
        $region75: #{forward.1} parent=11 // pred_region
          %s718 = ssub.s32 5120, 5120
          %719 = vsyncadd [#allocation19], %s718
          %s720 = sshll.u32 [#allocation20], 4
          %s721 = int_to_ptr.vmem [resolvable:$true] %s720
          %726 = dma.hbm_to_vmem [thread:$0]  %s16, 5120, %s721, [#allocation19], 64, 64, 4
        $region76: #{forward.1} parent=11 // pred_fallthru
          _
        // Predicated region
        $region77: #{forward.1} parent=11 // pred_check
          %p727 = pneg %p421
        $region78: #{forward.1} parent=11 // pred_check_branch
          %729 = sbr.rel (%p727) target = $region80
        $region79: #{forward.1} parent=11 // pred_region
          %s731 = ssub.s32 16384, 16384
          %732 = vsyncadd [#allocation22], %s731
          %s733 = sshll.u32 [#allocation21], 4
          %s734 = int_to_ptr.vmem [resolvable:$true] %s733
          %739 = dma.hbm_to_vmem [thread:$0]  %s17, 16384, %s734, [#allocation22], 64, 64, 4
        $region80: #{forward.1} parent=11 // pred_fallthru
          _
        // Predicated region
        $region81: #{forward.1} parent=11 // pred_check
          %p740 = pneg %p442
        $region82: #{forward.1} parent=11 // pred_check_branch
          %742 = sbr.rel (%p740) target = $region84
        $region83: #{forward.1} parent=11 // pred_region
          _
        $region84: #{forward.1} parent=11 // pred_fallthru
          _
        // Predicated region
        $region85: #{forward.1} parent=11 // pred_check
          %p743 = pneg %p463
        $region86: #{forward.1} parent=11 // pred_check_branch
          %745 = sbr.rel (%p743) target = $region88
        $region87: #{forward.1} parent=11 // pred_region
          %s747 = ssub.s32 18432, 18432
          %748 = vsyncadd [#allocation22], %s747
          %s749 = sshll.u32 [#allocation23], 4
          %s750 = int_to_ptr.vmem [resolvable:$true] %s749
          %755 = dma.hbm_to_vmem [thread:$0]  %s19, 18432, %s750, [#allocation22], 64, 64, 4
        $region88: #{forward.1} parent=11 // pred_fallthru
          _
        // Predicated region
        $region89: #{forward.1} parent=11 // pred_check
          %p756 = pneg %p484
        $region90: #{forward.1} parent=11 // pred_check_branch
          %758 = sbr.rel (%p756) target = $region92
        $region91: #{forward.1} parent=11 // pred_region
          %s760 = ssub.s32 16384, 16384
          %761 = vsyncadd [#allocation25], %s760
          %s762 = sshll.u32 [#allocation24], 4
          %s763 = int_to_ptr.vmem [resolvable:$true] %s762
          %768 = dma.hbm_to_vmem [thread:$0]  %s20, 16384, %s763, [#allocation25], 64, 64, 4
        $region92: #{forward.1} parent=11 // pred_fallthru
          _
        // Predicated region
        $region93: #{forward.1} parent=11 // pred_check
          %p769 = pneg %p505
        $region94: #{forward.1} parent=11 // pred_check_branch
          %771 = sbr.rel (%p769) target = $region96
        $region95: #{forward.1} parent=11 // pred_region
          _
        $region96: #{forward.1} parent=11 // pred_fallthru
          _
        // Predicated region
        $region97: #{forward.1} parent=11 // pred_check
          %p772 = pneg %p526
        $region98: #{forward.1} parent=11 // pred_check_branch
          %774 = sbr.rel (%p772) target = $region100
        $region99: #{forward.1} parent=11 // pred_region
          %s776 = ssub.s32 147456, 147456
          %777 = vsyncadd [#allocation25], %s776
          %s778 = sshll.u32 [#allocation26], 4
          %s779 = int_to_ptr.vmem [resolvable:$true] %s778
          %784 = dma.hbm_to_vmem [thread:$0]  %s22, 147456, %s779, [#allocation25], 128, 128, 8
        $region100: #{forward.1} parent=11 // pred_fallthru
          _
        // Predicated region
        $region101: #{forward.1} parent=11 // pred_check
          %p785 = pneg %p547
        $region102: #{forward.1} parent=11 // pred_check_branch
          %787 = sbr.rel (%p785) target = $region104
        $region103: #{forward.1} parent=11 // pred_region
          %s789 = ssub.s32 16384, 16384
          %790 = vsyncadd [#allocation28], %s789
          %s791 = sshll.u32 [#allocation27], 4
          %s792 = int_to_ptr.vmem [resolvable:$true] %s791
          %797 = dma.hbm_to_vmem [thread:$0]  %s23, 16384, %s792, [#allocation28], 64, 64, 4
        $region104: #{forward.1} parent=11 // pred_fallthru
          _
        // Predicated region
        $region105: #{forward.1} parent=11 // pred_check
          %p798 = pneg %p568
        $region106: #{forward.1} parent=11 // pred_check_branch
          %800 = sbr.rel (%p798) target = $region108
        $region107: #{forward.1} parent=11 // pred_region
          _
        $region108: #{forward.1} parent=11 // pred_fallthru
          _
      $region12: #{forward.1} parent=5 // pred_fallthru
        _
      %p801 = scmp.lt.s32.totalorder %s38, 4
      // Predicated region
      $region109: #{forward.1} parent=5 // pred_check
        %p802 = pneg %p801
      $region110: #{forward.1} parent=5 // pred_check_branch
        %804 = sbr.rel (%p802) target = $region112
      $region111: #{forward.1} parent=5 // pred_region
        // Predicated region
        $region113: #{forward.1} parent=111 // pred_check
          %p805 = pneg %p58
        $region114: #{forward.1} parent=111 // pred_check_branch
          %807 = sbr.rel (%p805) target = $region116
        $region115: #{forward.1} parent=111 // pred_region
          %p808 = scmp.lt.s32.totalorder %s38, 3
          %s809 = scalar_select %p808, %s38, 3
          %s810 = smul.addr %s809, 72
          %s811 = smul.addr %s810, 4
          %s812 = scalar_lea.vmem %s0, %s811
        $region116: #{forward.1} parent=111 // pred_fallthru
          _
      $region112: #{forward.1} parent=5 // pred_fallthru
        _
      %p813 = scmp.le.s32.totalorder 1, %s38
      %p814 = scmp.lt.s32.totalorder %s38, 5
      %p815 = pnand %p813, %p814
      %p816 = pneg %p815
      // Predicated region
      $region117: #{forward.1} parent=5 // pred_check
        _
      $region118: #{forward.1} parent=5 // pred_check_branch
        %818 = sbr.rel (%p815) target = $region120
      $region119: #{forward.1} parent=5 // pred_region
        %s819 = ssub.s32 %s38, 1
        // Predicated region
        $region121: #{forward.1} parent=119 // pred_check
          %p820 = pneg %p106
        $region122: #{forward.1} parent=119 // pred_check_branch
          %822 = sbr.rel (%p820) target = $region124
        $region123: #{forward.1} parent=119 // pred_region
          %823 = dma.done [#allocation11], 9216
        $region124: #{forward.1} parent=119 // pred_fallthru
          _
        // Predicated region
        $region125: #{forward.1} parent=119 // pred_check
          %p824 = pneg %p148
        $region126: #{forward.1} parent=119 // pred_check_branch
          %826 = sbr.rel (%p824) target = $region128
        $region127: #{forward.1} parent=119 // pred_region
          %827 = dma.done [#allocation13], 5760
        $region128: #{forward.1} parent=119 // pred_fallthru
          _
        // Predicated region
        $region129: #{forward.1} parent=119 // pred_check
          %p828 = pneg %p169
        $region130: #{forward.1} parent=119 // pred_check_branch
          %830 = sbr.rel (%p828) target = $region132
        $region131: #{forward.1} parent=119 // pred_region
          %831 = dma.done [#allocation13], 9216
        $region132: #{forward.1} parent=119 // pred_fallthru
          _
        // Predicated region
        $region133: #{forward.1} parent=119 // pred_check
          %p832 = pneg %p232
        $region134: #{forward.1} parent=119 // pred_check_branch
          %834 = sbr.rel (%p832) target = $region136
        $region135: #{forward.1} parent=119 // pred_region
          %835 = dma.done [#allocation16], 9216
        $region136: #{forward.1} parent=119 // pred_fallthru
          _
        // Predicated region
        $region137: #{forward.1} parent=119 // pred_check
          %p836 = pneg %p274
        $region138: #{forward.1} parent=119 // pred_check_branch
          %838 = sbr.rel (%p836) target = $region140
        $region139: #{forward.1} parent=119 // pred_region
          %839 = dma.done [#allocation16], 576
        $region140: #{forward.1} parent=119 // pred_fallthru
          _
        // Predicated region
        $region141: #{forward.1} parent=119 // pred_check
          %p840 = pneg %p295
        $region142: #{forward.1} parent=119 // pred_check_branch
          %842 = sbr.rel (%p840) target = $region144
        $region143: #{forward.1} parent=119 // pred_region
          %843 = dma.done [#allocation19], 9216
        $region144: #{forward.1} parent=119 // pred_fallthru
          _
        // Predicated region
        $region145: #{forward.1} parent=119 // pred_check
          %p844 = pneg %p400
        $region146: #{forward.1} parent=119 // pred_check_branch
          %846 = sbr.rel (%p844) target = $region148
        $region147: #{forward.1} parent=119 // pred_region
          %847 = dma.done [#allocation19], 5120
        $region148: #{forward.1} parent=119 // pred_fallthru
          _
        // Predicated region
        $region149: #{forward.1} parent=119 // pred_check
          %p848 = pneg %p421
        $region150: #{forward.1} parent=119 // pred_check_branch
          %850 = sbr.rel (%p848) target = $region152
        $region151: #{forward.1} parent=119 // pred_region
          %851 = dma.done [#allocation22], 16384
        $region152: #{forward.1} parent=119 // pred_fallthru
          _
        // Predicated region
        $region153: #{forward.1} parent=119 // pred_check
          %p852 = pneg %p463
        $region154: #{forward.1} parent=119 // pred_check_branch
          %854 = sbr.rel (%p852) target = $region156
        $region155: #{forward.1} parent=119 // pred_region
          %855 = dma.done [#allocation22], 18432
        $region156: #{forward.1} parent=119 // pred_fallthru
          _
        // Predicated region
        $region157: #{forward.1} parent=119 // pred_check
          %p856 = pneg %p484
        $region158: #{forward.1} parent=119 // pred_check_branch
          %858 = sbr.rel (%p856) target = $region160
        $region159: #{forward.1} parent=119 // pred_region
          %859 = dma.done [#allocation25], 16384
        $region160: #{forward.1} parent=119 // pred_fallthru
          _
        // Predicated region
        $region161: #{forward.1} parent=119 // pred_check
          %p860 = pneg %p526
        $region162: #{forward.1} parent=119 // pred_check_branch
          %862 = sbr.rel (%p860) target = $region164
        $region163: #{forward.1} parent=119 // pred_region
          %863 = dma.done [#allocation25], 147456
        $region164: #{forward.1} parent=119 // pred_fallthru
          _
        // Predicated region
        $region165: #{forward.1} parent=119 // pred_check
          %p864 = pneg %p547
        $region166: #{forward.1} parent=119 // pred_check_branch
          %866 = sbr.rel (%p864) target = $region168
        $region167: #{forward.1} parent=119 // pred_region
          %867 = dma.done [#allocation28], 16384
        $region168: #{forward.1} parent=119 // pred_fallthru
          _
        %p868 = scmp.lt.s32.totalorder %s43, 3
        %s869 = scalar_select %p868, %s43, 3
        %s870 = smul.addr %s869, 72
        %s871 = smul.addr %s870, 4
        %s872 = scalar_lea.vmem %s0, %s871
        %p873 = pneg %p64
        %p874 = pneg %p61
        %p875 = pneg %p85
        %p876 = pneg %p82
        %p877 = pneg %p106
        %p878 = pneg %p103
        %p879 = pneg %p127
        %p880 = pneg %p124
        %p881 = pneg %p148
        %p882 = pneg %p145
        %p883 = pneg %p169
        %p884 = pneg %p166
        %p885 = pneg %p190
        %p886 = pneg %p187
        %p887 = pneg %p211
        %p888 = pneg %p208
        %p889 = pneg %p232
        %p890 = pneg %p229
        %p891 = pneg %p253
        %p892 = pneg %p250
        %p893 = pneg %p274
        %p894 = pneg %p271
        %p895 = pneg %p295
        %p896 = pneg %p292
        %p897 = pneg %p316
        %p898 = pneg %p313
        %p899 = pneg %p337
        %p900 = pneg %p334
        %p901 = pneg %p358
        %p902 = pneg %p355
        %p903 = pneg %p379
        %p904 = pneg %p376
        %p905 = pneg %p400
        %p906 = pneg %p397
        %p907 = pneg %p421
        %p908 = pneg %p418
        %p909 = pneg %p442
        %p910 = pneg %p439
        %p911 = pneg %p463
        %p912 = pneg %p460
        %p913 = pneg %p484
        %p914 = pneg %p481
        %p915 = pneg %p505
        %p916 = pneg %p502
        %p917 = pneg %p526
        %p918 = pneg %p523
        %p919 = pneg %p547
        %p920 = pneg %p544
        %p921 = pneg %p568
        %p922 = pneg %p565
        %p923 = pneg %p594
        %p924 = pneg %p591
        %p925 = scmp.lt.s32.totalorder %s43, 3
        %s926 = scalar_select %p925, %s43, 3
        %s927 = smul.addr %s926, 72
        %s928 = smul.addr %s927, 8
        %s929 = scalar_lea.vmem %s25, %s928
        %p930 = scmp.lt.s32.totalorder %s43, 3
        %s931 = scalar_select %p930, %s43, 3
        %s932 = smul.addr %s931, 72
        %s933 = smul.addr %s932, 4
        %s934 = scalar_lea.vmem %s0, %s933
        %p935 = scmp.lt.s32.totalorder %s43, 3
        %s936 = scalar_select %p935, %s43, 3
        %s937 = smul.addr %s936, 72
        %s938 = smul.addr %s937, 8
        %s939 = scalar_lea.vmem %s25, %s938
        %v941 = vld [vmem:[%s934] sm:$0xf]
        %v942 = vld [vmem:[%s934 + $0x4] sm:$0xf]
        %v943 = vld [vmem:[%s934 + $0x8] sm:$0xf]
        %v944 = vld [vmem:[%s934 + $0xc] sm:$0xf]
        %v945 = vld [vmem:[%s934 + $0x10] sm:$0xf]
        %v946 = vld [vmem:[%s934 + $0x14] sm:$0xf]
        %v947 = vld [vmem:[%s934 + $0x18] sm:$0xf]
        %v948 = vld [vmem:[%s934 + $0x1c] sm:$0xf]
        %v949 = vld [vmem:[%s934 + $0x20] sm:$0xf]
        %v950 = vld [vmem:[%s934 + $0x24] sm:$0xf]
        %v951 = vld [vmem:[%s934 + $0x28] sm:$0xf]
        %v952 = vld [vmem:[%s934 + $0x2c] sm:$0xf]
        %v953 = vld [vmem:[%s934 + $0x30] sm:$0xf]
        %v954 = vld [vmem:[%s934 + $0x34] sm:$0xf]
        %v955 = vld [vmem:[%s934 + $0x38] sm:$0xf]
        %v956 = vld [vmem:[%s934 + $0x3c] sm:$0xf]
        %v957 = vld [vmem:[%s934 + $0x40] sm:$0xf]
        %v958 = vld [vmem:[%s934 + $0x44] sm:$0xf]
        %v959 = vld [vmem:[%s934 + $0x48] sm:$0xf]
        %v960 = vld [vmem:[%s934 + $0x4c] sm:$0xf]
        %v961 = vld [vmem:[%s934 + $0x50] sm:$0xf]
        %v962 = vld [vmem:[%s934 + $0x54] sm:$0xf]
        %v963 = vld [vmem:[%s934 + $0x58] sm:$0xf]
        %v964 = vld [vmem:[%s934 + $0x5c] sm:$0xf]
        %v965 = vld [vmem:[%s934 + $0x60] sm:$0xf]
        %v966 = vld [vmem:[%s934 + $0x64] sm:$0xf]
        %v967 = vld [vmem:[%s934 + $0x68] sm:$0xf]
        %v968 = vld [vmem:[%s934 + $0x6c] sm:$0xf]
        %v969 = vld [vmem:[%s934 + $0x70] sm:$0xf]
        %v970 = vld [vmem:[%s934 + $0x74] sm:$0xf]
        %v971 = vld [vmem:[%s934 + $0x78] sm:$0xf]
        %v972 = vld [vmem:[%s934 + $0x7c] sm:$0xf]
        %v973 = vld [vmem:[%s934 + $0x80] sm:$0xf]
        %v974 = vld [vmem:[%s934 + $0x84] sm:$0xf]
        %v975 = vld [vmem:[%s934 + $0x88] sm:$0xf]
        %v976 = vld [vmem:[%s934 + $0x8c] sm:$0xf]
        %v977 = vld [vmem:[%s934 + $0x90] sm:$0xf]
        %v978 = vld [vmem:[%s934 + $0x94] sm:$0xf]
        %v979 = vld [vmem:[%s934 + $0x98] sm:$0xf]
        %v980 = vld [vmem:[%s934 + $0x9c] sm:$0xf]
        %v981 = vld [vmem:[%s934 + $0xa0] sm:$0xf]
        %v982 = vld [vmem:[%s934 + $0xa4] sm:$0xf]
        %v983 = vld [vmem:[%s934 + $0xa8] sm:$0xf]
        %v984 = vld [vmem:[%s934 + $0xac] sm:$0xf]
        %v985 = vld [vmem:[%s934 + $0xb0] sm:$0xf]
        %v986 = vld [vmem:[%s934 + $0xb4] sm:$0xf]
        %v987 = vld [vmem:[%s934 + $0xb8] sm:$0xf]
        %v988 = vld [vmem:[%s934 + $0xbc] sm:$0xf]
        %v989 = vld [vmem:[%s934 + $0xc0] sm:$0xf]
        %v990 = vld [vmem:[%s934 + $0xc4] sm:$0xf]
        %v991 = vld [vmem:[%s934 + $0xc8] sm:$0xf]
        %v992 = vld [vmem:[%s934 + $0xcc] sm:$0xf]
        %v993 = vld [vmem:[%s934 + $0xd0] sm:$0xf]
        %v994 = vld [vmem:[%s934 + $0xd4] sm:$0xf]
        %v995 = vld [vmem:[%s934 + $0xd8] sm:$0xf]
        %v996 = vld [vmem:[%s934 + $0xdc] sm:$0xf]
        %v997 = vld [vmem:[%s934 + $0xe0] sm:$0xf]
        %v998 = vld [vmem:[%s934 + $0xe4] sm:$0xf]
        %v999 = vld [vmem:[%s934 + $0xe8] sm:$0xf]
        %v1000 = vld [vmem:[%s934 + $0xec] sm:$0xf]
        %v1001 = vld [vmem:[%s934 + $0xf0] sm:$0xf]
        %v1002 = vld [vmem:[%s934 + $0xf4] sm:$0xf]
        %v1003 = vld [vmem:[%s934 + $0xf8] sm:$0xf]
        %v1004 = vld [vmem:[%s934 + $0xfc] sm:$0xf]
        %v1005 = vld [vmem:[%s934 + $0x100] sm:$0xf]
        %v1006 = vld [vmem:[%s934 + $0x104] sm:$0xf]
        %v1007 = vld [vmem:[%s934 + $0x108] sm:$0xf]
        %v1008 = vld [vmem:[%s934 + $0x10c] sm:$0xf]
        %v1009 = vld [vmem:[%s934 + $0x110] sm:$0xf]
        %v1010 = vld [vmem:[%s934 + $0x114] sm:$0xf]
        %v1011 = vld [vmem:[%s934 + $0x118] sm:$0xf]
        %v1012 = vld [vmem:[%s934 + $0x11c] sm:$0xf]
        %1013 = vst [vmem:[#allocation9] sm:$0xff] 0.0
        %1014 = vst [vmem:[#allocation9 + $0x8] sm:$0xff] 0.0
        %1015 = vst [vmem:[#allocation9 + $0x10] sm:$0xff] 0.0
        %1016 = vst [vmem:[#allocation9 + $0x18] sm:$0xff] 0.0
        %1017 = vst [vmem:[#allocation9 + $0x20] sm:$0xff] 0.0
        %1018 = vst [vmem:[#allocation9 + $0x28] sm:$0xff] 0.0
        %1019 = vst [vmem:[#allocation9 + $0x30] sm:$0xff] 0.0
        %1020 = vst [vmem:[#allocation9 + $0x38] sm:$0xff] 0.0
        %1021 = vst [vmem:[#allocation9 + $0x40] sm:$0xff] 0.0
        %1022 = vst [vmem:[#allocation9 + $0x48] sm:$0xff] 0.0
        %1023 = vst [vmem:[#allocation9 + $0x50] sm:$0xff] 0.0
        %1024 = vst [vmem:[#allocation9 + $0x58] sm:$0xff] 0.0
        %1025 = vst [vmem:[#allocation9 + $0x60] sm:$0xff] 0.0
        %1026 = vst [vmem:[#allocation9 + $0x68] sm:$0xff] 0.0
        %1027 = vst [vmem:[#allocation9 + $0x70] sm:$0xff] 0.0
        %1028 = vst [vmem:[#allocation9 + $0x78] sm:$0xff] 0.0
        %1029 = vst [vmem:[#allocation9 + $0x80] sm:$0xff] 0.0
        %1030 = vst [vmem:[#allocation9 + $0x88] sm:$0xff] 0.0
        loop: start=0, step=1, limit=9
        $region169: #{forward.1} parent=119 // loop_pre_header
          _
        $region170: #{forward.1} parent=119 // loop_header
          %s1032 = sphi 0, %s1036
          %p1033 = scmp.ge.s32.totalorder %s1032, 9
        $region171: #{forward.1} parent=119 // loop_header_branch
          %1035 = sbr.rel (%p1033) target = $region175
        $region172: #{forward.1} parent=119 // loop_body
          %s1037 = smul.u32 %s1032, 90
          %s1038 = smul.addr %s1037, 4
          %s1039 = scalar_lea.vmem %s1, %s1038
          %v1040 = vld [vmem:[%s1039] sm:$0xff]
          %v1041 = vld [vmem:[%s1039 + $0x8] sm:$0xff]
          %v1042 = vld [vmem:[%s1039 + $0x10] sm:$0xf]
          %v1043 = vld [vmem:[%s1039 + $0x14] sm:$0xff]
          %v1044 = vld [vmem:[%s1039 + $0x1c] sm:$0xff]
          %v1045 = vld [vmem:[%s1039 + $0x24] sm:$0xf]
          %v1046 = vld [vmem:[%s1039 + $0x28] sm:$0xff]
          %v1047 = vld [vmem:[%s1039 + $0x30] sm:$0xff]
          %v1048 = vld [vmem:[%s1039 + $0x38] sm:$0xf]
          %v1049 = vld [vmem:[%s1039 + $0x3c] sm:$0xff]
          %v1050 = vld [vmem:[%s1039 + $0x44] sm:$0xff]
          %v1051 = vld [vmem:[%s1039 + $0x4c] sm:$0xf]
          %v1052 = vld [vmem:[%s1039 + $0x50] sm:$0xff]
          %v1053 = vld [vmem:[%s1039 + $0x58] sm:$0xff]
          %v1054 = vld [vmem:[%s1039 + $0x60] sm:$0xf]
          %v1055 = vld [vmem:[%s1039 + $0x64] sm:$0xff]
          %v1056 = vld [vmem:[%s1039 + $0x6c] sm:$0xff]
          %v1057 = vld [vmem:[%s1039 + $0x74] sm:$0xf]
          %v1058 = vld [vmem:[%s1039 + $0x78] sm:$0xff]
          %v1059 = vld [vmem:[%s1039 + $0x80] sm:$0xff]
          %v1060 = vld [vmem:[%s1039 + $0x88] sm:$0xf]
          %v1061 = vld [vmem:[%s1039 + $0x8c] sm:$0xff]
          %v1062 = vld [vmem:[%s1039 + $0x94] sm:$0xff]
          %v1063 = vld [vmem:[%s1039 + $0x9c] sm:$0xf]
          %v1064 = vld [vmem:[%s1039 + $0xa0] sm:$0xff]
          %v1065 = vld [vmem:[%s1039 + $0xa8] sm:$0xff]
          %v1066 = vld [vmem:[%s1039 + $0xb0] sm:$0xf]
          %v1067 = vld [vmem:[%s1039 + $0xb4] sm:$0xff]
          %v1068 = vld [vmem:[%s1039 + $0xbc] sm:$0xff]
          %v1069 = vld [vmem:[%s1039 + $0xc4] sm:$0xf]
          %v1070 = vld [vmem:[%s1039 + $0xc8] sm:$0xff]
          %v1071 = vld [vmem:[%s1039 + $0xd0] sm:$0xff]
          %v1072 = vld [vmem:[%s1039 + $0xd8] sm:$0xf]
          %v1073 = vld [vmem:[%s1039 + $0xdc] sm:$0xff]
          %v1074 = vld [vmem:[%s1039 + $0xe4] sm:$0xff]
          %v1075 = vld [vmem:[%s1039 + $0xec] sm:$0xf]
          %v1076 = vld [vmem:[%s1039 + $0xf0] sm:$0xff]
          %v1077 = vld [vmem:[%s1039 + $0xf8] sm:$0xff]
          %v1078 = vld [vmem:[%s1039 + $0x100] sm:$0xf]
          %v1079 = vld [vmem:[%s1039 + $0x104] sm:$0xff]
          %v1080 = vld [vmem:[%s1039 + $0x10c] sm:$0xff]
          %v1081 = vld [vmem:[%s1039 + $0x114] sm:$0xf]
          %v1082 = vld [vmem:[%s1039 + $0x118] sm:$0xff]
          %v1083 = vld [vmem:[%s1039 + $0x120] sm:$0xff]
          %v1084 = vld [vmem:[%s1039 + $0x128] sm:$0xf]
          %v1085 = vld [vmem:[%s1039 + $0x12c] sm:$0xff]
          %v1086 = vld [vmem:[%s1039 + $0x134] sm:$0xff]
          %v1087 = vld [vmem:[%s1039 + $0x13c] sm:$0xf]
          %v1088 = vld [vmem:[%s1039 + $0x140] sm:$0xff]
          %v1089 = vld [vmem:[%s1039 + $0x148] sm:$0xff]
          %v1090 = vld [vmem:[%s1039 + $0x150] sm:$0xf]
          %v1091 = vld [vmem:[%s1039 + $0x154] sm:$0xff]
          %v1092 = vld [vmem:[%s1039 + $0x15c] sm:$0xff]
          %v1093 = vld [vmem:[%s1039 + $0x164] sm:$0xf]
          %v1148 = vunpack.c.l.b16 %v1040
          %v1149 = vunpack.c.h.b16 %v1040
          %v1150 = vunpack.c.l.b16 %v1041
          %v1151 = vunpack.c.h.b16 %v1041
          %v1152 = vunpack.c.l.b16 %v1042
          %v1153 = vunpack.c.l.b16 %v1043
          %v1154 = vunpack.c.h.b16 %v1043
          %v1155 = vunpack.c.l.b16 %v1044
          %v1156 = vunpack.c.h.b16 %v1044
          %v1157 = vunpack.c.l.b16 %v1045
          %v1158 = vunpack.c.l.b16 %v1046
          %v1159 = vunpack.c.h.b16 %v1046
          %v1160 = vunpack.c.l.b16 %v1047
          %v1161 = vunpack.c.h.b16 %v1047
          %v1162 = vunpack.c.l.b16 %v1048
          %v1163 = vunpack.c.l.b16 %v1049
          %v1164 = vunpack.c.h.b16 %v1049
          %v1165 = vunpack.c.l.b16 %v1050
          %v1166 = vunpack.c.h.b16 %v1050
          %v1167 = vunpack.c.l.b16 %v1051
          %v1168 = vunpack.c.l.b16 %v1052
          %v1169 = vunpack.c.h.b16 %v1052
          %v1170 = vunpack.c.l.b16 %v1053
          %v1171 = vunpack.c.h.b16 %v1053
          %v1172 = vunpack.c.l.b16 %v1054
          %v1173 = vunpack.c.l.b16 %v1055
          %v1174 = vunpack.c.h.b16 %v1055
          %v1175 = vunpack.c.l.b16 %v1056
          %v1176 = vunpack.c.h.b16 %v1056
          %v1177 = vunpack.c.l.b16 %v1057
          %v1178 = vunpack.c.l.b16 %v1058
          %v1179 = vunpack.c.h.b16 %v1058
          %v1180 = vunpack.c.l.b16 %v1059
          %v1181 = vunpack.c.h.b16 %v1059
          %v1182 = vunpack.c.l.b16 %v1060
          %v1183 = vunpack.c.l.b16 %v1061
          %v1184 = vunpack.c.h.b16 %v1061
          %v1185 = vunpack.c.l.b16 %v1062
          %v1186 = vunpack.c.h.b16 %v1062
          %v1187 = vunpack.c.l.b16 %v1063
          %v1188 = vunpack.c.l.b16 %v1064
          %v1189 = vunpack.c.h.b16 %v1064
          %v1190 = vunpack.c.l.b16 %v1065
          %v1191 = vunpack.c.h.b16 %v1065
          %v1192 = vunpack.c.l.b16 %v1066
          %v1193 = vunpack.c.l.b16 %v1067
          %v1194 = vunpack.c.h.b16 %v1067
          %v1195 = vunpack.c.l.b16 %v1068
          %v1196 = vunpack.c.h.b16 %v1068
          %v1197 = vunpack.c.l.b16 %v1069
          %v1198 = vunpack.c.l.b16 %v1070
          %v1199 = vunpack.c.h.b16 %v1070
          %v1200 = vunpack.c.l.b16 %v1071
          %v1201 = vunpack.c.h.b16 %v1071
          %v1202 = vunpack.c.l.b16 %v1072
          %v1203 = vunpack.c.l.b16 %v1073
          %v1204 = vunpack.c.h.b16 %v1073
          %v1205 = vunpack.c.l.b16 %v1074
          %v1206 = vunpack.c.h.b16 %v1074
          %v1207 = vunpack.c.l.b16 %v1075
          %v1208 = vunpack.c.l.b16 %v1076
          %v1209 = vunpack.c.h.b16 %v1076
          %v1210 = vunpack.c.l.b16 %v1077
          %v1211 = vunpack.c.h.b16 %v1077
          %v1212 = vunpack.c.l.b16 %v1078
          %v1213 = vunpack.c.l.b16 %v1079
          %v1214 = vunpack.c.h.b16 %v1079
          %v1215 = vunpack.c.l.b16 %v1080
          %v1216 = vunpack.c.h.b16 %v1080
          %v1217 = vunpack.c.l.b16 %v1081
          %v1218 = vunpack.c.l.b16 %v1082
          %v1219 = vunpack.c.h.b16 %v1082
          %v1220 = vunpack.c.l.b16 %v1083
          %v1221 = vunpack.c.h.b16 %v1083
          %v1222 = vunpack.c.l.b16 %v1084
          %v1223 = vunpack.c.l.b16 %v1085
          %v1224 = vunpack.c.h.b16 %v1085
          %v1225 = vunpack.c.l.b16 %v1086
          %v1226 = vunpack.c.h.b16 %v1086
          %v1227 = vunpack.c.l.b16 %v1087
          %v1228 = vunpack.c.l.b16 %v1088
          %v1229 = vunpack.c.h.b16 %v1088
          %v1230 = vunpack.c.l.b16 %v1089
          %v1231 = vunpack.c.h.b16 %v1089
          %v1232 = vunpack.c.l.b16 %v1090
          %v1233 = vunpack.c.l.b16 %v1091
          %v1234 = vunpack.c.h.b16 %v1091
          %v1235 = vunpack.c.l.b16 %v1092
          %v1236 = vunpack.c.h.b16 %v1092
          %v1237 = vunpack.c.l.b16 %v1093
          %v1238 = vpack.c.b16 %v1153, %v1148
          %v1239 = vpack.c.b16 %v1154, %v1149
          %v1240 = vpack.c.b16 %v1155, %v1150
          %v1241 = vpack.c.b16 %v1156, %v1151
          %v1242 = vpack.c.b16 %v1157, %v1152
          %v1243 = vpack.c.b16 %v1163, %v1158
          %v1244 = vpack.c.b16 %v1164, %v1159
          %v1245 = vpack.c.b16 %v1165, %v1160
          %v1246 = vpack.c.b16 %v1166, %v1161
          %v1247 = vpack.c.b16 %v1167, %v1162
          %v1248 = vpack.c.b16 %v1173, %v1168
          %v1249 = vpack.c.b16 %v1174, %v1169
          %v1250 = vpack.c.b16 %v1175, %v1170
          %v1251 = vpack.c.b16 %v1176, %v1171
          %v1252 = vpack.c.b16 %v1177, %v1172
          %v1253 = vpack.c.b16 %v1183, %v1178
          %v1254 = vpack.c.b16 %v1184, %v1179
          %v1255 = vpack.c.b16 %v1185, %v1180
          %v1256 = vpack.c.b16 %v1186, %v1181
          %v1257 = vpack.c.b16 %v1187, %v1182
          %v1258 = vpack.c.b16 %v1193, %v1188
          %v1259 = vpack.c.b16 %v1194, %v1189
          %v1260 = vpack.c.b16 %v1195, %v1190
          %v1261 = vpack.c.b16 %v1196, %v1191
          %v1262 = vpack.c.b16 %v1197, %v1192
          %v1263 = vpack.c.b16 %v1203, %v1198
          %v1264 = vpack.c.b16 %v1204, %v1199
          %v1265 = vpack.c.b16 %v1205, %v1200
          %v1266 = vpack.c.b16 %v1206, %v1201
          %v1267 = vpack.c.b16 %v1207, %v1202
          %v1268 = vpack.c.b16 %v1213, %v1208
          %v1269 = vpack.c.b16 %v1214, %v1209
          %v1270 = vpack.c.b16 %v1215, %v1210
          %v1271 = vpack.c.b16 %v1216, %v1211
          %v1272 = vpack.c.b16 %v1217, %v1212
          %v1273 = vpack.c.b16 %v1223, %v1218
          %v1274 = vpack.c.b16 %v1224, %v1219
          %v1275 = vpack.c.b16 %v1225, %v1220
          %v1276 = vpack.c.b16 %v1226, %v1221
          %v1277 = vpack.c.b16 %v1227, %v1222
          %v1278 = vpack.c.b16 %v1233, %v1228
          %v1279 = vpack.c.b16 %v1234, %v1229
          %v1280 = vpack.c.b16 %v1235, %v1230
          %v1281 = vpack.c.b16 %v1236, %v1231
          %v1282 = vpack.c.b16 %v1237, %v1232
          %v1391 = vunpack.c.l.b16 %v941
          %v1392 = vunpack.c.l.b16 %v942
          %v1393 = vunpack.c.l.b16 %v943
          %v1394 = vunpack.c.l.b16 %v944
          %v1395 = vunpack.c.l.b16 %v945
          %v1396 = vunpack.c.l.b16 %v946
          %v1397 = vunpack.c.l.b16 %v947
          %v1398 = vunpack.c.l.b16 %v948
          %v1399 = vunpack.c.l.b16 %v949
          %v1400 = vunpack.c.l.b16 %v950
          %v1401 = vunpack.c.l.b16 %v951
          %v1402 = vunpack.c.l.b16 %v952
          %v1403 = vunpack.c.l.b16 %v953
          %v1404 = vunpack.c.l.b16 %v954
          %v1405 = vunpack.c.l.b16 %v955
          %v1406 = vunpack.c.l.b16 %v956
          %v1407 = vunpack.c.l.b16 %v957
          %v1408 = vunpack.c.l.b16 %v958
          %v1409 = vunpack.c.l.b16 %v959
          %v1410 = vunpack.c.l.b16 %v960
          %v1411 = vunpack.c.l.b16 %v961
          %v1412 = vunpack.c.l.b16 %v962
          %v1413 = vunpack.c.l.b16 %v963
          %v1414 = vunpack.c.l.b16 %v964
          %v1415 = vunpack.c.l.b16 %v965
          %v1416 = vunpack.c.l.b16 %v966
          %v1417 = vunpack.c.l.b16 %v967
          %v1418 = vunpack.c.l.b16 %v968
          %v1419 = vunpack.c.l.b16 %v969
          %v1420 = vunpack.c.l.b16 %v970
          %v1421 = vunpack.c.l.b16 %v971
          %v1422 = vunpack.c.l.b16 %v972
          %v1423 = vunpack.c.l.b16 %v973
          %v1424 = vunpack.c.l.b16 %v974
          %v1425 = vunpack.c.l.b16 %v975
          %v1426 = vunpack.c.l.b16 %v976
          %v1427 = vunpack.c.l.b16 %v977
          %v1428 = vunpack.c.l.b16 %v978
          %v1429 = vunpack.c.l.b16 %v979
          %v1430 = vunpack.c.l.b16 %v980
          %v1431 = vunpack.c.l.b16 %v981
          %v1432 = vunpack.c.l.b16 %v982
          %v1433 = vunpack.c.l.b16 %v983
          %v1434 = vunpack.c.l.b16 %v984
          %v1435 = vunpack.c.l.b16 %v985
          %v1436 = vunpack.c.l.b16 %v986
          %v1437 = vunpack.c.l.b16 %v987
          %v1438 = vunpack.c.l.b16 %v988
          %v1439 = vunpack.c.l.b16 %v989
          %v1440 = vunpack.c.l.b16 %v990
          %v1441 = vunpack.c.l.b16 %v991
          %v1442 = vunpack.c.l.b16 %v992
          %v1443 = vunpack.c.l.b16 %v993
          %v1444 = vunpack.c.l.b16 %v994
          %v1445 = vunpack.c.l.b16 %v995
          %v1446 = vunpack.c.l.b16 %v996
          %v1447 = vunpack.c.l.b16 %v997
          %v1448 = vunpack.c.l.b16 %v998
          %v1449 = vunpack.c.l.b16 %v999
          %v1450 = vunpack.c.l.b16 %v1000
          %v1451 = vunpack.c.l.b16 %v1001
          %v1452 = vunpack.c.l.b16 %v1002
          %v1453 = vunpack.c.l.b16 %v1003
          %v1454 = vunpack.c.l.b16 %v1004
          %v1455 = vunpack.c.l.b16 %v1005
          %v1456 = vunpack.c.l.b16 %v1006
          %v1457 = vunpack.c.l.b16 %v1007
          %v1458 = vunpack.c.l.b16 %v1008
          %v1459 = vunpack.c.l.b16 %v1009
          %v1460 = vunpack.c.l.b16 %v1010
          %v1461 = vunpack.c.l.b16 %v1011
          %v1462 = vunpack.c.l.b16 %v1012
          %v1463 = vpack.c.b16 %v1392, %v1391
          %v1464 = vpack.c.b16 %v1394, %v1393
          %v1465 = vpack.c.b16 %v1396, %v1395
          %v1466 = vpack.c.b16 %v1398, %v1397
          %v1467 = vpack.c.b16 %v1400, %v1399
          %v1468 = vpack.c.b16 %v1402, %v1401
          %v1469 = vpack.c.b16 %v1404, %v1403
          %v1470 = vpack.c.b16 %v1406, %v1405
          %v1471 = vpack.c.b16 %v1408, %v1407
          %v1472 = vpack.c.b16 %v1410, %v1409
          %v1473 = vpack.c.b16 %v1412, %v1411
          %v1474 = vpack.c.b16 %v1414, %v1413
          %v1475 = vpack.c.b16 %v1416, %v1415
          %v1476 = vpack.c.b16 %v1418, %v1417
          %v1477 = vpack.c.b16 %v1420, %v1419
          %v1478 = vpack.c.b16 %v1422, %v1421
          %v1479 = vpack.c.b16 %v1424, %v1423
          %v1480 = vpack.c.b16 %v1426, %v1425
          %v1481 = vpack.c.b16 %v1428, %v1427
          %v1482 = vpack.c.b16 %v1430, %v1429
          %v1483 = vpack.c.b16 %v1432, %v1431
          %v1484 = vpack.c.b16 %v1434, %v1433
          %v1485 = vpack.c.b16 %v1436, %v1435
          %v1486 = vpack.c.b16 %v1438, %v1437
          %v1487 = vpack.c.b16 %v1440, %v1439
          %v1488 = vpack.c.b16 %v1442, %v1441
          %v1489 = vpack.c.b16 %v1444, %v1443
          %v1490 = vpack.c.b16 %v1446, %v1445
          %v1491 = vpack.c.b16 %v1448, %v1447
          %v1492 = vpack.c.b16 %v1450, %v1449
          %v1493 = vpack.c.b16 %v1452, %v1451
          %v1494 = vpack.c.b16 %v1454, %v1453
          %v1495 = vpack.c.b16 %v1456, %v1455
          %v1496 = vpack.c.b16 %v1458, %v1457
          %v1497 = vpack.c.b16 %v1460, %v1459
          %v1498 = vpack.c.b16 %v1462, %v1461
          %vm1535 = vcmask 523264
          %v1537 = vsel %vm1535, %v1242, 0
          %v1540 = vsel %vm1535, %v1247, 0
          %v1543 = vsel %vm1535, %v1252, 0
          %v1546 = vsel %vm1535, %v1257, 0
          %v1549 = vsel %vm1535, %v1262, 0
          %v1552 = vsel %vm1535, %v1267, 0
          %v1555 = vsel %vm1535, %v1272, 0
          %v1558 = vsel %vm1535, %v1277, 0
          %v1561 = vsel %vm1535, %v1282, 0
          %1563 = vmatprep.subr.bf16.mxu0 0
          %1564 = vmatpush1.bf16.msra.mxu0 %v1470
          %1565 = vmatprep.subr.bf16.mxu0 0
          %1566 = vmatpush1.bf16.msra.mxu0 %v1469
          %1567 = vmatprep.subr.bf16.mxu0 0
          %1568 = vmatpush1.bf16.msra.mxu0 %v1468
          %1569 = vmatprep.subr.bf16.mxu0 0
          %1570 = vmatpush1.bf16.msra.mxu0 %v1467
          %1571 = vmatprep.subr.bf16.mxu0 0
          %1572 = vmatpush1.bf16.msra.mxu0 %v1466
          %1573 = vmatprep.subr.bf16.mxu0 0
          %1574 = vmatpush1.bf16.msra.mxu0 %v1465
          %1575 = vmatprep.subr.bf16.mxu0 0
          %1576 = vmatpush1.bf16.msra.mxu0 %v1464
          %1577 = vmatprep.subr.bf16.mxu0 0
          %1578 = vmatpush1.bf16.msra.mxu0 %v1463
          %1579 = vmatprep.subr.bf16.mxu0 0
          %1580 = vmatpush2.bf16.msra.mxu0 %v1478
          %1581 = vmatprep.subr.bf16.mxu0 0
          %1582 = vmatpush2.bf16.msra.mxu0 %v1477
          %1583 = vmatprep.subr.bf16.mxu0 0
          %1584 = vmatpush2.bf16.msra.mxu0 %v1476
          %1585 = vmatprep.subr.bf16.mxu0 0
          %1586 = vmatpush2.bf16.msra.mxu0 %v1475
          %1587 = vmatprep.subr.bf16.mxu0 0
          %1588 = vmatpush2.bf16.msra.mxu0 %v1474
          %1589 = vmatprep.subr.bf16.mxu0 0
          %1590 = vmatpush2.bf16.msra.mxu0 %v1473
          %1591 = vmatprep.subr.bf16.mxu0 0
          %1592 = vmatpush2.bf16.msra.mxu0 %v1472
          %1593 = vmatprep.subr.bf16.mxu0 0
          %1594 = vmatpush2.bf16.msra.mxu0 %v1471
          %1595 = vmatprep.mubr.bf16.mxu0 %v1239
          %1596 = vmatmul.mubr.bf16.gmra.mxu0 %v1238
          %v1597 = vpop.f32.mrf.mxu0
          %v1598 = vadd.f32 0.0, %v1597
          %v1599 = vpop.f32.mrf.mxu0
          %v1600 = vpop.f32.mrf.mxu0
          %v1601 = vadd.f32 0.0, %v1600
          %v1602 = vpop.f32.mrf.mxu0
          %1603 = vmatprep.mubr.bf16.mxu0 %v1244
          %1604 = vmatmul.mubr.bf16.gmra.mxu0 %v1243
          %v1605 = vpop.f32.mrf.mxu0
          %v1606 = vadd.f32 0.0, %v1605
          %v1607 = vpop.f32.mrf.mxu0
          %v1608 = vpop.f32.mrf.mxu0
          %v1609 = vadd.f32 0.0, %v1608
          %v1610 = vpop.f32.mrf.mxu0
          %1611 = vmatprep.mubr.bf16.mxu0 %v1249
          %1612 = vmatmul.mubr.bf16.gmra.mxu0 %v1248
          %v1613 = vpop.f32.mrf.mxu0
          %v1614 = vadd.f32 0.0, %v1613
          %v1615 = vpop.f32.mrf.mxu0
          %v1616 = vpop.f32.mrf.mxu0
          %v1617 = vadd.f32 0.0, %v1616
          %v1618 = vpop.f32.mrf.mxu0
          %1619 = vmatprep.mubr.bf16.mxu0 %v1254
          %1620 = vmatmul.mubr.bf16.gmra.mxu0 %v1253
          %v1621 = vpop.f32.mrf.mxu0
          %v1622 = vadd.f32 0.0, %v1621
          %v1623 = vpop.f32.mrf.mxu0
          %v1624 = vpop.f32.mrf.mxu0
          %v1625 = vadd.f32 0.0, %v1624
          %v1626 = vpop.f32.mrf.mxu0
          %1627 = vmatprep.mubr.bf16.mxu0 %v1259
          %1628 = vmatmul.mubr.bf16.gmra.mxu0 %v1258
          %v1629 = vpop.f32.mrf.mxu0
          %v1630 = vadd.f32 0.0, %v1629
          %v1631 = vpop.f32.mrf.mxu0
          %v1632 = vpop.f32.mrf.mxu0
          %v1633 = vadd.f32 0.0, %v1632
          %v1634 = vpop.f32.mrf.mxu0
          %1635 = vmatprep.mubr.bf16.mxu0 %v1264
          %1636 = vmatmul.mubr.bf16.gmra.mxu0 %v1263
          %v1637 = vpop.f32.mrf.mxu0
          %v1638 = vadd.f32 0.0, %v1637
          %v1639 = vpop.f32.mrf.mxu0
          %v1640 = vpop.f32.mrf.mxu0
          %v1641 = vadd.f32 0.0, %v1640
          %v1642 = vpop.f32.mrf.mxu0
          %1643 = vmatprep.mubr.bf16.mxu0 %v1269
          %1644 = vmatmul.mubr.bf16.gmra.mxu0 %v1268
          %v1645 = vpop.f32.mrf.mxu0
          %v1646 = vadd.f32 0.0, %v1645
          %v1647 = vpop.f32.mrf.mxu0
          %v1648 = vpop.f32.mrf.mxu0
          %v1649 = vadd.f32 0.0, %v1648
          %v1650 = vpop.f32.mrf.mxu0
          %1651 = vmatprep.mubr.bf16.mxu0 %v1274
          %1652 = vmatmul.mubr.bf16.gmra.mxu0 %v1273
          %v1653 = vpop.f32.mrf.mxu0
          %v1654 = vadd.f32 0.0, %v1653
          %v1655 = vpop.f32.mrf.mxu0
          %v1656 = vpop.f32.mrf.mxu0
          %v1657 = vadd.f32 0.0, %v1656
          %v1658 = vpop.f32.mrf.mxu0
          %1659 = vmatprep.mubr.bf16.mxu0 %v1279
          %1660 = vmatmul.mubr.bf16.gmra.mxu0 %v1278
          %v1661 = vpop.f32.mrf.mxu0
          %v1662 = vadd.f32 0.0, %v1661
          %v1663 = vpop.f32.mrf.mxu0
          %v1664 = vpop.f32.mrf.mxu0
          %v1665 = vadd.f32 0.0, %v1664
          %v1666 = vpop.f32.mrf.mxu0
          %1667 = vdwg.mxu0
          %1668 = vmatprep.subr.bf16.mxu0 0
          %1669 = vmatpush1.bf16.msra.mxu0 %v1486
          %1670 = vmatprep.subr.bf16.mxu0 0
          %1671 = vmatpush1.bf16.msra.mxu0 %v1485
          %1672 = vmatprep.subr.bf16.mxu0 0
          %1673 = vmatpush1.bf16.msra.mxu0 %v1484
          %1674 = vmatprep.subr.bf16.mxu0 0
          %1675 = vmatpush1.bf16.msra.mxu0 %v1483
          %1676 = vmatprep.subr.bf16.mxu0 0
          %1677 = vmatpush1.bf16.msra.mxu0 %v1482
          %1678 = vmatprep.subr.bf16.mxu0 0
          %1679 = vmatpush1.bf16.msra.mxu0 %v1481
          %1680 = vmatprep.subr.bf16.mxu0 0
          %1681 = vmatpush1.bf16.msra.mxu0 %v1480
          %1682 = vmatprep.subr.bf16.mxu0 0
          %1683 = vmatpush1.bf16.msra.mxu0 %v1479
          %1684 = vmatprep.subr.bf16.mxu0 0
          %1685 = vmatpush2.bf16.msra.mxu0 %v1494
          %1686 = vmatprep.subr.bf16.mxu0 0
          %1687 = vmatpush2.bf16.msra.mxu0 %v1493
          %1688 = vmatprep.subr.bf16.mxu0 0
          %1689 = vmatpush2.bf16.msra.mxu0 %v1492
          %1690 = vmatprep.subr.bf16.mxu0 0
          %1691 = vmatpush2.bf16.msra.mxu0 %v1491
          %1692 = vmatprep.subr.bf16.mxu0 0
          %1693 = vmatpush2.bf16.msra.mxu0 %v1490
          %1694 = vmatprep.subr.bf16.mxu0 0
          %1695 = vmatpush2.bf16.msra.mxu0 %v1489
          %1696 = vmatprep.subr.bf16.mxu0 0
          %1697 = vmatpush2.bf16.msra.mxu0 %v1488
          %1698 = vmatprep.subr.bf16.mxu0 0
          %1699 = vmatpush2.bf16.msra.mxu0 %v1487
          %1700 = vmatprep.mubr.bf16.mxu0 %v1241
          %1701 = vmatmul.mubr.bf16.gmra.mxu0 %v1240
          %v1702 = vpop.f32.mrf.mxu0
          %v1703 = vadd.f32 %v1598, %v1702
          %v1704 = vpop.f32.mrf.mxu0
          %v1705 = vpop.f32.mrf.mxu0
          %v1706 = vadd.f32 %v1601, %v1705
          %v1707 = vpop.f32.mrf.mxu0
          %1708 = vmatprep.mubr.bf16.mxu0 %v1246
          %1709 = vmatmul.mubr.bf16.gmra.mxu0 %v1245
          %v1710 = vpop.f32.mrf.mxu0
          %v1711 = vadd.f32 %v1606, %v1710
          %v1712 = vpop.f32.mrf.mxu0
          %v1713 = vpop.f32.mrf.mxu0
          %v1714 = vadd.f32 %v1609, %v1713
          %v1715 = vpop.f32.mrf.mxu0
          %1716 = vmatprep.mubr.bf16.mxu0 %v1251
          %1717 = vmatmul.mubr.bf16.gmra.mxu0 %v1250
          %v1718 = vpop.f32.mrf.mxu0
          %v1719 = vadd.f32 %v1614, %v1718
          %v1720 = vpop.f32.mrf.mxu0
          %v1721 = vpop.f32.mrf.mxu0
          %v1722 = vadd.f32 %v1617, %v1721
          %v1723 = vpop.f32.mrf.mxu0
          %1724 = vmatprep.mubr.bf16.mxu0 %v1256
          %1725 = vmatmul.mubr.bf16.gmra.mxu0 %v1255
          %v1726 = vpop.f32.mrf.mxu0
          %v1727 = vadd.f32 %v1622, %v1726
          %v1728 = vpop.f32.mrf.mxu0
          %v1729 = vpop.f32.mrf.mxu0
          %v1730 = vadd.f32 %v1625, %v1729
          %v1731 = vpop.f32.mrf.mxu0
          %1732 = vmatprep.mubr.bf16.mxu0 %v1261
          %1733 = vmatmul.mubr.bf16.gmra.mxu0 %v1260
          %v1734 = vpop.f32.mrf.mxu0
          %v1735 = vadd.f32 %v1630, %v1734
          %v1736 = vpop.f32.mrf.mxu0
          %v1737 = vpop.f32.mrf.mxu0
          %v1738 = vadd.f32 %v1633, %v1737
          %v1739 = vpop.f32.mrf.mxu0
          %1740 = vmatprep.mubr.bf16.mxu0 %v1266
          %1741 = vmatmul.mubr.bf16.gmra.mxu0 %v1265
          %v1742 = vpop.f32.mrf.mxu0
          %v1743 = vadd.f32 %v1638, %v1742
          %v1744 = vpop.f32.mrf.mxu0
          %v1745 = vpop.f32.mrf.mxu0
          %v1746 = vadd.f32 %v1641, %v1745
          %v1747 = vpop.f32.mrf.mxu0
          %1748 = vmatprep.mubr.bf16.mxu0 %v1271
          %1749 = vmatmul.mubr.bf16.gmra.mxu0 %v1270
          %v1750 = vpop.f32.mrf.mxu0
          %v1751 = vadd.f32 %v1646, %v1750
          %v1752 = vpop.f32.mrf.mxu0
          %v1753 = vpop.f32.mrf.mxu0
          %v1754 = vadd.f32 %v1649, %v1753
          %v1755 = vpop.f32.mrf.mxu0
          %1756 = vmatprep.mubr.bf16.mxu0 %v1276
          %1757 = vmatmul.mubr.bf16.gmra.mxu0 %v1275
          %v1758 = vpop.f32.mrf.mxu0
          %v1759 = vadd.f32 %v1654, %v1758
          %v1760 = vpop.f32.mrf.mxu0
          %v1761 = vpop.f32.mrf.mxu0
          %v1762 = vadd.f32 %v1657, %v1761
          %v1763 = vpop.f32.mrf.mxu0
          %1764 = vmatprep.mubr.bf16.mxu0 %v1281
          %1765 = vmatmul.mubr.bf16.gmra.mxu0 %v1280
          %v1766 = vpop.f32.mrf.mxu0
          %v1767 = vadd.f32 %v1662, %v1766
          %v1768 = vpop.f32.mrf.mxu0
          %v1769 = vpop.f32.mrf.mxu0
          %v1770 = vadd.f32 %v1665, %v1769
          %v1771 = vpop.f32.mrf.mxu0
          %1772 = vdwg.mxu0
          %1773 = vmatprep.subr.bf16.mxu0 0
          %1774 = vmatpush1.bf16.msra.mxu0 0
          %1775 = vmatprep.subr.bf16.mxu0 0
          %1776 = vmatpush1.bf16.msra.mxu0 0
          %1777 = vmatprep.subr.bf16.mxu0 0
          %1778 = vmatpush1.bf16.msra.mxu0 0
          %1779 = vmatprep.subr.bf16.mxu0 0
          %1780 = vmatpush1.bf16.msra.mxu0 0
          %1781 = vmatprep.subr.bf16.mxu0 0
          %1782 = vmatpush1.bf16.msra.mxu0 %v1498
          %1783 = vmatprep.subr.bf16.mxu0 0
          %1784 = vmatpush1.bf16.msra.mxu0 %v1497
          %1785 = vmatprep.subr.bf16.mxu0 0
          %1786 = vmatpush1.bf16.msra.mxu0 %v1496
          %1787 = vmatprep.subr.bf16.mxu0 0
          %1788 = vmatpush1.bf16.msra.mxu0 %v1495
          %1789 = vmatprep.subr.bf16.mxu0 0
          %1790 = vmatpush2.bf16.msra.mxu0 0
          %1791 = vmatprep.subr.bf16.mxu0 0
          %1792 = vmatpush2.bf16.msra.mxu0 0
          %1793 = vmatprep.subr.bf16.mxu0 0
          %1794 = vmatpush2.bf16.msra.mxu0 0
          %1795 = vmatprep.subr.bf16.mxu0 0
          %1796 = vmatpush2.bf16.msra.mxu0 0
          %1797 = vmatprep.subr.bf16.mxu0 0
          %1798 = vmatpush2.bf16.msra.mxu0 0
          %1799 = vmatprep.subr.bf16.mxu0 0
          %1800 = vmatpush2.bf16.msra.mxu0 0
          %1801 = vmatprep.subr.bf16.mxu0 0
          %1802 = vmatpush2.bf16.msra.mxu0 0
          %1803 = vmatprep.subr.bf16.mxu0 0
          %1804 = vmatpush2.bf16.msra.mxu0 0
          %1805 = vmatprep.mubr.bf16.mxu0 0
          %1806 = vmatmul.mubr.bf16.gmra.mxu0 %v1537
          %v1807 = vpop.f32.mrf.mxu0
          %v1808 = vadd.f32 %v1703, %v1807
          %v1809 = vpop.f32.mrf.mxu0
          %v1810 = vpop.f32.mrf.mxu0
          %v1811 = vadd.f32 %v1706, %v1810
          %v1812 = vpop.f32.mrf.mxu0
          %1813 = vmatprep.mubr.bf16.mxu0 0
          %1814 = vmatmul.mubr.bf16.gmra.mxu0 %v1540
          %v1815 = vpop.f32.mrf.mxu0
          %v1816 = vadd.f32 %v1711, %v1815
          %v1817 = vpop.f32.mrf.mxu0
          %v1818 = vpop.f32.mrf.mxu0
          %v1819 = vadd.f32 %v1714, %v1818
          %v1820 = vpop.f32.mrf.mxu0
          %1821 = vmatprep.mubr.bf16.mxu0 0
          %1822 = vmatmul.mubr.bf16.gmra.mxu0 %v1543
          %v1823 = vpop.f32.mrf.mxu0
          %v1824 = vadd.f32 %v1719, %v1823
          %v1825 = vpop.f32.mrf.mxu0
          %v1826 = vpop.f32.mrf.mxu0
          %v1827 = vadd.f32 %v1722, %v1826
          %v1828 = vpop.f32.mrf.mxu0
          %1829 = vmatprep.mubr.bf16.mxu0 0
          %1830 = vmatmul.mubr.bf16.gmra.mxu0 %v1546
          %v1831 = vpop.f32.mrf.mxu0
          %v1832 = vadd.f32 %v1727, %v1831
          %v1833 = vpop.f32.mrf.mxu0
          %v1834 = vpop.f32.mrf.mxu0
          %v1835 = vadd.f32 %v1730, %v1834
          %v1836 = vpop.f32.mrf.mxu0
          %1837 = vmatprep.mubr.bf16.mxu0 0
          %1838 = vmatmul.mubr.bf16.gmra.mxu0 %v1549
          %v1839 = vpop.f32.mrf.mxu0
          %v1840 = vadd.f32 %v1735, %v1839
          %v1841 = vpop.f32.mrf.mxu0
          %v1842 = vpop.f32.mrf.mxu0
          %v1843 = vadd.f32 %v1738, %v1842
          %v1844 = vpop.f32.mrf.mxu0
          %1845 = vmatprep.mubr.bf16.mxu0 0
          %1846 = vmatmul.mubr.bf16.gmra.mxu0 %v1552
          %v1847 = vpop.f32.mrf.mxu0
          %v1848 = vadd.f32 %v1743, %v1847
          %v1849 = vpop.f32.mrf.mxu0
          %v1850 = vpop.f32.mrf.mxu0
          %v1851 = vadd.f32 %v1746, %v1850
          %v1852 = vpop.f32.mrf.mxu0
          %1853 = vmatprep.mubr.bf16.mxu0 0
          %1854 = vmatmul.mubr.bf16.gmra.mxu0 %v1555
          %v1855 = vpop.f32.mrf.mxu0
          %v1856 = vadd.f32 %v1751, %v1855
          %v1857 = vpop.f32.mrf.mxu0
          %v1858 = vpop.f32.mrf.mxu0
          %v1859 = vadd.f32 %v1754, %v1858
          %v1860 = vpop.f32.mrf.mxu0
          %1861 = vmatprep.mubr.bf16.mxu0 0
          %1862 = vmatmul.mubr.bf16.gmra.mxu0 %v1558
          %v1863 = vpop.f32.mrf.mxu0
          %v1864 = vadd.f32 %v1759, %v1863
          %v1865 = vpop.f32.mrf.mxu0
          %v1866 = vpop.f32.mrf.mxu0
          %v1867 = vadd.f32 %v1762, %v1866
          %v1868 = vpop.f32.mrf.mxu0
          %1869 = vmatprep.mubr.bf16.mxu0 0
          %1870 = vmatmul.mubr.bf16.gmra.mxu0 %v1561
          %v1871 = vpop.f32.mrf.mxu0
          %v1872 = vadd.f32 %v1767, %v1871
          %v1873 = vpop.f32.mrf.mxu0
          %v1874 = vpop.f32.mrf.mxu0
          %v1875 = vadd.f32 %v1770, %v1874
          %v1876 = vpop.f32.mrf.mxu0
          %1877 = vdwg.mxu0
          %v1878 = vpack.c.bf16 %v1811, %v1808
          %v1879 = vpack.c.bf16 %v1819, %v1816
          %v1880 = vpack.c.bf16 %v1827, %v1824
          %v1881 = vpack.c.bf16 %v1835, %v1832
          %v1882 = vpack.c.bf16 %v1843, %v1840
          %v1883 = vpack.c.bf16 %v1851, %v1848
          %v1884 = vpack.c.bf16 %v1859, %v1856
          %v1885 = vpack.c.bf16 %v1867, %v1864
          %v1886 = vpack.c.bf16 %v1875, %v1872
          %v1887 = vld [vmem:[#allocation9] sm:$0xff]
          %v1888 = vld [vmem:[#allocation9 + $0x8] sm:$0xff]
          %v1889 = vld [vmem:[#allocation9 + $0x10] sm:$0xff]
          %v1890 = vld [vmem:[#allocation9 + $0x18] sm:$0xff]
          %v1891 = vld [vmem:[#allocation9 + $0x20] sm:$0xff]
          %v1892 = vld [vmem:[#allocation9 + $0x28] sm:$0xff]
          %v1893 = vld [vmem:[#allocation9 + $0x30] sm:$0xff]
          %v1894 = vld [vmem:[#allocation9 + $0x38] sm:$0xff]
          %v1895 = vld [vmem:[#allocation9 + $0x40] sm:$0xff]
          %v1896 = vld [vmem:[#allocation9 + $0x48] sm:$0xff]
          %v1897 = vld [vmem:[#allocation9 + $0x50] sm:$0xff]
          %v1898 = vld [vmem:[#allocation9 + $0x58] sm:$0xff]
          %v1899 = vld [vmem:[#allocation9 + $0x60] sm:$0xff]
          %v1900 = vld [vmem:[#allocation9 + $0x68] sm:$0xff]
          %v1901 = vld [vmem:[#allocation9 + $0x70] sm:$0xff]
          %v1902 = vld [vmem:[#allocation9 + $0x78] sm:$0xff]
          %v1903 = vld [vmem:[#allocation9 + $0x80] sm:$0xff]
          %v1904 = vld [vmem:[#allocation9 + $0x88] sm:$0xff]
          %s1905 = smul.u32 %s1032, 16
          %s1906 = smul.addr %s1905, 4
          %s1907 = scalar_lea.vmem [#allocation10], %s1906
          %v1908 = vld [vmem:[%s1907] sm:$0xf]
          %v1909 = vld [vmem:[%s1907 + $0x4] sm:$0xf]
          %v1910 = vld [vmem:[%s1907 + $0x8] sm:$0xf]
          %v1911 = vld [vmem:[%s1907 + $0xc] sm:$0xf]
          %v1912 = vld [vmem:[%s1907 + $0x10] sm:$0xf]
          %v1913 = vld [vmem:[%s1907 + $0x14] sm:$0xf]
          %v1914 = vld [vmem:[%s1907 + $0x18] sm:$0xf]
          %v1915 = vld [vmem:[%s1907 + $0x1c] sm:$0xf]
          %v1916 = vld [vmem:[%s1907 + $0x20] sm:$0xf]
          %v1917 = vld [vmem:[%s1907 + $0x24] sm:$0xf]
          %v1918 = vld [vmem:[%s1907 + $0x28] sm:$0xf]
          %v1919 = vld [vmem:[%s1907 + $0x2c] sm:$0xf]
          %v1920 = vld [vmem:[%s1907 + $0x30] sm:$0xf]
          %v1921 = vld [vmem:[%s1907 + $0x34] sm:$0xf]
          %v1922 = vld [vmem:[%s1907 + $0x38] sm:$0xf]
          %v1923 = vld [vmem:[%s1907 + $0x3c] sm:$0xf]
          %v1940 = vunpack.c.l.b16 %v1908
          %v1941 = vunpack.c.l.b16 %v1909
          %v1942 = vunpack.c.l.b16 %v1910
          %v1943 = vunpack.c.l.b16 %v1911
          %v1944 = vunpack.c.l.b16 %v1912
          %v1945 = vunpack.c.l.b16 %v1913
          %v1946 = vunpack.c.l.b16 %v1914
          %v1947 = vunpack.c.l.b16 %v1915
          %v1948 = vunpack.c.l.b16 %v1916
          %v1949 = vunpack.c.l.b16 %v1917
          %v1950 = vunpack.c.l.b16 %v1918
          %v1951 = vunpack.c.l.b16 %v1919
          %v1952 = vunpack.c.l.b16 %v1920
          %v1953 = vunpack.c.l.b16 %v1921
          %v1954 = vunpack.c.l.b16 %v1922
          %v1955 = vunpack.c.l.b16 %v1923
          %v1956 = vpack.c.b16 %v1941, %v1940
          %v1957 = vpack.c.b16 %v1943, %v1942
          %v1958 = vpack.c.b16 %v1945, %v1944
          %v1959 = vpack.c.b16 %v1947, %v1946
          %v1960 = vpack.c.b16 %v1949, %v1948
          %v1961 = vpack.c.b16 %v1951, %v1950
          %v1962 = vpack.c.b16 %v1953, %v1952
          %v1963 = vpack.c.b16 %v1955, %v1954
          %1972 = vmatprep.subr.bf16.mxu0 0
          %1973 = vmatpush1.bf16.msra.mxu0 %v1963
          %1974 = vmatprep.subr.bf16.mxu0 0
          %1975 = vmatpush1.bf16.msra.mxu0 %v1962
          %1976 = vmatprep.subr.bf16.mxu0 0
          %1977 = vmatpush1.bf16.msra.mxu0 %v1961
          %1978 = vmatprep.subr.bf16.mxu0 0
          %1979 = vmatpush1.bf16.msra.mxu0 %v1960
          %1980 = vmatprep.subr.bf16.mxu0 0
          %1981 = vmatpush1.bf16.msra.mxu0 %v1959
          %1982 = vmatprep.subr.bf16.mxu0 0
          %1983 = vmatpush1.bf16.msra.mxu0 %v1958
          %1984 = vmatprep.subr.bf16.mxu0 0
          %1985 = vmatpush1.bf16.msra.mxu0 %v1957
          %1986 = vmatprep.subr.bf16.mxu0 0
          %1987 = vmatpush1.bf16.msra.mxu0 %v1956
          %1988 = vmatprep.subr.bf16.mxu0 0
          %1989 = vmatpush2.bf16.msra.mxu0 0
          %1990 = vmatprep.subr.bf16.mxu0 0
          %1991 = vmatpush2.bf16.msra.mxu0 0
          %1992 = vmatprep.subr.bf16.mxu0 0
          %1993 = vmatpush2.bf16.msra.mxu0 0
          %1994 = vmatprep.subr.bf16.mxu0 0
          %1995 = vmatpush2.bf16.msra.mxu0 0
          %1996 = vmatprep.subr.bf16.mxu0 0
          %1997 = vmatpush2.bf16.msra.mxu0 0
          %1998 = vmatprep.subr.bf16.mxu0 0
          %1999 = vmatpush2.bf16.msra.mxu0 0
          %2000 = vmatprep.subr.bf16.mxu0 0
          %2001 = vmatpush2.bf16.msra.mxu0 0
          %2002 = vmatprep.subr.bf16.mxu0 0
          %2003 = vmatpush2.bf16.msra.mxu0 0
          %2004 = vmatprep.mubr.bf16.mxu0 0
          %2005 = vmatmul.mubr.bf16.gmra.mxu0 %v1878
          %v2006 = vpop.f32.mrf.mxu0
          %v2007 = vadd.f32 0.0, %v2006
          %v2008 = vpop.f32.mrf.mxu0
          %v2009 = vpop.f32.mrf.mxu0
          %v2010 = vadd.f32 0.0, %v2009
          %v2011 = vpop.f32.mrf.mxu0
          %2012 = vmatprep.mubr.bf16.mxu0 0
          %2013 = vmatmul.mubr.bf16.gmra.mxu0 %v1879
          %v2014 = vpop.f32.mrf.mxu0
          %v2015 = vadd.f32 0.0, %v2014
          %v2016 = vpop.f32.mrf.mxu0
          %v2017 = vpop.f32.mrf.mxu0
          %v2018 = vadd.f32 0.0, %v2017
          %v2019 = vpop.f32.mrf.mxu0
          %2020 = vmatprep.mubr.bf16.mxu0 0
          %2021 = vmatmul.mubr.bf16.gmra.mxu0 %v1880
          %v2022 = vpop.f32.mrf.mxu0
          %v2023 = vadd.f32 0.0, %v2022
          %v2024 = vpop.f32.mrf.mxu0
          %v2025 = vpop.f32.mrf.mxu0
          %v2026 = vadd.f32 0.0, %v2025
          %v2027 = vpop.f32.mrf.mxu0
          %2028 = vmatprep.mubr.bf16.mxu0 0
          %2029 = vmatmul.mubr.bf16.gmra.mxu0 %v1881
          %v2030 = vpop.f32.mrf.mxu0
          %v2031 = vadd.f32 0.0, %v2030
          %v2032 = vpop.f32.mrf.mxu0
          %v2033 = vpop.f32.mrf.mxu0
          %v2034 = vadd.f32 0.0, %v2033
          %v2035 = vpop.f32.mrf.mxu0
          %2036 = vmatprep.mubr.bf16.mxu0 0
          %2037 = vmatmul.mubr.bf16.gmra.mxu0 %v1882
          %v2038 = vpop.f32.mrf.mxu0
          %v2039 = vadd.f32 0.0, %v2038
          %v2040 = vpop.f32.mrf.mxu0
          %v2041 = vpop.f32.mrf.mxu0
          %v2042 = vadd.f32 0.0, %v2041
          %v2043 = vpop.f32.mrf.mxu0
          %2044 = vmatprep.mubr.bf16.mxu0 0
          %2045 = vmatmul.mubr.bf16.gmra.mxu0 %v1883
          %v2046 = vpop.f32.mrf.mxu0
          %v2047 = vadd.f32 0.0, %v2046
          %v2048 = vpop.f32.mrf.mxu0
          %v2049 = vpop.f32.mrf.mxu0
          %v2050 = vadd.f32 0.0, %v2049
          %v2051 = vpop.f32.mrf.mxu0
          %2052 = vmatprep.mubr.bf16.mxu0 0
          %2053 = vmatmul.mubr.bf16.gmra.mxu0 %v1884
          %v2054 = vpop.f32.mrf.mxu0
          %v2055 = vadd.f32 0.0, %v2054
          %v2056 = vpop.f32.mrf.mxu0
          %v2057 = vpop.f32.mrf.mxu0
          %v2058 = vadd.f32 0.0, %v2057
          %v2059 = vpop.f32.mrf.mxu0
          %2060 = vmatprep.mubr.bf16.mxu0 0
          %2061 = vmatmul.mubr.bf16.gmra.mxu0 %v1885
          %v2062 = vpop.f32.mrf.mxu0
          %v2063 = vadd.f32 0.0, %v2062
          %v2064 = vpop.f32.mrf.mxu0
          %v2065 = vpop.f32.mrf.mxu0
          %v2066 = vadd.f32 0.0, %v2065
          %v2067 = vpop.f32.mrf.mxu0
          %2068 = vmatprep.mubr.bf16.mxu0 0
          %2069 = vmatmul.mubr.bf16.gmra.mxu0 %v1886
          %v2070 = vpop.f32.mrf.mxu0
          %v2071 = vadd.f32 0.0, %v2070
          %v2072 = vpop.f32.mrf.mxu0
          %v2073 = vpop.f32.mrf.mxu0
          %v2074 = vadd.f32 0.0, %v2073
          %v2075 = vpop.f32.mrf.mxu0
          %2076 = vdwg.mxu0
          %v2077 = vadd.f32 %v1887, %v2007
          %v2078 = vadd.f32 %v1888, %v2010
          %v2079 = vadd.f32 %v1889, %v2015
          %v2080 = vadd.f32 %v1890, %v2018
          %v2081 = vadd.f32 %v1891, %v2023
          %v2082 = vadd.f32 %v1892, %v2026
          %v2083 = vadd.f32 %v1893, %v2031
          %v2084 = vadd.f32 %v1894, %v2034
          %v2085 = vadd.f32 %v1895, %v2039
          %v2086 = vadd.f32 %v1896, %v2042
          %v2087 = vadd.f32 %v1897, %v2047
          %v2088 = vadd.f32 %v1898, %v2050
          %v2089 = vadd.f32 %v1899, %v2055
          %v2090 = vadd.f32 %v1900, %v2058
          %v2091 = vadd.f32 %v1901, %v2063
          %v2092 = vadd.f32 %v1902, %v2066
          %v2093 = vadd.f32 %v1903, %v2071
          %v2094 = vadd.f32 %v1904, %v2074
          %2095 = vst [vmem:[#allocation9] sm:$0xff] %v2077
          %2096 = vst [vmem:[#allocation9 + $0x8] sm:$0xff] %v2078
          %2097 = vst [vmem:[#allocation9 + $0x10] sm:$0xff] %v2079
          %2098 = vst [vmem:[#allocation9 + $0x18] sm:$0xff] %v2080
          %2099 = vst [vmem:[#allocation9 + $0x20] sm:$0xff] %v2081
          %2100 = vst [vmem:[#allocation9 + $0x28] sm:$0xff] %v2082
          %2101 = vst [vmem:[#allocation9 + $0x30] sm:$0xff] %v2083
          %2102 = vst [vmem:[#allocation9 + $0x38] sm:$0xff] %v2084
          %2103 = vst [vmem:[#allocation9 + $0x40] sm:$0xff] %v2085
          %2104 = vst [vmem:[#allocation9 + $0x48] sm:$0xff] %v2086
          %2105 = vst [vmem:[#allocation9 + $0x50] sm:$0xff] %v2087
          %2106 = vst [vmem:[#allocation9 + $0x58] sm:$0xff] %v2088
          %2107 = vst [vmem:[#allocation9 + $0x60] sm:$0xff] %v2089
          %2108 = vst [vmem:[#allocation9 + $0x68] sm:$0xff] %v2090
          %2109 = vst [vmem:[#allocation9 + $0x70] sm:$0xff] %v2091
          %2110 = vst [vmem:[#allocation9 + $0x78] sm:$0xff] %v2092
          %2111 = vst [vmem:[#allocation9 + $0x80] sm:$0xff] %v2093
          %2112 = vst [vmem:[#allocation9 + $0x88] sm:$0xff] %v2094
        $region173: #{forward.1} parent=119 // loop_footer
          %s1036 = sadd.s32 1, %s1032
        $region174: #{forward.1} parent=119 // loop_footer_branch
          %1031 = sbr.rel target = $region170
        $region175: #{forward.1} parent=119 // loop_exit
          _
        %v2113 = vld [vmem:[#allocation9] sm:$0xff]
        %v2114 = vld [vmem:[#allocation9 + $0x8] sm:$0xff]
        %v2115 = vld [vmem:[#allocation9 + $0x10] sm:$0xff]
        %v2116 = vld [vmem:[#allocation9 + $0x18] sm:$0xff]
        %v2117 = vld [vmem:[#allocation9 + $0x20] sm:$0xff]
        %v2118 = vld [vmem:[#allocation9 + $0x28] sm:$0xff]
        %v2119 = vld [vmem:[#allocation9 + $0x30] sm:$0xff]
        %v2120 = vld [vmem:[#allocation9 + $0x38] sm:$0xff]
        %v2121 = vld [vmem:[#allocation9 + $0x40] sm:$0xff]
        %v2122 = vld [vmem:[#allocation9 + $0x48] sm:$0xff]
        %v2123 = vld [vmem:[#allocation9 + $0x50] sm:$0xff]
        %v2124 = vld [vmem:[#allocation9 + $0x58] sm:$0xff]
        %v2125 = vld [vmem:[#allocation9 + $0x60] sm:$0xff]
        %v2126 = vld [vmem:[#allocation9 + $0x68] sm:$0xff]
        %v2127 = vld [vmem:[#allocation9 + $0x70] sm:$0xff]
        %v2128 = vld [vmem:[#allocation9 + $0x78] sm:$0xff]
        %v2129 = vld [vmem:[#allocation9 + $0x80] sm:$0xff]
        %v2130 = vld [vmem:[#allocation9 + $0x88] sm:$0xff]
        %v2131 = vld [vmem:[%s3] sm:$0x1]
        %v2133 = vlaneseq
        %v2134 = vshrl.u32 %v2133, 7
        %v2135 = vsub.s32 0, %v2134
        %v2136 = vrot.slane %v2131, %v2135
        %v2138 = vadd.f32 %v2113, %v2136
        %v2139 = vadd.f32 %v2114, %v2136
        %v2140 = vadd.f32 %v2115, %v2136
        %v2141 = vadd.f32 %v2116, %v2136
        %v2142 = vadd.f32 %v2117, %v2136
        %v2143 = vadd.f32 %v2118, %v2136
        %v2144 = vadd.f32 %v2119, %v2136
        %v2145 = vadd.f32 %v2120, %v2136
        %v2146 = vadd.f32 %v2121, %v2136
        %v2147 = vadd.f32 %v2122, %v2136
        %v2148 = vadd.f32 %v2123, %v2136
        %v2149 = vadd.f32 %v2124, %v2136
        %v2150 = vadd.f32 %v2125, %v2136
        %v2151 = vadd.f32 %v2126, %v2136
        %v2152 = vadd.f32 %v2127, %v2136
        %v2153 = vadd.f32 %v2128, %v2136
        %v2154 = vadd.f32 %v2129, %v2136
        %v2155 = vadd.f32 %v2130, %v2136
        %v2156 = vmax.f32 %v2138, 0.0
        %v2157 = vmax.f32 %v2139, 0.0
        %v2158 = vmax.f32 %v2140, 0.0
        %v2159 = vmax.f32 %v2141, 0.0
        %v2160 = vmax.f32 %v2142, 0.0
        %v2161 = vmax.f32 %v2143, 0.0
        %v2162 = vmax.f32 %v2144, 0.0
        %v2163 = vmax.f32 %v2145, 0.0
        %v2164 = vmax.f32 %v2146, 0.0
        %v2165 = vmax.f32 %v2147, 0.0
        %v2166 = vmax.f32 %v2148, 0.0
        %v2167 = vmax.f32 %v2149, 0.0
        %v2168 = vmax.f32 %v2150, 0.0
        %v2169 = vmax.f32 %v2151, 0.0
        %v2170 = vmax.f32 %v2152, 0.0
        %v2171 = vmax.f32 %v2153, 0.0
        %v2172 = vmax.f32 %v2154, 0.0
        %v2173 = vmax.f32 %v2155, 0.0
        %v2174 = vpack.c.bf16 %v2157, %v2156
        %v2175 = vpack.c.bf16 %v2159, %v2158
        %v2176 = vpack.c.bf16 %v2161, %v2160
        %v2177 = vpack.c.bf16 %v2163, %v2162
        %v2178 = vpack.c.bf16 %v2165, %v2164
        %v2179 = vpack.c.bf16 %v2167, %v2166
        %v2180 = vpack.c.bf16 %v2169, %v2168
        %v2181 = vpack.c.bf16 %v2171, %v2170
        %v2182 = vpack.c.bf16 %v2173, %v2172
        %v2192 = vunpack.c.l.b16 %v2174
        %v2193 = vunpack.c.h.b16 %v2174
        %v2194 = vunpack.c.l.b16 %v2175
        %v2195 = vunpack.c.h.b16 %v2175
        %v2196 = vunpack.c.l.b16 %v2176
        %v2197 = vunpack.c.h.b16 %v2176
        %v2198 = vunpack.c.l.b16 %v2177
        %v2199 = vunpack.c.h.b16 %v2177
        %v2200 = vunpack.c.l.b16 %v2178
        %v2201 = vunpack.c.h.b16 %v2178
        %v2202 = vunpack.c.l.b16 %v2179
        %v2203 = vunpack.c.h.b16 %v2179
        %v2204 = vunpack.c.l.b16 %v2180
        %v2205 = vunpack.c.h.b16 %v2180
        %v2206 = vunpack.c.l.b16 %v2181
        %v2207 = vunpack.c.h.b16 %v2181
        %v2208 = vunpack.c.l.b16 %v2182
        %v2209 = vunpack.c.h.b16 %v2182
        %v2210 = vpack.c.b16 %v2192, %v2192
        %v2211 = vpack.c.b16 %v2193, %v2193
        %v2212 = vpack.c.b16 %v2194, %v2194
        %v2213 = vpack.c.b16 %v2195, %v2195
        %v2214 = vpack.c.b16 %v2196, %v2196
        %v2215 = vpack.c.b16 %v2197, %v2197
        %v2216 = vpack.c.b16 %v2198, %v2198
        %v2217 = vpack.c.b16 %v2199, %v2199
        %v2218 = vpack.c.b16 %v2200, %v2200
        %v2219 = vpack.c.b16 %v2201, %v2201
        %v2220 = vpack.c.b16 %v2202, %v2202
        %v2221 = vpack.c.b16 %v2203, %v2203
        %v2222 = vpack.c.b16 %v2204, %v2204
        %v2223 = vpack.c.b16 %v2205, %v2205
        %v2224 = vpack.c.b16 %v2206, %v2206
        %v2225 = vpack.c.b16 %v2207, %v2207
        %v2226 = vpack.c.b16 %v2208, %v2208
        %v2227 = vpack.c.b16 %v2209, %v2209
        %2246 = vst [vmem:[#allocation2] sm:$0xf] %v2210
        %2247 = vst [vmem:[#allocation2 + $0x4] sm:$0xf] %v2211
        %2248 = vst [vmem:[#allocation2 + $0x8] sm:$0xf] %v2212
        %2249 = vst [vmem:[#allocation2 + $0xc] sm:$0xf] %v2213
        %2250 = vst [vmem:[#allocation2 + $0x10] sm:$0xf] %v2214
        %2251 = vst [vmem:[#allocation2 + $0x14] sm:$0xf] %v2215
        %2252 = vst [vmem:[#allocation2 + $0x18] sm:$0xf] %v2216
        %2253 = vst [vmem:[#allocation2 + $0x1c] sm:$0xf] %v2217
        %2254 = vst [vmem:[#allocation2 + $0x20] sm:$0xf] %v2218
        %2255 = vst [vmem:[#allocation2 + $0x24] sm:$0xf] %v2219
        %2256 = vst [vmem:[#allocation2 + $0x28] sm:$0xf] %v2220
        %2257 = vst [vmem:[#allocation2 + $0x2c] sm:$0xf] %v2221
        %2258 = vst [vmem:[#allocation2 + $0x30] sm:$0xf] %v2222
        %2259 = vst [vmem:[#allocation2 + $0x34] sm:$0xf] %v2223
        %2260 = vst [vmem:[#allocation2 + $0x38] sm:$0xf] %v2224
        %2261 = vst [vmem:[#allocation2 + $0x3c] sm:$0xf] %v2225
        %2262 = vst [vmem:[#allocation2 + $0x40] sm:$0xf] %v2226
        %2263 = vst [vmem:[#allocation2 + $0x44] sm:$0xf] %v2227
        %v2264 = vld [vmem:[#allocation2] sm:$0xf]
        %v2265 = vld [vmem:[#allocation2 + $0x4] sm:$0xf]
        %v2266 = vld [vmem:[#allocation2 + $0x8] sm:$0xf]
        %v2267 = vld [vmem:[#allocation2 + $0xc] sm:$0xf]
        %v2268 = vld [vmem:[#allocation2 + $0x10] sm:$0xf]
        %v2269 = vld [vmem:[#allocation2 + $0x14] sm:$0xf]
        %v2270 = vld [vmem:[#allocation2 + $0x18] sm:$0xf]
        %v2271 = vld [vmem:[#allocation2 + $0x1c] sm:$0xf]
        %v2272 = vld [vmem:[#allocation2 + $0x20] sm:$0xf]
        %v2273 = vld [vmem:[#allocation2 + $0x24] sm:$0xf]
        %v2274 = vld [vmem:[#allocation2 + $0x28] sm:$0xf]
        %v2275 = vld [vmem:[#allocation2 + $0x2c] sm:$0xf]
        %v2276 = vld [vmem:[#allocation2 + $0x30] sm:$0xf]
        %v2277 = vld [vmem:[#allocation2 + $0x34] sm:$0xf]
        %v2278 = vld [vmem:[#allocation2 + $0x38] sm:$0xf]
        %v2279 = vld [vmem:[#allocation2 + $0x3c] sm:$0xf]
        %v2280 = vld [vmem:[#allocation2 + $0x40] sm:$0xf]
        %v2281 = vld [vmem:[#allocation2 + $0x44] sm:$0xf]
        %2282 = vst [vmem:[#allocation9] sm:$0xff] 0.0
        %2283 = vst [vmem:[#allocation9 + $0x8] sm:$0xff] 0.0
        %2284 = vst [vmem:[#allocation9 + $0x10] sm:$0xff] 0.0
        %2285 = vst [vmem:[#allocation9 + $0x18] sm:$0xff] 0.0
        %2286 = vst [vmem:[#allocation9 + $0x20] sm:$0xff] 0.0
        loop: start=0, step=1, limit=9
        $region176: #{forward.1} parent=119 // loop_pre_header
          _
        $region177: #{forward.1} parent=119 // loop_header
          %s2288 = sphi 0, %s2292
          %p2289 = scmp.ge.s32.totalorder %s2288, 9
        $region178: #{forward.1} parent=119 // loop_header_branch
          %2291 = sbr.rel (%p2289) target = $region182
        $region179: #{forward.1} parent=119 // loop_body
          %s2293 = smul.u32 %s2288, 10
          %s2294 = smul.addr %s2293, 4
          %s2295 = scalar_lea.vmem [#allocation12], %s2294
          %v2296 = vld [vmem:[%s2295] sm:$0xff]
          %v2297 = vld [vmem:[%s2295 + $0x8] sm:$0xff]
          %v2298 = vld [vmem:[%s2295 + $0x10] sm:$0xff]
          %v2299 = vld [vmem:[%s2295 + $0x18] sm:$0xff]
          %v2300 = vld [vmem:[%s2295 + $0x20] sm:$0xff]
          %v2306 = vunpack.c.l.b16 %v2296
          %v2307 = vunpack.c.h.b16 %v2296
          %v2308 = vunpack.c.l.b16 %v2297
          %v2309 = vunpack.c.h.b16 %v2297
          %v2310 = vunpack.c.l.b16 %v2298
          %v2311 = vunpack.c.h.b16 %v2298
          %v2312 = vunpack.c.l.b16 %v2299
          %v2313 = vunpack.c.h.b16 %v2299
          %v2314 = vunpack.c.l.b16 %v2300
          %v2315 = vunpack.c.h.b16 %v2300
          %v2316 = vpack.c.b16 %v2308, %v2306
          %v2317 = vpack.c.b16 %v2309, %v2307
          %v2318 = vpack.c.b16 %v2312, %v2310
          %v2319 = vpack.c.b16 %v2313, %v2311
          %v2320 = vpack.c.b16 %v2314, %v2314
          %v2321 = vpack.c.b16 %v2315, %v2315
          %v2343 = vunpack.c.l.b16 %v2264
          %v2344 = vunpack.c.l.b16 %v2265
          %v2345 = vunpack.c.l.b16 %v2266
          %v2346 = vunpack.c.l.b16 %v2267
          %v2347 = vunpack.c.l.b16 %v2268
          %v2348 = vunpack.c.l.b16 %v2269
          %v2349 = vunpack.c.l.b16 %v2270
          %v2350 = vunpack.c.l.b16 %v2271
          %v2351 = vunpack.c.l.b16 %v2272
          %v2352 = vunpack.c.l.b16 %v2273
          %v2353 = vunpack.c.l.b16 %v2274
          %v2354 = vunpack.c.l.b16 %v2275
          %v2355 = vunpack.c.l.b16 %v2276
          %v2356 = vunpack.c.l.b16 %v2277
          %v2357 = vunpack.c.l.b16 %v2278
          %v2358 = vunpack.c.l.b16 %v2279
          %v2359 = vunpack.c.l.b16 %v2280
          %v2360 = vunpack.c.l.b16 %v2281
          %v2361 = vpack.c.b16 %v2344, %v2343
          %v2362 = vpack.c.b16 %v2346, %v2345
          %v2363 = vpack.c.b16 %v2348, %v2347
          %v2364 = vpack.c.b16 %v2350, %v2349
          %v2365 = vpack.c.b16 %v2352, %v2351
          %v2366 = vpack.c.b16 %v2354, %v2353
          %v2367 = vpack.c.b16 %v2356, %v2355
          %v2368 = vpack.c.b16 %v2358, %v2357
          %v2369 = vpack.c.b16 %v2360, %v2359
          %vm2379 = vcmask 130048
          %v2381 = vsel %vm2379, %v2317, 0
          %v2384 = vsel %vm2379, %v2319, 0
          %v2387 = vsel %vm2379, %v2321, 0
          %2389 = vmatprep.subr.bf16.mxu0 0
          %2390 = vmatpush1.bf16.msra.mxu0 %v2368
          %2391 = vmatprep.subr.bf16.mxu0 0
          %2392 = vmatpush1.bf16.msra.mxu0 %v2367
          %2393 = vmatprep.subr.bf16.mxu0 0
          %2394 = vmatpush1.bf16.msra.mxu0 %v2366
          %2395 = vmatprep.subr.bf16.mxu0 0
          %2396 = vmatpush1.bf16.msra.mxu0 %v2365
          %2397 = vmatprep.subr.bf16.mxu0 0
          %2398 = vmatpush1.bf16.msra.mxu0 %v2364
          %2399 = vmatprep.subr.bf16.mxu0 0
          %2400 = vmatpush1.bf16.msra.mxu0 %v2363
          %2401 = vmatprep.subr.bf16.mxu0 0
          %2402 = vmatpush1.bf16.msra.mxu0 %v2362
          %2403 = vmatprep.subr.bf16.mxu0 0
          %2404 = vmatpush1.bf16.msra.mxu0 %v2361
          %2405 = vmatprep.subr.bf16.mxu0 0
          %2406 = vmatpush2.bf16.msra.mxu0 0
          %2407 = vmatprep.subr.bf16.mxu0 0
          %2408 = vmatpush2.bf16.msra.mxu0 0
          %2409 = vmatprep.subr.bf16.mxu0 0
          %2410 = vmatpush2.bf16.msra.mxu0 0
          %2411 = vmatprep.subr.bf16.mxu0 0
          %2412 = vmatpush2.bf16.msra.mxu0 0
          %2413 = vmatprep.subr.bf16.mxu0 0
          %2414 = vmatpush2.bf16.msra.mxu0 0
          %2415 = vmatprep.subr.bf16.mxu0 0
          %2416 = vmatpush2.bf16.msra.mxu0 0
          %2417 = vmatprep.subr.bf16.mxu0 0
          %2418 = vmatpush2.bf16.msra.mxu0 0
          %2419 = vmatprep.subr.bf16.mxu0 0
          %2420 = vmatpush2.bf16.msra.mxu0 %v2369
          %2421 = vmatprep.mubr.bf16.mxu0 %v2381
          %2422 = vmatmul.mubr.bf16.gmra.mxu0 %v2316
          %v2423 = vpop.f32.mrf.mxu0
          %v2424 = vadd.f32 0.0, %v2423
          %v2425 = vpop.f32.mrf.mxu0
          %v2426 = vpop.f32.mrf.mxu0
          %v2427 = vadd.f32 0.0, %v2426
          %v2428 = vpop.f32.mrf.mxu0
          %2429 = vmatprep.mubr.bf16.mxu0 %v2384
          %2430 = vmatmul.mubr.bf16.gmra.mxu0 %v2318
          %v2431 = vpop.f32.mrf.mxu0
          %v2432 = vadd.f32 0.0, %v2431
          %v2433 = vpop.f32.mrf.mxu0
          %v2434 = vpop.f32.mrf.mxu0
          %v2435 = vadd.f32 0.0, %v2434
          %v2436 = vpop.f32.mrf.mxu0
          %2437 = vmatprep.mubr.bf16.mxu0 %v2387
          %2438 = vmatmul.mubr.bf16.gmra.mxu0 %v2320
          %v2439 = vpop.f32.mrf.mxu0
          %v2440 = vadd.f32 0.0, %v2439
          %v2441 = vpop.f32.mrf.mxu0
          %v2442 = vpop.f32.mrf.mxu0
          %v2443 = vpop.f32.mrf.mxu0
          %2444 = vdwg.mxu0
          %v2445 = vpack.c.bf16 %v2427, %v2424
          %v2446 = vpack.c.bf16 %v2435, %v2432
          %v2447 = vpack.c.bf16 %v2440, %v2440
          %v2448 = vld [vmem:[#allocation9] sm:$0xff]
          %v2449 = vld [vmem:[#allocation9 + $0x8] sm:$0xff]
          %v2450 = vld [vmem:[#allocation9 + $0x10] sm:$0xff]
          %v2451 = vld [vmem:[#allocation9 + $0x18] sm:$0xff]
          %v2452 = vld [vmem:[#allocation9 + $0x20] sm:$0xff]
          %s2453 = smul.u32 %s2288, 16
          %s2454 = smul.addr %s2453, 4
          %s2455 = scalar_lea.vmem [#allocation14], %s2454
          %v2456 = vld [vmem:[%s2455] sm:$0xf]
          %v2457 = vld [vmem:[%s2455 + $0x4] sm:$0xf]
          %v2458 = vld [vmem:[%s2455 + $0x8] sm:$0xf]
          %v2459 = vld [vmem:[%s2455 + $0xc] sm:$0xf]
          %v2460 = vld [vmem:[%s2455 + $0x10] sm:$0xf]
          %v2461 = vld [vmem:[%s2455 + $0x14] sm:$0xf]
          %v2462 = vld [vmem:[%s2455 + $0x18] sm:$0xf]
          %v2463 = vld [vmem:[%s2455 + $0x1c] sm:$0xf]
          %v2464 = vld [vmem:[%s2455 + $0x20] sm:$0xf]
          %v2465 = vld [vmem:[%s2455 + $0x24] sm:$0xf]
          %v2466 = vld [vmem:[%s2455 + $0x28] sm:$0xf]
          %v2467 = vld [vmem:[%s2455 + $0x2c] sm:$0xf]
          %v2468 = vld [vmem:[%s2455 + $0x30] sm:$0xf]
          %v2469 = vld [vmem:[%s2455 + $0x34] sm:$0xf]
          %v2470 = vld [vmem:[%s2455 + $0x38] sm:$0xf]
          %v2471 = vld [vmem:[%s2455 + $0x3c] sm:$0xf]
          %v2488 = vunpack.c.l.b16 %v2456
          %v2489 = vunpack.c.l.b16 %v2457
          %v2490 = vunpack.c.l.b16 %v2458
          %v2491 = vunpack.c.l.b16 %v2459
          %v2492 = vunpack.c.l.b16 %v2460
          %v2493 = vunpack.c.l.b16 %v2461
          %v2494 = vunpack.c.l.b16 %v2462
          %v2495 = vunpack.c.l.b16 %v2463
          %v2496 = vunpack.c.l.b16 %v2464
          %v2497 = vunpack.c.l.b16 %v2465
          %v2498 = vunpack.c.l.b16 %v2466
          %v2499 = vunpack.c.l.b16 %v2467
          %v2500 = vunpack.c.l.b16 %v2468
          %v2501 = vunpack.c.l.b16 %v2469
          %v2502 = vunpack.c.l.b16 %v2470
          %v2503 = vunpack.c.l.b16 %v2471
          %v2504 = vpack.c.b16 %v2489, %v2488
          %v2505 = vpack.c.b16 %v2491, %v2490
          %v2506 = vpack.c.b16 %v2493, %v2492
          %v2507 = vpack.c.b16 %v2495, %v2494
          %v2508 = vpack.c.b16 %v2497, %v2496
          %v2509 = vpack.c.b16 %v2499, %v2498
          %v2510 = vpack.c.b16 %v2501, %v2500
          %v2511 = vpack.c.b16 %v2503, %v2502
          %2520 = vmatprep.subr.bf16.mxu0 0
          %2521 = vmatpush1.bf16.msra.mxu0 %v2511
          %2522 = vmatprep.subr.bf16.mxu0 0
          %2523 = vmatpush1.bf16.msra.mxu0 %v2510
          %2524 = vmatprep.subr.bf16.mxu0 0
          %2525 = vmatpush1.bf16.msra.mxu0 %v2509
          %2526 = vmatprep.subr.bf16.mxu0 0
          %2527 = vmatpush1.bf16.msra.mxu0 %v2508
          %2528 = vmatprep.subr.bf16.mxu0 0
          %2529 = vmatpush1.bf16.msra.mxu0 %v2507
          %2530 = vmatprep.subr.bf16.mxu0 0
          %2531 = vmatpush1.bf16.msra.mxu0 %v2506
          %2532 = vmatprep.subr.bf16.mxu0 0
          %2533 = vmatpush1.bf16.msra.mxu0 %v2505
          %2534 = vmatprep.subr.bf16.mxu0 0
          %2535 = vmatpush1.bf16.msra.mxu0 %v2504
          %2536 = vmatprep.subr.bf16.mxu0 0
          %2537 = vmatpush2.bf16.msra.mxu0 0
          %2538 = vmatprep.subr.bf16.mxu0 0
          %2539 = vmatpush2.bf16.msra.mxu0 0
          %2540 = vmatprep.subr.bf16.mxu0 0
          %2541 = vmatpush2.bf16.msra.mxu0 0
          %2542 = vmatprep.subr.bf16.mxu0 0
          %2543 = vmatpush2.bf16.msra.mxu0 0
          %2544 = vmatprep.subr.bf16.mxu0 0
          %2545 = vmatpush2.bf16.msra.mxu0 0
          %2546 = vmatprep.subr.bf16.mxu0 0
          %2547 = vmatpush2.bf16.msra.mxu0 0
          %2548 = vmatprep.subr.bf16.mxu0 0
          %2549 = vmatpush2.bf16.msra.mxu0 0
          %2550 = vmatprep.subr.bf16.mxu0 0
          %2551 = vmatpush2.bf16.msra.mxu0 0
          %2552 = vmatprep.mubr.bf16.mxu0 0
          %2553 = vmatmul.mubr.bf16.gmra.mxu0 %v2445
          %v2554 = vpop.f32.mrf.mxu0
          %v2555 = vadd.f32 0.0, %v2554
          %v2556 = vpop.f32.mrf.mxu0
          %v2557 = vpop.f32.mrf.mxu0
          %v2558 = vadd.f32 0.0, %v2557
          %v2559 = vpop.f32.mrf.mxu0
          %2560 = vmatprep.mubr.bf16.mxu0 0
          %2561 = vmatmul.mubr.bf16.gmra.mxu0 %v2446
          %v2562 = vpop.f32.mrf.mxu0
          %v2563 = vadd.f32 0.0, %v2562
          %v2564 = vpop.f32.mrf.mxu0
          %v2565 = vpop.f32.mrf.mxu0
          %v2566 = vadd.f32 0.0, %v2565
          %v2567 = vpop.f32.mrf.mxu0
          %2568 = vmatprep.mubr.bf16.mxu0 0
          %2569 = vmatmul.mubr.bf16.gmra.mxu0 %v2447
          %v2570 = vpop.f32.mrf.mxu0
          %v2571 = vadd.f32 0.0, %v2570
          %v2572 = vpop.f32.mrf.mxu0
          %v2573 = vpop.f32.mrf.mxu0
          %v2574 = vpop.f32.mrf.mxu0
          %2575 = vdwg.mxu0
          %v2576 = vadd.f32 %v2448, %v2555
          %v2577 = vadd.f32 %v2449, %v2558
          %v2578 = vadd.f32 %v2450, %v2563
          %v2579 = vadd.f32 %v2451, %v2566
          %v2580 = vadd.f32 %v2452, %v2571
          %2581 = vst [vmem:[#allocation9] sm:$0xff] %v2576
          %2582 = vst [vmem:[#allocation9 + $0x8] sm:$0xff] %v2577
          %2583 = vst [vmem:[#allocation9 + $0x10] sm:$0xff] %v2578
          %2584 = vst [vmem:[#allocation9 + $0x18] sm:$0xff] %v2579
          %2585 = vst [vmem:[#allocation9 + $0x20] sm:$0xff] %v2580
        $region180: #{forward.1} parent=119 // loop_footer
          %s2292 = sadd.s32 1, %s2288
        $region181: #{forward.1} parent=119 // loop_footer_branch
          %2287 = sbr.rel target = $region177
        $region182: #{forward.1} parent=119 // loop_exit
          _
        %v2586 = vld [vmem:[#allocation9] sm:$0xff]
        %v2587 = vld [vmem:[#allocation9 + $0x8] sm:$0xff]
        %v2588 = vld [vmem:[#allocation9 + $0x10] sm:$0xff]
        %v2589 = vld [vmem:[#allocation9 + $0x18] sm:$0xff]
        %v2590 = vld [vmem:[#allocation9 + $0x20] sm:$0xff]
        %v2591 = vld [vmem:[%s6] sm:$0x1]
        %v2593 = vlaneseq
        %v2594 = vshrl.u32 %v2593, 7
        %v2595 = vsub.s32 0, %v2594
        %v2596 = vrot.slane %v2591, %v2595
        %v2598 = vadd.f32 %v2586, %v2596
        %v2599 = vadd.f32 %v2587, %v2596
        %v2600 = vadd.f32 %v2588, %v2596
        %v2601 = vadd.f32 %v2589, %v2596
        %v2602 = vadd.f32 %v2590, %v2596
        %v2603 = vmax.f32 %v2598, 0.0
        %v2604 = vmax.f32 %v2599, 0.0
        %v2605 = vmax.f32 %v2600, 0.0
        %v2606 = vmax.f32 %v2601, 0.0
        %v2607 = vmax.f32 %v2602, 0.0
        %v2608 = vpack.c.bf16 %v2604, %v2603
        %v2609 = vpack.c.bf16 %v2606, %v2605
        %v2610 = vpack.c.bf16 %v2607, %v2607
        %v2614 = vunpack.c.l.b16 %v2608
        %v2615 = vunpack.c.h.b16 %v2608
        %v2616 = vunpack.c.l.b16 %v2609
        %v2617 = vunpack.c.h.b16 %v2609
        %v2618 = vunpack.c.l.b16 %v2610
        %v2619 = vpack.c.b16 %v2614, %v2614
        %v2620 = vpack.c.b16 %v2615, %v2615
        %v2621 = vpack.c.b16 %v2616, %v2616
        %v2622 = vpack.c.b16 %v2617, %v2617
        %v2623 = vpack.c.b16 %v2618, %v2618
        %2629 = vst [vmem:[#allocation3] sm:$0xf] %v2619
        %2630 = vst [vmem:[#allocation3 + $0x4] sm:$0xf] %v2620
        %2631 = vst [vmem:[#allocation3 + $0x8] sm:$0xf] %v2621
        %2632 = vst [vmem:[#allocation3 + $0xc] sm:$0xf] %v2622
        %2633 = vst [vmem:[#allocation3 + $0x10] sm:$0xf] %v2623
        %v2634 = vld [vmem:[#allocation3] sm:$0xf]
        %v2635 = vld [vmem:[#allocation3 + $0x4] sm:$0xf]
        %v2636 = vld [vmem:[#allocation3 + $0x8] sm:$0xf]
        %v2637 = vld [vmem:[#allocation3 + $0xc] sm:$0xf]
        %v2638 = vld [vmem:[#allocation3 + $0x10] sm:$0xf]
        %2639 = vst [vmem:[#allocation9] sm:$0xff] 0.0
        %2640 = vst [vmem:[#allocation9 + $0x8] sm:$0xff] 0.0
        loop: start=0, step=1, limit=9
        $region183: #{forward.1} parent=119 // loop_pre_header
          _
        $region184: #{forward.1} parent=119 // loop_header
          %s2642 = sphi 0, %s2646
          %p2643 = scmp.ge.s32.totalorder %s2642, 9
        $region185: #{forward.1} parent=119 // loop_header_branch
          %2645 = sbr.rel (%p2643) target = $region189
        $region186: #{forward.1} parent=119 // loop_body
          %s2647 = smul.u32 %s2642, 2
          %s2648 = smul.addr %s2647, 4
          %s2649 = scalar_lea.vmem %s7, %s2648
          %v2650 = vld [vmem:[%s2649] sm:$0xf]
          %v2651 = vld [vmem:[%s2649 + $0x4] sm:$0xf]
          %v2654 = vunpack.c.l.b16 %v2650
          %v2655 = vunpack.c.l.b16 %v2651
          %v2656 = vpack.c.b16 %v2655, %v2654
          %v2662 = vunpack.c.l.b16 %v2634
          %v2663 = vunpack.c.l.b16 %v2635
          %v2664 = vunpack.c.l.b16 %v2636
          %v2665 = vunpack.c.l.b16 %v2637
          %v2666 = vunpack.c.l.b16 %v2638
          %v2667 = vpack.c.b16 %v2663, %v2662
          %v2668 = vpack.c.b16 %v2665, %v2664
          %v2669 = vpack.c.b16 %v2666, %v2666
          %vm2672 = vcmask 326656
          %v2674 = vsel %vm2672, %v2656, 0
          %vm2676 = vcmask 1043456
          %v2678 = vsel %vm2676, %v2669, 0
          %2680 = vmatprep.subr.bf16.mxu0 0
          %2681 = vmatpush1.bf16.msra.mxu0 0
          %2682 = vmatprep.subr.bf16.mxu0 0
          %2683 = vmatpush1.bf16.msra.mxu0 0
          %2684 = vmatprep.subr.bf16.mxu0 0
          %2685 = vmatpush1.bf16.msra.mxu0 0
          %2686 = vmatprep.subr.bf16.mxu0 0
          %2687 = vmatpush1.bf16.msra.mxu0 0
          %2688 = vmatprep.subr.bf16.mxu0 0
          %2689 = vmatpush1.bf16.msra.mxu0 0
          %2690 = vmatprep.subr.bf16.mxu0 0
          %2691 = vmatpush1.bf16.msra.mxu0 %v2678
          %2692 = vmatprep.subr.bf16.mxu0 0
          %2693 = vmatpush1.bf16.msra.mxu0 %v2668
          %2694 = vmatprep.subr.bf16.mxu0 0
          %2695 = vmatpush1.bf16.msra.mxu0 %v2667
          %2696 = vmatprep.subr.bf16.mxu0 0
          %2697 = vmatpush2.bf16.msra.mxu0 0
          %2698 = vmatprep.subr.bf16.mxu0 0
          %2699 = vmatpush2.bf16.msra.mxu0 0
          %2700 = vmatprep.subr.bf16.mxu0 0
          %2701 = vmatpush2.bf16.msra.mxu0 0
          %2702 = vmatprep.subr.bf16.mxu0 0
          %2703 = vmatpush2.bf16.msra.mxu0 0
          %2704 = vmatprep.subr.bf16.mxu0 0
          %2705 = vmatpush2.bf16.msra.mxu0 0
          %2706 = vmatprep.subr.bf16.mxu0 0
          %2707 = vmatpush2.bf16.msra.mxu0 0
          %2708 = vmatprep.subr.bf16.mxu0 0
          %2709 = vmatpush2.bf16.msra.mxu0 0
          %2710 = vmatprep.subr.bf16.mxu0 0
          %2711 = vmatpush2.bf16.msra.mxu0 0
          %2712 = vmatprep.mubr.bf16.mxu0 0
          %2713 = vmatmul.mubr.bf16.gmra.mxu0 %v2674
          %v2714 = vpop.f32.mrf.mxu0
          %v2715 = vadd.f32 0.0, %v2714
          %v2716 = vpop.f32.mrf.mxu0
          %v2717 = vpop.f32.mrf.mxu0
          %v2718 = vadd.f32 0.0, %v2717
          %v2719 = vpop.f32.mrf.mxu0
          %2720 = vdwg.mxu0
          %v2721 = vpack.c.bf16 %v2718, %v2715
          %v2722 = vld [vmem:[#allocation9] sm:$0xff]
          %v2723 = vld [vmem:[#allocation9 + $0x8] sm:$0xff]
          %s2724 = smul.u32 %s2642, 16
          %s2725 = smul.addr %s2724, 4
          %s2726 = scalar_lea.vmem [#allocation15], %s2725
          %v2727 = vld [vmem:[%s2726] sm:$0xf]
          %v2728 = vld [vmem:[%s2726 + $0x4] sm:$0xf]
          %v2729 = vld [vmem:[%s2726 + $0x8] sm:$0xf]
          %v2730 = vld [vmem:[%s2726 + $0xc] sm:$0xf]
          %v2731 = vld [vmem:[%s2726 + $0x10] sm:$0xf]
          %v2732 = vld [vmem:[%s2726 + $0x14] sm:$0xf]
          %v2733 = vld [vmem:[%s2726 + $0x18] sm:$0xf]
          %v2734 = vld [vmem:[%s2726 + $0x1c] sm:$0xf]
          %v2735 = vld [vmem:[%s2726 + $0x20] sm:$0xf]
          %v2736 = vld [vmem:[%s2726 + $0x24] sm:$0xf]
          %v2737 = vld [vmem:[%s2726 + $0x28] sm:$0xf]
          %v2738 = vld [vmem:[%s2726 + $0x2c] sm:$0xf]
          %v2739 = vld [vmem:[%s2726 + $0x30] sm:$0xf]
          %v2740 = vld [vmem:[%s2726 + $0x34] sm:$0xf]
          %v2741 = vld [vmem:[%s2726 + $0x38] sm:$0xf]
          %v2742 = vld [vmem:[%s2726 + $0x3c] sm:$0xf]
          %v2759 = vunpack.c.l.b16 %v2727
          %v2760 = vunpack.c.l.b16 %v2728
          %v2761 = vunpack.c.l.b16 %v2729
          %v2762 = vunpack.c.l.b16 %v2730
          %v2763 = vunpack.c.l.b16 %v2731
          %v2764 = vunpack.c.l.b16 %v2732
          %v2765 = vunpack.c.l.b16 %v2733
          %v2766 = vunpack.c.l.b16 %v2734
          %v2767 = vunpack.c.l.b16 %v2735
          %v2768 = vunpack.c.l.b16 %v2736
          %v2769 = vunpack.c.l.b16 %v2737
          %v2770 = vunpack.c.l.b16 %v2738
          %v2771 = vunpack.c.l.b16 %v2739
          %v2772 = vunpack.c.l.b16 %v2740
          %v2773 = vunpack.c.l.b16 %v2741
          %v2774 = vunpack.c.l.b16 %v2742
          %v2775 = vpack.c.b16 %v2760, %v2759
          %v2776 = vpack.c.b16 %v2762, %v2761
          %v2777 = vpack.c.b16 %v2764, %v2763
          %v2778 = vpack.c.b16 %v2766, %v2765
          %v2779 = vpack.c.b16 %v2768, %v2767
          %v2780 = vpack.c.b16 %v2770, %v2769
          %v2781 = vpack.c.b16 %v2772, %v2771
          %v2782 = vpack.c.b16 %v2774, %v2773
          %2791 = vmatprep.subr.bf16.mxu0 0
          %2792 = vmatpush1.bf16.msra.mxu0 %v2782
          %2793 = vmatprep.subr.bf16.mxu0 0
          %2794 = vmatpush1.bf16.msra.mxu0 %v2781
          %2795 = vmatprep.subr.bf16.mxu0 0
          %2796 = vmatpush1.bf16.msra.mxu0 %v2780
          %2797 = vmatprep.subr.bf16.mxu0 0
          %2798 = vmatpush1.bf16.msra.mxu0 %v2779
          %2799 = vmatprep.subr.bf16.mxu0 0
          %2800 = vmatpush1.bf16.msra.mxu0 %v2778
          %2801 = vmatprep.subr.bf16.mxu0 0
          %2802 = vmatpush1.bf16.msra.mxu0 %v2777
          %2803 = vmatprep.subr.bf16.mxu0 0
          %2804 = vmatpush1.bf16.msra.mxu0 %v2776
          %2805 = vmatprep.subr.bf16.mxu0 0
          %2806 = vmatpush1.bf16.msra.mxu0 %v2775
          %2807 = vmatprep.subr.bf16.mxu0 0
          %2808 = vmatpush2.bf16.msra.mxu0 0
          %2809 = vmatprep.subr.bf16.mxu0 0
          %2810 = vmatpush2.bf16.msra.mxu0 0
          %2811 = vmatprep.subr.bf16.mxu0 0
          %2812 = vmatpush2.bf16.msra.mxu0 0
          %2813 = vmatprep.subr.bf16.mxu0 0
          %2814 = vmatpush2.bf16.msra.mxu0 0
          %2815 = vmatprep.subr.bf16.mxu0 0
          %2816 = vmatpush2.bf16.msra.mxu0 0
          %2817 = vmatprep.subr.bf16.mxu0 0
          %2818 = vmatpush2.bf16.msra.mxu0 0
          %2819 = vmatprep.subr.bf16.mxu0 0
          %2820 = vmatpush2.bf16.msra.mxu0 0
          %2821 = vmatprep.subr.bf16.mxu0 0
          %2822 = vmatpush2.bf16.msra.mxu0 0
          %2823 = vmatprep.mubr.bf16.mxu0 0
          %2824 = vmatmul.mubr.bf16.gmra.mxu0 %v2721
          %v2825 = vpop.f32.mrf.mxu0
          %v2826 = vadd.f32 0.0, %v2825
          %v2827 = vpop.f32.mrf.mxu0
          %v2828 = vpop.f32.mrf.mxu0
          %v2829 = vadd.f32 0.0, %v2828
          %v2830 = vpop.f32.mrf.mxu0
          %2831 = vdwg.mxu0
          %v2832 = vadd.f32 %v2722, %v2826
          %v2833 = vadd.f32 %v2723, %v2829
          %2834 = vst [vmem:[#allocation9] sm:$0xff] %v2832
          %2835 = vst [vmem:[#allocation9 + $0x8] sm:$0xff] %v2833
        $region187: #{forward.1} parent=119 // loop_footer
          %s2646 = sadd.s32 1, %s2642
        $region188: #{forward.1} parent=119 // loop_footer_branch
          %2641 = sbr.rel target = $region184
        $region189: #{forward.1} parent=119 // loop_exit
          _
        %v2836 = vld [vmem:[#allocation9] sm:$0xff]
        %v2837 = vld [vmem:[#allocation9 + $0x8] sm:$0xff]
        %v2838 = vld [vmem:[%s9] sm:$0x1]
        %v2840 = vlaneseq
        %v2841 = vshrl.u32 %v2840, 7
        %v2842 = vsub.s32 0, %v2841
        %v2843 = vrot.slane %v2838, %v2842
        %v2845 = vadd.f32 %v2836, %v2843
        %v2846 = vadd.f32 %v2837, %v2843
        %v2847 = vmax.f32 %v2845, 0.0
        %v2848 = vmax.f32 %v2846, 0.0
        %v2849 = vpack.c.bf16 %v2848, %v2847
        %v2851 = vunpack.c.l.b16 %v2849
        %v2852 = vunpack.c.h.b16 %v2849
        %v2853 = vpack.c.b16 %v2851, %v2851
        %v2854 = vpack.c.b16 %v2852, %v2852
        %2857 = vst [vmem:[#allocation4] sm:$0xf] %v2853
        %2858 = vst [vmem:[#allocation4 + $0x4] sm:$0xf] %v2854
        %v2859 = vld [vmem:[#allocation4] sm:$0xf]
        %v2860 = vld [vmem:[#allocation4 + $0x4] sm:$0xf]
        %2861 = vst [vmem:[#allocation9] sm:$0xff] 0.0
        loop: start=0, step=1, limit=9
        $region190: #{forward.1} parent=119 // loop_pre_header
          _
        $region191: #{forward.1} parent=119 // loop_header
          %s2863 = sphi 0, %s2867
          %p2864 = scmp.ge.s32.totalorder %s2863, 9
        $region192: #{forward.1} parent=119 // loop_header_branch
          %2866 = sbr.rel (%p2864) target = $region196
        $region193: #{forward.1} parent=119 // loop_body
          %s2868 = smul.addr %s2863, 4
          %s2869 = scalar_lea.vmem [#allocation17], %s2868
          %v2870 = vld [vmem:[%s2869] sm:$0xf]
          %v2873 = vunpack.c.l.b16 %v2859
          %v2874 = vunpack.c.l.b16 %v2860
          %v2875 = vpack.c.b16 %v2874, %v2873
          %vm2877 = vcmask 130048
          %v2879 = vsel %vm2877, %v2870, 0
          %2881 = vmatprep.subr.bf16.mxu0 0
          %2882 = vmatpush1.bf16.msra.mxu0 0
          %2883 = vmatprep.subr.bf16.mxu0 0
          %2884 = vmatpush1.bf16.msra.mxu0 0
          %2885 = vmatprep.subr.bf16.mxu0 0
          %2886 = vmatpush1.bf16.msra.mxu0 0
          %2887 = vmatprep.subr.bf16.mxu0 0
          %2888 = vmatpush1.bf16.msra.mxu0 0
          %2889 = vmatprep.subr.bf16.mxu0 0
          %2890 = vmatpush1.bf16.msra.mxu0 0
          %2891 = vmatprep.subr.bf16.mxu0 0
          %2892 = vmatpush1.bf16.msra.mxu0 0
          %2893 = vmatprep.subr.bf16.mxu0 0
          %2894 = vmatpush1.bf16.msra.mxu0 0
          %2895 = vmatprep.subr.bf16.mxu0 0
          %2896 = vmatpush1.bf16.msra.mxu0 %v2875
          %2897 = vmatprep.subr.bf16.mxu0 0
          %2898 = vmatpush2.bf16.msra.mxu0 0
          %2899 = vmatprep.subr.bf16.mxu0 0
          %2900 = vmatpush2.bf16.msra.mxu0 0
          %2901 = vmatprep.subr.bf16.mxu0 0
          %2902 = vmatpush2.bf16.msra.mxu0 0
          %2903 = vmatprep.subr.bf16.mxu0 0
          %2904 = vmatpush2.bf16.msra.mxu0 0
          %2905 = vmatprep.subr.bf16.mxu0 0
          %2906 = vmatpush2.bf16.msra.mxu0 0
          %2907 = vmatprep.subr.bf16.mxu0 0
          %2908 = vmatpush2.bf16.msra.mxu0 0
          %2909 = vmatprep.subr.bf16.mxu0 0
          %2910 = vmatpush2.bf16.msra.mxu0 0
          %2911 = vmatprep.subr.bf16.mxu0 0
          %2912 = vmatpush2.bf16.msra.mxu0 0
          %2913 = vmatprep.mubr.bf16.mxu0 0
          %2914 = vmatmul.mubr.bf16.gmra.mxu0 %v2879
          %v2915 = vpop.f32.mrf.mxu0
          %v2916 = vadd.f32 0.0, %v2915
          %v2917 = vpop.f32.mrf.mxu0
          %v2918 = vpop.f32.mrf.mxu0
          %v2919 = vpop.f32.mrf.mxu0
          %2920 = vdwg.mxu0
          %v2921 = vpack.c.bf16 %v2916, %v2916
          %v2922 = vld [vmem:[#allocation9] sm:$0xff]
          %s2923 = smul.u32 %s2863, 16
          %s2924 = smul.addr %s2923, 4
          %s2925 = scalar_lea.vmem [#allocation18], %s2924
          %v2926 = vld [vmem:[%s2925] sm:$0xf]
          %v2927 = vld [vmem:[%s2925 + $0x4] sm:$0xf]
          %v2928 = vld [vmem:[%s2925 + $0x8] sm:$0xf]
          %v2929 = vld [vmem:[%s2925 + $0xc] sm:$0xf]
          %v2930 = vld [vmem:[%s2925 + $0x10] sm:$0xf]
          %v2931 = vld [vmem:[%s2925 + $0x14] sm:$0xf]
          %v2932 = vld [vmem:[%s2925 + $0x18] sm:$0xf]
          %v2933 = vld [vmem:[%s2925 + $0x1c] sm:$0xf]
          %v2934 = vld [vmem:[%s2925 + $0x20] sm:$0xf]
          %v2935 = vld [vmem:[%s2925 + $0x24] sm:$0xf]
          %v2936 = vld [vmem:[%s2925 + $0x28] sm:$0xf]
          %v2937 = vld [vmem:[%s2925 + $0x2c] sm:$0xf]
          %v2938 = vld [vmem:[%s2925 + $0x30] sm:$0xf]
          %v2939 = vld [vmem:[%s2925 + $0x34] sm:$0xf]
          %v2940 = vld [vmem:[%s2925 + $0x38] sm:$0xf]
          %v2941 = vld [vmem:[%s2925 + $0x3c] sm:$0xf]
          %v2958 = vunpack.c.l.b16 %v2926
          %v2959 = vunpack.c.l.b16 %v2927
          %v2960 = vunpack.c.l.b16 %v2928
          %v2961 = vunpack.c.l.b16 %v2929
          %v2962 = vunpack.c.l.b16 %v2930
          %v2963 = vunpack.c.l.b16 %v2931
          %v2964 = vunpack.c.l.b16 %v2932
          %v2965 = vunpack.c.l.b16 %v2933
          %v2966 = vunpack.c.l.b16 %v2934
          %v2967 = vunpack.c.l.b16 %v2935
          %v2968 = vunpack.c.l.b16 %v2936
          %v2969 = vunpack.c.l.b16 %v2937
          %v2970 = vunpack.c.l.b16 %v2938
          %v2971 = vunpack.c.l.b16 %v2939
          %v2972 = vunpack.c.l.b16 %v2940
          %v2973 = vunpack.c.l.b16 %v2941
          %v2974 = vpack.c.b16 %v2959, %v2958
          %v2975 = vpack.c.b16 %v2961, %v2960
          %v2976 = vpack.c.b16 %v2963, %v2962
          %v2977 = vpack.c.b16 %v2965, %v2964
          %v2978 = vpack.c.b16 %v2967, %v2966
          %v2979 = vpack.c.b16 %v2969, %v2968
          %v2980 = vpack.c.b16 %v2971, %v2970
          %v2981 = vpack.c.b16 %v2973, %v2972
          %2990 = vmatprep.subr.bf16.mxu0 0
          %2991 = vmatpush1.bf16.msra.mxu0 %v2981
          %2992 = vmatprep.subr.bf16.mxu0 0
          %2993 = vmatpush1.bf16.msra.mxu0 %v2980
          %2994 = vmatprep.subr.bf16.mxu0 0
          %2995 = vmatpush1.bf16.msra.mxu0 %v2979
          %2996 = vmatprep.subr.bf16.mxu0 0
          %2997 = vmatpush1.bf16.msra.mxu0 %v2978
          %2998 = vmatprep.subr.bf16.mxu0 0
          %2999 = vmatpush1.bf16.msra.mxu0 %v2977
          %3000 = vmatprep.subr.bf16.mxu0 0
          %3001 = vmatpush1.bf16.msra.mxu0 %v2976
          %3002 = vmatprep.subr.bf16.mxu0 0
          %3003 = vmatpush1.bf16.msra.mxu0 %v2975
          %3004 = vmatprep.subr.bf16.mxu0 0
          %3005 = vmatpush1.bf16.msra.mxu0 %v2974
          %3006 = vmatprep.subr.bf16.mxu0 0
          %3007 = vmatpush2.bf16.msra.mxu0 0
          %3008 = vmatprep.subr.bf16.mxu0 0
          %3009 = vmatpush2.bf16.msra.mxu0 0
          %3010 = vmatprep.subr.bf16.mxu0 0
          %3011 = vmatpush2.bf16.msra.mxu0 0
          %3012 = vmatprep.subr.bf16.mxu0 0
          %3013 = vmatpush2.bf16.msra.mxu0 0
          %3014 = vmatprep.subr.bf16.mxu0 0
          %3015 = vmatpush2.bf16.msra.mxu0 0
          %3016 = vmatprep.subr.bf16.mxu0 0
          %3017 = vmatpush2.bf16.msra.mxu0 0
          %3018 = vmatprep.subr.bf16.mxu0 0
          %3019 = vmatpush2.bf16.msra.mxu0 0
          %3020 = vmatprep.subr.bf16.mxu0 0
          %3021 = vmatpush2.bf16.msra.mxu0 0
          %3022 = vmatprep.mubr.bf16.mxu0 0
          %3023 = vmatmul.mubr.bf16.gmra.mxu0 %v2921
          %v3024 = vpop.f32.mrf.mxu0
          %v3025 = vadd.f32 0.0, %v3024
          %v3026 = vpop.f32.mrf.mxu0
          %v3027 = vpop.f32.mrf.mxu0
          %v3028 = vpop.f32.mrf.mxu0
          %3029 = vdwg.mxu0
          %v3030 = vadd.f32 %v2922, %v3025
          %3031 = vst [vmem:[#allocation9] sm:$0xff] %v3030
        $region194: #{forward.1} parent=119 // loop_footer
          %s2867 = sadd.s32 1, %s2863
        $region195: #{forward.1} parent=119 // loop_footer_branch
          %2862 = sbr.rel target = $region191
        $region196: #{forward.1} parent=119 // loop_exit
          _
        %v3032 = vld [vmem:[#allocation9] sm:$0xff]
        %v3033 = vld [vmem:[%s12] sm:$0x1]
        %v3035 = vlaneseq
        %v3036 = vshrl.u32 %v3035, 7
        %v3037 = vsub.s32 0, %v3036
        %v3038 = vrot.slane %v3033, %v3037
        %v3040 = vadd.f32 %v3032, %v3038
        %v3041 = vmax.f32 %v3040, 0.0
        %v3042 = vpack.c.bf16 %v3041, %v3041
        %3043 = vst [vmem:[#allocation5] sm:$0xf] %v3042
        %v3044 = vld [vmem:[#allocation5] sm:$0xf]
        %3045 = vst [vmem:[#allocation9] sm:$0xff] 0.0
        %3046 = vst [vmem:[#allocation9 + $0x8] sm:$0xff] 0.0
        loop: start=0, step=1, limit=9
        $region197: #{forward.1} parent=119 // loop_pre_header
          _
        $region198: #{forward.1} parent=119 // loop_header
          %s3048 = sphi 0, %s3052
          %p3049 = scmp.ge.s32.totalorder %s3048, 9
        $region199: #{forward.1} parent=119 // loop_header_branch
          %3051 = sbr.rel (%p3049) target = $region203
        $region200: #{forward.1} parent=119 // loop_body
          %s3053 = smul.u32 %s3048, 2
          %s3054 = smul.addr %s3053, 4
          %s3055 = scalar_lea.vmem %s13, %s3054
          %v3056 = vld [vmem:[%s3055] sm:$0xf]
          %v3057 = vld [vmem:[%s3055 + $0x4] sm:$0xf]
          %v3060 = vunpack.c.l.b16 %v3056
          %v3061 = vunpack.c.l.b16 %v3057
          %v3062 = vpack.c.b16 %v3061, %v3060
          %vm3063 = vcmask 64512
          %v3065 = vsel %vm3063, %v3062, 0
          %vm3067 = vcmask 1043456
          %v3069 = vsel %vm3067, %v3044, 0
          %3071 = vmatprep.subr.bf16.mxu0 0
          %3072 = vmatpush1.bf16.msra.mxu0 0
          %3073 = vmatprep.subr.bf16.mxu0 0
          %3074 = vmatpush1.bf16.msra.mxu0 0
          %3075 = vmatprep.subr.bf16.mxu0 0
          %3076 = vmatpush1.bf16.msra.mxu0 0
          %3077 = vmatprep.subr.bf16.mxu0 0
          %3078 = vmatpush1.bf16.msra.mxu0 0
          %3079 = vmatprep.subr.bf16.mxu0 0
          %3080 = vmatpush1.bf16.msra.mxu0 0
          %3081 = vmatprep.subr.bf16.mxu0 0
          %3082 = vmatpush1.bf16.msra.mxu0 0
          %3083 = vmatprep.subr.bf16.mxu0 0
          %3084 = vmatpush1.bf16.msra.mxu0 0
          %3085 = vmatprep.subr.bf16.mxu0 0
          %3086 = vmatpush1.bf16.msra.mxu0 %v3069
          %3087 = vmatprep.subr.bf16.mxu0 0
          %3088 = vmatpush2.bf16.msra.mxu0 0
          %3089 = vmatprep.subr.bf16.mxu0 0
          %3090 = vmatpush2.bf16.msra.mxu0 0
          %3091 = vmatprep.subr.bf16.mxu0 0
          %3092 = vmatpush2.bf16.msra.mxu0 0
          %3093 = vmatprep.subr.bf16.mxu0 0
          %3094 = vmatpush2.bf16.msra.mxu0 0
          %3095 = vmatprep.subr.bf16.mxu0 0
          %3096 = vmatpush2.bf16.msra.mxu0 0
          %3097 = vmatprep.subr.bf16.mxu0 0
          %3098 = vmatpush2.bf16.msra.mxu0 0
          %3099 = vmatprep.subr.bf16.mxu0 0
          %3100 = vmatpush2.bf16.msra.mxu0 0
          %3101 = vmatprep.subr.bf16.mxu0 0
          %3102 = vmatpush2.bf16.msra.mxu0 0
          %3103 = vmatprep.mubr.bf16.mxu0 0
          %3104 = vmatmul.mubr.bf16.gmra.mxu0 %v3065
          %v3105 = vpop.f32.mrf.mxu0
          %v3106 = vadd.f32 0.0, %v3105
          %v3107 = vpop.f32.mrf.mxu0
          %v3108 = vpop.f32.mrf.mxu0
          %v3109 = vadd.f32 0.0, %v3108
          %v3110 = vpop.f32.mrf.mxu0
          %3111 = vdwg.mxu0
          %v3112 = vpack.c.bf16 %v3109, %v3106
          %v3113 = vld [vmem:[#allocation9] sm:$0xff]
          %v3114 = vld [vmem:[#allocation9 + $0x8] sm:$0xff]
          %s3115 = smul.u32 %s3048, 16
          %s3116 = smul.addr %s3115, 4
          %s3117 = scalar_lea.vmem %s14, %s3116
          %v3118 = vld [vmem:[%s3117] sm:$0xf]
          %v3119 = vld [vmem:[%s3117 + $0x4] sm:$0xf]
          %v3120 = vld [vmem:[%s3117 + $0x8] sm:$0xf]
          %v3121 = vld [vmem:[%s3117 + $0xc] sm:$0xf]
          %v3122 = vld [vmem:[%s3117 + $0x10] sm:$0xf]
          %v3123 = vld [vmem:[%s3117 + $0x14] sm:$0xf]
          %v3124 = vld [vmem:[%s3117 + $0x18] sm:$0xf]
          %v3125 = vld [vmem:[%s3117 + $0x1c] sm:$0xf]
          %v3126 = vld [vmem:[%s3117 + $0x20] sm:$0xf]
          %v3127 = vld [vmem:[%s3117 + $0x24] sm:$0xf]
          %v3128 = vld [vmem:[%s3117 + $0x28] sm:$0xf]
          %v3129 = vld [vmem:[%s3117 + $0x2c] sm:$0xf]
          %v3130 = vld [vmem:[%s3117 + $0x30] sm:$0xf]
          %v3131 = vld [vmem:[%s3117 + $0x34] sm:$0xf]
          %v3132 = vld [vmem:[%s3117 + $0x38] sm:$0xf]
          %v3133 = vld [vmem:[%s3117 + $0x3c] sm:$0xf]
          %v3150 = vunpack.c.l.b16 %v3118
          %v3151 = vunpack.c.l.b16 %v3119
          %v3152 = vunpack.c.l.b16 %v3120
          %v3153 = vunpack.c.l.b16 %v3121
          %v3154 = vunpack.c.l.b16 %v3122
          %v3155 = vunpack.c.l.b16 %v3123
          %v3156 = vunpack.c.l.b16 %v3124
          %v3157 = vunpack.c.l.b16 %v3125
          %v3158 = vunpack.c.l.b16 %v3126
          %v3159 = vunpack.c.l.b16 %v3127
          %v3160 = vunpack.c.l.b16 %v3128
          %v3161 = vunpack.c.l.b16 %v3129
          %v3162 = vunpack.c.l.b16 %v3130
          %v3163 = vunpack.c.l.b16 %v3131
          %v3164 = vunpack.c.l.b16 %v3132
          %v3165 = vunpack.c.l.b16 %v3133
          %v3166 = vpack.c.b16 %v3151, %v3150
          %v3167 = vpack.c.b16 %v3153, %v3152
          %v3168 = vpack.c.b16 %v3155, %v3154
          %v3169 = vpack.c.b16 %v3157, %v3156
          %v3170 = vpack.c.b16 %v3159, %v3158
          %v3171 = vpack.c.b16 %v3161, %v3160
          %v3172 = vpack.c.b16 %v3163, %v3162
          %v3173 = vpack.c.b16 %v3165, %v3164
          %3182 = vmatprep.subr.bf16.mxu0 0
          %3183 = vmatpush1.bf16.msra.mxu0 %v3173
          %3184 = vmatprep.subr.bf16.mxu0 0
          %3185 = vmatpush1.bf16.msra.mxu0 %v3172
          %3186 = vmatprep.subr.bf16.mxu0 0
          %3187 = vmatpush1.bf16.msra.mxu0 %v3171
          %3188 = vmatprep.subr.bf16.mxu0 0
          %3189 = vmatpush1.bf16.msra.mxu0 %v3170
          %3190 = vmatprep.subr.bf16.mxu0 0
          %3191 = vmatpush1.bf16.msra.mxu0 %v3169
          %3192 = vmatprep.subr.bf16.mxu0 0
          %3193 = vmatpush1.bf16.msra.mxu0 %v3168
          %3194 = vmatprep.subr.bf16.mxu0 0
          %3195 = vmatpush1.bf16.msra.mxu0 %v3167
          %3196 = vmatprep.subr.bf16.mxu0 0
          %3197 = vmatpush1.bf16.msra.mxu0 %v3166
          %3198 = vmatprep.subr.bf16.mxu0 0
          %3199 = vmatpush2.bf16.msra.mxu0 0
          %3200 = vmatprep.subr.bf16.mxu0 0
          %3201 = vmatpush2.bf16.msra.mxu0 0
          %3202 = vmatprep.subr.bf16.mxu0 0
          %3203 = vmatpush2.bf16.msra.mxu0 0
          %3204 = vmatprep.subr.bf16.mxu0 0
          %3205 = vmatpush2.bf16.msra.mxu0 0
          %3206 = vmatprep.subr.bf16.mxu0 0
          %3207 = vmatpush2.bf16.msra.mxu0 0
          %3208 = vmatprep.subr.bf16.mxu0 0
          %3209 = vmatpush2.bf16.msra.mxu0 0
          %3210 = vmatprep.subr.bf16.mxu0 0
          %3211 = vmatpush2.bf16.msra.mxu0 0
          %3212 = vmatprep.subr.bf16.mxu0 0
          %3213 = vmatpush2.bf16.msra.mxu0 0
          %3214 = vmatprep.mubr.bf16.mxu0 0
          %3215 = vmatmul.mubr.bf16.gmra.mxu0 %v3112
          %v3216 = vpop.f32.mrf.mxu0
          %v3217 = vadd.f32 0.0, %v3216
          %v3218 = vpop.f32.mrf.mxu0
          %v3219 = vpop.f32.mrf.mxu0
          %v3220 = vadd.f32 0.0, %v3219
          %v3221 = vpop.f32.mrf.mxu0
          %3222 = vdwg.mxu0
          %v3223 = vadd.f32 %v3113, %v3217
          %v3224 = vadd.f32 %v3114, %v3220
          %3225 = vst [vmem:[#allocation9] sm:$0xff] %v3223
          %3226 = vst [vmem:[#allocation9 + $0x8] sm:$0xff] %v3224
        $region201: #{forward.1} parent=119 // loop_footer
          %s3052 = sadd.s32 1, %s3048
        $region202: #{forward.1} parent=119 // loop_footer_branch
          %3047 = sbr.rel target = $region198
        $region203: #{forward.1} parent=119 // loop_exit
          _
        %v3227 = vld [vmem:[#allocation9] sm:$0xff]
        %v3228 = vld [vmem:[#allocation9 + $0x8] sm:$0xff]
        %v3229 = vld [vmem:[%s15] sm:$0x1]
        %v3231 = vlaneseq
        %v3232 = vshrl.u32 %v3231, 7
        %v3233 = vsub.s32 0, %v3232
        %v3234 = vrot.slane %v3229, %v3233
        %v3236 = vadd.f32 %v3227, %v3234
        %v3237 = vadd.f32 %v3228, %v3234
        %v3238 = vmax.f32 %v3236, 0.0
        %v3239 = vmax.f32 %v3237, 0.0
        %v3240 = vpack.c.bf16 %v3239, %v3238
        %v3242 = vunpack.c.l.b16 %v3240
        %v3243 = vunpack.c.h.b16 %v3240
        %v3244 = vpack.c.b16 %v3242, %v3242
        %v3245 = vpack.c.b16 %v3243, %v3243
        %3248 = vst [vmem:[#allocation6] sm:$0xf] %v3244
        %3249 = vst [vmem:[#allocation6 + $0x4] sm:$0xf] %v3245
        %v3250 = vld [vmem:[#allocation6] sm:$0xf]
        %v3251 = vld [vmem:[#allocation6 + $0x4] sm:$0xf]
        %v3252 = vld [vmem:[#allocation4] sm:$0xf]
        %v3253 = vld [vmem:[#allocation4 + $0x4] sm:$0xf]
        %v3254 = vadd.bf16 %v3250, %v3252
        %v3255 = vadd.bf16 %v3251, %v3253
        %3256 = vst [vmem:[#allocation9] sm:$0xff] 0.0
        %3257 = vst [vmem:[#allocation9 + $0x8] sm:$0xff] 0.0
        %3258 = vst [vmem:[#allocation9 + $0x10] sm:$0xff] 0.0
        %3259 = vst [vmem:[#allocation9 + $0x18] sm:$0xff] 0.0
        %3260 = vst [vmem:[#allocation9 + $0x20] sm:$0xff] 0.0
        loop: start=0, step=1, limit=16
        $region204: #{forward.1} parent=119 // loop_pre_header
          _
        $region205: #{forward.1} parent=119 // loop_header
          %s3262 = sphi 0, %s3266
          %p3263 = scmp.ge.s32.totalorder %s3262, 16
        $region206: #{forward.1} parent=119 // loop_header_branch
          %3265 = sbr.rel (%p3263) target = $region210
        $region207: #{forward.1} parent=119 // loop_body
          %s3267 = smul.u32 %s3262, 5
          %s3268 = smul.addr %s3267, 4
          %s3269 = scalar_lea.vmem [#allocation20], %s3268
          %v3270 = vld [vmem:[%s3269] sm:$0xf]
          %v3271 = vld [vmem:[%s3269 + $0x4] sm:$0xf]
          %v3272 = vld [vmem:[%s3269 + $0x8] sm:$0xf]
          %v3273 = vld [vmem:[%s3269 + $0xc] sm:$0xf]
          %v3274 = vld [vmem:[%s3269 + $0x10] sm:$0xf]
          %v3280 = vunpack.c.l.b16 %v3270
          %v3281 = vunpack.c.l.b16 %v3271
          %v3282 = vunpack.c.l.b16 %v3272
          %v3283 = vunpack.c.l.b16 %v3273
          %v3284 = vunpack.c.l.b16 %v3274
          %v3285 = vpack.c.b16 %v3281, %v3280
          %v3286 = vpack.c.b16 %v3283, %v3282
          %v3287 = vpack.c.b16 %v3284, %v3284
          %v3290 = vunpack.c.l.b16 %v3254
          %v3291 = vunpack.c.l.b16 %v3255
          %v3292 = vpack.c.b16 %v3291, %v3290
          %vm3294 = vcmask 130048
          %v3296 = vsel %vm3294, %v3285, 0
          %v3299 = vsel %vm3294, %v3286, 0
          %v3302 = vsel %vm3294, %v3287, 0
          %3304 = vmatprep.subr.bf16.mxu0 0
          %3305 = vmatpush1.bf16.msra.mxu0 0
          %3306 = vmatprep.subr.bf16.mxu0 0
          %3307 = vmatpush1.bf16.msra.mxu0 0
          %3308 = vmatprep.subr.bf16.mxu0 0
          %3309 = vmatpush1.bf16.msra.mxu0 0
          %3310 = vmatprep.subr.bf16.mxu0 0
          %3311 = vmatpush1.bf16.msra.mxu0 0
          %3312 = vmatprep.subr.bf16.mxu0 0
          %3313 = vmatpush1.bf16.msra.mxu0 0
          %3314 = vmatprep.subr.bf16.mxu0 0
          %3315 = vmatpush1.bf16.msra.mxu0 0
          %3316 = vmatprep.subr.bf16.mxu0 0
          %3317 = vmatpush1.bf16.msra.mxu0 0
          %3318 = vmatprep.subr.bf16.mxu0 0
          %3319 = vmatpush1.bf16.msra.mxu0 %v3292
          %3320 = vmatprep.subr.bf16.mxu0 0
          %3321 = vmatpush2.bf16.msra.mxu0 0
          %3322 = vmatprep.subr.bf16.mxu0 0
          %3323 = vmatpush2.bf16.msra.mxu0 0
          %3324 = vmatprep.subr.bf16.mxu0 0
          %3325 = vmatpush2.bf16.msra.mxu0 0
          %3326 = vmatprep.subr.bf16.mxu0 0
          %3327 = vmatpush2.bf16.msra.mxu0 0
          %3328 = vmatprep.subr.bf16.mxu0 0
          %3329 = vmatpush2.bf16.msra.mxu0 0
          %3330 = vmatprep.subr.bf16.mxu0 0
          %3331 = vmatpush2.bf16.msra.mxu0 0
          %3332 = vmatprep.subr.bf16.mxu0 0
          %3333 = vmatpush2.bf16.msra.mxu0 0
          %3334 = vmatprep.subr.bf16.mxu0 0
          %3335 = vmatpush2.bf16.msra.mxu0 0
          %3336 = vmatprep.mubr.bf16.mxu0 0
          %3337 = vmatmul.mubr.bf16.gmra.mxu0 %v3296
          %v3338 = vpop.f32.mrf.mxu0
          %v3339 = vadd.f32 0.0, %v3338
          %v3340 = vpop.f32.mrf.mxu0
          %v3341 = vpop.f32.mrf.mxu0
          %v3342 = vadd.f32 0.0, %v3341
          %v3343 = vpop.f32.mrf.mxu0
          %3344 = vmatprep.mubr.bf16.mxu0 0
          %3345 = vmatmul.mubr.bf16.gmra.mxu0 %v3299
          %v3346 = vpop.f32.mrf.mxu0
          %v3347 = vadd.f32 0.0, %v3346
          %v3348 = vpop.f32.mrf.mxu0
          %v3349 = vpop.f32.mrf.mxu0
          %v3350 = vadd.f32 0.0, %v3349
          %v3351 = vpop.f32.mrf.mxu0
          %3352 = vmatprep.mubr.bf16.mxu0 0
          %3353 = vmatmul.mubr.bf16.gmra.mxu0 %v3302
          %v3354 = vpop.f32.mrf.mxu0
          %v3355 = vadd.f32 0.0, %v3354
          %v3356 = vpop.f32.mrf.mxu0
          %v3357 = vpop.f32.mrf.mxu0
          %v3358 = vpop.f32.mrf.mxu0
          %3359 = vdwg.mxu0
          %v3360 = vpack.c.bf16 %v3342, %v3339
          %v3361 = vpack.c.bf16 %v3350, %v3347
          %v3362 = vpack.c.bf16 %v3355, %v3355
          %v3363 = vld [vmem:[#allocation9] sm:$0xff]
          %v3364 = vld [vmem:[#allocation9 + $0x8] sm:$0xff]
          %v3365 = vld [vmem:[#allocation9 + $0x10] sm:$0xff]
          %v3366 = vld [vmem:[#allocation9 + $0x18] sm:$0xff]
          %v3367 = vld [vmem:[#allocation9 + $0x20] sm:$0xff]
          %s3368 = smul.u32 %s3262, 16
          %s3369 = smul.addr %s3368, 4
          %s3370 = scalar_lea.vmem [#allocation21], %s3369
          %v3371 = vld [vmem:[%s3370] sm:$0xf]
          %v3372 = vld [vmem:[%s3370 + $0x4] sm:$0xf]
          %v3373 = vld [vmem:[%s3370 + $0x8] sm:$0xf]
          %v3374 = vld [vmem:[%s3370 + $0xc] sm:$0xf]
          %v3375 = vld [vmem:[%s3370 + $0x10] sm:$0xf]
          %v3376 = vld [vmem:[%s3370 + $0x14] sm:$0xf]
          %v3377 = vld [vmem:[%s3370 + $0x18] sm:$0xf]
          %v3378 = vld [vmem:[%s3370 + $0x1c] sm:$0xf]
          %v3379 = vld [vmem:[%s3370 + $0x20] sm:$0xf]
          %v3380 = vld [vmem:[%s3370 + $0x24] sm:$0xf]
          %v3381 = vld [vmem:[%s3370 + $0x28] sm:$0xf]
          %v3382 = vld [vmem:[%s3370 + $0x2c] sm:$0xf]
          %v3383 = vld [vmem:[%s3370 + $0x30] sm:$0xf]
          %v3384 = vld [vmem:[%s3370 + $0x34] sm:$0xf]
          %v3385 = vld [vmem:[%s3370 + $0x38] sm:$0xf]
          %v3386 = vld [vmem:[%s3370 + $0x3c] sm:$0xf]
          %v3403 = vunpack.c.l.b16 %v3371
          %v3404 = vunpack.c.l.b16 %v3372
          %v3405 = vunpack.c.l.b16 %v3373
          %v3406 = vunpack.c.l.b16 %v3374
          %v3407 = vunpack.c.l.b16 %v3375
          %v3408 = vunpack.c.l.b16 %v3376
          %v3409 = vunpack.c.l.b16 %v3377
          %v3410 = vunpack.c.l.b16 %v3378
          %v3411 = vunpack.c.l.b16 %v3379
          %v3412 = vunpack.c.l.b16 %v3380
          %v3413 = vunpack.c.l.b16 %v3381
          %v3414 = vunpack.c.l.b16 %v3382
          %v3415 = vunpack.c.l.b16 %v3383
          %v3416 = vunpack.c.l.b16 %v3384
          %v3417 = vunpack.c.l.b16 %v3385
          %v3418 = vunpack.c.l.b16 %v3386
          %v3419 = vpack.c.b16 %v3404, %v3403
          %v3420 = vpack.c.b16 %v3406, %v3405
          %v3421 = vpack.c.b16 %v3408, %v3407
          %v3422 = vpack.c.b16 %v3410, %v3409
          %v3423 = vpack.c.b16 %v3412, %v3411
          %v3424 = vpack.c.b16 %v3414, %v3413
          %v3425 = vpack.c.b16 %v3416, %v3415
          %v3426 = vpack.c.b16 %v3418, %v3417
          %3435 = vmatprep.subr.bf16.mxu0 0
          %3436 = vmatpush1.bf16.msra.mxu0 %v3426
          %3437 = vmatprep.subr.bf16.mxu0 0
          %3438 = vmatpush1.bf16.msra.mxu0 %v3425
          %3439 = vmatprep.subr.bf16.mxu0 0
          %3440 = vmatpush1.bf16.msra.mxu0 %v3424
          %3441 = vmatprep.subr.bf16.mxu0 0
          %3442 = vmatpush1.bf16.msra.mxu0 %v3423
          %3443 = vmatprep.subr.bf16.mxu0 0
          %3444 = vmatpush1.bf16.msra.mxu0 %v3422
          %3445 = vmatprep.subr.bf16.mxu0 0
          %3446 = vmatpush1.bf16.msra.mxu0 %v3421
          %3447 = vmatprep.subr.bf16.mxu0 0
          %3448 = vmatpush1.bf16.msra.mxu0 %v3420
          %3449 = vmatprep.subr.bf16.mxu0 0
          %3450 = vmatpush1.bf16.msra.mxu0 %v3419
          %3451 = vmatprep.subr.bf16.mxu0 0
          %3452 = vmatpush2.bf16.msra.mxu0 0
          %3453 = vmatprep.subr.bf16.mxu0 0
          %3454 = vmatpush2.bf16.msra.mxu0 0
          %3455 = vmatprep.subr.bf16.mxu0 0
          %3456 = vmatpush2.bf16.msra.mxu0 0
          %3457 = vmatprep.subr.bf16.mxu0 0
          %3458 = vmatpush2.bf16.msra.mxu0 0
          %3459 = vmatprep.subr.bf16.mxu0 0
          %3460 = vmatpush2.bf16.msra.mxu0 0
          %3461 = vmatprep.subr.bf16.mxu0 0
          %3462 = vmatpush2.bf16.msra.mxu0 0
          %3463 = vmatprep.subr.bf16.mxu0 0
          %3464 = vmatpush2.bf16.msra.mxu0 0
          %3465 = vmatprep.subr.bf16.mxu0 0
          %3466 = vmatpush2.bf16.msra.mxu0 0
          %3467 = vmatprep.mubr.bf16.mxu0 0
          %3468 = vmatmul.mubr.bf16.gmra.mxu0 %v3360
          %v3469 = vpop.f32.mrf.mxu0
          %v3470 = vadd.f32 0.0, %v3469
          %v3471 = vpop.f32.mrf.mxu0
          %v3472 = vpop.f32.mrf.mxu0
          %v3473 = vadd.f32 0.0, %v3472
          %v3474 = vpop.f32.mrf.mxu0
          %3475 = vmatprep.mubr.bf16.mxu0 0
          %3476 = vmatmul.mubr.bf16.gmra.mxu0 %v3361
          %v3477 = vpop.f32.mrf.mxu0
          %v3478 = vadd.f32 0.0, %v3477
          %v3479 = vpop.f32.mrf.mxu0
          %v3480 = vpop.f32.mrf.mxu0
          %v3481 = vadd.f32 0.0, %v3480
          %v3482 = vpop.f32.mrf.mxu0
          %3483 = vmatprep.mubr.bf16.mxu0 0
          %3484 = vmatmul.mubr.bf16.gmra.mxu0 %v3362
          %v3485 = vpop.f32.mrf.mxu0
          %v3486 = vadd.f32 0.0, %v3485
          %v3487 = vpop.f32.mrf.mxu0
          %v3488 = vpop.f32.mrf.mxu0
          %v3489 = vpop.f32.mrf.mxu0
          %3490 = vdwg.mxu0
          %v3491 = vadd.f32 %v3363, %v3470
          %v3492 = vadd.f32 %v3364, %v3473
          %v3493 = vadd.f32 %v3365, %v3478
          %v3494 = vadd.f32 %v3366, %v3481
          %v3495 = vadd.f32 %v3367, %v3486
          %3496 = vst [vmem:[#allocation9] sm:$0xff] %v3491
          %3497 = vst [vmem:[#allocation9 + $0x8] sm:$0xff] %v3492
          %3498 = vst [vmem:[#allocation9 + $0x10] sm:$0xff] %v3493
          %3499 = vst [vmem:[#allocation9 + $0x18] sm:$0xff] %v3494
          %3500 = vst [vmem:[#allocation9 + $0x20] sm:$0xff] %v3495
        $region208: #{forward.1} parent=119 // loop_footer
          %s3266 = sadd.s32 1, %s3262
        $region209: #{forward.1} parent=119 // loop_footer_branch
          %3261 = sbr.rel target = $region205
        $region210: #{forward.1} parent=119 // loop_exit
          _
        %v3501 = vld [vmem:[#allocation9] sm:$0xff]
        %v3502 = vld [vmem:[#allocation9 + $0x8] sm:$0xff]
        %v3503 = vld [vmem:[#allocation9 + $0x10] sm:$0xff]
        %v3504 = vld [vmem:[#allocation9 + $0x18] sm:$0xff]
        %v3505 = vld [vmem:[#allocation9 + $0x20] sm:$0xff]
        %v3506 = vld [vmem:[%s18] sm:$0x1]
        %v3508 = vlaneseq
        %v3509 = vshrl.u32 %v3508, 7
        %v3510 = vsub.s32 0, %v3509
        %v3511 = vrot.slane %v3506, %v3510
        %v3513 = vadd.f32 %v3501, %v3511
        %v3514 = vadd.f32 %v3502, %v3511
        %v3515 = vadd.f32 %v3503, %v3511
        %v3516 = vadd.f32 %v3504, %v3511
        %v3517 = vadd.f32 %v3505, %v3511
        %v3518 = vmax.f32 %v3513, 0.0
        %v3519 = vmax.f32 %v3514, 0.0
        %v3520 = vmax.f32 %v3515, 0.0
        %v3521 = vmax.f32 %v3516, 0.0
        %v3522 = vmax.f32 %v3517, 0.0
        %v3523 = vpack.c.bf16 %v3519, %v3518
        %v3524 = vpack.c.bf16 %v3521, %v3520
        %v3525 = vpack.c.bf16 %v3522, %v3522
        %v3529 = vunpack.c.l.b16 %v3523
        %v3530 = vunpack.c.h.b16 %v3523
        %v3531 = vunpack.c.l.b16 %v3524
        %v3532 = vunpack.c.h.b16 %v3524
        %v3533 = vunpack.c.l.b16 %v3525
        %v3534 = vpack.c.b16 %v3529, %v3529
        %v3535 = vpack.c.b16 %v3530, %v3530
        %v3536 = vpack.c.b16 %v3531, %v3531
        %v3537 = vpack.c.b16 %v3532, %v3532
        %v3538 = vpack.c.b16 %v3533, %v3533
        %3544 = vst [vmem:[#allocation7] sm:$0xf] %v3534
        %3545 = vst [vmem:[#allocation7 + $0x4] sm:$0xf] %v3535
        %3546 = vst [vmem:[#allocation7 + $0x8] sm:$0xf] %v3536
        %3547 = vst [vmem:[#allocation7 + $0xc] sm:$0xf] %v3537
        %3548 = vst [vmem:[#allocation7 + $0x10] sm:$0xf] %v3538
        %v3549 = vld [vmem:[#allocation7] sm:$0xf]
        %v3550 = vld [vmem:[#allocation7 + $0x4] sm:$0xf]
        %v3551 = vld [vmem:[#allocation7 + $0x8] sm:$0xf]
        %v3552 = vld [vmem:[#allocation7 + $0xc] sm:$0xf]
        %v3553 = vld [vmem:[#allocation7 + $0x10] sm:$0xf]
        %v3554 = vld [vmem:[#allocation3] sm:$0xf]
        %v3555 = vld [vmem:[#allocation3 + $0x4] sm:$0xf]
        %v3556 = vld [vmem:[#allocation3 + $0x8] sm:$0xf]
        %v3557 = vld [vmem:[#allocation3 + $0xc] sm:$0xf]
        %v3558 = vld [vmem:[#allocation3 + $0x10] sm:$0xf]
        %v3559 = vadd.bf16 %v3549, %v3554
        %v3560 = vadd.bf16 %v3550, %v3555
        %v3561 = vadd.bf16 %v3551, %v3556
        %v3562 = vadd.bf16 %v3552, %v3557
        %v3563 = vadd.bf16 %v3553, %v3558
        %3564 = vst [vmem:[#allocation9] sm:$0xff] 0.0
        %3565 = vst [vmem:[#allocation9 + $0x8] sm:$0xff] 0.0
        %3566 = vst [vmem:[#allocation9 + $0x10] sm:$0xff] 0.0
        %3567 = vst [vmem:[#allocation9 + $0x18] sm:$0xff] 0.0
        %3568 = vst [vmem:[#allocation9 + $0x20] sm:$0xff] 0.0
        %3569 = vst [vmem:[#allocation9 + $0x28] sm:$0xff] 0.0
        %3570 = vst [vmem:[#allocation9 + $0x30] sm:$0xff] 0.0
        %3571 = vst [vmem:[#allocation9 + $0x38] sm:$0xff] 0.0
        %3572 = vst [vmem:[#allocation9 + $0x40] sm:$0xff] 0.0
        %3573 = vst [vmem:[#allocation9 + $0x48] sm:$0xff] 0.0
        %3574 = vst [vmem:[#allocation9 + $0x50] sm:$0xff] 0.0
        %3575 = vst [vmem:[#allocation9 + $0x58] sm:$0xff] 0.0
        %3576 = vst [vmem:[#allocation9 + $0x60] sm:$0xff] 0.0
        %3577 = vst [vmem:[#allocation9 + $0x68] sm:$0xff] 0.0
        %3578 = vst [vmem:[#allocation9 + $0x70] sm:$0xff] 0.0
        %3579 = vst [vmem:[#allocation9 + $0x78] sm:$0xff] 0.0
        %3580 = vst [vmem:[#allocation9 + $0x80] sm:$0xff] 0.0
        %3581 = vst [vmem:[#allocation9 + $0x88] sm:$0xff] 0.0
        loop: start=0, step=1, limit=16
        $region211: #{forward.1} parent=119 // loop_pre_header
          _
        $region212: #{forward.1} parent=119 // loop_header
          %s3583 = sphi 0, %s3587
          %p3584 = scmp.ge.s32.totalorder %s3583, 16
        $region213: #{forward.1} parent=119 // loop_header_branch
          %3586 = sbr.rel (%p3584) target = $region217
        $region214: #{forward.1} parent=119 // loop_body
          %s3588 = smul.u32 %s3583, 18
          %s3589 = smul.addr %s3588, 4
          %s3590 = scalar_lea.vmem [#allocation23], %s3589
          %v3591 = vld [vmem:[%s3590] sm:$0xf]
          %v3592 = vld [vmem:[%s3590 + $0x4] sm:$0xf]
          %v3593 = vld [vmem:[%s3590 + $0x8] sm:$0xf]
          %v3594 = vld [vmem:[%s3590 + $0xc] sm:$0xf]
          %v3595 = vld [vmem:[%s3590 + $0x10] sm:$0xf]
          %v3596 = vld [vmem:[%s3590 + $0x14] sm:$0xf]
          %v3597 = vld [vmem:[%s3590 + $0x18] sm:$0xf]
          %v3598 = vld [vmem:[%s3590 + $0x1c] sm:$0xf]
          %v3599 = vld [vmem:[%s3590 + $0x20] sm:$0xf]
          %v3600 = vld [vmem:[%s3590 + $0x24] sm:$0xf]
          %v3601 = vld [vmem:[%s3590 + $0x28] sm:$0xf]
          %v3602 = vld [vmem:[%s3590 + $0x2c] sm:$0xf]
          %v3603 = vld [vmem:[%s3590 + $0x30] sm:$0xf]
          %v3604 = vld [vmem:[%s3590 + $0x34] sm:$0xf]
          %v3605 = vld [vmem:[%s3590 + $0x38] sm:$0xf]
          %v3606 = vld [vmem:[%s3590 + $0x3c] sm:$0xf]
          %v3607 = vld [vmem:[%s3590 + $0x40] sm:$0xf]
          %v3608 = vld [vmem:[%s3590 + $0x44] sm:$0xf]
          %v3627 = vunpack.c.l.b16 %v3591
          %v3628 = vunpack.c.l.b16 %v3592
          %v3629 = vunpack.c.l.b16 %v3593
          %v3630 = vunpack.c.l.b16 %v3594
          %v3631 = vunpack.c.l.b16 %v3595
          %v3632 = vunpack.c.l.b16 %v3596
          %v3633 = vunpack.c.l.b16 %v3597
          %v3634 = vunpack.c.l.b16 %v3598
          %v3635 = vunpack.c.l.b16 %v3599
          %v3636 = vunpack.c.l.b16 %v3600
          %v3637 = vunpack.c.l.b16 %v3601
          %v3638 = vunpack.c.l.b16 %v3602
          %v3639 = vunpack.c.l.b16 %v3603
          %v3640 = vunpack.c.l.b16 %v3604
          %v3641 = vunpack.c.l.b16 %v3605
          %v3642 = vunpack.c.l.b16 %v3606
          %v3643 = vunpack.c.l.b16 %v3607
          %v3644 = vunpack.c.l.b16 %v3608
          %v3645 = vpack.c.b16 %v3628, %v3627
          %v3646 = vpack.c.b16 %v3630, %v3629
          %v3647 = vpack.c.b16 %v3632, %v3631
          %v3648 = vpack.c.b16 %v3634, %v3633
          %v3649 = vpack.c.b16 %v3636, %v3635
          %v3650 = vpack.c.b16 %v3638, %v3637
          %v3651 = vpack.c.b16 %v3640, %v3639
          %v3652 = vpack.c.b16 %v3642, %v3641
          %v3653 = vpack.c.b16 %v3644, %v3643
          %v3659 = vunpack.c.l.b16 %v3559
          %v3660 = vunpack.c.l.b16 %v3560
          %v3661 = vunpack.c.l.b16 %v3561
          %v3662 = vunpack.c.l.b16 %v3562
          %v3663 = vunpack.c.l.b16 %v3563
          %v3664 = vpack.c.b16 %v3660, %v3659
          %v3665 = vpack.c.b16 %v3662, %v3661
          %v3666 = vpack.c.b16 %v3663, %v3663
          %vm3669 = vcmask 326656
          %v3671 = vsel %vm3669, %v3645, 0
          %v3674 = vsel %vm3669, %v3646, 0
          %v3677 = vsel %vm3669, %v3647, 0
          %v3680 = vsel %vm3669, %v3648, 0
          %v3683 = vsel %vm3669, %v3649, 0
          %v3686 = vsel %vm3669, %v3650, 0
          %v3689 = vsel %vm3669, %v3651, 0
          %v3692 = vsel %vm3669, %v3652, 0
          %v3695 = vsel %vm3669, %v3653, 0
          %vm3697 = vcmask 1043456
          %v3699 = vsel %vm3697, %v3666, 0
          %3701 = vmatprep.subr.bf16.mxu0 0
          %3702 = vmatpush1.bf16.msra.mxu0 0
          %3703 = vmatprep.subr.bf16.mxu0 0
          %3704 = vmatpush1.bf16.msra.mxu0 0
          %3705 = vmatprep.subr.bf16.mxu0 0
          %3706 = vmatpush1.bf16.msra.mxu0 0
          %3707 = vmatprep.subr.bf16.mxu0 0
          %3708 = vmatpush1.bf16.msra.mxu0 0
          %3709 = vmatprep.subr.bf16.mxu0 0
          %3710 = vmatpush1.bf16.msra.mxu0 0
          %3711 = vmatprep.subr.bf16.mxu0 0
          %3712 = vmatpush1.bf16.msra.mxu0 %v3699
          %3713 = vmatprep.subr.bf16.mxu0 0
          %3714 = vmatpush1.bf16.msra.mxu0 %v3665
          %3715 = vmatprep.subr.bf16.mxu0 0
          %3716 = vmatpush1.bf16.msra.mxu0 %v3664
          %3717 = vmatprep.subr.bf16.mxu0 0
          %3718 = vmatpush2.bf16.msra.mxu0 0
          %3719 = vmatprep.subr.bf16.mxu0 0
          %3720 = vmatpush2.bf16.msra.mxu0 0
          %3721 = vmatprep.subr.bf16.mxu0 0
          %3722 = vmatpush2.bf16.msra.mxu0 0
          %3723 = vmatprep.subr.bf16.mxu0 0
          %3724 = vmatpush2.bf16.msra.mxu0 0
          %3725 = vmatprep.subr.bf16.mxu0 0
          %3726 = vmatpush2.bf16.msra.mxu0 0
          %3727 = vmatprep.subr.bf16.mxu0 0
          %3728 = vmatpush2.bf16.msra.mxu0 0
          %3729 = vmatprep.subr.bf16.mxu0 0
          %3730 = vmatpush2.bf16.msra.mxu0 0
          %3731 = vmatprep.subr.bf16.mxu0 0
          %3732 = vmatpush2.bf16.msra.mxu0 0
          %3733 = vmatprep.mubr.bf16.mxu0 0
          %3734 = vmatmul.mubr.bf16.gmra.mxu0 %v3671
          %v3735 = vpop.f32.mrf.mxu0
          %v3736 = vadd.f32 0.0, %v3735
          %v3737 = vpop.f32.mrf.mxu0
          %v3738 = vpop.f32.mrf.mxu0
          %v3739 = vadd.f32 0.0, %v3738
          %v3740 = vpop.f32.mrf.mxu0
          %3741 = vmatprep.mubr.bf16.mxu0 0
          %3742 = vmatmul.mubr.bf16.gmra.mxu0 %v3674
          %v3743 = vpop.f32.mrf.mxu0
          %v3744 = vadd.f32 0.0, %v3743
          %v3745 = vpop.f32.mrf.mxu0
          %v3746 = vpop.f32.mrf.mxu0
          %v3747 = vadd.f32 0.0, %v3746
          %v3748 = vpop.f32.mrf.mxu0
          %3749 = vmatprep.mubr.bf16.mxu0 0
          %3750 = vmatmul.mubr.bf16.gmra.mxu0 %v3677
          %v3751 = vpop.f32.mrf.mxu0
          %v3752 = vadd.f32 0.0, %v3751
          %v3753 = vpop.f32.mrf.mxu0
          %v3754 = vpop.f32.mrf.mxu0
          %v3755 = vadd.f32 0.0, %v3754
          %v3756 = vpop.f32.mrf.mxu0
          %3757 = vmatprep.mubr.bf16.mxu0 0
          %3758 = vmatmul.mubr.bf16.gmra.mxu0 %v3680
          %v3759 = vpop.f32.mrf.mxu0
          %v3760 = vadd.f32 0.0, %v3759
          %v3761 = vpop.f32.mrf.mxu0
          %v3762 = vpop.f32.mrf.mxu0
          %v3763 = vadd.f32 0.0, %v3762
          %v3764 = vpop.f32.mrf.mxu0
          %3765 = vmatprep.mubr.bf16.mxu0 0
          %3766 = vmatmul.mubr.bf16.gmra.mxu0 %v3683
          %v3767 = vpop.f32.mrf.mxu0
          %v3768 = vadd.f32 0.0, %v3767
          %v3769 = vpop.f32.mrf.mxu0
          %v3770 = vpop.f32.mrf.mxu0
          %v3771 = vadd.f32 0.0, %v3770
          %v3772 = vpop.f32.mrf.mxu0
          %3773 = vmatprep.mubr.bf16.mxu0 0
          %3774 = vmatmul.mubr.bf16.gmra.mxu0 %v3686
          %v3775 = vpop.f32.mrf.mxu0
          %v3776 = vadd.f32 0.0, %v3775
          %v3777 = vpop.f32.mrf.mxu0
          %v3778 = vpop.f32.mrf.mxu0
          %v3779 = vadd.f32 0.0, %v3778
          %v3780 = vpop.f32.mrf.mxu0
          %3781 = vmatprep.mubr.bf16.mxu0 0
          %3782 = vmatmul.mubr.bf16.gmra.mxu0 %v3689
          %v3783 = vpop.f32.mrf.mxu0
          %v3784 = vadd.f32 0.0, %v3783
          %v3785 = vpop.f32.mrf.mxu0
          %v3786 = vpop.f32.mrf.mxu0
          %v3787 = vadd.f32 0.0, %v3786
          %v3788 = vpop.f32.mrf.mxu0
          %3789 = vmatprep.mubr.bf16.mxu0 0
          %3790 = vmatmul.mubr.bf16.gmra.mxu0 %v3692
          %v3791 = vpop.f32.mrf.mxu0
          %v3792 = vadd.f32 0.0, %v3791
          %v3793 = vpop.f32.mrf.mxu0
          %v3794 = vpop.f32.mrf.mxu0
          %v3795 = vadd.f32 0.0, %v3794
          %v3796 = vpop.f32.mrf.mxu0
          %3797 = vmatprep.mubr.bf16.mxu0 0
          %3798 = vmatmul.mubr.bf16.gmra.mxu0 %v3695
          %v3799 = vpop.f32.mrf.mxu0
          %v3800 = vadd.f32 0.0, %v3799
          %v3801 = vpop.f32.mrf.mxu0
          %v3802 = vpop.f32.mrf.mxu0
          %v3803 = vadd.f32 0.0, %v3802
          %v3804 = vpop.f32.mrf.mxu0
          %3805 = vdwg.mxu0
          %v3806 = vpack.c.bf16 %v3739, %v3736
          %v3807 = vpack.c.bf16 %v3747, %v3744
          %v3808 = vpack.c.bf16 %v3755, %v3752
          %v3809 = vpack.c.bf16 %v3763, %v3760
          %v3810 = vpack.c.bf16 %v3771, %v3768
          %v3811 = vpack.c.bf16 %v3779, %v3776
          %v3812 = vpack.c.bf16 %v3787, %v3784
          %v3813 = vpack.c.bf16 %v3795, %v3792
          %v3814 = vpack.c.bf16 %v3803, %v3800
          %v3815 = vld [vmem:[#allocation9] sm:$0xff]
          %v3816 = vld [vmem:[#allocation9 + $0x8] sm:$0xff]
          %v3817 = vld [vmem:[#allocation9 + $0x10] sm:$0xff]
          %v3818 = vld [vmem:[#allocation9 + $0x18] sm:$0xff]
          %v3819 = vld [vmem:[#allocation9 + $0x20] sm:$0xff]
          %v3820 = vld [vmem:[#allocation9 + $0x28] sm:$0xff]
          %v3821 = vld [vmem:[#allocation9 + $0x30] sm:$0xff]
          %v3822 = vld [vmem:[#allocation9 + $0x38] sm:$0xff]
          %v3823 = vld [vmem:[#allocation9 + $0x40] sm:$0xff]
          %v3824 = vld [vmem:[#allocation9 + $0x48] sm:$0xff]
          %v3825 = vld [vmem:[#allocation9 + $0x50] sm:$0xff]
          %v3826 = vld [vmem:[#allocation9 + $0x58] sm:$0xff]
          %v3827 = vld [vmem:[#allocation9 + $0x60] sm:$0xff]
          %v3828 = vld [vmem:[#allocation9 + $0x68] sm:$0xff]
          %v3829 = vld [vmem:[#allocation9 + $0x70] sm:$0xff]
          %v3830 = vld [vmem:[#allocation9 + $0x78] sm:$0xff]
          %v3831 = vld [vmem:[#allocation9 + $0x80] sm:$0xff]
          %v3832 = vld [vmem:[#allocation9 + $0x88] sm:$0xff]
          %s3833 = smul.u32 %s3583, 16
          %s3834 = smul.addr %s3833, 4
          %s3835 = scalar_lea.vmem [#allocation24], %s3834
          %v3836 = vld [vmem:[%s3835] sm:$0xf]
          %v3837 = vld [vmem:[%s3835 + $0x4] sm:$0xf]
          %v3838 = vld [vmem:[%s3835 + $0x8] sm:$0xf]
          %v3839 = vld [vmem:[%s3835 + $0xc] sm:$0xf]
          %v3840 = vld [vmem:[%s3835 + $0x10] sm:$0xf]
          %v3841 = vld [vmem:[%s3835 + $0x14] sm:$0xf]
          %v3842 = vld [vmem:[%s3835 + $0x18] sm:$0xf]
          %v3843 = vld [vmem:[%s3835 + $0x1c] sm:$0xf]
          %v3844 = vld [vmem:[%s3835 + $0x20] sm:$0xf]
          %v3845 = vld [vmem:[%s3835 + $0x24] sm:$0xf]
          %v3846 = vld [vmem:[%s3835 + $0x28] sm:$0xf]
          %v3847 = vld [vmem:[%s3835 + $0x2c] sm:$0xf]
          %v3848 = vld [vmem:[%s3835 + $0x30] sm:$0xf]
          %v3849 = vld [vmem:[%s3835 + $0x34] sm:$0xf]
          %v3850 = vld [vmem:[%s3835 + $0x38] sm:$0xf]
          %v3851 = vld [vmem:[%s3835 + $0x3c] sm:$0xf]
          %v3868 = vunpack.c.l.b16 %v3836
          %v3869 = vunpack.c.l.b16 %v3837
          %v3870 = vunpack.c.l.b16 %v3838
          %v3871 = vunpack.c.l.b16 %v3839
          %v3872 = vunpack.c.l.b16 %v3840
          %v3873 = vunpack.c.l.b16 %v3841
          %v3874 = vunpack.c.l.b16 %v3842
          %v3875 = vunpack.c.l.b16 %v3843
          %v3876 = vunpack.c.l.b16 %v3844
          %v3877 = vunpack.c.l.b16 %v3845
          %v3878 = vunpack.c.l.b16 %v3846
          %v3879 = vunpack.c.l.b16 %v3847
          %v3880 = vunpack.c.l.b16 %v3848
          %v3881 = vunpack.c.l.b16 %v3849
          %v3882 = vunpack.c.l.b16 %v3850
          %v3883 = vunpack.c.l.b16 %v3851
          %v3884 = vpack.c.b16 %v3869, %v3868
          %v3885 = vpack.c.b16 %v3871, %v3870
          %v3886 = vpack.c.b16 %v3873, %v3872
          %v3887 = vpack.c.b16 %v3875, %v3874
          %v3888 = vpack.c.b16 %v3877, %v3876
          %v3889 = vpack.c.b16 %v3879, %v3878
          %v3890 = vpack.c.b16 %v3881, %v3880
          %v3891 = vpack.c.b16 %v3883, %v3882
          %3900 = vmatprep.subr.bf16.mxu0 0
          %3901 = vmatpush1.bf16.msra.mxu0 %v3891
          %3902 = vmatprep.subr.bf16.mxu0 0
          %3903 = vmatpush1.bf16.msra.mxu0 %v3890
          %3904 = vmatprep.subr.bf16.mxu0 0
          %3905 = vmatpush1.bf16.msra.mxu0 %v3889
          %3906 = vmatprep.subr.bf16.mxu0 0
          %3907 = vmatpush1.bf16.msra.mxu0 %v3888
          %3908 = vmatprep.subr.bf16.mxu0 0
          %3909 = vmatpush1.bf16.msra.mxu0 %v3887
          %3910 = vmatprep.subr.bf16.mxu0 0
          %3911 = vmatpush1.bf16.msra.mxu0 %v3886
          %3912 = vmatprep.subr.bf16.mxu0 0
          %3913 = vmatpush1.bf16.msra.mxu0 %v3885
          %3914 = vmatprep.subr.bf16.mxu0 0
          %3915 = vmatpush1.bf16.msra.mxu0 %v3884
          %3916 = vmatprep.subr.bf16.mxu0 0
          %3917 = vmatpush2.bf16.msra.mxu0 0
          %3918 = vmatprep.subr.bf16.mxu0 0
          %3919 = vmatpush2.bf16.msra.mxu0 0
          %3920 = vmatprep.subr.bf16.mxu0 0
          %3921 = vmatpush2.bf16.msra.mxu0 0
          %3922 = vmatprep.subr.bf16.mxu0 0
          %3923 = vmatpush2.bf16.msra.mxu0 0
          %3924 = vmatprep.subr.bf16.mxu0 0
          %3925 = vmatpush2.bf16.msra.mxu0 0
          %3926 = vmatprep.subr.bf16.mxu0 0
          %3927 = vmatpush2.bf16.msra.mxu0 0
          %3928 = vmatprep.subr.bf16.mxu0 0
          %3929 = vmatpush2.bf16.msra.mxu0 0
          %3930 = vmatprep.subr.bf16.mxu0 0
          %3931 = vmatpush2.bf16.msra.mxu0 0
          %3932 = vmatprep.mubr.bf16.mxu0 0
          %3933 = vmatmul.mubr.bf16.gmra.mxu0 %v3806
          %v3934 = vpop.f32.mrf.mxu0
          %v3935 = vadd.f32 0.0, %v3934
          %v3936 = vpop.f32.mrf.mxu0
          %v3937 = vpop.f32.mrf.mxu0
          %v3938 = vadd.f32 0.0, %v3937
          %v3939 = vpop.f32.mrf.mxu0
          %3940 = vmatprep.mubr.bf16.mxu0 0
          %3941 = vmatmul.mubr.bf16.gmra.mxu0 %v3807
          %v3942 = vpop.f32.mrf.mxu0
          %v3943 = vadd.f32 0.0, %v3942
          %v3944 = vpop.f32.mrf.mxu0
          %v3945 = vpop.f32.mrf.mxu0
          %v3946 = vadd.f32 0.0, %v3945
          %v3947 = vpop.f32.mrf.mxu0
          %3948 = vmatprep.mubr.bf16.mxu0 0
          %3949 = vmatmul.mubr.bf16.gmra.mxu0 %v3808
          %v3950 = vpop.f32.mrf.mxu0
          %v3951 = vadd.f32 0.0, %v3950
          %v3952 = vpop.f32.mrf.mxu0
          %v3953 = vpop.f32.mrf.mxu0
          %v3954 = vadd.f32 0.0, %v3953
          %v3955 = vpop.f32.mrf.mxu0
          %3956 = vmatprep.mubr.bf16.mxu0 0
          %3957 = vmatmul.mubr.bf16.gmra.mxu0 %v3809
          %v3958 = vpop.f32.mrf.mxu0
          %v3959 = vadd.f32 0.0, %v3958
          %v3960 = vpop.f32.mrf.mxu0
          %v3961 = vpop.f32.mrf.mxu0
          %v3962 = vadd.f32 0.0, %v3961
          %v3963 = vpop.f32.mrf.mxu0
          %3964 = vmatprep.mubr.bf16.mxu0 0
          %3965 = vmatmul.mubr.bf16.gmra.mxu0 %v3810
          %v3966 = vpop.f32.mrf.mxu0
          %v3967 = vadd.f32 0.0, %v3966
          %v3968 = vpop.f32.mrf.mxu0
          %v3969 = vpop.f32.mrf.mxu0
          %v3970 = vadd.f32 0.0, %v3969
          %v3971 = vpop.f32.mrf.mxu0
          %3972 = vmatprep.mubr.bf16.mxu0 0
          %3973 = vmatmul.mubr.bf16.gmra.mxu0 %v3811
          %v3974 = vpop.f32.mrf.mxu0
          %v3975 = vadd.f32 0.0, %v3974
          %v3976 = vpop.f32.mrf.mxu0
          %v3977 = vpop.f32.mrf.mxu0
          %v3978 = vadd.f32 0.0, %v3977
          %v3979 = vpop.f32.mrf.mxu0
          %3980 = vmatprep.mubr.bf16.mxu0 0
          %3981 = vmatmul.mubr.bf16.gmra.mxu0 %v3812
          %v3982 = vpop.f32.mrf.mxu0
          %v3983 = vadd.f32 0.0, %v3982
          %v3984 = vpop.f32.mrf.mxu0
          %v3985 = vpop.f32.mrf.mxu0
          %v3986 = vadd.f32 0.0, %v3985
          %v3987 = vpop.f32.mrf.mxu0
          %3988 = vmatprep.mubr.bf16.mxu0 0
          %3989 = vmatmul.mubr.bf16.gmra.mxu0 %v3813
          %v3990 = vpop.f32.mrf.mxu0
          %v3991 = vadd.f32 0.0, %v3990
          %v3992 = vpop.f32.mrf.mxu0
          %v3993 = vpop.f32.mrf.mxu0
          %v3994 = vadd.f32 0.0, %v3993
          %v3995 = vpop.f32.mrf.mxu0
          %3996 = vmatprep.mubr.bf16.mxu0 0
          %3997 = vmatmul.mubr.bf16.gmra.mxu0 %v3814
          %v3998 = vpop.f32.mrf.mxu0
          %v3999 = vadd.f32 0.0, %v3998
          %v4000 = vpop.f32.mrf.mxu0
          %v4001 = vpop.f32.mrf.mxu0
          %v4002 = vadd.f32 0.0, %v4001
          %v4003 = vpop.f32.mrf.mxu0
          %4004 = vdwg.mxu0
          %v4005 = vadd.f32 %v3815, %v3935
          %v4006 = vadd.f32 %v3816, %v3938
          %v4007 = vadd.f32 %v3817, %v3943
          %v4008 = vadd.f32 %v3818, %v3946
          %v4009 = vadd.f32 %v3819, %v3951
          %v4010 = vadd.f32 %v3820, %v3954
          %v4011 = vadd.f32 %v3821, %v3959
          %v4012 = vadd.f32 %v3822, %v3962
          %v4013 = vadd.f32 %v3823, %v3967
          %v4014 = vadd.f32 %v3824, %v3970
          %v4015 = vadd.f32 %v3825, %v3975
          %v4016 = vadd.f32 %v3826, %v3978
          %v4017 = vadd.f32 %v3827, %v3983
          %v4018 = vadd.f32 %v3828, %v3986
          %v4019 = vadd.f32 %v3829, %v3991
          %v4020 = vadd.f32 %v3830, %v3994
          %v4021 = vadd.f32 %v3831, %v3999
          %v4022 = vadd.f32 %v3832, %v4002
          %4023 = vst [vmem:[#allocation9] sm:$0xff] %v4005
          %4024 = vst [vmem:[#allocation9 + $0x8] sm:$0xff] %v4006
          %4025 = vst [vmem:[#allocation9 + $0x10] sm:$0xff] %v4007
          %4026 = vst [vmem:[#allocation9 + $0x18] sm:$0xff] %v4008
          %4027 = vst [vmem:[#allocation9 + $0x20] sm:$0xff] %v4009
          %4028 = vst [vmem:[#allocation9 + $0x28] sm:$0xff] %v4010
          %4029 = vst [vmem:[#allocation9 + $0x30] sm:$0xff] %v4011
          %4030 = vst [vmem:[#allocation9 + $0x38] sm:$0xff] %v4012
          %4031 = vst [vmem:[#allocation9 + $0x40] sm:$0xff] %v4013
          %4032 = vst [vmem:[#allocation9 + $0x48] sm:$0xff] %v4014
          %4033 = vst [vmem:[#allocation9 + $0x50] sm:$0xff] %v4015
          %4034 = vst [vmem:[#allocation9 + $0x58] sm:$0xff] %v4016
          %4035 = vst [vmem:[#allocation9 + $0x60] sm:$0xff] %v4017
          %4036 = vst [vmem:[#allocation9 + $0x68] sm:$0xff] %v4018
          %4037 = vst [vmem:[#allocation9 + $0x70] sm:$0xff] %v4019
          %4038 = vst [vmem:[#allocation9 + $0x78] sm:$0xff] %v4020
          %4039 = vst [vmem:[#allocation9 + $0x80] sm:$0xff] %v4021
          %4040 = vst [vmem:[#allocation9 + $0x88] sm:$0xff] %v4022
        $region215: #{forward.1} parent=119 // loop_footer
          %s3587 = sadd.s32 1, %s3583
        $region216: #{forward.1} parent=119 // loop_footer_branch
          %3582 = sbr.rel target = $region212
        $region217: #{forward.1} parent=119 // loop_exit
          _
        %v4041 = vld [vmem:[#allocation9] sm:$0xff]
        %v4042 = vld [vmem:[#allocation9 + $0x8] sm:$0xff]
        %v4043 = vld [vmem:[#allocation9 + $0x10] sm:$0xff]
        %v4044 = vld [vmem:[#allocation9 + $0x18] sm:$0xff]
        %v4045 = vld [vmem:[#allocation9 + $0x20] sm:$0xff]
        %v4046 = vld [vmem:[#allocation9 + $0x28] sm:$0xff]
        %v4047 = vld [vmem:[#allocation9 + $0x30] sm:$0xff]
        %v4048 = vld [vmem:[#allocation9 + $0x38] sm:$0xff]
        %v4049 = vld [vmem:[#allocation9 + $0x40] sm:$0xff]
        %v4050 = vld [vmem:[#allocation9 + $0x48] sm:$0xff]
        %v4051 = vld [vmem:[#allocation9 + $0x50] sm:$0xff]
        %v4052 = vld [vmem:[#allocation9 + $0x58] sm:$0xff]
        %v4053 = vld [vmem:[#allocation9 + $0x60] sm:$0xff]
        %v4054 = vld [vmem:[#allocation9 + $0x68] sm:$0xff]
        %v4055 = vld [vmem:[#allocation9 + $0x70] sm:$0xff]
        %v4056 = vld [vmem:[#allocation9 + $0x78] sm:$0xff]
        %v4057 = vld [vmem:[#allocation9 + $0x80] sm:$0xff]
        %v4058 = vld [vmem:[#allocation9 + $0x88] sm:$0xff]
        %v4059 = vld [vmem:[%s21] sm:$0x1]
        %v4061 = vlaneseq
        %v4062 = vshrl.u32 %v4061, 7
        %v4063 = vsub.s32 0, %v4062
        %v4064 = vrot.slane %v4059, %v4063
        %v4066 = vadd.f32 %v4041, %v4064
        %v4067 = vadd.f32 %v4042, %v4064
        %v4068 = vadd.f32 %v4043, %v4064
        %v4069 = vadd.f32 %v4044, %v4064
        %v4070 = vadd.f32 %v4045, %v4064
        %v4071 = vadd.f32 %v4046, %v4064
        %v4072 = vadd.f32 %v4047, %v4064
        %v4073 = vadd.f32 %v4048, %v4064
        %v4074 = vadd.f32 %v4049, %v4064
        %v4075 = vadd.f32 %v4050, %v4064
        %v4076 = vadd.f32 %v4051, %v4064
        %v4077 = vadd.f32 %v4052, %v4064
        %v4078 = vadd.f32 %v4053, %v4064
        %v4079 = vadd.f32 %v4054, %v4064
        %v4080 = vadd.f32 %v4055, %v4064
        %v4081 = vadd.f32 %v4056, %v4064
        %v4082 = vadd.f32 %v4057, %v4064
        %v4083 = vadd.f32 %v4058, %v4064
        %v4084 = vmax.f32 %v4066, 0.0
        %v4085 = vmax.f32 %v4067, 0.0
        %v4086 = vmax.f32 %v4068, 0.0
        %v4087 = vmax.f32 %v4069, 0.0
        %v4088 = vmax.f32 %v4070, 0.0
        %v4089 = vmax.f32 %v4071, 0.0
        %v4090 = vmax.f32 %v4072, 0.0
        %v4091 = vmax.f32 %v4073, 0.0
        %v4092 = vmax.f32 %v4074, 0.0
        %v4093 = vmax.f32 %v4075, 0.0
        %v4094 = vmax.f32 %v4076, 0.0
        %v4095 = vmax.f32 %v4077, 0.0
        %v4096 = vmax.f32 %v4078, 0.0
        %v4097 = vmax.f32 %v4079, 0.0
        %v4098 = vmax.f32 %v4080, 0.0
        %v4099 = vmax.f32 %v4081, 0.0
        %v4100 = vmax.f32 %v4082, 0.0
        %v4101 = vmax.f32 %v4083, 0.0
        %v4102 = vpack.c.bf16 %v4085, %v4084
        %v4103 = vpack.c.bf16 %v4087, %v4086
        %v4104 = vpack.c.bf16 %v4089, %v4088
        %v4105 = vpack.c.bf16 %v4091, %v4090
        %v4106 = vpack.c.bf16 %v4093, %v4092
        %v4107 = vpack.c.bf16 %v4095, %v4094
        %v4108 = vpack.c.bf16 %v4097, %v4096
        %v4109 = vpack.c.bf16 %v4099, %v4098
        %v4110 = vpack.c.bf16 %v4101, %v4100
        %v4120 = vunpack.c.l.b16 %v4102
        %v4121 = vunpack.c.h.b16 %v4102
        %v4122 = vunpack.c.l.b16 %v4103
        %v4123 = vunpack.c.h.b16 %v4103
        %v4124 = vunpack.c.l.b16 %v4104
        %v4125 = vunpack.c.h.b16 %v4104
        %v4126 = vunpack.c.l.b16 %v4105
        %v4127 = vunpack.c.h.b16 %v4105
        %v4128 = vunpack.c.l.b16 %v4106
        %v4129 = vunpack.c.h.b16 %v4106
        %v4130 = vunpack.c.l.b16 %v4107
        %v4131 = vunpack.c.h.b16 %v4107
        %v4132 = vunpack.c.l.b16 %v4108
        %v4133 = vunpack.c.h.b16 %v4108
        %v4134 = vunpack.c.l.b16 %v4109
        %v4135 = vunpack.c.h.b16 %v4109
        %v4136 = vunpack.c.l.b16 %v4110
        %v4137 = vunpack.c.h.b16 %v4110
        %v4138 = vpack.c.b16 %v4120, %v4120
        %v4139 = vpack.c.b16 %v4121, %v4121
        %v4140 = vpack.c.b16 %v4122, %v4122
        %v4141 = vpack.c.b16 %v4123, %v4123
        %v4142 = vpack.c.b16 %v4124, %v4124
        %v4143 = vpack.c.b16 %v4125, %v4125
        %v4144 = vpack.c.b16 %v4126, %v4126
        %v4145 = vpack.c.b16 %v4127, %v4127
        %v4146 = vpack.c.b16 %v4128, %v4128
        %v4147 = vpack.c.b16 %v4129, %v4129
        %v4148 = vpack.c.b16 %v4130, %v4130
        %v4149 = vpack.c.b16 %v4131, %v4131
        %v4150 = vpack.c.b16 %v4132, %v4132
        %v4151 = vpack.c.b16 %v4133, %v4133
        %v4152 = vpack.c.b16 %v4134, %v4134
        %v4153 = vpack.c.b16 %v4135, %v4135
        %v4154 = vpack.c.b16 %v4136, %v4136
        %v4155 = vpack.c.b16 %v4137, %v4137
        %4174 = vst [vmem:[#allocation8] sm:$0xf] %v4138
        %4175 = vst [vmem:[#allocation8 + $0x4] sm:$0xf] %v4139
        %4176 = vst [vmem:[#allocation8 + $0x8] sm:$0xf] %v4140
        %4177 = vst [vmem:[#allocation8 + $0xc] sm:$0xf] %v4141
        %4178 = vst [vmem:[#allocation8 + $0x10] sm:$0xf] %v4142
        %4179 = vst [vmem:[#allocation8 + $0x14] sm:$0xf] %v4143
        %4180 = vst [vmem:[#allocation8 + $0x18] sm:$0xf] %v4144
        %4181 = vst [vmem:[#allocation8 + $0x1c] sm:$0xf] %v4145
        %4182 = vst [vmem:[#allocation8 + $0x20] sm:$0xf] %v4146
        %4183 = vst [vmem:[#allocation8 + $0x24] sm:$0xf] %v4147
        %4184 = vst [vmem:[#allocation8 + $0x28] sm:$0xf] %v4148
        %4185 = vst [vmem:[#allocation8 + $0x2c] sm:$0xf] %v4149
        %4186 = vst [vmem:[#allocation8 + $0x30] sm:$0xf] %v4150
        %4187 = vst [vmem:[#allocation8 + $0x34] sm:$0xf] %v4151
        %4188 = vst [vmem:[#allocation8 + $0x38] sm:$0xf] %v4152
        %4189 = vst [vmem:[#allocation8 + $0x3c] sm:$0xf] %v4153
        %4190 = vst [vmem:[#allocation8 + $0x40] sm:$0xf] %v4154
        %4191 = vst [vmem:[#allocation8 + $0x44] sm:$0xf] %v4155
        %v4192 = vld [vmem:[#allocation8] sm:$0xf]
        %v4193 = vld [vmem:[#allocation8 + $0x4] sm:$0xf]
        %v4194 = vld [vmem:[#allocation8 + $0x8] sm:$0xf]
        %v4195 = vld [vmem:[#allocation8 + $0xc] sm:$0xf]
        %v4196 = vld [vmem:[#allocation8 + $0x10] sm:$0xf]
        %v4197 = vld [vmem:[#allocation8 + $0x14] sm:$0xf]
        %v4198 = vld [vmem:[#allocation8 + $0x18] sm:$0xf]
        %v4199 = vld [vmem:[#allocation8 + $0x1c] sm:$0xf]
        %v4200 = vld [vmem:[#allocation8 + $0x20] sm:$0xf]
        %v4201 = vld [vmem:[#allocation8 + $0x24] sm:$0xf]
        %v4202 = vld [vmem:[#allocation8 + $0x28] sm:$0xf]
        %v4203 = vld [vmem:[#allocation8 + $0x2c] sm:$0xf]
        %v4204 = vld [vmem:[#allocation8 + $0x30] sm:$0xf]
        %v4205 = vld [vmem:[#allocation8 + $0x34] sm:$0xf]
        %v4206 = vld [vmem:[#allocation8 + $0x38] sm:$0xf]
        %v4207 = vld [vmem:[#allocation8 + $0x3c] sm:$0xf]
        %v4208 = vld [vmem:[#allocation8 + $0x40] sm:$0xf]
        %v4209 = vld [vmem:[#allocation8 + $0x44] sm:$0xf]
        %v4210 = vld [vmem:[#allocation2] sm:$0xf]
        %v4211 = vld [vmem:[#allocation2 + $0x4] sm:$0xf]
        %v4212 = vld [vmem:[#allocation2 + $0x8] sm:$0xf]
        %v4213 = vld [vmem:[#allocation2 + $0xc] sm:$0xf]
        %v4214 = vld [vmem:[#allocation2 + $0x10] sm:$0xf]
        %v4215 = vld [vmem:[#allocation2 + $0x14] sm:$0xf]
        %v4216 = vld [vmem:[#allocation2 + $0x18] sm:$0xf]
        %v4217 = vld [vmem:[#allocation2 + $0x1c] sm:$0xf]
        %v4218 = vld [vmem:[#allocation2 + $0x20] sm:$0xf]
        %v4219 = vld [vmem:[#allocation2 + $0x24] sm:$0xf]
        %v4220 = vld [vmem:[#allocation2 + $0x28] sm:$0xf]
        %v4221 = vld [vmem:[#allocation2 + $0x2c] sm:$0xf]
        %v4222 = vld [vmem:[#allocation2 + $0x30] sm:$0xf]
        %v4223 = vld [vmem:[#allocation2 + $0x34] sm:$0xf]
        %v4224 = vld [vmem:[#allocation2 + $0x38] sm:$0xf]
        %v4225 = vld [vmem:[#allocation2 + $0x3c] sm:$0xf]
        %v4226 = vld [vmem:[#allocation2 + $0x40] sm:$0xf]
        %v4227 = vld [vmem:[#allocation2 + $0x44] sm:$0xf]
        %v4228 = vadd.bf16 %v4192, %v4210
        %v4229 = vadd.bf16 %v4193, %v4211
        %v4230 = vadd.bf16 %v4194, %v4212
        %v4231 = vadd.bf16 %v4195, %v4213
        %v4232 = vadd.bf16 %v4196, %v4214
        %v4233 = vadd.bf16 %v4197, %v4215
        %v4234 = vadd.bf16 %v4198, %v4216
        %v4235 = vadd.bf16 %v4199, %v4217
        %v4236 = vadd.bf16 %v4200, %v4218
        %v4237 = vadd.bf16 %v4201, %v4219
        %v4238 = vadd.bf16 %v4202, %v4220
        %v4239 = vadd.bf16 %v4203, %v4221
        %v4240 = vadd.bf16 %v4204, %v4222
        %v4241 = vadd.bf16 %v4205, %v4223
        %v4242 = vadd.bf16 %v4206, %v4224
        %v4243 = vadd.bf16 %v4207, %v4225
        %v4244 = vadd.bf16 %v4208, %v4226
        %v4245 = vadd.bf16 %v4209, %v4227
        %4246 = vst [vmem:[#allocation9] sm:$0xff] 0.0
        %4247 = vst [vmem:[#allocation9 + $0x8] sm:$0xff] 0.0
        %4248 = vst [vmem:[#allocation9 + $0x10] sm:$0xff] 0.0
        %4249 = vst [vmem:[#allocation9 + $0x18] sm:$0xff] 0.0
        %4250 = vst [vmem:[#allocation9 + $0x20] sm:$0xff] 0.0
        %4251 = vst [vmem:[#allocation9 + $0x28] sm:$0xff] 0.0
        %4252 = vst [vmem:[#allocation9 + $0x30] sm:$0xff] 0.0
        %4253 = vst [vmem:[#allocation9 + $0x38] sm:$0xff] 0.0
        %4254 = vst [vmem:[#allocation9 + $0x40] sm:$0xff] 0.0
        %4255 = vst [vmem:[#allocation9 + $0x48] sm:$0xff] 0.0
        %4256 = vst [vmem:[#allocation9 + $0x50] sm:$0xff] 0.0
        %4257 = vst [vmem:[#allocation9 + $0x58] sm:$0xff] 0.0
        %4258 = vst [vmem:[#allocation9 + $0x60] sm:$0xff] 0.0
        %4259 = vst [vmem:[#allocation9 + $0x68] sm:$0xff] 0.0
        %4260 = vst [vmem:[#allocation9 + $0x70] sm:$0xff] 0.0
        %4261 = vst [vmem:[#allocation9 + $0x78] sm:$0xff] 0.0
        %4262 = vst [vmem:[#allocation9 + $0x80] sm:$0xff] 0.0
        %4263 = vst [vmem:[#allocation9 + $0x88] sm:$0xff] 0.0
        %4264 = vst [vmem:[#allocation9 + $0x90] sm:$0xff] 0.0
        %4265 = vst [vmem:[#allocation9 + $0x98] sm:$0xff] 0.0
        %4266 = vst [vmem:[#allocation9 + $0xa0] sm:$0xff] 0.0
        %4267 = vst [vmem:[#allocation9 + $0xa8] sm:$0xff] 0.0
        %4268 = vst [vmem:[#allocation9 + $0xb0] sm:$0xff] 0.0
        %4269 = vst [vmem:[#allocation9 + $0xb8] sm:$0xff] 0.0
        %4270 = vst [vmem:[#allocation9 + $0xc0] sm:$0xff] 0.0
        %4271 = vst [vmem:[#allocation9 + $0xc8] sm:$0xff] 0.0
        %4272 = vst [vmem:[#allocation9 + $0xd0] sm:$0xff] 0.0
        %4273 = vst [vmem:[#allocation9 + $0xd8] sm:$0xff] 0.0
        %4274 = vst [vmem:[#allocation9 + $0xe0] sm:$0xff] 0.0
        %4275 = vst [vmem:[#allocation9 + $0xe8] sm:$0xff] 0.0
        %4276 = vst [vmem:[#allocation9 + $0xf0] sm:$0xff] 0.0
        %4277 = vst [vmem:[#allocation9 + $0xf8] sm:$0xff] 0.0
        %4278 = vst [vmem:[#allocation9 + $0x100] sm:$0xff] 0.0
        %4279 = vst [vmem:[#allocation9 + $0x108] sm:$0xff] 0.0
        %4280 = vst [vmem:[#allocation9 + $0x110] sm:$0xff] 0.0
        %4281 = vst [vmem:[#allocation9 + $0x118] sm:$0xff] 0.0
        %4282 = vst [vmem:[#allocation9 + $0x120] sm:$0xff] 0.0
        %4283 = vst [vmem:[#allocation9 + $0x128] sm:$0xff] 0.0
        %4284 = vst [vmem:[#allocation9 + $0x130] sm:$0xff] 0.0
        %4285 = vst [vmem:[#allocation9 + $0x138] sm:$0xff] 0.0
        %4286 = vst [vmem:[#allocation9 + $0x140] sm:$0xff] 0.0
        %4287 = vst [vmem:[#allocation9 + $0x148] sm:$0xff] 0.0
        %4288 = vst [vmem:[#allocation9 + $0x150] sm:$0xff] 0.0
        %4289 = vst [vmem:[#allocation9 + $0x158] sm:$0xff] 0.0
        %4290 = vst [vmem:[#allocation9 + $0x160] sm:$0xff] 0.0
        %4291 = vst [vmem:[#allocation9 + $0x168] sm:$0xff] 0.0
        %4292 = vst [vmem:[#allocation9 + $0x170] sm:$0xff] 0.0
        %4293 = vst [vmem:[#allocation9 + $0x178] sm:$0xff] 0.0
        %4294 = vst [vmem:[#allocation9 + $0x180] sm:$0xff] 0.0
        %4295 = vst [vmem:[#allocation9 + $0x188] sm:$0xff] 0.0
        %4296 = vst [vmem:[#allocation9 + $0x190] sm:$0xff] 0.0
        %4297 = vst [vmem:[#allocation9 + $0x198] sm:$0xff] 0.0
        %4298 = vst [vmem:[#allocation9 + $0x1a0] sm:$0xff] 0.0
        %4299 = vst [vmem:[#allocation9 + $0x1a8] sm:$0xff] 0.0
        %4300 = vst [vmem:[#allocation9 + $0x1b0] sm:$0xff] 0.0
        %4301 = vst [vmem:[#allocation9 + $0x1b8] sm:$0xff] 0.0
        %4302 = vst [vmem:[#allocation9 + $0x1c0] sm:$0xff] 0.0
        %4303 = vst [vmem:[#allocation9 + $0x1c8] sm:$0xff] 0.0
        %4304 = vst [vmem:[#allocation9 + $0x1d0] sm:$0xff] 0.0
        %4305 = vst [vmem:[#allocation9 + $0x1d8] sm:$0xff] 0.0
        %4306 = vst [vmem:[#allocation9 + $0x1e0] sm:$0xff] 0.0
        %4307 = vst [vmem:[#allocation9 + $0x1e8] sm:$0xff] 0.0
        %4308 = vst [vmem:[#allocation9 + $0x1f0] sm:$0xff] 0.0
        %4309 = vst [vmem:[#allocation9 + $0x1f8] sm:$0xff] 0.0
        %4310 = vst [vmem:[#allocation9 + $0x200] sm:$0xff] 0.0
        %4311 = vst [vmem:[#allocation9 + $0x208] sm:$0xff] 0.0
        %4312 = vst [vmem:[#allocation9 + $0x210] sm:$0xff] 0.0
        %4313 = vst [vmem:[#allocation9 + $0x218] sm:$0xff] 0.0
        %4314 = vst [vmem:[#allocation9 + $0x220] sm:$0xff] 0.0
        %4315 = vst [vmem:[#allocation9 + $0x228] sm:$0xff] 0.0
        %4316 = vst [vmem:[#allocation9 + $0x230] sm:$0xff] 0.0
        %4317 = vst [vmem:[#allocation9 + $0x238] sm:$0xff] 0.0
        loop: start=0, step=1, limit=16
        $region218: #{forward.1} parent=119 // loop_pre_header
          _
        $region219: #{forward.1} parent=119 // loop_header
          %s4319 = sphi 0, %s4323
          %p4320 = scmp.ge.s32.totalorder %s4319, 16
        $region220: #{forward.1} parent=119 // loop_header_branch
          %4322 = sbr.rel (%p4320) target = $region224
        $region221: #{forward.1} parent=119 // loop_body
          %s4324 = smul.u32 %s4319, 144
          %s4325 = smul.addr %s4324, 4
          %s4326 = scalar_lea.vmem [#allocation26], %s4325
          %v4327 = vld [vmem:[%s4326] sm:$0xff]
          %v4328 = vld [vmem:[%s4326 + $0x8] sm:$0xff]
          %v4329 = vld [vmem:[%s4326 + $0x10] sm:$0xff]
          %v4330 = vld [vmem:[%s4326 + $0x18] sm:$0xff]
          %v4331 = vld [vmem:[%s4326 + $0x20] sm:$0xff]
          %v4332 = vld [vmem:[%s4326 + $0x28] sm:$0xff]
          %v4333 = vld [vmem:[%s4326 + $0x30] sm:$0xff]
          %v4334 = vld [vmem:[%s4326 + $0x38] sm:$0xff]
          %v4335 = vld [vmem:[%s4326 + $0x40] sm:$0xff]
          %v4336 = vld [vmem:[%s4326 + $0x48] sm:$0xff]
          %v4337 = vld [vmem:[%s4326 + $0x50] sm:$0xff]
          %v4338 = vld [vmem:[%s4326 + $0x58] sm:$0xff]
          %v4339 = vld [vmem:[%s4326 + $0x60] sm:$0xff]
          %v4340 = vld [vmem:[%s4326 + $0x68] sm:$0xff]
          %v4341 = vld [vmem:[%s4326 + $0x70] sm:$0xff]
          %v4342 = vld [vmem:[%s4326 + $0x78] sm:$0xff]
          %v4343 = vld [vmem:[%s4326 + $0x80] sm:$0xff]
          %v4344 = vld [vmem:[%s4326 + $0x88] sm:$0xff]
          %v4345 = vld [vmem:[%s4326 + $0x90] sm:$0xff]
          %v4346 = vld [vmem:[%s4326 + $0x98] sm:$0xff]
          %v4347 = vld [vmem:[%s4326 + $0xa0] sm:$0xff]
          %v4348 = vld [vmem:[%s4326 + $0xa8] sm:$0xff]
          %v4349 = vld [vmem:[%s4326 + $0xb0] sm:$0xff]
          %v4350 = vld [vmem:[%s4326 + $0xb8] sm:$0xff]
          %v4351 = vld [vmem:[%s4326 + $0xc0] sm:$0xff]
          %v4352 = vld [vmem:[%s4326 + $0xc8] sm:$0xff]
          %v4353 = vld [vmem:[%s4326 + $0xd0] sm:$0xff]
          %v4354 = vld [vmem:[%s4326 + $0xd8] sm:$0xff]
          %v4355 = vld [vmem:[%s4326 + $0xe0] sm:$0xff]
          %v4356 = vld [vmem:[%s4326 + $0xe8] sm:$0xff]
          %v4357 = vld [vmem:[%s4326 + $0xf0] sm:$0xff]
          %v4358 = vld [vmem:[%s4326 + $0xf8] sm:$0xff]
          %v4359 = vld [vmem:[%s4326 + $0x100] sm:$0xff]
          %v4360 = vld [vmem:[%s4326 + $0x108] sm:$0xff]
          %v4361 = vld [vmem:[%s4326 + $0x110] sm:$0xff]
          %v4362 = vld [vmem:[%s4326 + $0x118] sm:$0xff]
          %v4363 = vld [vmem:[%s4326 + $0x120] sm:$0xff]
          %v4364 = vld [vmem:[%s4326 + $0x128] sm:$0xff]
          %v4365 = vld [vmem:[%s4326 + $0x130] sm:$0xff]
          %v4366 = vld [vmem:[%s4326 + $0x138] sm:$0xff]
          %v4367 = vld [vmem:[%s4326 + $0x140] sm:$0xff]
          %v4368 = vld [vmem:[%s4326 + $0x148] sm:$0xff]
          %v4369 = vld [vmem:[%s4326 + $0x150] sm:$0xff]
          %v4370 = vld [vmem:[%s4326 + $0x158] sm:$0xff]
          %v4371 = vld [vmem:[%s4326 + $0x160] sm:$0xff]
          %v4372 = vld [vmem:[%s4326 + $0x168] sm:$0xff]
          %v4373 = vld [vmem:[%s4326 + $0x170] sm:$0xff]
          %v4374 = vld [vmem:[%s4326 + $0x178] sm:$0xff]
          %v4375 = vld [vmem:[%s4326 + $0x180] sm:$0xff]
          %v4376 = vld [vmem:[%s4326 + $0x188] sm:$0xff]
          %v4377 = vld [vmem:[%s4326 + $0x190] sm:$0xff]
          %v4378 = vld [vmem:[%s4326 + $0x198] sm:$0xff]
          %v4379 = vld [vmem:[%s4326 + $0x1a0] sm:$0xff]
          %v4380 = vld [vmem:[%s4326 + $0x1a8] sm:$0xff]
          %v4381 = vld [vmem:[%s4326 + $0x1b0] sm:$0xff]
          %v4382 = vld [vmem:[%s4326 + $0x1b8] sm:$0xff]
          %v4383 = vld [vmem:[%s4326 + $0x1c0] sm:$0xff]
          %v4384 = vld [vmem:[%s4326 + $0x1c8] sm:$0xff]
          %v4385 = vld [vmem:[%s4326 + $0x1d0] sm:$0xff]
          %v4386 = vld [vmem:[%s4326 + $0x1d8] sm:$0xff]
          %v4387 = vld [vmem:[%s4326 + $0x1e0] sm:$0xff]
          %v4388 = vld [vmem:[%s4326 + $0x1e8] sm:$0xff]
          %v4389 = vld [vmem:[%s4326 + $0x1f0] sm:$0xff]
          %v4390 = vld [vmem:[%s4326 + $0x1f8] sm:$0xff]
          %v4391 = vld [vmem:[%s4326 + $0x200] sm:$0xff]
          %v4392 = vld [vmem:[%s4326 + $0x208] sm:$0xff]
          %v4393 = vld [vmem:[%s4326 + $0x210] sm:$0xff]
          %v4394 = vld [vmem:[%s4326 + $0x218] sm:$0xff]
          %v4395 = vld [vmem:[%s4326 + $0x220] sm:$0xff]
          %v4396 = vld [vmem:[%s4326 + $0x228] sm:$0xff]
          %v4397 = vld [vmem:[%s4326 + $0x230] sm:$0xff]
          %v4398 = vld [vmem:[%s4326 + $0x238] sm:$0xff]
          %v4471 = vunpack.c.l.b16 %v4327
          %v4472 = vunpack.c.h.b16 %v4327
          %v4473 = vunpack.c.l.b16 %v4328
          %v4474 = vunpack.c.h.b16 %v4328
          %v4475 = vunpack.c.l.b16 %v4329
          %v4476 = vunpack.c.h.b16 %v4329
          %v4477 = vunpack.c.l.b16 %v4330
          %v4478 = vunpack.c.h.b16 %v4330
          %v4479 = vunpack.c.l.b16 %v4331
          %v4480 = vunpack.c.h.b16 %v4331
          %v4481 = vunpack.c.l.b16 %v4332
          %v4482 = vunpack.c.h.b16 %v4332
          %v4483 = vunpack.c.l.b16 %v4333
          %v4484 = vunpack.c.h.b16 %v4333
          %v4485 = vunpack.c.l.b16 %v4334
          %v4486 = vunpack.c.h.b16 %v4334
          %v4487 = vunpack.c.l.b16 %v4335
          %v4488 = vunpack.c.h.b16 %v4335
          %v4489 = vunpack.c.l.b16 %v4336
          %v4490 = vunpack.c.h.b16 %v4336
          %v4491 = vunpack.c.l.b16 %v4337
          %v4492 = vunpack.c.h.b16 %v4337
          %v4493 = vunpack.c.l.b16 %v4338
          %v4494 = vunpack.c.h.b16 %v4338
          %v4495 = vunpack.c.l.b16 %v4339
          %v4496 = vunpack.c.h.b16 %v4339
          %v4497 = vunpack.c.l.b16 %v4340
          %v4498 = vunpack.c.h.b16 %v4340
          %v4499 = vunpack.c.l.b16 %v4341
          %v4500 = vunpack.c.h.b16 %v4341
          %v4501 = vunpack.c.l.b16 %v4342
          %v4502 = vunpack.c.h.b16 %v4342
          %v4503 = vunpack.c.l.b16 %v4343
          %v4504 = vunpack.c.h.b16 %v4343
          %v4505 = vunpack.c.l.b16 %v4344
          %v4506 = vunpack.c.h.b16 %v4344
          %v4507 = vunpack.c.l.b16 %v4345
          %v4508 = vunpack.c.h.b16 %v4345
          %v4509 = vunpack.c.l.b16 %v4346
          %v4510 = vunpack.c.h.b16 %v4346
          %v4511 = vunpack.c.l.b16 %v4347
          %v4512 = vunpack.c.h.b16 %v4347
          %v4513 = vunpack.c.l.b16 %v4348
          %v4514 = vunpack.c.h.b16 %v4348
          %v4515 = vunpack.c.l.b16 %v4349
          %v4516 = vunpack.c.h.b16 %v4349
          %v4517 = vunpack.c.l.b16 %v4350
          %v4518 = vunpack.c.h.b16 %v4350
          %v4519 = vunpack.c.l.b16 %v4351
          %v4520 = vunpack.c.h.b16 %v4351
          %v4521 = vunpack.c.l.b16 %v4352
          %v4522 = vunpack.c.h.b16 %v4352
          %v4523 = vunpack.c.l.b16 %v4353
          %v4524 = vunpack.c.h.b16 %v4353
          %v4525 = vunpack.c.l.b16 %v4354
          %v4526 = vunpack.c.h.b16 %v4354
          %v4527 = vunpack.c.l.b16 %v4355
          %v4528 = vunpack.c.h.b16 %v4355
          %v4529 = vunpack.c.l.b16 %v4356
          %v4530 = vunpack.c.h.b16 %v4356
          %v4531 = vunpack.c.l.b16 %v4357
          %v4532 = vunpack.c.h.b16 %v4357
          %v4533 = vunpack.c.l.b16 %v4358
          %v4534 = vunpack.c.h.b16 %v4358
          %v4535 = vunpack.c.l.b16 %v4359
          %v4536 = vunpack.c.h.b16 %v4359
          %v4537 = vunpack.c.l.b16 %v4360
          %v4538 = vunpack.c.h.b16 %v4360
          %v4539 = vunpack.c.l.b16 %v4361
          %v4540 = vunpack.c.h.b16 %v4361
          %v4541 = vunpack.c.l.b16 %v4362
          %v4542 = vunpack.c.h.b16 %v4362
          %v4543 = vunpack.c.l.b16 %v4363
          %v4544 = vunpack.c.h.b16 %v4363
          %v4545 = vunpack.c.l.b16 %v4364
          %v4546 = vunpack.c.h.b16 %v4364
          %v4547 = vunpack.c.l.b16 %v4365
          %v4548 = vunpack.c.h.b16 %v4365
          %v4549 = vunpack.c.l.b16 %v4366
          %v4550 = vunpack.c.h.b16 %v4366
          %v4551 = vunpack.c.l.b16 %v4367
          %v4552 = vunpack.c.h.b16 %v4367
          %v4553 = vunpack.c.l.b16 %v4368
          %v4554 = vunpack.c.h.b16 %v4368
          %v4555 = vunpack.c.l.b16 %v4369
          %v4556 = vunpack.c.h.b16 %v4369
          %v4557 = vunpack.c.l.b16 %v4370
          %v4558 = vunpack.c.h.b16 %v4370
          %v4559 = vunpack.c.l.b16 %v4371
          %v4560 = vunpack.c.h.b16 %v4371
          %v4561 = vunpack.c.l.b16 %v4372
          %v4562 = vunpack.c.h.b16 %v4372
          %v4563 = vunpack.c.l.b16 %v4373
          %v4564 = vunpack.c.h.b16 %v4373
          %v4565 = vunpack.c.l.b16 %v4374
          %v4566 = vunpack.c.h.b16 %v4374
          %v4567 = vunpack.c.l.b16 %v4375
          %v4568 = vunpack.c.h.b16 %v4375
          %v4569 = vunpack.c.l.b16 %v4376
          %v4570 = vunpack.c.h.b16 %v4376
          %v4571 = vunpack.c.l.b16 %v4377
          %v4572 = vunpack.c.h.b16 %v4377
          %v4573 = vunpack.c.l.b16 %v4378
          %v4574 = vunpack.c.h.b16 %v4378
          %v4575 = vunpack.c.l.b16 %v4379
          %v4576 = vunpack.c.h.b16 %v4379
          %v4577 = vunpack.c.l.b16 %v4380
          %v4578 = vunpack.c.h.b16 %v4380
          %v4579 = vunpack.c.l.b16 %v4381
          %v4580 = vunpack.c.h.b16 %v4381
          %v4581 = vunpack.c.l.b16 %v4382
          %v4582 = vunpack.c.h.b16 %v4382
          %v4583 = vunpack.c.l.b16 %v4383
          %v4584 = vunpack.c.h.b16 %v4383
          %v4585 = vunpack.c.l.b16 %v4384
          %v4586 = vunpack.c.h.b16 %v4384
          %v4587 = vunpack.c.l.b16 %v4385
          %v4588 = vunpack.c.h.b16 %v4385
          %v4589 = vunpack.c.l.b16 %v4386
          %v4590 = vunpack.c.h.b16 %v4386
          %v4591 = vunpack.c.l.b16 %v4387
          %v4592 = vunpack.c.h.b16 %v4387
          %v4593 = vunpack.c.l.b16 %v4388
          %v4594 = vunpack.c.h.b16 %v4388
          %v4595 = vunpack.c.l.b16 %v4389
          %v4596 = vunpack.c.h.b16 %v4389
          %v4597 = vunpack.c.l.b16 %v4390
          %v4598 = vunpack.c.h.b16 %v4390
          %v4599 = vunpack.c.l.b16 %v4391
          %v4600 = vunpack.c.h.b16 %v4391
          %v4601 = vunpack.c.l.b16 %v4392
          %v4602 = vunpack.c.h.b16 %v4392
          %v4603 = vunpack.c.l.b16 %v4393
          %v4604 = vunpack.c.h.b16 %v4393
          %v4605 = vunpack.c.l.b16 %v4394
          %v4606 = vunpack.c.h.b16 %v4394
          %v4607 = vunpack.c.l.b16 %v4395
          %v4608 = vunpack.c.h.b16 %v4395
          %v4609 = vunpack.c.l.b16 %v4396
          %v4610 = vunpack.c.h.b16 %v4396
          %v4611 = vunpack.c.l.b16 %v4397
          %v4612 = vunpack.c.h.b16 %v4397
          %v4613 = vunpack.c.l.b16 %v4398
          %v4614 = vunpack.c.h.b16 %v4398
          %v4615 = vpack.c.b16 %v4473, %v4471
          %v4616 = vpack.c.b16 %v4474, %v4472
          %v4617 = vpack.c.b16 %v4477, %v4475
          %v4618 = vpack.c.b16 %v4478, %v4476
          %v4619 = vpack.c.b16 %v4481, %v4479
          %v4620 = vpack.c.b16 %v4482, %v4480
          %v4621 = vpack.c.b16 %v4485, %v4483
          %v4622 = vpack.c.b16 %v4486, %v4484
          %v4623 = vpack.c.b16 %v4489, %v4487
          %v4624 = vpack.c.b16 %v4490, %v4488
          %v4625 = vpack.c.b16 %v4493, %v4491
          %v4626 = vpack.c.b16 %v4494, %v4492
          %v4627 = vpack.c.b16 %v4497, %v4495
          %v4628 = vpack.c.b16 %v4498, %v4496
          %v4629 = vpack.c.b16 %v4501, %v4499
          %v4630 = vpack.c.b16 %v4502, %v4500
          %v4631 = vpack.c.b16 %v4505, %v4503
          %v4632 = vpack.c.b16 %v4506, %v4504
          %v4633 = vpack.c.b16 %v4509, %v4507
          %v4634 = vpack.c.b16 %v4510, %v4508
          %v4635 = vpack.c.b16 %v4513, %v4511
          %v4636 = vpack.c.b16 %v4514, %v4512
          %v4637 = vpack.c.b16 %v4517, %v4515
          %v4638 = vpack.c.b16 %v4518, %v4516
          %v4639 = vpack.c.b16 %v4521, %v4519
          %v4640 = vpack.c.b16 %v4522, %v4520
          %v4641 = vpack.c.b16 %v4525, %v4523
          %v4642 = vpack.c.b16 %v4526, %v4524
          %v4643 = vpack.c.b16 %v4529, %v4527
          %v4644 = vpack.c.b16 %v4530, %v4528
          %v4645 = vpack.c.b16 %v4533, %v4531
          %v4646 = vpack.c.b16 %v4534, %v4532
          %v4647 = vpack.c.b16 %v4537, %v4535
          %v4648 = vpack.c.b16 %v4538, %v4536
          %v4649 = vpack.c.b16 %v4541, %v4539
          %v4650 = vpack.c.b16 %v4542, %v4540
          %v4651 = vpack.c.b16 %v4545, %v4543
          %v4652 = vpack.c.b16 %v4546, %v4544
          %v4653 = vpack.c.b16 %v4549, %v4547
          %v4654 = vpack.c.b16 %v4550, %v4548
          %v4655 = vpack.c.b16 %v4553, %v4551
          %v4656 = vpack.c.b16 %v4554, %v4552
          %v4657 = vpack.c.b16 %v4557, %v4555
          %v4658 = vpack.c.b16 %v4558, %v4556
          %v4659 = vpack.c.b16 %v4561, %v4559
          %v4660 = vpack.c.b16 %v4562, %v4560
          %v4661 = vpack.c.b16 %v4565, %v4563
          %v4662 = vpack.c.b16 %v4566, %v4564
          %v4663 = vpack.c.b16 %v4569, %v4567
          %v4664 = vpack.c.b16 %v4570, %v4568
          %v4665 = vpack.c.b16 %v4573, %v4571
          %v4666 = vpack.c.b16 %v4574, %v4572
          %v4667 = vpack.c.b16 %v4577, %v4575
          %v4668 = vpack.c.b16 %v4578, %v4576
          %v4669 = vpack.c.b16 %v4581, %v4579
          %v4670 = vpack.c.b16 %v4582, %v4580
          %v4671 = vpack.c.b16 %v4585, %v4583
          %v4672 = vpack.c.b16 %v4586, %v4584
          %v4673 = vpack.c.b16 %v4589, %v4587
          %v4674 = vpack.c.b16 %v4590, %v4588
          %v4675 = vpack.c.b16 %v4593, %v4591
          %v4676 = vpack.c.b16 %v4594, %v4592
          %v4677 = vpack.c.b16 %v4597, %v4595
          %v4678 = vpack.c.b16 %v4598, %v4596
          %v4679 = vpack.c.b16 %v4601, %v4599
          %v4680 = vpack.c.b16 %v4602, %v4600
          %v4681 = vpack.c.b16 %v4605, %v4603
          %v4682 = vpack.c.b16 %v4606, %v4604
          %v4683 = vpack.c.b16 %v4609, %v4607
          %v4684 = vpack.c.b16 %v4610, %v4608
          %v4685 = vpack.c.b16 %v4613, %v4611
          %v4686 = vpack.c.b16 %v4614, %v4612
          %v4741 = vunpack.c.l.b16 %v4228
          %v4742 = vunpack.c.l.b16 %v4229
          %v4743 = vunpack.c.l.b16 %v4230
          %v4744 = vunpack.c.l.b16 %v4231
          %v4745 = vunpack.c.l.b16 %v4232
          %v4746 = vunpack.c.l.b16 %v4233
          %v4747 = vunpack.c.l.b16 %v4234
          %v4748 = vunpack.c.l.b16 %v4235
          %v4749 = vunpack.c.l.b16 %v4236
          %v4750 = vunpack.c.l.b16 %v4237
          %v4751 = vunpack.c.l.b16 %v4238
          %v4752 = vunpack.c.l.b16 %v4239
          %v4753 = vunpack.c.l.b16 %v4240
          %v4754 = vunpack.c.l.b16 %v4241
          %v4755 = vunpack.c.l.b16 %v4242
          %v4756 = vunpack.c.l.b16 %v4243
          %v4757 = vunpack.c.l.b16 %v4244
          %v4758 = vunpack.c.l.b16 %v4245
          %v4759 = vpack.c.b16 %v4742, %v4741
          %v4760 = vpack.c.b16 %v4744, %v4743
          %v4761 = vpack.c.b16 %v4746, %v4745
          %v4762 = vpack.c.b16 %v4748, %v4747
          %v4763 = vpack.c.b16 %v4750, %v4749
          %v4764 = vpack.c.b16 %v4752, %v4751
          %v4765 = vpack.c.b16 %v4754, %v4753
          %v4766 = vpack.c.b16 %v4756, %v4755
          %v4767 = vpack.c.b16 %v4758, %v4757
          %vm4777 = vcmask 130048
          %v4779 = vsel %vm4777, %v4616, 0
          %v4782 = vsel %vm4777, %v4618, 0
          %v4785 = vsel %vm4777, %v4620, 0
          %v4788 = vsel %vm4777, %v4622, 0
          %v4791 = vsel %vm4777, %v4624, 0
          %v4794 = vsel %vm4777, %v4626, 0
          %v4797 = vsel %vm4777, %v4628, 0
          %v4800 = vsel %vm4777, %v4630, 0
          %v4803 = vsel %vm4777, %v4632, 0
          %v4806 = vsel %vm4777, %v4634, 0
          %v4809 = vsel %vm4777, %v4636, 0
          %v4812 = vsel %vm4777, %v4638, 0
          %v4815 = vsel %vm4777, %v4640, 0
          %v4818 = vsel %vm4777, %v4642, 0
          %v4821 = vsel %vm4777, %v4644, 0
          %v4824 = vsel %vm4777, %v4646, 0
          %v4827 = vsel %vm4777, %v4648, 0
          %v4830 = vsel %vm4777, %v4650, 0
          %v4833 = vsel %vm4777, %v4652, 0
          %v4836 = vsel %vm4777, %v4654, 0
          %v4839 = vsel %vm4777, %v4656, 0
          %v4842 = vsel %vm4777, %v4658, 0
          %v4845 = vsel %vm4777, %v4660, 0
          %v4848 = vsel %vm4777, %v4662, 0
          %v4851 = vsel %vm4777, %v4664, 0
          %v4854 = vsel %vm4777, %v4666, 0
          %v4857 = vsel %vm4777, %v4668, 0
          %v4860 = vsel %vm4777, %v4670, 0
          %v4863 = vsel %vm4777, %v4672, 0
          %v4866 = vsel %vm4777, %v4674, 0
          %v4869 = vsel %vm4777, %v4676, 0
          %v4872 = vsel %vm4777, %v4678, 0
          %v4875 = vsel %vm4777, %v4680, 0
          %v4878 = vsel %vm4777, %v4682, 0
          %v4881 = vsel %vm4777, %v4684, 0
          %v4884 = vsel %vm4777, %v4686, 0
          %4886 = vmatprep.subr.bf16.mxu0 0
          %4887 = vmatpush1.bf16.msra.mxu0 %v4766
          %4888 = vmatprep.subr.bf16.mxu0 0
          %4889 = vmatpush1.bf16.msra.mxu0 %v4765
          %4890 = vmatprep.subr.bf16.mxu0 0
          %4891 = vmatpush1.bf16.msra.mxu0 %v4764
          %4892 = vmatprep.subr.bf16.mxu0 0
          %4893 = vmatpush1.bf16.msra.mxu0 %v4763
          %4894 = vmatprep.subr.bf16.mxu0 0
          %4895 = vmatpush1.bf16.msra.mxu0 %v4762
          %4896 = vmatprep.subr.bf16.mxu0 0
          %4897 = vmatpush1.bf16.msra.mxu0 %v4761
          %4898 = vmatprep.subr.bf16.mxu0 0
          %4899 = vmatpush1.bf16.msra.mxu0 %v4760
          %4900 = vmatprep.subr.bf16.mxu0 0
          %4901 = vmatpush1.bf16.msra.mxu0 %v4759
          %4902 = vmatprep.subr.bf16.mxu0 0
          %4903 = vmatpush2.bf16.msra.mxu0 0
          %4904 = vmatprep.subr.bf16.mxu0 0
          %4905 = vmatpush2.bf16.msra.mxu0 0
          %4906 = vmatprep.subr.bf16.mxu0 0
          %4907 = vmatpush2.bf16.msra.mxu0 0
          %4908 = vmatprep.subr.bf16.mxu0 0
          %4909 = vmatpush2.bf16.msra.mxu0 0
          %4910 = vmatprep.subr.bf16.mxu0 0
          %4911 = vmatpush2.bf16.msra.mxu0 0
          %4912 = vmatprep.subr.bf16.mxu0 0
          %4913 = vmatpush2.bf16.msra.mxu0 0
          %4914 = vmatprep.subr.bf16.mxu0 0
          %4915 = vmatpush2.bf16.msra.mxu0 0
          %4916 = vmatprep.subr.bf16.mxu0 0
          %4917 = vmatpush2.bf16.msra.mxu0 %v4767
          %4918 = vmatprep.mubr.bf16.mxu0 %v4779
          %4919 = vmatmul.mubr.bf16.gmra.mxu0 %v4615
          %v4920 = vpop.f32.mrf.mxu0
          %v4921 = vadd.f32 0.0, %v4920
          %v4922 = vpop.f32.mrf.mxu0
          %v4923 = vpop.f32.mrf.mxu0
          %v4924 = vadd.f32 0.0, %v4923
          %v4925 = vpop.f32.mrf.mxu0
          %4926 = vmatprep.mubr.bf16.mxu0 %v4782
          %4927 = vmatmul.mubr.bf16.gmra.mxu0 %v4617
          %v4928 = vpop.f32.mrf.mxu0
          %v4929 = vadd.f32 0.0, %v4928
          %v4930 = vpop.f32.mrf.mxu0
          %v4931 = vpop.f32.mrf.mxu0
          %v4932 = vadd.f32 0.0, %v4931
          %v4933 = vpop.f32.mrf.mxu0
          %4934 = vmatprep.mubr.bf16.mxu0 %v4785
          %4935 = vmatmul.mubr.bf16.gmra.mxu0 %v4619
          %v4936 = vpop.f32.mrf.mxu0
          %v4937 = vadd.f32 0.0, %v4936
          %v4938 = vpop.f32.mrf.mxu0
          %v4939 = vpop.f32.mrf.mxu0
          %v4940 = vadd.f32 0.0, %v4939
          %v4941 = vpop.f32.mrf.mxu0
          %4942 = vmatprep.mubr.bf16.mxu0 %v4788
          %4943 = vmatmul.mubr.bf16.gmra.mxu0 %v4621
          %v4944 = vpop.f32.mrf.mxu0
          %v4945 = vadd.f32 0.0, %v4944
          %v4946 = vpop.f32.mrf.mxu0
          %v4947 = vpop.f32.mrf.mxu0
          %v4948 = vadd.f32 0.0, %v4947
          %v4949 = vpop.f32.mrf.mxu0
          %4950 = vmatprep.mubr.bf16.mxu0 %v4791
          %4951 = vmatmul.mubr.bf16.gmra.mxu0 %v4623
          %v4952 = vpop.f32.mrf.mxu0
          %v4953 = vadd.f32 0.0, %v4952
          %v4954 = vpop.f32.mrf.mxu0
          %v4955 = vpop.f32.mrf.mxu0
          %v4956 = vadd.f32 0.0, %v4955
          %v4957 = vpop.f32.mrf.mxu0
          %4958 = vmatprep.mubr.bf16.mxu0 %v4794
          %4959 = vmatmul.mubr.bf16.gmra.mxu0 %v4625
          %v4960 = vpop.f32.mrf.mxu0
          %v4961 = vadd.f32 0.0, %v4960
          %v4962 = vpop.f32.mrf.mxu0
          %v4963 = vpop.f32.mrf.mxu0
          %v4964 = vadd.f32 0.0, %v4963
          %v4965 = vpop.f32.mrf.mxu0
          %4966 = vmatprep.mubr.bf16.mxu0 %v4797
          %4967 = vmatmul.mubr.bf16.gmra.mxu0 %v4627
          %v4968 = vpop.f32.mrf.mxu0
          %v4969 = vadd.f32 0.0, %v4968
          %v4970 = vpop.f32.mrf.mxu0
          %v4971 = vpop.f32.mrf.mxu0
          %v4972 = vadd.f32 0.0, %v4971
          %v4973 = vpop.f32.mrf.mxu0
          %4974 = vmatprep.mubr.bf16.mxu0 %v4800
          %4975 = vmatmul.mubr.bf16.gmra.mxu0 %v4629
          %v4976 = vpop.f32.mrf.mxu0
          %v4977 = vadd.f32 0.0, %v4976
          %v4978 = vpop.f32.mrf.mxu0
          %v4979 = vpop.f32.mrf.mxu0
          %v4980 = vadd.f32 0.0, %v4979
          %v4981 = vpop.f32.mrf.mxu0
          %4982 = vmatprep.mubr.bf16.mxu0 %v4803
          %4983 = vmatmul.mubr.bf16.gmra.mxu0 %v4631
          %v4984 = vpop.f32.mrf.mxu0
          %v4985 = vadd.f32 0.0, %v4984
          %v4986 = vpop.f32.mrf.mxu0
          %v4987 = vpop.f32.mrf.mxu0
          %v4988 = vadd.f32 0.0, %v4987
          %v4989 = vpop.f32.mrf.mxu0
          %4990 = vmatprep.mubr.bf16.mxu0 %v4806
          %4991 = vmatmul.mubr.bf16.gmra.mxu0 %v4633
          %v4992 = vpop.f32.mrf.mxu0
          %v4993 = vadd.f32 0.0, %v4992
          %v4994 = vpop.f32.mrf.mxu0
          %v4995 = vpop.f32.mrf.mxu0
          %v4996 = vadd.f32 0.0, %v4995
          %v4997 = vpop.f32.mrf.mxu0
          %4998 = vmatprep.mubr.bf16.mxu0 %v4809
          %4999 = vmatmul.mubr.bf16.gmra.mxu0 %v4635
          %v5000 = vpop.f32.mrf.mxu0
          %v5001 = vadd.f32 0.0, %v5000
          %v5002 = vpop.f32.mrf.mxu0
          %v5003 = vpop.f32.mrf.mxu0
          %v5004 = vadd.f32 0.0, %v5003
          %v5005 = vpop.f32.mrf.mxu0
          %5006 = vmatprep.mubr.bf16.mxu0 %v4812
          %5007 = vmatmul.mubr.bf16.gmra.mxu0 %v4637
          %v5008 = vpop.f32.mrf.mxu0
          %v5009 = vadd.f32 0.0, %v5008
          %v5010 = vpop.f32.mrf.mxu0
          %v5011 = vpop.f32.mrf.mxu0
          %v5012 = vadd.f32 0.0, %v5011
          %v5013 = vpop.f32.mrf.mxu0
          %5014 = vmatprep.mubr.bf16.mxu0 %v4815
          %5015 = vmatmul.mubr.bf16.gmra.mxu0 %v4639
          %v5016 = vpop.f32.mrf.mxu0
          %v5017 = vadd.f32 0.0, %v5016
          %v5018 = vpop.f32.mrf.mxu0
          %v5019 = vpop.f32.mrf.mxu0
          %v5020 = vadd.f32 0.0, %v5019
          %v5021 = vpop.f32.mrf.mxu0
          %5022 = vmatprep.mubr.bf16.mxu0 %v4818
          %5023 = vmatmul.mubr.bf16.gmra.mxu0 %v4641
          %v5024 = vpop.f32.mrf.mxu0
          %v5025 = vadd.f32 0.0, %v5024
          %v5026 = vpop.f32.mrf.mxu0
          %v5027 = vpop.f32.mrf.mxu0
          %v5028 = vadd.f32 0.0, %v5027
          %v5029 = vpop.f32.mrf.mxu0
          %5030 = vmatprep.mubr.bf16.mxu0 %v4821
          %5031 = vmatmul.mubr.bf16.gmra.mxu0 %v4643
          %v5032 = vpop.f32.mrf.mxu0
          %v5033 = vadd.f32 0.0, %v5032
          %v5034 = vpop.f32.mrf.mxu0
          %v5035 = vpop.f32.mrf.mxu0
          %v5036 = vadd.f32 0.0, %v5035
          %v5037 = vpop.f32.mrf.mxu0
          %5038 = vmatprep.mubr.bf16.mxu0 %v4824
          %5039 = vmatmul.mubr.bf16.gmra.mxu0 %v4645
          %v5040 = vpop.f32.mrf.mxu0
          %v5041 = vadd.f32 0.0, %v5040
          %v5042 = vpop.f32.mrf.mxu0
          %v5043 = vpop.f32.mrf.mxu0
          %v5044 = vadd.f32 0.0, %v5043
          %v5045 = vpop.f32.mrf.mxu0
          %5046 = vmatprep.mubr.bf16.mxu0 %v4827
          %5047 = vmatmul.mubr.bf16.gmra.mxu0 %v4647
          %v5048 = vpop.f32.mrf.mxu0
          %v5049 = vadd.f32 0.0, %v5048
          %v5050 = vpop.f32.mrf.mxu0
          %v5051 = vpop.f32.mrf.mxu0
          %v5052 = vadd.f32 0.0, %v5051
          %v5053 = vpop.f32.mrf.mxu0
          %5054 = vmatprep.mubr.bf16.mxu0 %v4830
          %5055 = vmatmul.mubr.bf16.gmra.mxu0 %v4649
          %v5056 = vpop.f32.mrf.mxu0
          %v5057 = vadd.f32 0.0, %v5056
          %v5058 = vpop.f32.mrf.mxu0
          %v5059 = vpop.f32.mrf.mxu0
          %v5060 = vadd.f32 0.0, %v5059
          %v5061 = vpop.f32.mrf.mxu0
          %5062 = vmatprep.mubr.bf16.mxu0 %v4833
          %5063 = vmatmul.mubr.bf16.gmra.mxu0 %v4651
          %v5064 = vpop.f32.mrf.mxu0
          %v5065 = vadd.f32 0.0, %v5064
          %v5066 = vpop.f32.mrf.mxu0
          %v5067 = vpop.f32.mrf.mxu0
          %v5068 = vadd.f32 0.0, %v5067
          %v5069 = vpop.f32.mrf.mxu0
          %5070 = vmatprep.mubr.bf16.mxu0 %v4836
          %5071 = vmatmul.mubr.bf16.gmra.mxu0 %v4653
          %v5072 = vpop.f32.mrf.mxu0
          %v5073 = vadd.f32 0.0, %v5072
          %v5074 = vpop.f32.mrf.mxu0
          %v5075 = vpop.f32.mrf.mxu0
          %v5076 = vadd.f32 0.0, %v5075
          %v5077 = vpop.f32.mrf.mxu0
          %5078 = vmatprep.mubr.bf16.mxu0 %v4839
          %5079 = vmatmul.mubr.bf16.gmra.mxu0 %v4655
          %v5080 = vpop.f32.mrf.mxu0
          %v5081 = vadd.f32 0.0, %v5080
          %v5082 = vpop.f32.mrf.mxu0
          %v5083 = vpop.f32.mrf.mxu0
          %v5084 = vadd.f32 0.0, %v5083
          %v5085 = vpop.f32.mrf.mxu0
          %5086 = vmatprep.mubr.bf16.mxu0 %v4842
          %5087 = vmatmul.mubr.bf16.gmra.mxu0 %v4657
          %v5088 = vpop.f32.mrf.mxu0
          %v5089 = vadd.f32 0.0, %v5088
          %v5090 = vpop.f32.mrf.mxu0
          %v5091 = vpop.f32.mrf.mxu0
          %v5092 = vadd.f32 0.0, %v5091
          %v5093 = vpop.f32.mrf.mxu0
          %5094 = vmatprep.mubr.bf16.mxu0 %v4845
          %5095 = vmatmul.mubr.bf16.gmra.mxu0 %v4659
          %v5096 = vpop.f32.mrf.mxu0
          %v5097 = vadd.f32 0.0, %v5096
          %v5098 = vpop.f32.mrf.mxu0
          %v5099 = vpop.f32.mrf.mxu0
          %v5100 = vadd.f32 0.0, %v5099
          %v5101 = vpop.f32.mrf.mxu0
          %5102 = vmatprep.mubr.bf16.mxu0 %v4848
          %5103 = vmatmul.mubr.bf16.gmra.mxu0 %v4661
          %v5104 = vpop.f32.mrf.mxu0
          %v5105 = vadd.f32 0.0, %v5104
          %v5106 = vpop.f32.mrf.mxu0
          %v5107 = vpop.f32.mrf.mxu0
          %v5108 = vadd.f32 0.0, %v5107
          %v5109 = vpop.f32.mrf.mxu0
          %5110 = vmatprep.mubr.bf16.mxu0 %v4851
          %5111 = vmatmul.mubr.bf16.gmra.mxu0 %v4663
          %v5112 = vpop.f32.mrf.mxu0
          %v5113 = vadd.f32 0.0, %v5112
          %v5114 = vpop.f32.mrf.mxu0
          %v5115 = vpop.f32.mrf.mxu0
          %v5116 = vadd.f32 0.0, %v5115
          %v5117 = vpop.f32.mrf.mxu0
          %5118 = vmatprep.mubr.bf16.mxu0 %v4854
          %5119 = vmatmul.mubr.bf16.gmra.mxu0 %v4665
          %v5120 = vpop.f32.mrf.mxu0
          %v5121 = vadd.f32 0.0, %v5120
          %v5122 = vpop.f32.mrf.mxu0
          %v5123 = vpop.f32.mrf.mxu0
          %v5124 = vadd.f32 0.0, %v5123
          %v5125 = vpop.f32.mrf.mxu0
          %5126 = vmatprep.mubr.bf16.mxu0 %v4857
          %5127 = vmatmul.mubr.bf16.gmra.mxu0 %v4667
          %v5128 = vpop.f32.mrf.mxu0
          %v5129 = vadd.f32 0.0, %v5128
          %v5130 = vpop.f32.mrf.mxu0
          %v5131 = vpop.f32.mrf.mxu0
          %v5132 = vadd.f32 0.0, %v5131
          %v5133 = vpop.f32.mrf.mxu0
          %5134 = vmatprep.mubr.bf16.mxu0 %v4860
          %5135 = vmatmul.mubr.bf16.gmra.mxu0 %v4669
          %v5136 = vpop.f32.mrf.mxu0
          %v5137 = vadd.f32 0.0, %v5136
          %v5138 = vpop.f32.mrf.mxu0
          %v5139 = vpop.f32.mrf.mxu0
          %v5140 = vadd.f32 0.0, %v5139
          %v5141 = vpop.f32.mrf.mxu0
          %5142 = vmatprep.mubr.bf16.mxu0 %v4863
          %5143 = vmatmul.mubr.bf16.gmra.mxu0 %v4671
          %v5144 = vpop.f32.mrf.mxu0
          %v5145 = vadd.f32 0.0, %v5144
          %v5146 = vpop.f32.mrf.mxu0
          %v5147 = vpop.f32.mrf.mxu0
          %v5148 = vadd.f32 0.0, %v5147
          %v5149 = vpop.f32.mrf.mxu0
          %5150 = vmatprep.mubr.bf16.mxu0 %v4866
          %5151 = vmatmul.mubr.bf16.gmra.mxu0 %v4673
          %v5152 = vpop.f32.mrf.mxu0
          %v5153 = vadd.f32 0.0, %v5152
          %v5154 = vpop.f32.mrf.mxu0
          %v5155 = vpop.f32.mrf.mxu0
          %v5156 = vadd.f32 0.0, %v5155
          %v5157 = vpop.f32.mrf.mxu0
          %5158 = vmatprep.mubr.bf16.mxu0 %v4869
          %5159 = vmatmul.mubr.bf16.gmra.mxu0 %v4675
          %v5160 = vpop.f32.mrf.mxu0
          %v5161 = vadd.f32 0.0, %v5160
          %v5162 = vpop.f32.mrf.mxu0
          %v5163 = vpop.f32.mrf.mxu0
          %v5164 = vadd.f32 0.0, %v5163
          %v5165 = vpop.f32.mrf.mxu0
          %5166 = vmatprep.mubr.bf16.mxu0 %v4872
          %5167 = vmatmul.mubr.bf16.gmra.mxu0 %v4677
          %v5168 = vpop.f32.mrf.mxu0
          %v5169 = vadd.f32 0.0, %v5168
          %v5170 = vpop.f32.mrf.mxu0
          %v5171 = vpop.f32.mrf.mxu0
          %v5172 = vadd.f32 0.0, %v5171
          %v5173 = vpop.f32.mrf.mxu0
          %5174 = vmatprep.mubr.bf16.mxu0 %v4875
          %5175 = vmatmul.mubr.bf16.gmra.mxu0 %v4679
          %v5176 = vpop.f32.mrf.mxu0
          %v5177 = vadd.f32 0.0, %v5176
          %v5178 = vpop.f32.mrf.mxu0
          %v5179 = vpop.f32.mrf.mxu0
          %v5180 = vadd.f32 0.0, %v5179
          %v5181 = vpop.f32.mrf.mxu0
          %5182 = vmatprep.mubr.bf16.mxu0 %v4878
          %5183 = vmatmul.mubr.bf16.gmra.mxu0 %v4681
          %v5184 = vpop.f32.mrf.mxu0
          %v5185 = vadd.f32 0.0, %v5184
          %v5186 = vpop.f32.mrf.mxu0
          %v5187 = vpop.f32.mrf.mxu0
          %v5188 = vadd.f32 0.0, %v5187
          %v5189 = vpop.f32.mrf.mxu0
          %5190 = vmatprep.mubr.bf16.mxu0 %v4881
          %5191 = vmatmul.mubr.bf16.gmra.mxu0 %v4683
          %v5192 = vpop.f32.mrf.mxu0
          %v5193 = vadd.f32 0.0, %v5192
          %v5194 = vpop.f32.mrf.mxu0
          %v5195 = vpop.f32.mrf.mxu0
          %v5196 = vadd.f32 0.0, %v5195
          %v5197 = vpop.f32.mrf.mxu0
          %5198 = vmatprep.mubr.bf16.mxu0 %v4884
          %5199 = vmatmul.mubr.bf16.gmra.mxu0 %v4685
          %v5200 = vpop.f32.mrf.mxu0
          %v5201 = vadd.f32 0.0, %v5200
          %v5202 = vpop.f32.mrf.mxu0
          %v5203 = vpop.f32.mrf.mxu0
          %v5204 = vadd.f32 0.0, %v5203
          %v5205 = vpop.f32.mrf.mxu0
          %5206 = vdwg.mxu0
          %v5207 = vpack.c.bf16 %v4924, %v4921
          %v5208 = vpack.c.bf16 %v4932, %v4929
          %v5209 = vpack.c.bf16 %v4940, %v4937
          %v5210 = vpack.c.bf16 %v4948, %v4945
          %v5211 = vpack.c.bf16 %v4956, %v4953
          %v5212 = vpack.c.bf16 %v4964, %v4961
          %v5213 = vpack.c.bf16 %v4972, %v4969
          %v5214 = vpack.c.bf16 %v4980, %v4977
          %v5215 = vpack.c.bf16 %v4988, %v4985
          %v5216 = vpack.c.bf16 %v4996, %v4993
          %v5217 = vpack.c.bf16 %v5004, %v5001
          %v5218 = vpack.c.bf16 %v5012, %v5009
          %v5219 = vpack.c.bf16 %v5020, %v5017
          %v5220 = vpack.c.bf16 %v5028, %v5025
          %v5221 = vpack.c.bf16 %v5036, %v5033
          %v5222 = vpack.c.bf16 %v5044, %v5041
          %v5223 = vpack.c.bf16 %v5052, %v5049
          %v5224 = vpack.c.bf16 %v5060, %v5057
          %v5225 = vpack.c.bf16 %v5068, %v5065
          %v5226 = vpack.c.bf16 %v5076, %v5073
          %v5227 = vpack.c.bf16 %v5084, %v5081
          %v5228 = vpack.c.bf16 %v5092, %v5089
          %v5229 = vpack.c.bf16 %v5100, %v5097
          %v5230 = vpack.c.bf16 %v5108, %v5105
          %v5231 = vpack.c.bf16 %v5116, %v5113
          %v5232 = vpack.c.bf16 %v5124, %v5121
          %v5233 = vpack.c.bf16 %v5132, %v5129
          %v5234 = vpack.c.bf16 %v5140, %v5137
          %v5235 = vpack.c.bf16 %v5148, %v5145
          %v5236 = vpack.c.bf16 %v5156, %v5153
          %v5237 = vpack.c.bf16 %v5164, %v5161
          %v5238 = vpack.c.bf16 %v5172, %v5169
          %v5239 = vpack.c.bf16 %v5180, %v5177
          %v5240 = vpack.c.bf16 %v5188, %v5185
          %v5241 = vpack.c.bf16 %v5196, %v5193
          %v5242 = vpack.c.bf16 %v5204, %v5201
          %v5243 = vld [vmem:[#allocation9] sm:$0xff]
          %v5244 = vld [vmem:[#allocation9 + $0x8] sm:$0xff]
          %v5245 = vld [vmem:[#allocation9 + $0x10] sm:$0xff]
          %v5246 = vld [vmem:[#allocation9 + $0x18] sm:$0xff]
          %v5247 = vld [vmem:[#allocation9 + $0x20] sm:$0xff]
          %v5248 = vld [vmem:[#allocation9 + $0x28] sm:$0xff]
          %v5249 = vld [vmem:[#allocation9 + $0x30] sm:$0xff]
          %v5250 = vld [vmem:[#allocation9 + $0x38] sm:$0xff]
          %v5251 = vld [vmem:[#allocation9 + $0x40] sm:$0xff]
          %v5252 = vld [vmem:[#allocation9 + $0x48] sm:$0xff]
          %v5253 = vld [vmem:[#allocation9 + $0x50] sm:$0xff]
          %v5254 = vld [vmem:[#allocation9 + $0x58] sm:$0xff]
          %v5255 = vld [vmem:[#allocation9 + $0x60] sm:$0xff]
          %v5256 = vld [vmem:[#allocation9 + $0x68] sm:$0xff]
          %v5257 = vld [vmem:[#allocation9 + $0x70] sm:$0xff]
          %v5258 = vld [vmem:[#allocation9 + $0x78] sm:$0xff]
          %v5259 = vld [vmem:[#allocation9 + $0x80] sm:$0xff]
          %v5260 = vld [vmem:[#allocation9 + $0x88] sm:$0xff]
          %v5261 = vld [vmem:[#allocation9 + $0x90] sm:$0xff]
          %v5262 = vld [vmem:[#allocation9 + $0x98] sm:$0xff]
          %v5263 = vld [vmem:[#allocation9 + $0xa0] sm:$0xff]
          %v5264 = vld [vmem:[#allocation9 + $0xa8] sm:$0xff]
          %v5265 = vld [vmem:[#allocation9 + $0xb0] sm:$0xff]
          %v5266 = vld [vmem:[#allocation9 + $0xb8] sm:$0xff]
          %v5267 = vld [vmem:[#allocation9 + $0xc0] sm:$0xff]
          %v5268 = vld [vmem:[#allocation9 + $0xc8] sm:$0xff]
          %v5269 = vld [vmem:[#allocation9 + $0xd0] sm:$0xff]
          %v5270 = vld [vmem:[#allocation9 + $0xd8] sm:$0xff]
          %v5271 = vld [vmem:[#allocation9 + $0xe0] sm:$0xff]
          %v5272 = vld [vmem:[#allocation9 + $0xe8] sm:$0xff]
          %v5273 = vld [vmem:[#allocation9 + $0xf0] sm:$0xff]
          %v5274 = vld [vmem:[#allocation9 + $0xf8] sm:$0xff]
          %v5275 = vld [vmem:[#allocation9 + $0x100] sm:$0xff]
          %v5276 = vld [vmem:[#allocation9 + $0x108] sm:$0xff]
          %v5277 = vld [vmem:[#allocation9 + $0x110] sm:$0xff]
          %v5278 = vld [vmem:[#allocation9 + $0x118] sm:$0xff]
          %v5279 = vld [vmem:[#allocation9 + $0x120] sm:$0xff]
          %v5280 = vld [vmem:[#allocation9 + $0x128] sm:$0xff]
          %v5281 = vld [vmem:[#allocation9 + $0x130] sm:$0xff]
          %v5282 = vld [vmem:[#allocation9 + $0x138] sm:$0xff]
          %v5283 = vld [vmem:[#allocation9 + $0x140] sm:$0xff]
          %v5284 = vld [vmem:[#allocation9 + $0x148] sm:$0xff]
          %v5285 = vld [vmem:[#allocation9 + $0x150] sm:$0xff]
          %v5286 = vld [vmem:[#allocation9 + $0x158] sm:$0xff]
          %v5287 = vld [vmem:[#allocation9 + $0x160] sm:$0xff]
          %v5288 = vld [vmem:[#allocation9 + $0x168] sm:$0xff]
          %v5289 = vld [vmem:[#allocation9 + $0x170] sm:$0xff]
          %v5290 = vld [vmem:[#allocation9 + $0x178] sm:$0xff]
          %v5291 = vld [vmem:[#allocation9 + $0x180] sm:$0xff]
          %v5292 = vld [vmem:[#allocation9 + $0x188] sm:$0xff]
          %v5293 = vld [vmem:[#allocation9 + $0x190] sm:$0xff]
          %v5294 = vld [vmem:[#allocation9 + $0x198] sm:$0xff]
          %v5295 = vld [vmem:[#allocation9 + $0x1a0] sm:$0xff]
          %v5296 = vld [vmem:[#allocation9 + $0x1a8] sm:$0xff]
          %v5297 = vld [vmem:[#allocation9 + $0x1b0] sm:$0xff]
          %v5298 = vld [vmem:[#allocation9 + $0x1b8] sm:$0xff]
          %v5299 = vld [vmem:[#allocation9 + $0x1c0] sm:$0xff]
          %v5300 = vld [vmem:[#allocation9 + $0x1c8] sm:$0xff]
          %v5301 = vld [vmem:[#allocation9 + $0x1d0] sm:$0xff]
          %v5302 = vld [vmem:[#allocation9 + $0x1d8] sm:$0xff]
          %v5303 = vld [vmem:[#allocation9 + $0x1e0] sm:$0xff]
          %v5304 = vld [vmem:[#allocation9 + $0x1e8] sm:$0xff]
          %v5305 = vld [vmem:[#allocation9 + $0x1f0] sm:$0xff]
          %v5306 = vld [vmem:[#allocation9 + $0x1f8] sm:$0xff]
          %v5307 = vld [vmem:[#allocation9 + $0x200] sm:$0xff]
          %v5308 = vld [vmem:[#allocation9 + $0x208] sm:$0xff]
          %v5309 = vld [vmem:[#allocation9 + $0x210] sm:$0xff]
          %v5310 = vld [vmem:[#allocation9 + $0x218] sm:$0xff]
          %v5311 = vld [vmem:[#allocation9 + $0x220] sm:$0xff]
          %v5312 = vld [vmem:[#allocation9 + $0x228] sm:$0xff]
          %v5313 = vld [vmem:[#allocation9 + $0x230] sm:$0xff]
          %v5314 = vld [vmem:[#allocation9 + $0x238] sm:$0xff]
          %s5315 = smul.u32 %s4319, 16
          %s5316 = smul.addr %s5315, 4
          %s5317 = scalar_lea.vmem [#allocation27], %s5316
          %v5318 = vld [vmem:[%s5317] sm:$0xf]
          %v5319 = vld [vmem:[%s5317 + $0x4] sm:$0xf]
          %v5320 = vld [vmem:[%s5317 + $0x8] sm:$0xf]
          %v5321 = vld [vmem:[%s5317 + $0xc] sm:$0xf]
          %v5322 = vld [vmem:[%s5317 + $0x10] sm:$0xf]
          %v5323 = vld [vmem:[%s5317 + $0x14] sm:$0xf]
          %v5324 = vld [vmem:[%s5317 + $0x18] sm:$0xf]
          %v5325 = vld [vmem:[%s5317 + $0x1c] sm:$0xf]
          %v5326 = vld [vmem:[%s5317 + $0x20] sm:$0xf]
          %v5327 = vld [vmem:[%s5317 + $0x24] sm:$0xf]
          %v5328 = vld [vmem:[%s5317 + $0x28] sm:$0xf]
          %v5329 = vld [vmem:[%s5317 + $0x2c] sm:$0xf]
          %v5330 = vld [vmem:[%s5317 + $0x30] sm:$0xf]
          %v5331 = vld [vmem:[%s5317 + $0x34] sm:$0xf]
          %v5332 = vld [vmem:[%s5317 + $0x38] sm:$0xf]
          %v5333 = vld [vmem:[%s5317 + $0x3c] sm:$0xf]
          %v5350 = vunpack.c.l.b16 %v5318
          %v5351 = vunpack.c.l.b16 %v5319
          %v5352 = vunpack.c.l.b16 %v5320
          %v5353 = vunpack.c.l.b16 %v5321
          %v5354 = vunpack.c.l.b16 %v5322
          %v5355 = vunpack.c.l.b16 %v5323
          %v5356 = vunpack.c.l.b16 %v5324
          %v5357 = vunpack.c.l.b16 %v5325
          %v5358 = vunpack.c.l.b16 %v5326
          %v5359 = vunpack.c.l.b16 %v5327
          %v5360 = vunpack.c.l.b16 %v5328
          %v5361 = vunpack.c.l.b16 %v5329
          %v5362 = vunpack.c.l.b16 %v5330
          %v5363 = vunpack.c.l.b16 %v5331
          %v5364 = vunpack.c.l.b16 %v5332
          %v5365 = vunpack.c.l.b16 %v5333
          %v5366 = vpack.c.b16 %v5351, %v5350
          %v5367 = vpack.c.b16 %v5353, %v5352
          %v5368 = vpack.c.b16 %v5355, %v5354
          %v5369 = vpack.c.b16 %v5357, %v5356
          %v5370 = vpack.c.b16 %v5359, %v5358
          %v5371 = vpack.c.b16 %v5361, %v5360
          %v5372 = vpack.c.b16 %v5363, %v5362
          %v5373 = vpack.c.b16 %v5365, %v5364
          %5382 = vmatprep.subr.bf16.mxu0 0
          %5383 = vmatpush1.bf16.msra.mxu0 %v5373
          %5384 = vmatprep.subr.bf16.mxu0 0
          %5385 = vmatpush1.bf16.msra.mxu0 %v5372
          %5386 = vmatprep.subr.bf16.mxu0 0
          %5387 = vmatpush1.bf16.msra.mxu0 %v5371
          %5388 = vmatprep.subr.bf16.mxu0 0
          %5389 = vmatpush1.bf16.msra.mxu0 %v5370
          %5390 = vmatprep.subr.bf16.mxu0 0
          %5391 = vmatpush1.bf16.msra.mxu0 %v5369
          %5392 = vmatprep.subr.bf16.mxu0 0
          %5393 = vmatpush1.bf16.msra.mxu0 %v5368
          %5394 = vmatprep.subr.bf16.mxu0 0
          %5395 = vmatpush1.bf16.msra.mxu0 %v5367
          %5396 = vmatprep.subr.bf16.mxu0 0
          %5397 = vmatpush1.bf16.msra.mxu0 %v5366
          %5398 = vmatprep.subr.bf16.mxu0 0
          %5399 = vmatpush2.bf16.msra.mxu0 0
          %5400 = vmatprep.subr.bf16.mxu0 0
          %5401 = vmatpush2.bf16.msra.mxu0 0
          %5402 = vmatprep.subr.bf16.mxu0 0
          %5403 = vmatpush2.bf16.msra.mxu0 0
          %5404 = vmatprep.subr.bf16.mxu0 0
          %5405 = vmatpush2.bf16.msra.mxu0 0
          %5406 = vmatprep.subr.bf16.mxu0 0
          %5407 = vmatpush2.bf16.msra.mxu0 0
          %5408 = vmatprep.subr.bf16.mxu0 0
          %5409 = vmatpush2.bf16.msra.mxu0 0
          %5410 = vmatprep.subr.bf16.mxu0 0
          %5411 = vmatpush2.bf16.msra.mxu0 0
          %5412 = vmatprep.subr.bf16.mxu0 0
          %5413 = vmatpush2.bf16.msra.mxu0 0
          %5414 = vmatprep.mubr.bf16.mxu0 0
          %5415 = vmatmul.mubr.bf16.gmra.mxu0 %v5207
          %v5416 = vpop.f32.mrf.mxu0
          %v5417 = vadd.f32 0.0, %v5416
          %v5418 = vpop.f32.mrf.mxu0
          %v5419 = vpop.f32.mrf.mxu0
          %v5420 = vadd.f32 0.0, %v5419
          %v5421 = vpop.f32.mrf.mxu0
          %5422 = vmatprep.mubr.bf16.mxu0 0
          %5423 = vmatmul.mubr.bf16.gmra.mxu0 %v5208
          %v5424 = vpop.f32.mrf.mxu0
          %v5425 = vadd.f32 0.0, %v5424
          %v5426 = vpop.f32.mrf.mxu0
          %v5427 = vpop.f32.mrf.mxu0
          %v5428 = vadd.f32 0.0, %v5427
          %v5429 = vpop.f32.mrf.mxu0
          %5430 = vmatprep.mubr.bf16.mxu0 0
          %5431 = vmatmul.mubr.bf16.gmra.mxu0 %v5209
          %v5432 = vpop.f32.mrf.mxu0
          %v5433 = vadd.f32 0.0, %v5432
          %v5434 = vpop.f32.mrf.mxu0
          %v5435 = vpop.f32.mrf.mxu0
          %v5436 = vadd.f32 0.0, %v5435
          %v5437 = vpop.f32.mrf.mxu0
          %5438 = vmatprep.mubr.bf16.mxu0 0
          %5439 = vmatmul.mubr.bf16.gmra.mxu0 %v5210
          %v5440 = vpop.f32.mrf.mxu0
          %v5441 = vadd.f32 0.0, %v5440
          %v5442 = vpop.f32.mrf.mxu0
          %v5443 = vpop.f32.mrf.mxu0
          %v5444 = vadd.f32 0.0, %v5443
          %v5445 = vpop.f32.mrf.mxu0
          %5446 = vmatprep.mubr.bf16.mxu0 0
          %5447 = vmatmul.mubr.bf16.gmra.mxu0 %v5211
          %v5448 = vpop.f32.mrf.mxu0
          %v5449 = vadd.f32 0.0, %v5448
          %v5450 = vpop.f32.mrf.mxu0
          %v5451 = vpop.f32.mrf.mxu0
          %v5452 = vadd.f32 0.0, %v5451
          %v5453 = vpop.f32.mrf.mxu0
          %5454 = vmatprep.mubr.bf16.mxu0 0
          %5455 = vmatmul.mubr.bf16.gmra.mxu0 %v5212
          %v5456 = vpop.f32.mrf.mxu0
          %v5457 = vadd.f32 0.0, %v5456
          %v5458 = vpop.f32.mrf.mxu0
          %v5459 = vpop.f32.mrf.mxu0
          %v5460 = vadd.f32 0.0, %v5459
          %v5461 = vpop.f32.mrf.mxu0
          %5462 = vmatprep.mubr.bf16.mxu0 0
          %5463 = vmatmul.mubr.bf16.gmra.mxu0 %v5213
          %v5464 = vpop.f32.mrf.mxu0
          %v5465 = vadd.f32 0.0, %v5464
          %v5466 = vpop.f32.mrf.mxu0
          %v5467 = vpop.f32.mrf.mxu0
          %v5468 = vadd.f32 0.0, %v5467
          %v5469 = vpop.f32.mrf.mxu0
          %5470 = vmatprep.mubr.bf16.mxu0 0
          %5471 = vmatmul.mubr.bf16.gmra.mxu0 %v5214
          %v5472 = vpop.f32.mrf.mxu0
          %v5473 = vadd.f32 0.0, %v5472
          %v5474 = vpop.f32.mrf.mxu0
          %v5475 = vpop.f32.mrf.mxu0
          %v5476 = vadd.f32 0.0, %v5475
          %v5477 = vpop.f32.mrf.mxu0
          %5478 = vmatprep.mubr.bf16.mxu0 0
          %5479 = vmatmul.mubr.bf16.gmra.mxu0 %v5215
          %v5480 = vpop.f32.mrf.mxu0
          %v5481 = vadd.f32 0.0, %v5480
          %v5482 = vpop.f32.mrf.mxu0
          %v5483 = vpop.f32.mrf.mxu0
          %v5484 = vadd.f32 0.0, %v5483
          %v5485 = vpop.f32.mrf.mxu0
          %5486 = vmatprep.mubr.bf16.mxu0 0
          %5487 = vmatmul.mubr.bf16.gmra.mxu0 %v5216
          %v5488 = vpop.f32.mrf.mxu0
          %v5489 = vadd.f32 0.0, %v5488
          %v5490 = vpop.f32.mrf.mxu0
          %v5491 = vpop.f32.mrf.mxu0
          %v5492 = vadd.f32 0.0, %v5491
          %v5493 = vpop.f32.mrf.mxu0
          %5494 = vmatprep.mubr.bf16.mxu0 0
          %5495 = vmatmul.mubr.bf16.gmra.mxu0 %v5217
          %v5496 = vpop.f32.mrf.mxu0
          %v5497 = vadd.f32 0.0, %v5496
          %v5498 = vpop.f32.mrf.mxu0
          %v5499 = vpop.f32.mrf.mxu0
          %v5500 = vadd.f32 0.0, %v5499
          %v5501 = vpop.f32.mrf.mxu0
          %5502 = vmatprep.mubr.bf16.mxu0 0
          %5503 = vmatmul.mubr.bf16.gmra.mxu0 %v5218
          %v5504 = vpop.f32.mrf.mxu0
          %v5505 = vadd.f32 0.0, %v5504
          %v5506 = vpop.f32.mrf.mxu0
          %v5507 = vpop.f32.mrf.mxu0
          %v5508 = vadd.f32 0.0, %v5507
          %v5509 = vpop.f32.mrf.mxu0
          %5510 = vmatprep.mubr.bf16.mxu0 0
          %5511 = vmatmul.mubr.bf16.gmra.mxu0 %v5219
          %v5512 = vpop.f32.mrf.mxu0
          %v5513 = vadd.f32 0.0, %v5512
          %v5514 = vpop.f32.mrf.mxu0
          %v5515 = vpop.f32.mrf.mxu0
          %v5516 = vadd.f32 0.0, %v5515
          %v5517 = vpop.f32.mrf.mxu0
          %5518 = vmatprep.mubr.bf16.mxu0 0
          %5519 = vmatmul.mubr.bf16.gmra.mxu0 %v5220
          %v5520 = vpop.f32.mrf.mxu0
          %v5521 = vadd.f32 0.0, %v5520
          %v5522 = vpop.f32.mrf.mxu0
          %v5523 = vpop.f32.mrf.mxu0
          %v5524 = vadd.f32 0.0, %v5523
          %v5525 = vpop.f32.mrf.mxu0
          %5526 = vmatprep.mubr.bf16.mxu0 0
          %5527 = vmatmul.mubr.bf16.gmra.mxu0 %v5221
          %v5528 = vpop.f32.mrf.mxu0
          %v5529 = vadd.f32 0.0, %v5528
          %v5530 = vpop.f32.mrf.mxu0
          %v5531 = vpop.f32.mrf.mxu0
          %v5532 = vadd.f32 0.0, %v5531
          %v5533 = vpop.f32.mrf.mxu0
          %5534 = vmatprep.mubr.bf16.mxu0 0
          %5535 = vmatmul.mubr.bf16.gmra.mxu0 %v5222
          %v5536 = vpop.f32.mrf.mxu0
          %v5537 = vadd.f32 0.0, %v5536
          %v5538 = vpop.f32.mrf.mxu0
          %v5539 = vpop.f32.mrf.mxu0
          %v5540 = vadd.f32 0.0, %v5539
          %v5541 = vpop.f32.mrf.mxu0
          %5542 = vmatprep.mubr.bf16.mxu0 0
          %5543 = vmatmul.mubr.bf16.gmra.mxu0 %v5223
          %v5544 = vpop.f32.mrf.mxu0
          %v5545 = vadd.f32 0.0, %v5544
          %v5546 = vpop.f32.mrf.mxu0
          %v5547 = vpop.f32.mrf.mxu0
          %v5548 = vadd.f32 0.0, %v5547
          %v5549 = vpop.f32.mrf.mxu0
          %5550 = vmatprep.mubr.bf16.mxu0 0
          %5551 = vmatmul.mubr.bf16.gmra.mxu0 %v5224
          %v5552 = vpop.f32.mrf.mxu0
          %v5553 = vadd.f32 0.0, %v5552
          %v5554 = vpop.f32.mrf.mxu0
          %v5555 = vpop.f32.mrf.mxu0
          %v5556 = vadd.f32 0.0, %v5555
          %v5557 = vpop.f32.mrf.mxu0
          %5558 = vmatprep.mubr.bf16.mxu0 0
          %5559 = vmatmul.mubr.bf16.gmra.mxu0 %v5225
          %v5560 = vpop.f32.mrf.mxu0
          %v5561 = vadd.f32 0.0, %v5560
          %v5562 = vpop.f32.mrf.mxu0
          %v5563 = vpop.f32.mrf.mxu0
          %v5564 = vadd.f32 0.0, %v5563
          %v5565 = vpop.f32.mrf.mxu0
          %5566 = vmatprep.mubr.bf16.mxu0 0
          %5567 = vmatmul.mubr.bf16.gmra.mxu0 %v5226
          %v5568 = vpop.f32.mrf.mxu0
          %v5569 = vadd.f32 0.0, %v5568
          %v5570 = vpop.f32.mrf.mxu0
          %v5571 = vpop.f32.mrf.mxu0
          %v5572 = vadd.f32 0.0, %v5571
          %v5573 = vpop.f32.mrf.mxu0
          %5574 = vmatprep.mubr.bf16.mxu0 0
          %5575 = vmatmul.mubr.bf16.gmra.mxu0 %v5227
          %v5576 = vpop.f32.mrf.mxu0
          %v5577 = vadd.f32 0.0, %v5576
          %v5578 = vpop.f32.mrf.mxu0
          %v5579 = vpop.f32.mrf.mxu0
          %v5580 = vadd.f32 0.0, %v5579
          %v5581 = vpop.f32.mrf.mxu0
          %5582 = vmatprep.mubr.bf16.mxu0 0
          %5583 = vmatmul.mubr.bf16.gmra.mxu0 %v5228
          %v5584 = vpop.f32.mrf.mxu0
          %v5585 = vadd.f32 0.0, %v5584
          %v5586 = vpop.f32.mrf.mxu0
          %v5587 = vpop.f32.mrf.mxu0
          %v5588 = vadd.f32 0.0, %v5587
          %v5589 = vpop.f32.mrf.mxu0
          %5590 = vmatprep.mubr.bf16.mxu0 0
          %5591 = vmatmul.mubr.bf16.gmra.mxu0 %v5229
          %v5592 = vpop.f32.mrf.mxu0
          %v5593 = vadd.f32 0.0, %v5592
          %v5594 = vpop.f32.mrf.mxu0
          %v5595 = vpop.f32.mrf.mxu0
          %v5596 = vadd.f32 0.0, %v5595
          %v5597 = vpop.f32.mrf.mxu0
          %5598 = vmatprep.mubr.bf16.mxu0 0
          %5599 = vmatmul.mubr.bf16.gmra.mxu0 %v5230
          %v5600 = vpop.f32.mrf.mxu0
          %v5601 = vadd.f32 0.0, %v5600
          %v5602 = vpop.f32.mrf.mxu0
          %v5603 = vpop.f32.mrf.mxu0
          %v5604 = vadd.f32 0.0, %v5603
          %v5605 = vpop.f32.mrf.mxu0
          %5606 = vmatprep.mubr.bf16.mxu0 0
          %5607 = vmatmul.mubr.bf16.gmra.mxu0 %v5231
          %v5608 = vpop.f32.mrf.mxu0
          %v5609 = vadd.f32 0.0, %v5608
          %v5610 = vpop.f32.mrf.mxu0
          %v5611 = vpop.f32.mrf.mxu0
          %v5612 = vadd.f32 0.0, %v5611
          %v5613 = vpop.f32.mrf.mxu0
          %5614 = vmatprep.mubr.bf16.mxu0 0
          %5615 = vmatmul.mubr.bf16.gmra.mxu0 %v5232
          %v5616 = vpop.f32.mrf.mxu0
          %v5617 = vadd.f32 0.0, %v5616
          %v5618 = vpop.f32.mrf.mxu0
          %v5619 = vpop.f32.mrf.mxu0
          %v5620 = vadd.f32 0.0, %v5619
          %v5621 = vpop.f32.mrf.mxu0
          %5622 = vmatprep.mubr.bf16.mxu0 0
          %5623 = vmatmul.mubr.bf16.gmra.mxu0 %v5233
          %v5624 = vpop.f32.mrf.mxu0
          %v5625 = vadd.f32 0.0, %v5624
          %v5626 = vpop.f32.mrf.mxu0
          %v5627 = vpop.f32.mrf.mxu0
          %v5628 = vadd.f32 0.0, %v5627
          %v5629 = vpop.f32.mrf.mxu0
          %5630 = vmatprep.mubr.bf16.mxu0 0
          %5631 = vmatmul.mubr.bf16.gmra.mxu0 %v5234
          %v5632 = vpop.f32.mrf.mxu0
          %v5633 = vadd.f32 0.0, %v5632
          %v5634 = vpop.f32.mrf.mxu0
          %v5635 = vpop.f32.mrf.mxu0
          %v5636 = vadd.f32 0.0, %v5635
          %v5637 = vpop.f32.mrf.mxu0
          %5638 = vmatprep.mubr.bf16.mxu0 0
          %5639 = vmatmul.mubr.bf16.gmra.mxu0 %v5235
          %v5640 = vpop.f32.mrf.mxu0
          %v5641 = vadd.f32 0.0, %v5640
          %v5642 = vpop.f32.mrf.mxu0
          %v5643 = vpop.f32.mrf.mxu0
          %v5644 = vadd.f32 0.0, %v5643
          %v5645 = vpop.f32.mrf.mxu0
          %5646 = vmatprep.mubr.bf16.mxu0 0
          %5647 = vmatmul.mubr.bf16.gmra.mxu0 %v5236
          %v5648 = vpop.f32.mrf.mxu0
          %v5649 = vadd.f32 0.0, %v5648
          %v5650 = vpop.f32.mrf.mxu0
          %v5651 = vpop.f32.mrf.mxu0
          %v5652 = vadd.f32 0.0, %v5651
          %v5653 = vpop.f32.mrf.mxu0
          %5654 = vmatprep.mubr.bf16.mxu0 0
          %5655 = vmatmul.mubr.bf16.gmra.mxu0 %v5237
          %v5656 = vpop.f32.mrf.mxu0
          %v5657 = vadd.f32 0.0, %v5656
          %v5658 = vpop.f32.mrf.mxu0
          %v5659 = vpop.f32.mrf.mxu0
          %v5660 = vadd.f32 0.0, %v5659
          %v5661 = vpop.f32.mrf.mxu0
          %5662 = vmatprep.mubr.bf16.mxu0 0
          %5663 = vmatmul.mubr.bf16.gmra.mxu0 %v5238
          %v5664 = vpop.f32.mrf.mxu0
          %v5665 = vadd.f32 0.0, %v5664
          %v5666 = vpop.f32.mrf.mxu0
          %v5667 = vpop.f32.mrf.mxu0
          %v5668 = vadd.f32 0.0, %v5667
          %v5669 = vpop.f32.mrf.mxu0
          %5670 = vmatprep.mubr.bf16.mxu0 0
          %5671 = vmatmul.mubr.bf16.gmra.mxu0 %v5239
          %v5672 = vpop.f32.mrf.mxu0
          %v5673 = vadd.f32 0.0, %v5672
          %v5674 = vpop.f32.mrf.mxu0
          %v5675 = vpop.f32.mrf.mxu0
          %v5676 = vadd.f32 0.0, %v5675
          %v5677 = vpop.f32.mrf.mxu0
          %5678 = vmatprep.mubr.bf16.mxu0 0
          %5679 = vmatmul.mubr.bf16.gmra.mxu0 %v5240
          %v5680 = vpop.f32.mrf.mxu0
          %v5681 = vadd.f32 0.0, %v5680
          %v5682 = vpop.f32.mrf.mxu0
          %v5683 = vpop.f32.mrf.mxu0
          %v5684 = vadd.f32 0.0, %v5683
          %v5685 = vpop.f32.mrf.mxu0
          %5686 = vmatprep.mubr.bf16.mxu0 0
          %5687 = vmatmul.mubr.bf16.gmra.mxu0 %v5241
          %v5688 = vpop.f32.mrf.mxu0
          %v5689 = vadd.f32 0.0, %v5688
          %v5690 = vpop.f32.mrf.mxu0
          %v5691 = vpop.f32.mrf.mxu0
          %v5692 = vadd.f32 0.0, %v5691
          %v5693 = vpop.f32.mrf.mxu0
          %5694 = vmatprep.mubr.bf16.mxu0 0
          %5695 = vmatmul.mubr.bf16.gmra.mxu0 %v5242
          %v5696 = vpop.f32.mrf.mxu0
          %v5697 = vadd.f32 0.0, %v5696
          %v5698 = vpop.f32.mrf.mxu0
          %v5699 = vpop.f32.mrf.mxu0
          %v5700 = vadd.f32 0.0, %v5699
          %v5701 = vpop.f32.mrf.mxu0
          %5702 = vdwg.mxu0
          %v5703 = vadd.f32 %v5243, %v5417
          %v5704 = vadd.f32 %v5244, %v5420
          %v5705 = vadd.f32 %v5245, %v5425
          %v5706 = vadd.f32 %v5246, %v5428
          %v5707 = vadd.f32 %v5247, %v5433
          %v5708 = vadd.f32 %v5248, %v5436
          %v5709 = vadd.f32 %v5249, %v5441
          %v5710 = vadd.f32 %v5250, %v5444
          %v5711 = vadd.f32 %v5251, %v5449
          %v5712 = vadd.f32 %v5252, %v5452
          %v5713 = vadd.f32 %v5253, %v5457
          %v5714 = vadd.f32 %v5254, %v5460
          %v5715 = vadd.f32 %v5255, %v5465
          %v5716 = vadd.f32 %v5256, %v5468
          %v5717 = vadd.f32 %v5257, %v5473
          %v5718 = vadd.f32 %v5258, %v5476
          %v5719 = vadd.f32 %v5259, %v5481
          %v5720 = vadd.f32 %v5260, %v5484
          %v5721 = vadd.f32 %v5261, %v5489
          %v5722 = vadd.f32 %v5262, %v5492
          %v5723 = vadd.f32 %v5263, %v5497
          %v5724 = vadd.f32 %v5264, %v5500
          %v5725 = vadd.f32 %v5265, %v5505
          %v5726 = vadd.f32 %v5266, %v5508
          %v5727 = vadd.f32 %v5267, %v5513
          %v5728 = vadd.f32 %v5268, %v5516
          %v5729 = vadd.f32 %v5269, %v5521
          %v5730 = vadd.f32 %v5270, %v5524
          %v5731 = vadd.f32 %v5271, %v5529
          %v5732 = vadd.f32 %v5272, %v5532
          %v5733 = vadd.f32 %v5273, %v5537
          %v5734 = vadd.f32 %v5274, %v5540
          %v5735 = vadd.f32 %v5275, %v5545
          %v5736 = vadd.f32 %v5276, %v5548
          %v5737 = vadd.f32 %v5277, %v5553
          %v5738 = vadd.f32 %v5278, %v5556
          %v5739 = vadd.f32 %v5279, %v5561
          %v5740 = vadd.f32 %v5280, %v5564
          %v5741 = vadd.f32 %v5281, %v5569
          %v5742 = vadd.f32 %v5282, %v5572
          %v5743 = vadd.f32 %v5283, %v5577
          %v5744 = vadd.f32 %v5284, %v5580
          %v5745 = vadd.f32 %v5285, %v5585
          %v5746 = vadd.f32 %v5286, %v5588
          %v5747 = vadd.f32 %v5287, %v5593
          %v5748 = vadd.f32 %v5288, %v5596
          %v5749 = vadd.f32 %v5289, %v5601
          %v5750 = vadd.f32 %v5290, %v5604
          %v5751 = vadd.f32 %v5291, %v5609
          %v5752 = vadd.f32 %v5292, %v5612
          %v5753 = vadd.f32 %v5293, %v5617
          %v5754 = vadd.f32 %v5294, %v5620
          %v5755 = vadd.f32 %v5295, %v5625
          %v5756 = vadd.f32 %v5296, %v5628
          %v5757 = vadd.f32 %v5297, %v5633
          %v5758 = vadd.f32 %v5298, %v5636
          %v5759 = vadd.f32 %v5299, %v5641
          %v5760 = vadd.f32 %v5300, %v5644
          %v5761 = vadd.f32 %v5301, %v5649
          %v5762 = vadd.f32 %v5302, %v5652
          %v5763 = vadd.f32 %v5303, %v5657
          %v5764 = vadd.f32 %v5304, %v5660
          %v5765 = vadd.f32 %v5305, %v5665
          %v5766 = vadd.f32 %v5306, %v5668
          %v5767 = vadd.f32 %v5307, %v5673
          %v5768 = vadd.f32 %v5308, %v5676
          %v5769 = vadd.f32 %v5309, %v5681
          %v5770 = vadd.f32 %v5310, %v5684
          %v5771 = vadd.f32 %v5311, %v5689
          %v5772 = vadd.f32 %v5312, %v5692
          %v5773 = vadd.f32 %v5313, %v5697
          %v5774 = vadd.f32 %v5314, %v5700
          %5775 = vst [vmem:[#allocation9] sm:$0xff] %v5703
          %5776 = vst [vmem:[#allocation9 + $0x8] sm:$0xff] %v5704
          %5777 = vst [vmem:[#allocation9 + $0x10] sm:$0xff] %v5705
          %5778 = vst [vmem:[#allocation9 + $0x18] sm:$0xff] %v5706
          %5779 = vst [vmem:[#allocation9 + $0x20] sm:$0xff] %v5707
          %5780 = vst [vmem:[#allocation9 + $0x28] sm:$0xff] %v5708
          %5781 = vst [vmem:[#allocation9 + $0x30] sm:$0xff] %v5709
          %5782 = vst [vmem:[#allocation9 + $0x38] sm:$0xff] %v5710
          %5783 = vst [vmem:[#allocation9 + $0x40] sm:$0xff] %v5711
          %5784 = vst [vmem:[#allocation9 + $0x48] sm:$0xff] %v5712
          %5785 = vst [vmem:[#allocation9 + $0x50] sm:$0xff] %v5713
          %5786 = vst [vmem:[#allocation9 + $0x58] sm:$0xff] %v5714
          %5787 = vst [vmem:[#allocation9 + $0x60] sm:$0xff] %v5715
          %5788 = vst [vmem:[#allocation9 + $0x68] sm:$0xff] %v5716
          %5789 = vst [vmem:[#allocation9 + $0x70] sm:$0xff] %v5717
          %5790 = vst [vmem:[#allocation9 + $0x78] sm:$0xff] %v5718
          %5791 = vst [vmem:[#allocation9 + $0x80] sm:$0xff] %v5719
          %5792 = vst [vmem:[#allocation9 + $0x88] sm:$0xff] %v5720
          %5793 = vst [vmem:[#allocation9 + $0x90] sm:$0xff] %v5721
          %5794 = vst [vmem:[#allocation9 + $0x98] sm:$0xff] %v5722
          %5795 = vst [vmem:[#allocation9 + $0xa0] sm:$0xff] %v5723
          %5796 = vst [vmem:[#allocation9 + $0xa8] sm:$0xff] %v5724
          %5797 = vst [vmem:[#allocation9 + $0xb0] sm:$0xff] %v5725
          %5798 = vst [vmem:[#allocation9 + $0xb8] sm:$0xff] %v5726
          %5799 = vst [vmem:[#allocation9 + $0xc0] sm:$0xff] %v5727
          %5800 = vst [vmem:[#allocation9 + $0xc8] sm:$0xff] %v5728
          %5801 = vst [vmem:[#allocation9 + $0xd0] sm:$0xff] %v5729
          %5802 = vst [vmem:[#allocation9 + $0xd8] sm:$0xff] %v5730
          %5803 = vst [vmem:[#allocation9 + $0xe0] sm:$0xff] %v5731
          %5804 = vst [vmem:[#allocation9 + $0xe8] sm:$0xff] %v5732
          %5805 = vst [vmem:[#allocation9 + $0xf0] sm:$0xff] %v5733
          %5806 = vst [vmem:[#allocation9 + $0xf8] sm:$0xff] %v5734
          %5807 = vst [vmem:[#allocation9 + $0x100] sm:$0xff] %v5735
          %5808 = vst [vmem:[#allocation9 + $0x108] sm:$0xff] %v5736
          %5809 = vst [vmem:[#allocation9 + $0x110] sm:$0xff] %v5737
          %5810 = vst [vmem:[#allocation9 + $0x118] sm:$0xff] %v5738
          %5811 = vst [vmem:[#allocation9 + $0x120] sm:$0xff] %v5739
          %5812 = vst [vmem:[#allocation9 + $0x128] sm:$0xff] %v5740
          %5813 = vst [vmem:[#allocation9 + $0x130] sm:$0xff] %v5741
          %5814 = vst [vmem:[#allocation9 + $0x138] sm:$0xff] %v5742
          %5815 = vst [vmem:[#allocation9 + $0x140] sm:$0xff] %v5743
          %5816 = vst [vmem:[#allocation9 + $0x148] sm:$0xff] %v5744
          %5817 = vst [vmem:[#allocation9 + $0x150] sm:$0xff] %v5745
          %5818 = vst [vmem:[#allocation9 + $0x158] sm:$0xff] %v5746
          %5819 = vst [vmem:[#allocation9 + $0x160] sm:$0xff] %v5747
          %5820 = vst [vmem:[#allocation9 + $0x168] sm:$0xff] %v5748
          %5821 = vst [vmem:[#allocation9 + $0x170] sm:$0xff] %v5749
          %5822 = vst [vmem:[#allocation9 + $0x178] sm:$0xff] %v5750
          %5823 = vst [vmem:[#allocation9 + $0x180] sm:$0xff] %v5751
          %5824 = vst [vmem:[#allocation9 + $0x188] sm:$0xff] %v5752
          %5825 = vst [vmem:[#allocation9 + $0x190] sm:$0xff] %v5753
          %5826 = vst [vmem:[#allocation9 + $0x198] sm:$0xff] %v5754
          %5827 = vst [vmem:[#allocation9 + $0x1a0] sm:$0xff] %v5755
          %5828 = vst [vmem:[#allocation9 + $0x1a8] sm:$0xff] %v5756
          %5829 = vst [vmem:[#allocation9 + $0x1b0] sm:$0xff] %v5757
          %5830 = vst [vmem:[#allocation9 + $0x1b8] sm:$0xff] %v5758
          %5831 = vst [vmem:[#allocation9 + $0x1c0] sm:$0xff] %v5759
          %5832 = vst [vmem:[#allocation9 + $0x1c8] sm:$0xff] %v5760
          %5833 = vst [vmem:[#allocation9 + $0x1d0] sm:$0xff] %v5761
          %5834 = vst [vmem:[#allocation9 + $0x1d8] sm:$0xff] %v5762
          %5835 = vst [vmem:[#allocation9 + $0x1e0] sm:$0xff] %v5763
          %5836 = vst [vmem:[#allocation9 + $0x1e8] sm:$0xff] %v5764
          %5837 = vst [vmem:[#allocation9 + $0x1f0] sm:$0xff] %v5765
          %5838 = vst [vmem:[#allocation9 + $0x1f8] sm:$0xff] %v5766
          %5839 = vst [vmem:[#allocation9 + $0x200] sm:$0xff] %v5767
          %5840 = vst [vmem:[#allocation9 + $0x208] sm:$0xff] %v5768
          %5841 = vst [vmem:[#allocation9 + $0x210] sm:$0xff] %v5769
          %5842 = vst [vmem:[#allocation9 + $0x218] sm:$0xff] %v5770
          %5843 = vst [vmem:[#allocation9 + $0x220] sm:$0xff] %v5771
          %5844 = vst [vmem:[#allocation9 + $0x228] sm:$0xff] %v5772
          %5845 = vst [vmem:[#allocation9 + $0x230] sm:$0xff] %v5773
          %5846 = vst [vmem:[#allocation9 + $0x238] sm:$0xff] %v5774
        $region222: #{forward.1} parent=119 // loop_footer
          %s4323 = sadd.s32 1, %s4319
        $region223: #{forward.1} parent=119 // loop_footer_branch
          %4318 = sbr.rel target = $region219
        $region224: #{forward.1} parent=119 // loop_exit
          _
        %v5847 = vld [vmem:[#allocation9] sm:$0xff]
        %v5848 = vld [vmem:[#allocation9 + $0x8] sm:$0xff]
        %v5849 = vld [vmem:[#allocation9 + $0x10] sm:$0xff]
        %v5850 = vld [vmem:[#allocation9 + $0x18] sm:$0xff]
        %v5851 = vld [vmem:[#allocation9 + $0x20] sm:$0xff]
        %v5852 = vld [vmem:[#allocation9 + $0x28] sm:$0xff]
        %v5853 = vld [vmem:[#allocation9 + $0x30] sm:$0xff]
        %v5854 = vld [vmem:[#allocation9 + $0x38] sm:$0xff]
        %v5855 = vld [vmem:[#allocation9 + $0x40] sm:$0xff]
        %v5856 = vld [vmem:[#allocation9 + $0x48] sm:$0xff]
        %v5857 = vld [vmem:[#allocation9 + $0x50] sm:$0xff]
        %v5858 = vld [vmem:[#allocation9 + $0x58] sm:$0xff]
        %v5859 = vld [vmem:[#allocation9 + $0x60] sm:$0xff]
        %v5860 = vld [vmem:[#allocation9 + $0x68] sm:$0xff]
        %v5861 = vld [vmem:[#allocation9 + $0x70] sm:$0xff]
        %v5862 = vld [vmem:[#allocation9 + $0x78] sm:$0xff]
        %v5863 = vld [vmem:[#allocation9 + $0x80] sm:$0xff]
        %v5864 = vld [vmem:[#allocation9 + $0x88] sm:$0xff]
        %v5865 = vld [vmem:[#allocation9 + $0x90] sm:$0xff]
        %v5866 = vld [vmem:[#allocation9 + $0x98] sm:$0xff]
        %v5867 = vld [vmem:[#allocation9 + $0xa0] sm:$0xff]
        %v5868 = vld [vmem:[#allocation9 + $0xa8] sm:$0xff]
        %v5869 = vld [vmem:[#allocation9 + $0xb0] sm:$0xff]
        %v5870 = vld [vmem:[#allocation9 + $0xb8] sm:$0xff]
        %v5871 = vld [vmem:[#allocation9 + $0xc0] sm:$0xff]
        %v5872 = vld [vmem:[#allocation9 + $0xc8] sm:$0xff]
        %v5873 = vld [vmem:[#allocation9 + $0xd0] sm:$0xff]
        %v5874 = vld [vmem:[#allocation9 + $0xd8] sm:$0xff]
        %v5875 = vld [vmem:[#allocation9 + $0xe0] sm:$0xff]
        %v5876 = vld [vmem:[#allocation9 + $0xe8] sm:$0xff]
        %v5877 = vld [vmem:[#allocation9 + $0xf0] sm:$0xff]
        %v5878 = vld [vmem:[#allocation9 + $0xf8] sm:$0xff]
        %v5879 = vld [vmem:[#allocation9 + $0x100] sm:$0xff]
        %v5880 = vld [vmem:[#allocation9 + $0x108] sm:$0xff]
        %v5881 = vld [vmem:[#allocation9 + $0x110] sm:$0xff]
        %v5882 = vld [vmem:[#allocation9 + $0x118] sm:$0xff]
        %v5883 = vld [vmem:[#allocation9 + $0x120] sm:$0xff]
        %v5884 = vld [vmem:[#allocation9 + $0x128] sm:$0xff]
        %v5885 = vld [vmem:[#allocation9 + $0x130] sm:$0xff]
        %v5886 = vld [vmem:[#allocation9 + $0x138] sm:$0xff]
        %v5887 = vld [vmem:[#allocation9 + $0x140] sm:$0xff]
        %v5888 = vld [vmem:[#allocation9 + $0x148] sm:$0xff]
        %v5889 = vld [vmem:[#allocation9 + $0x150] sm:$0xff]
        %v5890 = vld [vmem:[#allocation9 + $0x158] sm:$0xff]
        %v5891 = vld [vmem:[#allocation9 + $0x160] sm:$0xff]
        %v5892 = vld [vmem:[#allocation9 + $0x168] sm:$0xff]
        %v5893 = vld [vmem:[#allocation9 + $0x170] sm:$0xff]
        %v5894 = vld [vmem:[#allocation9 + $0x178] sm:$0xff]
        %v5895 = vld [vmem:[#allocation9 + $0x180] sm:$0xff]
        %v5896 = vld [vmem:[#allocation9 + $0x188] sm:$0xff]
        %v5897 = vld [vmem:[#allocation9 + $0x190] sm:$0xff]
        %v5898 = vld [vmem:[#allocation9 + $0x198] sm:$0xff]
        %v5899 = vld [vmem:[#allocation9 + $0x1a0] sm:$0xff]
        %v5900 = vld [vmem:[#allocation9 + $0x1a8] sm:$0xff]
        %v5901 = vld [vmem:[#allocation9 + $0x1b0] sm:$0xff]
        %v5902 = vld [vmem:[#allocation9 + $0x1b8] sm:$0xff]
        %v5903 = vld [vmem:[#allocation9 + $0x1c0] sm:$0xff]
        %v5904 = vld [vmem:[#allocation9 + $0x1c8] sm:$0xff]
        %v5905 = vld [vmem:[#allocation9 + $0x1d0] sm:$0xff]
        %v5906 = vld [vmem:[#allocation9 + $0x1d8] sm:$0xff]
        %v5907 = vld [vmem:[#allocation9 + $0x1e0] sm:$0xff]
        %v5908 = vld [vmem:[#allocation9 + $0x1e8] sm:$0xff]
        %v5909 = vld [vmem:[#allocation9 + $0x1f0] sm:$0xff]
        %v5910 = vld [vmem:[#allocation9 + $0x1f8] sm:$0xff]
        %v5911 = vld [vmem:[#allocation9 + $0x200] sm:$0xff]
        %v5912 = vld [vmem:[#allocation9 + $0x208] sm:$0xff]
        %v5913 = vld [vmem:[#allocation9 + $0x210] sm:$0xff]
        %v5914 = vld [vmem:[#allocation9 + $0x218] sm:$0xff]
        %v5915 = vld [vmem:[#allocation9 + $0x220] sm:$0xff]
        %v5916 = vld [vmem:[#allocation9 + $0x228] sm:$0xff]
        %v5917 = vld [vmem:[#allocation9 + $0x230] sm:$0xff]
        %v5918 = vld [vmem:[#allocation9 + $0x238] sm:$0xff]
        %v5919 = vld [vmem:[%s24] sm:$0x1]
        %v5921 = vlaneseq
        %v5922 = vshrl.u32 %v5921, 7
        %v5923 = vsub.s32 0, %v5922
        %v5924 = vrot.slane %v5919, %v5923
        %v5926 = vadd.f32 %v5847, %v5924
        %v5927 = vadd.f32 %v5848, %v5924
        %v5928 = vadd.f32 %v5849, %v5924
        %v5929 = vadd.f32 %v5850, %v5924
        %v5930 = vadd.f32 %v5851, %v5924
        %v5931 = vadd.f32 %v5852, %v5924
        %v5932 = vadd.f32 %v5853, %v5924
        %v5933 = vadd.f32 %v5854, %v5924
        %v5934 = vadd.f32 %v5855, %v5924
        %v5935 = vadd.f32 %v5856, %v5924
        %v5936 = vadd.f32 %v5857, %v5924
        %v5937 = vadd.f32 %v5858, %v5924
        %v5938 = vadd.f32 %v5859, %v5924
        %v5939 = vadd.f32 %v5860, %v5924
        %v5940 = vadd.f32 %v5861, %v5924
        %v5941 = vadd.f32 %v5862, %v5924
        %v5942 = vadd.f32 %v5863, %v5924
        %v5943 = vadd.f32 %v5864, %v5924
        %v5944 = vadd.f32 %v5865, %v5924
        %v5945 = vadd.f32 %v5866, %v5924
        %v5946 = vadd.f32 %v5867, %v5924
        %v5947 = vadd.f32 %v5868, %v5924
        %v5948 = vadd.f32 %v5869, %v5924
        %v5949 = vadd.f32 %v5870, %v5924
        %v5950 = vadd.f32 %v5871, %v5924
        %v5951 = vadd.f32 %v5872, %v5924
        %v5952 = vadd.f32 %v5873, %v5924
        %v5953 = vadd.f32 %v5874, %v5924
        %v5954 = vadd.f32 %v5875, %v5924
        %v5955 = vadd.f32 %v5876, %v5924
        %v5956 = vadd.f32 %v5877, %v5924
        %v5957 = vadd.f32 %v5878, %v5924
        %v5958 = vadd.f32 %v5879, %v5924
        %v5959 = vadd.f32 %v5880, %v5924
        %v5960 = vadd.f32 %v5881, %v5924
        %v5961 = vadd.f32 %v5882, %v5924
        %v5962 = vadd.f32 %v5883, %v5924
        %v5963 = vadd.f32 %v5884, %v5924
        %v5964 = vadd.f32 %v5885, %v5924
        %v5965 = vadd.f32 %v5886, %v5924
        %v5966 = vadd.f32 %v5887, %v5924
        %v5967 = vadd.f32 %v5888, %v5924
        %v5968 = vadd.f32 %v5889, %v5924
        %v5969 = vadd.f32 %v5890, %v5924
        %v5970 = vadd.f32 %v5891, %v5924
        %v5971 = vadd.f32 %v5892, %v5924
        %v5972 = vadd.f32 %v5893, %v5924
        %v5973 = vadd.f32 %v5894, %v5924
        %v5974 = vadd.f32 %v5895, %v5924
        %v5975 = vadd.f32 %v5896, %v5924
        %v5976 = vadd.f32 %v5897, %v5924
        %v5977 = vadd.f32 %v5898, %v5924
        %v5978 = vadd.f32 %v5899, %v5924
        %v5979 = vadd.f32 %v5900, %v5924
        %v5980 = vadd.f32 %v5901, %v5924
        %v5981 = vadd.f32 %v5902, %v5924
        %v5982 = vadd.f32 %v5903, %v5924
        %v5983 = vadd.f32 %v5904, %v5924
        %v5984 = vadd.f32 %v5905, %v5924
        %v5985 = vadd.f32 %v5906, %v5924
        %v5986 = vadd.f32 %v5907, %v5924
        %v5987 = vadd.f32 %v5908, %v5924
        %v5988 = vadd.f32 %v5909, %v5924
        %v5989 = vadd.f32 %v5910, %v5924
        %v5990 = vadd.f32 %v5911, %v5924
        %v5991 = vadd.f32 %v5912, %v5924
        %v5992 = vadd.f32 %v5913, %v5924
        %v5993 = vadd.f32 %v5914, %v5924
        %v5994 = vadd.f32 %v5915, %v5924
        %v5995 = vadd.f32 %v5916, %v5924
        %v5996 = vadd.f32 %v5917, %v5924
        %v5997 = vadd.f32 %v5918, %v5924
        %v5998 = vxor.u32 %v5926, 2147483648
        %v5999 = vxor.u32 %v5927, 2147483648
        %v6000 = vxor.u32 %v5928, 2147483648
        %v6001 = vxor.u32 %v5929, 2147483648
        %v6002 = vxor.u32 %v5930, 2147483648
        %v6003 = vxor.u32 %v5931, 2147483648
        %v6004 = vxor.u32 %v5932, 2147483648
        %v6005 = vxor.u32 %v5933, 2147483648
        %v6006 = vxor.u32 %v5934, 2147483648
        %v6007 = vxor.u32 %v5935, 2147483648
        %v6008 = vxor.u32 %v5936, 2147483648
        %v6009 = vxor.u32 %v5937, 2147483648
        %v6010 = vxor.u32 %v5938, 2147483648
        %v6011 = vxor.u32 %v5939, 2147483648
        %v6012 = vxor.u32 %v5940, 2147483648
        %v6013 = vxor.u32 %v5941, 2147483648
        %v6014 = vxor.u32 %v5942, 2147483648
        %v6015 = vxor.u32 %v5943, 2147483648
        %v6016 = vxor.u32 %v5944, 2147483648
        %v6017 = vxor.u32 %v5945, 2147483648
        %v6018 = vxor.u32 %v5946, 2147483648
        %v6019 = vxor.u32 %v5947, 2147483648
        %v6020 = vxor.u32 %v5948, 2147483648
        %v6021 = vxor.u32 %v5949, 2147483648
        %v6022 = vxor.u32 %v5950, 2147483648
        %v6023 = vxor.u32 %v5951, 2147483648
        %v6024 = vxor.u32 %v5952, 2147483648
        %v6025 = vxor.u32 %v5953, 2147483648
        %v6026 = vxor.u32 %v5954, 2147483648
        %v6027 = vxor.u32 %v5955, 2147483648
        %v6028 = vxor.u32 %v5956, 2147483648
        %v6029 = vxor.u32 %v5957, 2147483648
        %v6030 = vxor.u32 %v5958, 2147483648
        %v6031 = vxor.u32 %v5959, 2147483648
        %v6032 = vxor.u32 %v5960, 2147483648
        %v6033 = vxor.u32 %v5961, 2147483648
        %v6034 = vxor.u32 %v5962, 2147483648
        %v6035 = vxor.u32 %v5963, 2147483648
        %v6036 = vxor.u32 %v5964, 2147483648
        %v6037 = vxor.u32 %v5965, 2147483648
        %v6038 = vxor.u32 %v5966, 2147483648
        %v6039 = vxor.u32 %v5967, 2147483648
        %v6040 = vxor.u32 %v5968, 2147483648
        %v6041 = vxor.u32 %v5969, 2147483648
        %v6042 = vxor.u32 %v5970, 2147483648
        %v6043 = vxor.u32 %v5971, 2147483648
        %v6044 = vxor.u32 %v5972, 2147483648
        %v6045 = vxor.u32 %v5973, 2147483648
        %v6046 = vxor.u32 %v5974, 2147483648
        %v6047 = vxor.u32 %v5975, 2147483648
        %v6048 = vxor.u32 %v5976, 2147483648
        %v6049 = vxor.u32 %v5977, 2147483648
        %v6050 = vxor.u32 %v5978, 2147483648
        %v6051 = vxor.u32 %v5979, 2147483648
        %v6052 = vxor.u32 %v5980, 2147483648
        %v6053 = vxor.u32 %v5981, 2147483648
        %v6054 = vxor.u32 %v5982, 2147483648
        %v6055 = vxor.u32 %v5983, 2147483648
        %v6056 = vxor.u32 %v5984, 2147483648
        %v6057 = vxor.u32 %v5985, 2147483648
        %v6058 = vxor.u32 %v5986, 2147483648
        %v6059 = vxor.u32 %v5987, 2147483648
        %v6060 = vxor.u32 %v5988, 2147483648
        %v6061 = vxor.u32 %v5989, 2147483648
        %v6062 = vxor.u32 %v5990, 2147483648
        %v6063 = vxor.u32 %v5991, 2147483648
        %v6064 = vxor.u32 %v5992, 2147483648
        %v6065 = vxor.u32 %v5993, 2147483648
        %v6066 = vxor.u32 %v5994, 2147483648
        %v6067 = vxor.u32 %v5995, 2147483648
        %v6068 = vxor.u32 %v5996, 2147483648
        %v6069 = vxor.u32 %v5997, 2147483648
        %v6070 = vmul.f32 %v5998, 1.442695
        %v6071 = vpow.pop %v6070
        %v6072 = vmul.f32 %v5999, 1.442695
        %v6073 = vpow.pop %v6072
        %v6074 = vmul.f32 %v6000, 1.442695
        %v6075 = vpow.pop %v6074
        %v6076 = vmul.f32 %v6001, 1.442695
        %v6077 = vpow.pop %v6076
        %v6078 = vmul.f32 %v6002, 1.442695
        %v6079 = vpow.pop %v6078
        %v6080 = vmul.f32 %v6003, 1.442695
        %v6081 = vpow.pop %v6080
        %v6082 = vmul.f32 %v6004, 1.442695
        %v6083 = vpow.pop %v6082
        %v6084 = vmul.f32 %v6005, 1.442695
        %v6085 = vpow.pop %v6084
        %v6086 = vmul.f32 %v6006, 1.442695
        %v6087 = vpow.pop %v6086
        %v6088 = vmul.f32 %v6007, 1.442695
        %v6089 = vpow.pop %v6088
        %v6090 = vmul.f32 %v6008, 1.442695
        %v6091 = vpow.pop %v6090
        %v6092 = vmul.f32 %v6009, 1.442695
        %v6093 = vpow.pop %v6092
        %v6094 = vmul.f32 %v6010, 1.442695
        %v6095 = vpow.pop %v6094
        %v6096 = vmul.f32 %v6011, 1.442695
        %v6097 = vpow.pop %v6096
        %v6098 = vmul.f32 %v6012, 1.442695
        %v6099 = vpow.pop %v6098
        %v6100 = vmul.f32 %v6013, 1.442695
        %v6101 = vpow.pop %v6100
        %v6102 = vmul.f32 %v6014, 1.442695
        %v6103 = vpow.pop %v6102
        %v6104 = vmul.f32 %v6015, 1.442695
        %v6105 = vpow.pop %v6104
        %v6106 = vmul.f32 %v6016, 1.442695
        %v6107 = vpow.pop %v6106
        %v6108 = vmul.f32 %v6017, 1.442695
        %v6109 = vpow.pop %v6108
        %v6110 = vmul.f32 %v6018, 1.442695
        %v6111 = vpow.pop %v6110
        %v6112 = vmul.f32 %v6019, 1.442695
        %v6113 = vpow.pop %v6112
        %v6114 = vmul.f32 %v6020, 1.442695
        %v6115 = vpow.pop %v6114
        %v6116 = vmul.f32 %v6021, 1.442695
        %v6117 = vpow.pop %v6116
        %v6118 = vmul.f32 %v6022, 1.442695
        %v6119 = vpow.pop %v6118
        %v6120 = vmul.f32 %v6023, 1.442695
        %v6121 = vpow.pop %v6120
        %v6122 = vmul.f32 %v6024, 1.442695
        %v6123 = vpow.pop %v6122
        %v6124 = vmul.f32 %v6025, 1.442695
        %v6125 = vpow.pop %v6124
        %v6126 = vmul.f32 %v6026, 1.442695
        %v6127 = vpow.pop %v6126
        %v6128 = vmul.f32 %v6027, 1.442695
        %v6129 = vpow.pop %v6128
        %v6130 = vmul.f32 %v6028, 1.442695
        %v6131 = vpow.pop %v6130
        %v6132 = vmul.f32 %v6029, 1.442695
        %v6133 = vpow.pop %v6132
        %v6134 = vmul.f32 %v6030, 1.442695
        %v6135 = vpow.pop %v6134
        %v6136 = vmul.f32 %v6031, 1.442695
        %v6137 = vpow.pop %v6136
        %v6138 = vmul.f32 %v6032, 1.442695
        %v6139 = vpow.pop %v6138
        %v6140 = vmul.f32 %v6033, 1.442695
        %v6141 = vpow.pop %v6140
        %v6142 = vmul.f32 %v6034, 1.442695
        %v6143 = vpow.pop %v6142
        %v6144 = vmul.f32 %v6035, 1.442695
        %v6145 = vpow.pop %v6144
        %v6146 = vmul.f32 %v6036, 1.442695
        %v6147 = vpow.pop %v6146
        %v6148 = vmul.f32 %v6037, 1.442695
        %v6149 = vpow.pop %v6148
        %v6150 = vmul.f32 %v6038, 1.442695
        %v6151 = vpow.pop %v6150
        %v6152 = vmul.f32 %v6039, 1.442695
        %v6153 = vpow.pop %v6152
        %v6154 = vmul.f32 %v6040, 1.442695
        %v6155 = vpow.pop %v6154
        %v6156 = vmul.f32 %v6041, 1.442695
        %v6157 = vpow.pop %v6156
        %v6158 = vmul.f32 %v6042, 1.442695
        %v6159 = vpow.pop %v6158
        %v6160 = vmul.f32 %v6043, 1.442695
        %v6161 = vpow.pop %v6160
        %v6162 = vmul.f32 %v6044, 1.442695
        %v6163 = vpow.pop %v6162
        %v6164 = vmul.f32 %v6045, 1.442695
        %v6165 = vpow.pop %v6164
        %v6166 = vmul.f32 %v6046, 1.442695
        %v6167 = vpow.pop %v6166
        %v6168 = vmul.f32 %v6047, 1.442695
        %v6169 = vpow.pop %v6168
        %v6170 = vmul.f32 %v6048, 1.442695
        %v6171 = vpow.pop %v6170
        %v6172 = vmul.f32 %v6049, 1.442695
        %v6173 = vpow.pop %v6172
        %v6174 = vmul.f32 %v6050, 1.442695
        %v6175 = vpow.pop %v6174
        %v6176 = vmul.f32 %v6051, 1.442695
        %v6177 = vpow.pop %v6176
        %v6178 = vmul.f32 %v6052, 1.442695
        %v6179 = vpow.pop %v6178
        %v6180 = vmul.f32 %v6053, 1.442695
        %v6181 = vpow.pop %v6180
        %v6182 = vmul.f32 %v6054, 1.442695
        %v6183 = vpow.pop %v6182
        %v6184 = vmul.f32 %v6055, 1.442695
        %v6185 = vpow.pop %v6184
        %v6186 = vmul.f32 %v6056, 1.442695
        %v6187 = vpow.pop %v6186
        %v6188 = vmul.f32 %v6057, 1.442695
        %v6189 = vpow.pop %v6188
        %v6190 = vmul.f32 %v6058, 1.442695
        %v6191 = vpow.pop %v6190
        %v6192 = vmul.f32 %v6059, 1.442695
        %v6193 = vpow.pop %v6192
        %v6194 = vmul.f32 %v6060, 1.442695
        %v6195 = vpow.pop %v6194
        %v6196 = vmul.f32 %v6061, 1.442695
        %v6197 = vpow.pop %v6196
        %v6198 = vmul.f32 %v6062, 1.442695
        %v6199 = vpow.pop %v6198
        %v6200 = vmul.f32 %v6063, 1.442695
        %v6201 = vpow.pop %v6200
        %v6202 = vmul.f32 %v6064, 1.442695
        %v6203 = vpow.pop %v6202
        %v6204 = vmul.f32 %v6065, 1.442695
        %v6205 = vpow.pop %v6204
        %v6206 = vmul.f32 %v6066, 1.442695
        %v6207 = vpow.pop %v6206
        %v6208 = vmul.f32 %v6067, 1.442695
        %v6209 = vpow.pop %v6208
        %v6210 = vmul.f32 %v6068, 1.442695
        %v6211 = vpow.pop %v6210
        %v6212 = vmul.f32 %v6069, 1.442695
        %v6213 = vpow.pop %v6212
        %v6214 = vadd.f32 %v6071, 1.0
        %v6215 = vadd.f32 %v6073, 1.0
        %v6216 = vadd.f32 %v6075, 1.0
        %v6217 = vadd.f32 %v6077, 1.0
        %v6218 = vadd.f32 %v6079, 1.0
        %v6219 = vadd.f32 %v6081, 1.0
        %v6220 = vadd.f32 %v6083, 1.0
        %v6221 = vadd.f32 %v6085, 1.0
        %v6222 = vadd.f32 %v6087, 1.0
        %v6223 = vadd.f32 %v6089, 1.0
        %v6224 = vadd.f32 %v6091, 1.0
        %v6225 = vadd.f32 %v6093, 1.0
        %v6226 = vadd.f32 %v6095, 1.0
        %v6227 = vadd.f32 %v6097, 1.0
        %v6228 = vadd.f32 %v6099, 1.0
        %v6229 = vadd.f32 %v6101, 1.0
        %v6230 = vadd.f32 %v6103, 1.0
        %v6231 = vadd.f32 %v6105, 1.0
        %v6232 = vadd.f32 %v6107, 1.0
        %v6233 = vadd.f32 %v6109, 1.0
        %v6234 = vadd.f32 %v6111, 1.0
        %v6235 = vadd.f32 %v6113, 1.0
        %v6236 = vadd.f32 %v6115, 1.0
        %v6237 = vadd.f32 %v6117, 1.0
        %v6238 = vadd.f32 %v6119, 1.0
        %v6239 = vadd.f32 %v6121, 1.0
        %v6240 = vadd.f32 %v6123, 1.0
        %v6241 = vadd.f32 %v6125, 1.0
        %v6242 = vadd.f32 %v6127, 1.0
        %v6243 = vadd.f32 %v6129, 1.0
        %v6244 = vadd.f32 %v6131, 1.0
        %v6245 = vadd.f32 %v6133, 1.0
        %v6246 = vadd.f32 %v6135, 1.0
        %v6247 = vadd.f32 %v6137, 1.0
        %v6248 = vadd.f32 %v6139, 1.0
        %v6249 = vadd.f32 %v6141, 1.0
        %v6250 = vadd.f32 %v6143, 1.0
        %v6251 = vadd.f32 %v6145, 1.0
        %v6252 = vadd.f32 %v6147, 1.0
        %v6253 = vadd.f32 %v6149, 1.0
        %v6254 = vadd.f32 %v6151, 1.0
        %v6255 = vadd.f32 %v6153, 1.0
        %v6256 = vadd.f32 %v6155, 1.0
        %v6257 = vadd.f32 %v6157, 1.0
        %v6258 = vadd.f32 %v6159, 1.0
        %v6259 = vadd.f32 %v6161, 1.0
        %v6260 = vadd.f32 %v6163, 1.0
        %v6261 = vadd.f32 %v6165, 1.0
        %v6262 = vadd.f32 %v6167, 1.0
        %v6263 = vadd.f32 %v6169, 1.0
        %v6264 = vadd.f32 %v6171, 1.0
        %v6265 = vadd.f32 %v6173, 1.0
        %v6266 = vadd.f32 %v6175, 1.0
        %v6267 = vadd.f32 %v6177, 1.0
        %v6268 = vadd.f32 %v6179, 1.0
        %v6269 = vadd.f32 %v6181, 1.0
        %v6270 = vadd.f32 %v6183, 1.0
        %v6271 = vadd.f32 %v6185, 1.0
        %v6272 = vadd.f32 %v6187, 1.0
        %v6273 = vadd.f32 %v6189, 1.0
        %v6274 = vadd.f32 %v6191, 1.0
        %v6275 = vadd.f32 %v6193, 1.0
        %v6276 = vadd.f32 %v6195, 1.0
        %v6277 = vadd.f32 %v6197, 1.0
        %v6278 = vadd.f32 %v6199, 1.0
        %v6279 = vadd.f32 %v6201, 1.0
        %v6280 = vadd.f32 %v6203, 1.0
        %v6281 = vadd.f32 %v6205, 1.0
        %v6282 = vadd.f32 %v6207, 1.0
        %v6283 = vadd.f32 %v6209, 1.0
        %v6284 = vadd.f32 %v6211, 1.0
        %v6285 = vadd.f32 %v6213, 1.0
        %v6286 = vrcp.pop %v6214
        %v6287 = vmul.f32 1.0, %v6286
        %v6288 = vrcp.pop %v6215
        %v6289 = vmul.f32 1.0, %v6288
        %v6290 = vrcp.pop %v6216
        %v6291 = vmul.f32 1.0, %v6290
        %v6292 = vrcp.pop %v6217
        %v6293 = vmul.f32 1.0, %v6292
        %v6294 = vrcp.pop %v6218
        %v6295 = vmul.f32 1.0, %v6294
        %v6296 = vrcp.pop %v6219
        %v6297 = vmul.f32 1.0, %v6296
        %v6298 = vrcp.pop %v6220
        %v6299 = vmul.f32 1.0, %v6298
        %v6300 = vrcp.pop %v6221
        %v6301 = vmul.f32 1.0, %v6300
        %v6302 = vrcp.pop %v6222
        %v6303 = vmul.f32 1.0, %v6302
        %v6304 = vrcp.pop %v6223
        %v6305 = vmul.f32 1.0, %v6304
        %v6306 = vrcp.pop %v6224
        %v6307 = vmul.f32 1.0, %v6306
        %v6308 = vrcp.pop %v6225
        %v6309 = vmul.f32 1.0, %v6308
        %v6310 = vrcp.pop %v6226
        %v6311 = vmul.f32 1.0, %v6310
        %v6312 = vrcp.pop %v6227
        %v6313 = vmul.f32 1.0, %v6312
        %v6314 = vrcp.pop %v6228
        %v6315 = vmul.f32 1.0, %v6314
        %v6316 = vrcp.pop %v6229
        %v6317 = vmul.f32 1.0, %v6316
        %v6318 = vrcp.pop %v6230
        %v6319 = vmul.f32 1.0, %v6318
        %v6320 = vrcp.pop %v6231
        %v6321 = vmul.f32 1.0, %v6320
        %v6322 = vrcp.pop %v6232
        %v6323 = vmul.f32 1.0, %v6322
        %v6324 = vrcp.pop %v6233
        %v6325 = vmul.f32 1.0, %v6324
        %v6326 = vrcp.pop %v6234
        %v6327 = vmul.f32 1.0, %v6326
        %v6328 = vrcp.pop %v6235
        %v6329 = vmul.f32 1.0, %v6328
        %v6330 = vrcp.pop %v6236
        %v6331 = vmul.f32 1.0, %v6330
        %v6332 = vrcp.pop %v6237
        %v6333 = vmul.f32 1.0, %v6332
        %v6334 = vrcp.pop %v6238
        %v6335 = vmul.f32 1.0, %v6334
        %v6336 = vrcp.pop %v6239
        %v6337 = vmul.f32 1.0, %v6336
        %v6338 = vrcp.pop %v6240
        %v6339 = vmul.f32 1.0, %v6338
        %v6340 = vrcp.pop %v6241
        %v6341 = vmul.f32 1.0, %v6340
        %v6342 = vrcp.pop %v6242
        %v6343 = vmul.f32 1.0, %v6342
        %v6344 = vrcp.pop %v6243
        %v6345 = vmul.f32 1.0, %v6344
        %v6346 = vrcp.pop %v6244
        %v6347 = vmul.f32 1.0, %v6346
        %v6348 = vrcp.pop %v6245
        %v6349 = vmul.f32 1.0, %v6348
        %v6350 = vrcp.pop %v6246
        %v6351 = vmul.f32 1.0, %v6350
        %v6352 = vrcp.pop %v6247
        %v6353 = vmul.f32 1.0, %v6352
        %v6354 = vrcp.pop %v6248
        %v6355 = vmul.f32 1.0, %v6354
        %v6356 = vrcp.pop %v6249
        %v6357 = vmul.f32 1.0, %v6356
        %v6358 = vrcp.pop %v6250
        %v6359 = vmul.f32 1.0, %v6358
        %v6360 = vrcp.pop %v6251
        %v6361 = vmul.f32 1.0, %v6360
        %v6362 = vrcp.pop %v6252
        %v6363 = vmul.f32 1.0, %v6362
        %v6364 = vrcp.pop %v6253
        %v6365 = vmul.f32 1.0, %v6364
        %v6366 = vrcp.pop %v6254
        %v6367 = vmul.f32 1.0, %v6366
        %v6368 = vrcp.pop %v6255
        %v6369 = vmul.f32 1.0, %v6368
        %v6370 = vrcp.pop %v6256
        %v6371 = vmul.f32 1.0, %v6370
        %v6372 = vrcp.pop %v6257
        %v6373 = vmul.f32 1.0, %v6372
        %v6374 = vrcp.pop %v6258
        %v6375 = vmul.f32 1.0, %v6374
        %v6376 = vrcp.pop %v6259
        %v6377 = vmul.f32 1.0, %v6376
        %v6378 = vrcp.pop %v6260
        %v6379 = vmul.f32 1.0, %v6378
        %v6380 = vrcp.pop %v6261
        %v6381 = vmul.f32 1.0, %v6380
        %v6382 = vrcp.pop %v6262
        %v6383 = vmul.f32 1.0, %v6382
        %v6384 = vrcp.pop %v6263
        %v6385 = vmul.f32 1.0, %v6384
        %v6386 = vrcp.pop %v6264
        %v6387 = vmul.f32 1.0, %v6386
        %v6388 = vrcp.pop %v6265
        %v6389 = vmul.f32 1.0, %v6388
        %v6390 = vrcp.pop %v6266
        %v6391 = vmul.f32 1.0, %v6390
        %v6392 = vrcp.pop %v6267
        %v6393 = vmul.f32 1.0, %v6392
        %v6394 = vrcp.pop %v6268
        %v6395 = vmul.f32 1.0, %v6394
        %v6396 = vrcp.pop %v6269
        %v6397 = vmul.f32 1.0, %v6396
        %v6398 = vrcp.pop %v6270
        %v6399 = vmul.f32 1.0, %v6398
        %v6400 = vrcp.pop %v6271
        %v6401 = vmul.f32 1.0, %v6400
        %v6402 = vrcp.pop %v6272
        %v6403 = vmul.f32 1.0, %v6402
        %v6404 = vrcp.pop %v6273
        %v6405 = vmul.f32 1.0, %v6404
        %v6406 = vrcp.pop %v6274
        %v6407 = vmul.f32 1.0, %v6406
        %v6408 = vrcp.pop %v6275
        %v6409 = vmul.f32 1.0, %v6408
        %v6410 = vrcp.pop %v6276
        %v6411 = vmul.f32 1.0, %v6410
        %v6412 = vrcp.pop %v6277
        %v6413 = vmul.f32 1.0, %v6412
        %v6414 = vrcp.pop %v6278
        %v6415 = vmul.f32 1.0, %v6414
        %v6416 = vrcp.pop %v6279
        %v6417 = vmul.f32 1.0, %v6416
        %v6418 = vrcp.pop %v6280
        %v6419 = vmul.f32 1.0, %v6418
        %v6420 = vrcp.pop %v6281
        %v6421 = vmul.f32 1.0, %v6420
        %v6422 = vrcp.pop %v6282
        %v6423 = vmul.f32 1.0, %v6422
        %v6424 = vrcp.pop %v6283
        %v6425 = vmul.f32 1.0, %v6424
        %v6426 = vrcp.pop %v6284
        %v6427 = vmul.f32 1.0, %v6426
        %v6428 = vrcp.pop %v6285
        %v6429 = vmul.f32 1.0, %v6428
        %6430 = vst [vmem:[%s939] sm:$0xff] %v6287
        %6431 = vst [vmem:[%s939 + $0x8] sm:$0xff] %v6289
        %6432 = vst [vmem:[%s939 + $0x10] sm:$0xff] %v6291
        %6433 = vst [vmem:[%s939 + $0x18] sm:$0xff] %v6293
        %6434 = vst [vmem:[%s939 + $0x20] sm:$0xff] %v6295
        %6435 = vst [vmem:[%s939 + $0x28] sm:$0xff] %v6297
        %6436 = vst [vmem:[%s939 + $0x30] sm:$0xff] %v6299
        %6437 = vst [vmem:[%s939 + $0x38] sm:$0xff] %v6301
        %6438 = vst [vmem:[%s939 + $0x40] sm:$0xff] %v6303
        %6439 = vst [vmem:[%s939 + $0x48] sm:$0xff] %v6305
        %6440 = vst [vmem:[%s939 + $0x50] sm:$0xff] %v6307
        %6441 = vst [vmem:[%s939 + $0x58] sm:$0xff] %v6309
        %6442 = vst [vmem:[%s939 + $0x60] sm:$0xff] %v6311
        %6443 = vst [vmem:[%s939 + $0x68] sm:$0xff] %v6313
        %6444 = vst [vmem:[%s939 + $0x70] sm:$0xff] %v6315
        %6445 = vst [vmem:[%s939 + $0x78] sm:$0xff] %v6317
        %6446 = vst [vmem:[%s939 + $0x80] sm:$0xff] %v6319
        %6447 = vst [vmem:[%s939 + $0x88] sm:$0xff] %v6321
        %6448 = vst [vmem:[%s939 + $0x90] sm:$0xff] %v6323
        %6449 = vst [vmem:[%s939 + $0x98] sm:$0xff] %v6325
        %6450 = vst [vmem:[%s939 + $0xa0] sm:$0xff] %v6327
        %6451 = vst [vmem:[%s939 + $0xa8] sm:$0xff] %v6329
        %6452 = vst [vmem:[%s939 + $0xb0] sm:$0xff] %v6331
        %6453 = vst [vmem:[%s939 + $0xb8] sm:$0xff] %v6333
        %6454 = vst [vmem:[%s939 + $0xc0] sm:$0xff] %v6335
        %6455 = vst [vmem:[%s939 + $0xc8] sm:$0xff] %v6337
        %6456 = vst [vmem:[%s939 + $0xd0] sm:$0xff] %v6339
        %6457 = vst [vmem:[%s939 + $0xd8] sm:$0xff] %v6341
        %6458 = vst [vmem:[%s939 + $0xe0] sm:$0xff] %v6343
        %6459 = vst [vmem:[%s939 + $0xe8] sm:$0xff] %v6345
        %6460 = vst [vmem:[%s939 + $0xf0] sm:$0xff] %v6347
        %6461 = vst [vmem:[%s939 + $0xf8] sm:$0xff] %v6349
        %6462 = vst [vmem:[%s939 + $0x100] sm:$0xff] %v6351
        %6463 = vst [vmem:[%s939 + $0x108] sm:$0xff] %v6353
        %6464 = vst [vmem:[%s939 + $0x110] sm:$0xff] %v6355
        %6465 = vst [vmem:[%s939 + $0x118] sm:$0xff] %v6357
        %6466 = vst [vmem:[%s939 + $0x120] sm:$0xff] %v6359
        %6467 = vst [vmem:[%s939 + $0x128] sm:$0xff] %v6361
        %6468 = vst [vmem:[%s939 + $0x130] sm:$0xff] %v6363
        %6469 = vst [vmem:[%s939 + $0x138] sm:$0xff] %v6365
        %6470 = vst [vmem:[%s939 + $0x140] sm:$0xff] %v6367
        %6471 = vst [vmem:[%s939 + $0x148] sm:$0xff] %v6369
        %6472 = vst [vmem:[%s939 + $0x150] sm:$0xff] %v6371
        %6473 = vst [vmem:[%s939 + $0x158] sm:$0xff] %v6373
        %6474 = vst [vmem:[%s939 + $0x160] sm:$0xff] %v6375
        %6475 = vst [vmem:[%s939 + $0x168] sm:$0xff] %v6377
        %6476 = vst [vmem:[%s939 + $0x170] sm:$0xff] %v6379
        %6477 = vst [vmem:[%s939 + $0x178] sm:$0xff] %v6381
        %6478 = vst [vmem:[%s939 + $0x180] sm:$0xff] %v6383
        %6479 = vst [vmem:[%s939 + $0x188] sm:$0xff] %v6385
        %6480 = vst [vmem:[%s939 + $0x190] sm:$0xff] %v6387
        %6481 = vst [vmem:[%s939 + $0x198] sm:$0xff] %v6389
        %6482 = vst [vmem:[%s939 + $0x1a0] sm:$0xff] %v6391
        %6483 = vst [vmem:[%s939 + $0x1a8] sm:$0xff] %v6393
        %6484 = vst [vmem:[%s939 + $0x1b0] sm:$0xff] %v6395
        %6485 = vst [vmem:[%s939 + $0x1b8] sm:$0xff] %v6397
        %6486 = vst [vmem:[%s939 + $0x1c0] sm:$0xff] %v6399
        %6487 = vst [vmem:[%s939 + $0x1c8] sm:$0xff] %v6401
        %6488 = vst [vmem:[%s939 + $0x1d0] sm:$0xff] %v6403
        %6489 = vst [vmem:[%s939 + $0x1d8] sm:$0xff] %v6405
        %6490 = vst [vmem:[%s939 + $0x1e0] sm:$0xff] %v6407
        %6491 = vst [vmem:[%s939 + $0x1e8] sm:$0xff] %v6409
        %6492 = vst [vmem:[%s939 + $0x1f0] sm:$0xff] %v6411
        %6493 = vst [vmem:[%s939 + $0x1f8] sm:$0xff] %v6413
        %6494 = vst [vmem:[%s939 + $0x200] sm:$0xff] %v6415
        %6495 = vst [vmem:[%s939 + $0x208] sm:$0xff] %v6417
        %6496 = vst [vmem:[%s939 + $0x210] sm:$0xff] %v6419
        %6497 = vst [vmem:[%s939 + $0x218] sm:$0xff] %v6421
        %6498 = vst [vmem:[%s939 + $0x220] sm:$0xff] %v6423
        %6499 = vst [vmem:[%s939 + $0x228] sm:$0xff] %v6425
        %6500 = vst [vmem:[%s939 + $0x230] sm:$0xff] %v6427
        %6501 = vst [vmem:[%s939 + $0x238] sm:$0xff] %v6429
        %p6502 = scmp.lt.s32.totalorder %s43, 3
        %s6503 = scalar_select %p6502, %s43, 3
        %s6504 = smul.addr %s6503, 72
        %s6505 = smul.addr %s6504, 8
        %s6506 = scalar_lea.vmem %s25, %s6505
        // Predicated region
        $region225: #{forward.1} parent=119 // pred_check
          %p6507 = pneg %p591
        $region226: #{forward.1} parent=119 // pred_check_branch
          %6509 = sbr.rel (%p6507) target = $region228
        $region227: #{forward.1} parent=119 // pred_region
          _
        $region228: #{forward.1} parent=119 // pred_fallthru
          _
      $region120: #{forward.1} parent=5 // pred_fallthru
        _
      %p6510 = scmp.le.s32.totalorder 2, %s38
      // Predicated region
      $region229: #{forward.1} parent=5 // pred_check
        %p6511 = pneg %p6510
      $region230: #{forward.1} parent=5 // pred_check_branch
        %6513 = sbr.rel (%p6511) target = $region232
      $region231: #{forward.1} parent=5 // pred_region
        %s6514 = ssub.s32 %s38, 2
        // Predicated region
        $region233: #{forward.1} parent=231 // pred_check
          %p6515 = pneg %p597
        $region234: #{forward.1} parent=231 // pred_check_branch
          %6517 = sbr.rel (%p6515) target = $region236
        $region235: #{forward.1} parent=231 // pred_region
          %p6518 = scmp.lt.s32.totalorder %s44, 3
          %s6519 = scalar_select %p6518, %s44, 3
          %s6520 = smul.addr %s6519, 72
          %s6521 = smul.addr %s6520, 8
          %s6522 = scalar_lea.vmem %s25, %s6521
        $region236: #{forward.1} parent=231 // pred_fallthru
          _
      $region232: #{forward.1} parent=5 // pred_fallthru
        _
    $region6: #{forward.1} parent=1 // loop_footer
      %s42 = sadd.s32 1, %s38
    $region7: #{forward.1} parent=1 // loop_footer_branch
      %37 = sbr.rel target = $region3
    $region8: #{forward.1} parent=1 // loop_exit
      _
    %6523 = vsyncpa [#allocation11], 1
    %s6524 = scalar_lea.sflag [#allocation11], 1
    %6525 = vsyncpa %s6524, 1
    %6526 = vsyncpa [#allocation13], 1
    %6527 = vsyncpa [#allocation16], 1
    %6528 = vsyncpa [#allocation19], 1
    %6529 = vsyncpa [#allocation22], 1
    %6530 = vsyncpa [#allocation25], 1
    %6531 = vsyncpa [#allocation28], 1

</llo_original>
